<compile_context>
chip_gen: v5e
topology: v5e:2x2
jax: 0.10.0
libtpu: 0.0.40
codegen_flags: <defaults>
</compile_context>

<pallas_src>
import jax
import jax.numpy as jnp
from jax import lax
from jax.experimental import pallas as pl
from jax.experimental.pallas import tpu as pltpu

EPS = 1e-5


# ----------------------------- wrapper-side helpers -----------------------------

def _phase_split(xp, s):
    """(B, Hp, Wp, C) -> (s*s, B, ceil(Hp/s), ceil(Wp/s), C).

    Phase (a, b) (flat index a*s+b) holds xp[:, a::s, b::s, :]; trailing zero-pad
    rows/cols are never read by the kernel.  For s == 1 this is just a reshape.
    """
    B, Hp, Wp, C = xp.shape
    Hpp = -(-Hp // s)
    Wpp = -(-Wp // s)
    xp = jnp.pad(xp, ((0, 0), (0, Hpp * s - Hp), (0, Wpp * s - Wp), (0, 0)))
    xp = xp.reshape(B, Hpp, s, Wpp, s, C)
    xp = jnp.transpose(xp, (2, 4, 0, 1, 3, 5))          # (s, s, B, Hpp, Wpp, C)
    return xp.reshape(s * s, B, Hpp, Wpp, C)


# ----------------------------- fused BasicBlock kernel -----------------------------

def _make_block_kernel(stride, Ho, Wo, Cin, P, has_down):
    s = stride
    M = Ho * Wo
    taps = [(kh, kw) for kh in range(3) for kw in range(3)]
    pack1 = (Cin % 128 == 0)       # K-pack conv1 only if column bands stay lane-aligned
    pack2 = (P % 128 == 0)

    def kernel(xph_ref, w1_ref, s1_ref, b1_ref, w2_ref, s2_ref, b2_ref, *rest):
        if has_down:
            wd_ref, sd_ref, bd_ref, o_ref, hpad_ref, lhs1_ref, lhs2_ref = rest
        else:
            o_ref, hpad_ref, lhs1_ref, lhs2_ref = rest

        def window(phase, dh, dw):
            # contiguous (Ho, Wo, Cin) bf16 slice of the phase-split padded input,
            # flattened to an (M, Cin) MXU operand (input is pre-cast to bf16).
            w = xph_ref[phase, pl.ds(dh, Ho), pl.ds(dw, Wo), :]
            return w.reshape(M, Cin)

        # ---- conv1: 3x3 stride-s pad-1 ----
        if pack1:
            # build the (M, 9*Cin) im2col LHS once in VMEM, single K-packed GEMM
            for t, (kh, kw) in enumerate(taps):
                lhs1_ref[:, pl.ds(t * Cin, Cin)] = window(
                    (kh % s) * s + (kw % s), kh // s, kw // s)
            h = jnp.dot(lhs1_ref[...], w1_ref[...],
                        preferred_element_type=jnp.float32)
        else:
            # lane-alignment fallback: per-tap K=Cin GEMMs, chained accumulation
            h = None
            for t, (kh, kw) in enumerate(taps):
                d = jnp.dot(window((kh % s) * s + (kw % s), kh // s, kw // s),
                            w1_ref[pl.ds(t * Cin, Cin), :],
                            preferred_element_type=jnp.float32)
                h = d if h is None else h + d
        h = jnp.maximum(h * s1_ref[...] + b1_ref[...], 0.0)

        # stage conv1 output in a zero-padded bf16 VMEM scratch (halo for conv2)
        hpad_ref[...] = jnp.zeros_like(hpad_ref)
        hpad_ref[pl.ds(1, Ho), pl.ds(1, Wo), :] = (
            h.reshape(Ho, Wo, P).astype(jnp.bfloat16))

        # ---- conv2: 3x3 stride-1 pad-1 + BN ----
        if pack2:
            for t, (kh, kw) in enumerate(taps):
                lhs2_ref[:, pl.ds(t * P, P)] = (
                    hpad_ref[pl.ds(kh, Ho), pl.ds(kw, Wo), :].reshape(M, P))
            out = jnp.dot(lhs2_ref[...], w2_ref[...],
                          preferred_element_type=jnp.float32)
        else:
            # TODO(synk): for planes < 128 the output store is lane-sparse; fold
            # spatial columns into channels before relying on this path.
            out = None
            for t, (kh, kw) in enumerate(taps):
                lhs = hpad_ref[pl.ds(kh, Ho), pl.ds(kw, Wo), :].reshape(M, P)
                d = jnp.dot(lhs, w2_ref[pl.ds(t * P, P), :],
                            preferred_element_type=jnp.float32)
                out = d if out is None else out + d
        out = out * s2_ref[...] + b2_ref[...]

        # ---- shortcut LAST (short live range): identity or 1x1/stride-s + BN ----
        # x[s*oh, s*ow] == xpad[s*oh + 1, s*ow + 1] -> phase (1%s,1%s), offset 1//s
        doff = 1 // s
        dph = (1 % s) * s + (1 % s)
        idw = window(dph, doff, doff)
        if has_down:
            identity = jnp.dot(idw, wd_ref[...], preferred_element_type=jnp.float32)
            identity = identity * sd_ref[...] + bd_ref[...]
        else:
            identity = idw.astype(jnp.float32)           # bf16-rounded residual

        o_ref[...] = jnp.maximum(out + identity, 0.0).reshape(Ho, Wo, P).astype(o_ref.dtype)

    return kernel


def basic_block_forward_nhwc(blk, x_nhwc):
    """Fused BasicBlock forward, NHWC in -> NHWC out (one pallas_call)."""
    s = int(blk["stride"])
    B, H, W, Cin = x_nhwc.shape
    P = blk["w1"].shape[-1]
    has_down = "wd" in blk
    if not has_down:
        assert s == 1 and Cin == P, "identity shortcut needs stride=1 and Cin==planes"
    Ho = (H + 2 - 3) // s + 1
    Wo = (W + 2 - 3) // s + 1
    M = Ho * Wo

    # bf16 input: halves HBM->VMEM DMA bytes; the convs only ever consume bf16.
    xp = jnp.pad(x_nhwc.astype(jnp.bfloat16), ((0, 0), (1, 1), (1, 1), (0, 0)))
    xph = _phase_split(xp, s)                            # (s*s, B, Hpp, Wpp, Cin)
    nphase, _, Hpp, Wpp, _ = xph.shape

    args = [xph, blk["w1"], blk["s1"], blk["b1"], blk["w2"], blk["s2"], blk["b2"]]
    in_specs = [
        pl.BlockSpec((nphase, None, Hpp, Wpp, Cin), lambda b: (0, b, 0, 0, 0)),
        pl.BlockSpec((9 * Cin, P), lambda b: (0, 0)),
        pl.BlockSpec((1, P), lambda b: (0, 0)),
        pl.BlockSpec((1, P), lambda b: (0, 0)),
        pl.BlockSpec((9 * P, P), lambda b: (0, 0)),
        pl.BlockSpec((1, P), lambda b: (0, 0)),
        pl.BlockSpec((1, P), lambda b: (0, 0)),
    ]
    if has_down:
        args += [blk["wd"], blk["sd"], blk["bd"]]
        in_specs += [
            pl.BlockSpec((Cin, P), lambda b: (0, 0)),
            pl.BlockSpec((1, P), lambda b: (0, 0)),
            pl.BlockSpec((1, P), lambda b: (0, 0)),
        ]

    return pl.pallas_call(
        _make_block_kernel(s, Ho, Wo, Cin, P, has_down),
        out_shape=jax.ShapeDtypeStruct((B, Ho, Wo, P), jnp.float32),
        grid=(B,),
        in_specs=in_specs,
        out_specs=pl.BlockSpec((None, Ho, Wo, P), lambda b: (b, 0, 0, 0)),
        scratch_shapes=[
            pltpu.VMEM((Ho + 2, Wo + 2, P), jnp.bfloat16),   # conv1->conv2 halo (bf16)
            pltpu.VMEM((M, 9 * Cin), jnp.bfloat16),          # K-packed im2col LHS, conv1
            pltpu.VMEM((M, 9 * P), jnp.bfloat16),            # K-packed im2col LHS, conv2
        ],
        compiler_params=pltpu.CompilerParams(
            dimension_semantics=("parallel",),
            vmem_limit_bytes=32 * 1024 * 1024,
        ),
    )(*args)


def basic_block_forward(blk, x_nchw):
    """PyTorch BasicBlock.forward semantics: NCHW in, NCHW out."""
    x = jnp.transpose(x_nchw, (0, 2, 3, 1))              # NCHW -> NHWC
    y = basic_block_forward_nhwc(blk, x)
    return jnp.transpose(y, (0, 3, 1, 2))                # NHWC -> NCHW


# ----------------------------- parameters -----------------------------

def _kaiming(key, kh, kw, cin, cout):
    fan_out = kh * kw * cout                             # kaiming_normal_, fan_out, relu
    return (2.0 / fan_out) ** 0.5 * jax.random.normal(key, (kh, kw, cin, cout), jnp.float32)


def _bn_fold(key, c):
    # inference-mode BN with non-trivial affine params / running stats, folded once.
    kg, kb, km, kv = jax.random.split(key, 4)
    gamma = 1.0 + 0.1 * jax.random.normal(kg, (c,), jnp.float32)
    beta = 0.1 * jax.random.normal(kb, (c,), jnp.float32)
    mean = 0.1 * jax.random.normal(km, (c,), jnp.float32)
    var = jax.random.uniform(kv, (c,), jnp.float32, 0.5, 1.5)
    scale = gamma / jnp.sqrt(var + EPS)
    shift = beta - mean * scale
    return scale.reshape(1, c), shift.reshape(1, c)


def init_basic_block(key, inplanes, planes, stride=1):
    k1, k2, kd, kb1, kb2, kbd = jax.random.split(key, 6)
    w1 = _kaiming(k1, 3, 3, inplanes, planes)
    w2 = _kaiming(k2, 3, 3, planes, planes)
    s1, b1 = _bn_fold(kb1, planes)
    s2, b2 = _bn_fold(kb2, planes)
    blk = {
        "stride": stride,
        "w1_hwio": w1, "w2_hwio": w2,                    # f32 HWIO (reference only)
        # K-packed (KH*KW*Cin, Cout) bf16 weights: one MXU GEMM per conv
        # (row order kh, kw, cin matches the in-kernel im2col column order).
        "w1": w1.reshape(9 * inplanes, planes).astype(jnp.bfloat16),
        "w2": w2.reshape(9 * planes, planes).astype(jnp.bfloat16),
        "s1": s1, "b1": b1, "s2": s2, "b2": b2,
    }
    if stride != 1 or inplanes != planes:
        wd = _kaiming(kd, 1, 1, inplanes, planes)
        sd, bd = _bn_fold(kbd, planes)
        blk.update({
            "wd_hwio": wd,
            "wd": wd.reshape(inplanes, planes).astype(jnp.bfloat16),
            "sd": sd, "bd": bd,
        })
    return blk


# ----------------------------- pure-JAX reference -----------------------------

def ref_basic_block(blk, x_nchw):
    x = jnp.transpose(x_nchw, (0, 2, 3, 1)).astype(jnp.float32)
    s = int(blk["stride"])
    xb = x.astype(jnp.bfloat16)

    def conv(inp_bf16, w_f32, stride, pad):
        return lax.conv_general_dilated(
            inp_bf16, w_f32.astype(jnp.bfloat16), (stride, stride),
            [(pad, pad), (pad, pad)],
            dimension_numbers=("NHWC", "HWIO", "NHWC"),
            preferred_element_type=jnp.float32)

    h = jnp.maximum(conv(xb, blk["w1_hwio"], s, 1) * blk["s1"] + blk["b1"], 0.0)
    out = conv(h.astype(jnp.bfloat16), blk["w2_hwio"], 1, 1) * blk["s2"] + blk["b2"]
    if "wd_hwio" in blk:
        identity = conv(xb, blk["wd_hwio"], s, 0) * blk["sd"] + blk["bd"]
    else:
        identity = x
    out = jnp.maximum(out + identity, 0.0)
    return jnp.transpose(out, (0, 3, 1, 2))


# ----------------------------- main -----------------------------

if __name__ == "__main__":
    key = jax.random.PRNGKey(0)
    kA, kB, kx = jax.random.split(key, 3)

    # Block A: inplanes=64 -> planes=128, stride=2 (1x1-conv + BN downsample path)
    # Block B: inplanes=planes=128, stride=1 (identity shortcut)
    blkA = init_basic_block(kA, 64, 128, stride=2)
    blkB = init_basic_block(kB, 128, 128, stride=1)

    x = jax.random.normal(kx, (2, 64, 32, 32), jnp.float32)   # NCHW, like PyTorch

    # Keep activations NHWC between consecutive blocks; transpose once per chain.
    x_nhwc = jnp.transpose(x, (0, 2, 3, 1))
    yA = basic_block_forward_nhwc(blkA, x_nhwc)       # (2, 16, 16, 128) NHWC
    yB = basic_block_forward_nhwc(blkB, yA)           # (2, 16, 16, 128) NHWC
    y = jnp.transpose(yB, (0, 3, 1, 2))               # NCHW
    y, yA = jax.block_until_ready((y, yA))

    assert yA.shape == (2, 16, 16, 128), yA.shape
    assert y.shape == (2, 128, 16, 16), y.shape

    refA = ref_basic_block(blkA, x)
    refB = ref_basic_block(blkB, refA)
    refA, refB = jax.block_until_ready((refA, refB))

    yA_nchw = jnp.transpose(yA, (0, 3, 1, 2))
    errA = float(jnp.max(jnp.abs(yA_nchw - refA)))
    errB = float(jnp.max(jnp.abs(y - refB)))
    assert jnp.allclose(yA_nchw, refA, atol=2e-2, rtol=2e-2), errA
    assert jnp.allclose(y, refB, atol=2e-2, rtol=2e-2), errB

    print("KERNEL_OK")
</pallas_src>

<mosaic_0001>
module attributes {stable_mosaic.version = 11 : i64} {
  func.func @kernel(%arg0: i32, %arg1: memref<4x1x17x17x64xbf16, #tpu.memory_space<vmem>>, %arg2: memref<576x128xbf16, #tpu.memory_space<vmem>>, %arg3: memref<1x128xf32, #tpu.memory_space<vmem>>, %arg4: memref<1x128xf32, #tpu.memory_space<vmem>>, %arg5: memref<1152x128xbf16, #tpu.memory_space<vmem>>, %arg6: memref<1x128xf32, #tpu.memory_space<vmem>>, %arg7: memref<1x128xf32, #tpu.memory_space<vmem>>, %arg8: memref<64x128xbf16, #tpu.memory_space<vmem>>, %arg9: memref<1x128xf32, #tpu.memory_space<vmem>>, %arg10: memref<1x128xf32, #tpu.memory_space<vmem>>, %arg11: memref<1x16x16x128xf32, #tpu.memory_space<vmem>>, %arg12: memref<18x18x128xbf16, #tpu.memory_space<vmem>>, %arg13: memref<256x576xbf16, #tpu.memory_space<vmem>>, %arg14: memref<256x1152xbf16, #tpu.memory_space<vmem>>) attributes {dimension_semantics = [#tpu.dimension_semantics<parallel>], iteration_bounds = array<i64: 2>, scalar_prefetch = 0 : i64, scratch_operands = 3 : i64, tpu.core_type = #tpu.core_type<tc>, window_params = [{transform_indices = @transform_0, window_bounds = array<i64: 4, 1, 17, 17, 64>}, {pipeline_mode = #tpu.pipeline_mode<synchronous>, transform_indices = @transform_1, window_bounds = array<i64: 576, 128>}, {pipeline_mode = #tpu.pipeline_mode<synchronous>, transform_indices = @transform_2, window_bounds = array<i64: 1, 128>}, {pipeline_mode = #tpu.pipeline_mode<synchronous>, transform_indices = @transform_3, window_bounds = array<i64: 1, 128>}, {pipeline_mode = #tpu.pipeline_mode<synchronous>, transform_indices = @transform_4, window_bounds = array<i64: 1152, 128>}, {pipeline_mode = #tpu.pipeline_mode<synchronous>, transform_indices = @transform_5, window_bounds = array<i64: 1, 128>}, {pipeline_mode = #tpu.pipeline_mode<synchronous>, transform_indices = @transform_6, window_bounds = array<i64: 1, 128>}, {pipeline_mode = #tpu.pipeline_mode<synchronous>, transform_indices = @transform_7, window_bounds = array<i64: 64, 128>}, {pipeline_mode = #tpu.pipeline_mode<synchronous>, transform_indices = @transform_8, window_bounds = array<i64: 1, 128>}, {pipeline_mode = #tpu.pipeline_mode<synchronous>, transform_indices = @transform_9, window_bounds = array<i64: 1, 128>}, {transform_indices = @transform_10, window_bounds = array<i64: 1, 16, 16, 128>}]} {
    %c0 = arith.constant 0 : index
    %c0_0 = arith.constant 0 : index
    %c0_1 = arith.constant 0 : index
    %c0_2 = arith.constant 0 : index
    %c0_3 = arith.constant 0 : index
    %0 = vector.load %arg1[%c0, %c0_0, %c0_1, %c0_2, %c0_3] : memref<4x1x17x17x64xbf16, #tpu.memory_space<vmem>>, vector<1x1x16x16x64xbf16>
    %1 = vector.shape_cast %0 : vector<1x1x16x16x64xbf16> to vector<16x16x64xbf16>
    %2 = vector.shape_cast %1 : vector<16x16x64xbf16> to vector<256x64xbf16>
    %c0_4 = arith.constant 0 : index
    %c0_5 = arith.constant 0 : index
    %3 = vector.load %arg2[%c0_4, %c0_5] : memref<576x128xbf16, #tpu.memory_space<vmem>>, vector<64x128xbf16>
    %cst = arith.constant dense<0.000000e+00> : vector<256x128xf32>
    %4 = tpu.matmul %2, %3, %cst {dimension_numbers = #tpu.dot_dimension_numbers<[1], [0], [0], [1], [0, 0, 1, 1], [], []>} : vector<256x64xbf16>, vector<64x128xbf16>, vector<256x128xf32> -> vector<256x128xf32>
    %c1 = arith.constant 1 : index
    %c0_6 = arith.constant 0 : index
    %c0_7 = arith.constant 0 : index
    %c0_8 = arith.constant 0 : index
    %c0_9 = arith.constant 0 : index
    %5 = vector.load %arg1[%c1, %c0_6, %c0_7, %c0_8, %c0_9] : memref<4x1x17x17x64xbf16, #tpu.memory_space<vmem>>, vector<1x1x16x16x64xbf16>
    %6 = vector.shape_cast %5 : vector<1x1x16x16x64xbf16> to vector<16x16x64xbf16>
    %7 = vector.shape_cast %6 : vector<16x16x64xbf16> to vector<256x64xbf16>
    %c64 = arith.constant 64 : index
    %c0_10 = arith.constant 0 : index
    %8 = vector.load %arg2[%c64, %c0_10] : memref<576x128xbf16, #tpu.memory_space<vmem>>, vector<64x128xbf16>
    %cst_11 = arith.constant dense<0.000000e+00> : vector<256x128xf32>
    %9 = tpu.matmul %7, %8, %cst_11 {dimension_numbers = #tpu.dot_dimension_numbers<[1], [0], [0], [1], [0, 0, 1, 1], [], []>} : vector<256x64xbf16>, vector<64x128xbf16>, vector<256x128xf32> -> vector<256x128xf32>
    %10 = arith.addf %4, %9 : vector<256x128xf32>
    %c0_12 = arith.constant 0 : index
    %c0_13 = arith.constant 0 : index
    %c0_14 = arith.constant 0 : index
    %c1_15 = arith.constant 1 : index
    %c0_16 = arith.constant 0 : index
    %11 = vector.load %arg1[%c0_12, %c0_13, %c0_14, %c1_15, %c0_16] : memref<4x1x17x17x64xbf16, #tpu.memory_space<vmem>>, vector<1x1x16x16x64xbf16>
    %12 = vector.shape_cast %11 : vector<1x1x16x16x64xbf16> to vector<16x16x64xbf16>
    %13 = vector.shape_cast %12 : vector<16x16x64xbf16> to vector<256x64xbf16>
    %c128 = arith.constant 128 : index
    %c0_17 = arith.constant 0 : index
    %14 = vector.load %arg2[%c128, %c0_17] : memref<576x128xbf16, #tpu.memory_space<vmem>>, vector<64x128xbf16>
    %cst_18 = arith.constant dense<0.000000e+00> : vector<256x128xf32>
    %15 = tpu.matmul %13, %14, %cst_18 {dimension_numbers = #tpu.dot_dimension_numbers<[1], [0], [0], [1], [0, 0, 1, 1], [], []>} : vector<256x64xbf16>, vector<64x128xbf16>, vector<256x128xf32> -> vector<256x128xf32>
    %16 = arith.addf %10, %15 : vector<256x128xf32>
    %c2 = arith.constant 2 : index
    %c0_19 = arith.constant 0 : index
    %c0_20 = arith.constant 0 : index
    %c0_21 = arith.constant 0 : index
    %c0_22 = arith.constant 0 : index
    %17 = vector.load %arg1[%c2, %c0_19, %c0_20, %c0_21, %c0_22] : memref<4x1x17x17x64xbf16, #tpu.memory_space<vmem>>, vector<1x1x16x16x64xbf16>
    %18 = vector.shape_cast %17 : vector<1x1x16x16x64xbf16> to vector<16x16x64xbf16>
    %19 = vector.shape_cast %18 : vector<16x16x64xbf16> to vector<256x64xbf16>
    %c192 = arith.constant 192 : index
    %c0_23 = arith.constant 0 : index
    %20 = vector.load %arg2[%c192, %c0_23] : memref<576x128xbf16, #tpu.memory_space<vmem>>, vector<64x128xbf16>
    %cst_24 = arith.constant dense<0.000000e+00> : vector<256x128xf32>
    %21 = tpu.matmul %19, %20, %cst_24 {dimension_numbers = #tpu.dot_dimension_numbers<[1], [0], [0], [1], [0, 0, 1, 1], [], []>} : vector<256x64xbf16>, vector<64x128xbf16>, vector<256x128xf32> -> vector<256x128xf32>
    %22 = arith.addf %16, %21 : vector<256x128xf32>
    %c3 = arith.constant 3 : index
    %c0_25 = arith.constant 0 : index
    %c0_26 = arith.constant 0 : index
    %c0_27 = arith.constant 0 : index
    %c0_28 = arith.constant 0 : index
    %23 = vector.load %arg1[%c3, %c0_25, %c0_26, %c0_27, %c0_28] : memref<4x1x17x17x64xbf16, #tpu.memory_space<vmem>>, vector<1x1x16x16x64xbf16>
    %24 = vector.shape_cast %23 : vector<1x1x16x16x64xbf16> to vector<16x16x64xbf16>
    %25 = vector.shape_cast %24 : vector<16x16x64xbf16> to vector<256x64xbf16>
    %c256 = arith.constant 256 : index
    %c0_29 = arith.constant 0 : index
    %26 = vector.load %arg2[%c256, %c0_29] : memref<576x128xbf16, #tpu.memory_space<vmem>>, vector<64x128xbf16>
    %cst_30 = arith.constant dense<0.000000e+00> : vector<256x128xf32>
    %27 = tpu.matmul %25, %26, %cst_30 {dimension_numbers = #tpu.dot_dimension_numbers<[1], [0], [0], [1], [0, 0, 1, 1], [], []>} : vector<256x64xbf16>, vector<64x128xbf16>, vector<256x128xf32> -> vector<256x128xf32>
    %28 = arith.addf %22, %27 : vector<256x128xf32>
    %c2_31 = arith.constant 2 : index
    %c0_32 = arith.constant 0 : index
    %c0_33 = arith.constant 0 : index
    %c1_34 = arith.constant 1 : index
    %c0_35 = arith.constant 0 : index
    %29 = vector.load %arg1[%c2_31, %c0_32, %c0_33, %c1_34, %c0_35] : memref<4x1x17x17x64xbf16, #tpu.memory_space<vmem>>, vector<1x1x16x16x64xbf16>
    %30 = vector.shape_cast %29 : vector<1x1x16x16x64xbf16> to vector<16x16x64xbf16>
    %31 = vector.shape_cast %30 : vector<16x16x64xbf16> to vector<256x64xbf16>
    %c320 = arith.constant 320 : index
    %c0_36 = arith.constant 0 : index
    %32 = vector.load %arg2[%c320, %c0_36] : memref<576x128xbf16, #tpu.memory_space<vmem>>, vector<64x128xbf16>
    %cst_37 = arith.constant dense<0.000000e+00> : vector<256x128xf32>
    %33 = tpu.matmul %31, %32, %cst_37 {dimension_numbers = #tpu.dot_dimension_numbers<[1], [0], [0], [1], [0, 0, 1, 1], [], []>} : vector<256x64xbf16>, vector<64x128xbf16>, vector<256x128xf32> -> vector<256x128xf32>
    %34 = arith.addf %28, %33 : vector<256x128xf32>
    %c0_38 = arith.constant 0 : index
    %c0_39 = arith.constant 0 : index
    %c1_40 = arith.constant 1 : index
    %c0_41 = arith.constant 0 : index
    %c0_42 = arith.constant 0 : index
    %35 = vector.load %arg1[%c0_38, %c0_39, %c1_40, %c0_41, %c0_42] : memref<4x1x17x17x64xbf16, #tpu.memory_space<vmem>>, vector<1x1x16x16x64xbf16>
    %36 = vector.shape_cast %35 : vector<1x1x16x16x64xbf16> to vector<16x16x64xbf16>
    %37 = vector.shape_cast %36 : vector<16x16x64xbf16> to vector<256x64xbf16>
    %c384 = arith.constant 384 : index
    %c0_43 = arith.constant 0 : index
    %38 = vector.load %arg2[%c384, %c0_43] : memref<576x128xbf16, #tpu.memory_space<vmem>>, vector<64x128xbf16>
    %cst_44 = arith.constant dense<0.000000e+00> : vector<256x128xf32>
    %39 = tpu.matmul %37, %38, %cst_44 {dimension_numbers = #tpu.dot_dimension_numbers<[1], [0], [0], [1], [0, 0, 1, 1], [], []>} : vector<256x64xbf16>, vector<64x128xbf16>, vector<256x128xf32> -> vector<256x128xf32>
    %40 = arith.addf %34, %39 : vector<256x128xf32>
    %c1_45 = arith.constant 1 : index
    %c0_46 = arith.constant 0 : index
    %c1_47 = arith.constant 1 : index
    %c0_48 = arith.constant 0 : index
    %c0_49 = arith.constant 0 : index
    %41 = vector.load %arg1[%c1_45, %c0_46, %c1_47, %c0_48, %c0_49] : memref<4x1x17x17x64xbf16, #tpu.memory_space<vmem>>, vector<1x1x16x16x64xbf16>
    %42 = vector.shape_cast %41 : vector<1x1x16x16x64xbf16> to vector<16x16x64xbf16>
    %43 = vector.shape_cast %42 : vector<16x16x64xbf16> to vector<256x64xbf16>
    %c448 = arith.constant 448 : index
    %c0_50 = arith.constant 0 : index
    %44 = vector.load %arg2[%c448, %c0_50] : memref<576x128xbf16, #tpu.memory_space<vmem>>, vector<64x128xbf16>
    %cst_51 = arith.constant dense<0.000000e+00> : vector<256x128xf32>
    %45 = tpu.matmul %43, %44, %cst_51 {dimension_numbers = #tpu.dot_dimension_numbers<[1], [0], [0], [1], [0, 0, 1, 1], [], []>} : vector<256x64xbf16>, vector<64x128xbf16>, vector<256x128xf32> -> vector<256x128xf32>
    %46 = arith.addf %40, %45 : vector<256x128xf32>
    %c0_52 = arith.constant 0 : index
    %c0_53 = arith.constant 0 : index
    %c1_54 = arith.constant 1 : index
    %c1_55 = arith.constant 1 : index
    %c0_56 = arith.constant 0 : index
    %47 = vector.load %arg1[%c0_52, %c0_53, %c1_54, %c1_55, %c0_56] : memref<4x1x17x17x64xbf16, #tpu.memory_space<vmem>>, vector<1x1x16x16x64xbf16>
    %48 = vector.shape_cast %47 : vector<1x1x16x16x64xbf16> to vector<16x16x64xbf16>
    %49 = vector.shape_cast %48 : vector<16x16x64xbf16> to vector<256x64xbf16>
    %c512 = arith.constant 512 : index
    %c0_57 = arith.constant 0 : index
    %50 = vector.load %arg2[%c512, %c0_57] : memref<576x128xbf16, #tpu.memory_space<vmem>>, vector<64x128xbf16>
    %cst_58 = arith.constant dense<0.000000e+00> : vector<256x128xf32>
    %51 = tpu.matmul %49, %50, %cst_58 {dimension_numbers = #tpu.dot_dimension_numbers<[1], [0], [0], [1], [0, 0, 1, 1], [], []>} : vector<256x64xbf16>, vector<64x128xbf16>, vector<256x128xf32> -> vector<256x128xf32>
    %52 = arith.addf %46, %51 : vector<256x128xf32>
    %c0_59 = arith.constant 0 : index
    %c0_60 = arith.constant 0 : index
    %53 = vector.load %arg3[%c0_59, %c0_60] : memref<1x128xf32, #tpu.memory_space<vmem>>, vector<1x128xf32>
    %54 = vector.broadcast %53 : vector<1x128xf32> to vector<256x128xf32>
    %55 = arith.mulf %52, %54 : vector<256x128xf32>
    %c0_61 = arith.constant 0 : index
    %c0_62 = arith.constant 0 : index
    %56 = vector.load %arg4[%c0_61, %c0_62] : memref<1x128xf32, #tpu.memory_space<vmem>>, vector<1x128xf32>
    %57 = vector.broadcast %56 : vector<1x128xf32> to vector<256x128xf32>
    %58 = arith.addf %55, %57 : vector<256x128xf32>
    %cst_63 = arith.constant 0.000000e+00 : f32
    %59 = vector.broadcast %cst_63 : f32 to vector<256x128xf32>
    %60 = arith.maximumf %58, %59 : vector<256x128xf32>
    %cst_64 = arith.constant 0.000000e+00 : bf16
    %61 = vector.broadcast %cst_64 : bf16 to vector<18x18x128xbf16>
    %c0_65 = arith.constant 0 : index
    %c0_66 = arith.constant 0 : index
    %c0_67 = arith.constant 0 : index
    %62 = vector.load %arg12[%c0_65, %c0_66, %c0_67] : memref<18x18x128xbf16, #tpu.memory_space<vmem>>, vector<18x18x128xbf16>
    tpu.vector_store %arg12[%c0_65, %c0_66, %c0_67], %61 {strides = array<i32>} : memref<18x18x128xbf16, #tpu.memory_space<vmem>>, vector<18x18x128xbf16>,
    %63 = vector.shape_cast %60 : vector<256x128xf32> to vector<16x16x128xf32>
    %64 = arith.truncf %63 : vector<16x16x128xf32> to vector<16x16x128xbf16>
    %c1_68 = arith.constant 1 : index
    %c1_69 = arith.constant 1 : index
    %c0_70 = arith.constant 0 : index
    %65 = vector.load %arg12[%c1_68, %c1_69, %c0_70] : memref<18x18x128xbf16, #tpu.memory_space<vmem>>, vector<16x16x128xbf16>
    tpu.vector_store %arg12[%c1_68, %c1_69, %c0_70], %64 {strides = array<i32>} : memref<18x18x128xbf16, #tpu.memory_space<vmem>>, vector<16x16x128xbf16>,
    %c0_71 = arith.constant 0 : index
    %c0_72 = arith.constant 0 : index
    %c0_73 = arith.constant 0 : index
    %66 = vector.load %arg12[%c0_71, %c0_72, %c0_73] : memref<18x18x128xbf16, #tpu.memory_space<vmem>>, vector<16x16x128xbf16>
    %67 = vector.shape_cast %66 : vector<16x16x128xbf16> to vector<256x128xbf16>
    %c0_74 = arith.constant 0 : index
    %c0_75 = arith.constant 0 : index
    %68 = vector.load %arg14[%c0_74, %c0_75] : memref<256x1152xbf16, #tpu.memory_space<vmem>>, vector<256x128xbf16>
    tpu.vector_store %arg14[%c0_74, %c0_75], %67 {strides = array<i32>} : memref<256x1152xbf16, #tpu.memory_space<vmem>>, vector<256x128xbf16>,
    %c0_76 = arith.constant 0 : index
    %c1_77 = arith.constant 1 : index
    %c0_78 = arith.constant 0 : index
    %69 = vector.load %arg12[%c0_76, %c1_77, %c0_78] : memref<18x18x128xbf16, #tpu.memory_space<vmem>>, vector<16x16x128xbf16>
    %70 = vector.shape_cast %69 : vector<16x16x128xbf16> to vector<256x128xbf16>
    %c0_79 = arith.constant 0 : index
    %c128_80 = arith.constant 128 : index
    %71 = vector.load %arg14[%c0_79, %c128_80] : memref<256x1152xbf16, #tpu.memory_space<vmem>>, vector<256x128xbf16>
    tpu.vector_store %arg14[%c0_79, %c128_80], %70 {strides = array<i32>} : memref<256x1152xbf16, #tpu.memory_space<vmem>>, vector<256x128xbf16>,
    %c0_81 = arith.constant 0 : index
    %c2_82 = arith.constant 2 : index
    %c0_83 = arith.constant 0 : index
    %72 = vector.load %arg12[%c0_81, %c2_82, %c0_83] : memref<18x18x128xbf16, #tpu.memory_space<vmem>>, vector<16x16x128xbf16>
    %73 = vector.shape_cast %72 : vector<16x16x128xbf16> to vector<256x128xbf16>
    %c0_84 = arith.constant 0 : index
    %c256_85 = arith.constant 256 : index
    %74 = vector.load %arg14[%c0_84, %c256_85] : memref<256x1152xbf16, #tpu.memory_space<vmem>>, vector<256x128xbf16>
    tpu.vector_store %arg14[%c0_84, %c256_85], %73 {strides = array<i32>} : memref<256x1152xbf16, #tpu.memory_space<vmem>>, vector<256x128xbf16>,
    %c1_86 = arith.constant 1 : index
    %c0_87 = arith.constant 0 : index
    %c0_88 = arith.constant 0 : index
    %75 = vector.load %arg12[%c1_86, %c0_87, %c0_88] : memref<18x18x128xbf16, #tpu.memory_space<vmem>>, vector<16x16x128xbf16>
    %76 = vector.shape_cast %75 : vector<16x16x128xbf16> to vector<256x128xbf16>
    %c0_89 = arith.constant 0 : index
    %c384_90 = arith.constant 384 : index
    %77 = vector.load %arg14[%c0_89, %c384_90] : memref<256x1152xbf16, #tpu.memory_space<vmem>>, vector<256x128xbf16>
    tpu.vector_store %arg14[%c0_89, %c384_90], %76 {strides = array<i32>} : memref<256x1152xbf16, #tpu.memory_space<vmem>>, vector<256x128xbf16>,
    %c1_91 = arith.constant 1 : index
    %c1_92 = arith.constant 1 : index
    %c0_93 = arith.constant 0 : index
    %78 = vector.load %arg12[%c1_91, %c1_92, %c0_93] : memref<18x18x128xbf16, #tpu.memory_space<vmem>>, vector<16x16x128xbf16>
    %79 = vector.shape_cast %78 : vector<16x16x128xbf16> to vector<256x128xbf16>
    %c0_94 = arith.constant 0 : index
    %c512_95 = arith.constant 512 : index
    %80 = vector.load %arg14[%c0_94, %c512_95] : memref<256x1152xbf16, #tpu.memory_space<vmem>>, vector<256x128xbf16>
    tpu.vector_store %arg14[%c0_94, %c512_95], %79 {strides = array<i32>} : memref<256x1152xbf16, #tpu.memory_space<vmem>>, vector<256x128xbf16>,
    %c1_96 = arith.constant 1 : index
    %c2_97 = arith.constant 2 : index
    %c0_98 = arith.constant 0 : index
    %81 = vector.load %arg12[%c1_96, %c2_97, %c0_98] : memref<18x18x128xbf16, #tpu.memory_space<vmem>>, vector<16x16x128xbf16>
    %82 = vector.shape_cast %81 : vector<16x16x128xbf16> to vector<256x128xbf16>
    %c0_99 = arith.constant 0 : index
    %c640 = arith.constant 640 : index
    %83 = vector.load %arg14[%c0_99, %c640] : memref<256x1152xbf16, #tpu.memory_space<vmem>>, vector<256x128xbf16>
    tpu.vector_store %arg14[%c0_99, %c640], %82 {strides = array<i32>} : memref<256x1152xbf16, #tpu.memory_space<vmem>>, vector<256x128xbf16>,
    %c2_100 = arith.constant 2 : index
    %c0_101 = arith.constant 0 : index
    %c0_102 = arith.constant 0 : index
    %84 = vector.load %arg12[%c2_100, %c0_101, %c0_102] : memref<18x18x128xbf16, #tpu.memory_space<vmem>>, vector<16x16x128xbf16>
    %85 = vector.shape_cast %84 : vector<16x16x128xbf16> to vector<256x128xbf16>
    %c0_103 = arith.constant 0 : index
    %c768 = arith.constant 768 : index
    %86 = vector.load %arg14[%c0_103, %c768] : memref<256x1152xbf16, #tpu.memory_space<vmem>>, vector<256x128xbf16>
    tpu.vector_store %arg14[%c0_103, %c768], %85 {strides = array<i32>} : memref<256x1152xbf16, #tpu.memory_space<vmem>>, vector<256x128xbf16>,
    %c2_104 = arith.constant 2 : index
    %c1_105 = arith.constant 1 : index
    %c0_106 = arith.constant 0 : index
    %87 = vector.load %arg12[%c2_104, %c1_105, %c0_106] : memref<18x18x128xbf16, #tpu.memory_space<vmem>>, vector<16x16x128xbf16>
    %88 = vector.shape_cast %87 : vector<16x16x128xbf16> to vector<256x128xbf16>
    %c0_107 = arith.constant 0 : index
    %c896 = arith.constant 896 : index
    %89 = vector.load %arg14[%c0_107, %c896] : memref<256x1152xbf16, #tpu.memory_space<vmem>>, vector<256x128xbf16>
    tpu.vector_store %arg14[%c0_107, %c896], %88 {strides = array<i32>} : memref<256x1152xbf16, #tpu.memory_space<vmem>>, vector<256x128xbf16>,
    %c2_108 = arith.constant 2 : index
    %c2_109 = arith.constant 2 : index
    %c0_110 = arith.constant 0 : index
    %90 = vector.load %arg12[%c2_108, %c2_109, %c0_110] : memref<18x18x128xbf16, #tpu.memory_space<vmem>>, vector<16x16x128xbf16>
    %91 = vector.shape_cast %90 : vector<16x16x128xbf16> to vector<256x128xbf16>
    %c0_111 = arith.constant 0 : index
    %c1024 = arith.constant 1024 : index
    %92 = vector.load %arg14[%c0_111, %c1024] : memref<256x1152xbf16, #tpu.memory_space<vmem>>, vector<256x128xbf16>
    tpu.vector_store %arg14[%c0_111, %c1024], %91 {strides = array<i32>} : memref<256x1152xbf16, #tpu.memory_space<vmem>>, vector<256x128xbf16>,
    %c0_112 = arith.constant 0 : index
    %c0_113 = arith.constant 0 : index
    %93 = vector.load %arg14[%c0_112, %c0_113] : memref<256x1152xbf16, #tpu.memory_space<vmem>>, vector<256x1152xbf16>
    %c0_114 = arith.constant 0 : index
    %c0_115 = arith.constant 0 : index
    %94 = vector.load %arg5[%c0_114, %c0_115] : memref<1152x128xbf16, #tpu.memory_space<vmem>>, vector<1152x128xbf16>
    %cst_116 = arith.constant dense<0.000000e+00> : vector<256x128xf32>
    %95 = tpu.matmul %93, %94, %cst_116 {dimension_numbers = #tpu.dot_dimension_numbers<[1], [0], [0], [1], [0, 0, 1, 1], [], []>} : vector<256x1152xbf16>, vector<1152x128xbf16>, vector<256x128xf32> -> vector<256x128xf32>
    %c0_117 = arith.constant 0 : index
    %c0_118 = arith.constant 0 : index
    %96 = vector.load %arg6[%c0_117, %c0_118] : memref<1x128xf32, #tpu.memory_space<vmem>>, vector<1x128xf32>
    %97 = vector.broadcast %96 : vector<1x128xf32> to vector<256x128xf32>
    %98 = arith.mulf %95, %97 : vector<256x128xf32>
    %c0_119 = arith.constant 0 : index
    %c0_120 = arith.constant 0 : index
    %99 = vector.load %arg7[%c0_119, %c0_120] : memref<1x128xf32, #tpu.memory_space<vmem>>, vector<1x128xf32>
    %100 = vector.broadcast %99 : vector<1x128xf32> to vector<256x128xf32>
    %101 = arith.addf %98, %100 : vector<256x128xf32>
    %c3_121 = arith.constant 3 : index
    %c0_122 = arith.constant 0 : index
    %c0_123 = arith.constant 0 : index
    %c0_124 = arith.constant 0 : index
    %c0_125 = arith.constant 0 : index
    %102 = vector.load %arg1[%c3_121, %c0_122, %c0_123, %c0_124, %c0_125] : memref<4x1x17x17x64xbf16, #tpu.memory_space<vmem>>, vector<1x1x16x16x64xbf16>
    %103 = vector.shape_cast %102 : vector<1x1x16x16x64xbf16> to vector<16x16x64xbf16>
    %104 = vector.shape_cast %103 : vector<16x16x64xbf16> to vector<256x64xbf16>
    %c0_126 = arith.constant 0 : index
    %c0_127 = arith.constant 0 : index
    %105 = vector.load %arg8[%c0_126, %c0_127] : memref<64x128xbf16, #tpu.memory_space<vmem>>, vector<64x128xbf16>
    %cst_128 = arith.constant dense<0.000000e+00> : vector<256x128xf32>
    %106 = tpu.matmul %104, %105, %cst_128 {dimension_numbers = #tpu.dot_dimension_numbers<[1], [0], [0], [1], [0, 0, 1, 1], [], []>} : vector<256x64xbf16>, vector<64x128xbf16>, vector<256x128xf32> -> vector<256x128xf32>
    %c0_129 = arith.constant 0 : index
    %c0_130 = arith.constant 0 : index
    %107 = vector.load %arg9[%c0_129, %c0_130] : memref<1x128xf32, #tpu.memory_space<vmem>>, vector<1x128xf32>
    %108 = vector.broadcast %107 : vector<1x128xf32> to vector<256x128xf32>
    %109 = arith.mulf %106, %108 : vector<256x128xf32>
    %c0_131 = arith.constant 0 : index
    %c0_132 = arith.constant 0 : index
    %110 = vector.load %arg10[%c0_131, %c0_132] : memref<1x128xf32, #tpu.memory_space<vmem>>, vector<1x128xf32>
    %111 = vector.broadcast %110 : vector<1x128xf32> to vector<256x128xf32>
    %112 = arith.addf %109, %111 : vector<256x128xf32>
    %113 = arith.addf %101, %112 : vector<256x128xf32>
    %cst_133 = arith.constant 0.000000e+00 : f32
    %114 = vector.broadcast %cst_133 : f32 to vector<256x128xf32>
    %115 = arith.maximumf %113, %114 : vector<256x128xf32>
    %116 = vector.shape_cast %115 : vector<256x128xf32> to vector<16x16x128xf32>
    %c0_134 = arith.constant 0 : index
    %c0_135 = arith.constant 0 : index
    %c0_136 = arith.constant 0 : index
    %c0_137 = arith.constant 0 : index
    %117 = vector.load %arg11[%c0_134, %c0_135, %c0_136, %c0_137] : memref<1x16x16x128xf32, #tpu.memory_space<vmem>>, vector<1x16x16x128xf32>
    %118 = vector.shape_cast %117 : vector<1x16x16x128xf32> to vector<16x16x128xf32>
    %119 = vector.shape_cast %116 : vector<16x16x128xf32> to vector<1x16x16x128xf32>
    tpu.vector_store %arg11[%c0_134, %c0_135, %c0_136, %c0_137], %119 {strides = array<i32>} : memref<1x16x16x128xf32, #tpu.memory_space<vmem>>, vector<1x16x16x128xf32>,
    return
  }
  func.func @transform_0(%arg0: i32) -> (i32, i32, i32, i32, i32) {
    %c0_i32 = arith.constant 0 : i32
    %c0_i32_0 = arith.constant 0 : i32
    %c0_i32_1 = arith.constant 0 : i32
    %c0_i32_2 = arith.constant 0 : i32
    %c0_i32_3 = arith.constant 0 : i32
    return %c0_i32, %arg0, %c0_i32_0, %c0_i32_1, %c0_i32_2 : i32, i32, i32, i32, i32
  }
  func.func @transform_1(%arg0: i32) -> (i32, i32) {
    %c0_i32 = arith.constant 0 : i32
    %c0_i32_0 = arith.constant 0 : i32
    %c0_i32_1 = arith.constant 0 : i32
    return %c0_i32, %c0_i32_0 : i32, i32
  }
  func.func @transform_2(%arg0: i32) -> (i32, i32) {
    %c0_i32 = arith.constant 0 : i32
    %c0_i32_0 = arith.constant 0 : i32
    %c0_i32_1 = arith.constant 0 : i32
    return %c0_i32, %c0_i32_0 : i32, i32
  }
  func.func @transform_3(%arg0: i32) -> (i32, i32) {
    %c0_i32 = arith.constant 0 : i32
    %c0_i32_0 = arith.constant 0 : i32
    %c0_i32_1 = arith.constant 0 : i32
    return %c0_i32, %c0_i32_0 : i32, i32
  }
  func.func @transform_4(%arg0: i32) -> (i32, i32) {
    %c0_i32 = arith.constant 0 : i32
    %c0_i32_0 = arith.constant 0 : i32
    %c0_i32_1 = arith.constant 0 : i32
    return %c0_i32, %c0_i32_0 : i32, i32
  }
  func.func @transform_5(%arg0: i32) -> (i32, i32) {
    %c0_i32 = arith.constant 0 : i32
    %c0_i32_0 = arith.constant 0 : i32
    %c0_i32_1 = arith.constant 0 : i32
    return %c0_i32, %c0_i32_0 : i32, i32
  }
  func.func @transform_6(%arg0: i32) -> (i32, i32) {
    %c0_i32 = arith.constant 0 : i32
    %c0_i32_0 = arith.constant 0 : i32
    %c0_i32_1 = arith.constant 0 : i32
    return %c0_i32, %c0_i32_0 : i32, i32
  }
  func.func @transform_7(%arg0: i32) -> (i32, i32) {
    %c0_i32 = arith.constant 0 : i32
    %c0_i32_0 = arith.constant 0 : i32
    %c0_i32_1 = arith.constant 0 : i32
    return %c0_i32, %c0_i32_0 : i32, i32
  }
  func.func @transform_8(%arg0: i32) -> (i32, i32) {
    %c0_i32 = arith.constant 0 : i32
    %c0_i32_0 = arith.constant 0 : i32
    %c0_i32_1 = arith.constant 0 : i32
    return %c0_i32, %c0_i32_0 : i32, i32
  }
  func.func @transform_9(%arg0: i32) -> (i32, i32) {
    %c0_i32 = arith.constant 0 : i32
    %c0_i32_0 = arith.constant 0 : i32
    %c0_i32_1 = arith.constant 0 : i32
    return %c0_i32, %c0_i32_0 : i32, i32
  }
  func.func @transform_10(%arg0: i32) -> (i32, i32, i32, i32) {
    %c0_i32 = arith.constant 0 : i32
    %c0_i32_0 = arith.constant 0 : i32
    %c0_i32_1 = arith.constant 0 : i32
    %c0_i32_2 = arith.constant 0 : i32
    return %arg0, %c0_i32, %c0_i32_0, %c0_i32_1 : i32, i32, i32, i32
  }
}

</mosaic_0001>

<llo_original>
// kernel: tpu_custom_call.1
$region0: #{tpu_custom_call.1}
  #allocation0 [shape = 'u32[]', space=smem, size = 0x4, offset = 0x4, fixed_abs, tag = 'smem constant byte address 0x4 - core index']
  #allocation1 [shape = 'u32[72,128]{1,0:T(1,128)}', space=vmem, size = 0x9000, scoped, tag = 'internal scratch']
  #allocation2 [shape = 'bf16[18,18,128]{2,1,0:T(8,128)(2,1)}', space=vmem, size = 0x1b000, scoped, tag = 'scratch operand']
  #allocation3 [shape = 'bf16[256,576]{1,0:T(8,128)(2,1)}', space=vmem, size = 0x50000, scoped, tag = 'scratch operand']
  #allocation4 [shape = 'bf16[256,1152]{1,0:T(8,128)(2,1)}', space=vmem, size = 0x90000, scoped, tag = 'scratch operand']
  %s0 = inlined_call_operand.vmem [shape: bf16[4,2,17,17,64], index: 0, kind: input, shape index: {}]
  %s1 = inlined_call_operand.vmem [shape: bf16[576,128], index: 1, kind: input, shape index: {}]
  %s2 = inlined_call_operand.vmem [shape: f32[1,128], index: 2, kind: input, shape index: {}]
  %s3 = inlined_call_operand.vmem [shape: f32[1,128], index: 3, kind: input, shape index: {}]
  %s4 = inlined_call_operand.vmem [shape: bf16[1152,128], index: 4, kind: input, shape index: {}]
  %s5 = inlined_call_operand.vmem [shape: f32[1,128], index: 5, kind: input, shape index: {}]
  %s6 = inlined_call_operand.vmem [shape: f32[1,128], index: 6, kind: input, shape index: {}]
  %s7 = inlined_call_operand.vmem [shape: bf16[64,128], index: 7, kind: input, shape index: {}]
  %s8 = inlined_call_operand.vmem [shape: f32[1,128], index: 8, kind: input, shape index: {}]
  %s9 = inlined_call_operand.vmem [shape: f32[1,128], index: 9, kind: input, shape index: {}]
  %s10 = inlined_call_operand.hbm [shape: f32[2,16,16,128], index: 10, kind: output, shape index: {}]
  %s11 = sld [smem:[#allocation0]]
  $region114: #{tpu_custom_call.1} parent=0
    _
  %s13 = ssub.s32 1, %s11
  %s14 = scalar_select 0, %s13, %s11
  $region1: #{tpu_custom_call.1} parent=0
    #allocation5 [shape = 'u8[835584]{0}', space=vmem, size = 0xcc000, scoped, tag = 'input window, operand 0']
    #allocation6 [shape = 'u8[262144]{0}', space=vmem, size = 0x40000, scoped, tag = 'output window, operand 0']
    #allocation7 [shape = 's32[2]{0}', space=sflag, size = 0x8, scoped, tag = 'scoped memory for tpu_custom_call.1']
    %15 = vsyncpa [#allocation7], 0
    %s16 = scalar_lea.sflag [#allocation7], 1
    %17 = vsyncpa %s16, 0
    loop: start=0, step=1, limit=4
    $region2: #{tpu_custom_call.1} parent=1 // loop_pre_header
      _
    $region3: #{tpu_custom_call.1} parent=1 // loop_header
      %s19 = sphi 0, %s23
      %p20 = scmp.ge.s32.totalorder %s19, 4
      %s29 = sphi 0, %s31
      %s32 = sphi 0, %s29
      %s33 = sphi 0, %s32
      %s49 = sphi 0, %s33
      %s53 = sphi 0, %s53
      %s55 = sphi 0, %s53
      %s56 = sphi 0, %s55
      %s70 = sphi 0, %s56
      %s74 = sphi 0, %s74
      %s76 = sphi 0, %s74
      %s77 = sphi 0, %s76
      %s91 = sphi 0, %s77
      %s95 = sphi 0, %s95
      %s97 = sphi 0, %s95
      %s98 = sphi 0, %s97
      %s112 = sphi 0, %s98
      %s116 = sphi 0, %s116
      %s118 = sphi 0, %s116
      %s119 = sphi 0, %s118
      %s133 = sphi 0, %s119
      %s137 = sphi 0, %s137
      %s139 = sphi 0, %s137
      %s140 = sphi 0, %s139
      %s154 = sphi 0, %s140
      %s158 = sphi 0, %s158
      %s160 = sphi 0, %s158
      %s161 = sphi 0, %s160
      %s175 = sphi 0, %s161
      %s179 = sphi 0, %s179
      %s181 = sphi 0, %s179
      %s182 = sphi 0, %s181
      %s196 = sphi 0, %s182
      %s200 = sphi 0, %s200
      %s202 = sphi 0, %s200
      %s203 = sphi 0, %s202
      %s217 = sphi 0, %s203
      %s221 = sphi 0, %s221
      %s223 = sphi 0, %s221
      %s224 = sphi 0, %s223
      %s238 = sphi 0, %s224
      %s244 = sphi 0, %s246
      %s247 = sphi 0, %s244
      %s248 = sphi 0, %s247
      %s264 = sphi 0, %s248
    $region4: #{tpu_custom_call.1} parent=1 // loop_header_branch
      %22 = sbr.rel (%p20) target = $region8
    $region5: #{tpu_custom_call.1} parent=1 // loop_body
      %s24 = ssub.s32 %s19, 1
      %s25 = ssub.s32 %s19, 2
      %s26 = sadd.s32 %s19, 1
      %s27 = ssub.s32 %s19, %s26
      %p28 = scmp.eq.s32.totalorder %s27, 0
      %s30 = sadd.s32 %s29, 1
      %s31 = scalar_select %p28, %s29, %s30
      %p34 = pneg %p28
      %p35 = scmp.eq.s32.totalorder %s19, 1
      %p36 = por %p34, %p35
      %p37 = scmp.ne.s32.totalorder %s29, %s32
      %p38 = scmp.eq.s32.totalorder %s19, 0
      %p39 = por %p37, %p38
      %p40 = scmp.ne.s32.totalorder %s29, %s32
      %p41 = scmp.eq.s32.totalorder %s24, 1
      %p42 = por %p40, %p41
      %p43 = scmp.ne.s32.totalorder %s32, %s33
      %p44 = scmp.eq.s32.totalorder %s24, 0
      %p45 = por %p43, %p44
      %p46 = scmp.ne.s32.totalorder %s32, %s33
      %p47 = scmp.eq.s32.totalorder %s25, 1
      %p48 = por %p46, %p47
      %p50 = scmp.ne.s32.totalorder %s33, %s49
      %p51 = scmp.eq.s32.totalorder %s25, 0
      %p52 = por %p50, %p51
      %s54 = sadd.s32 %s53, 1
      %p57 = scmp.eq.s32.totalorder %s19, 1
      %p58 = scmp.ne.s32.totalorder %s53, %s55
      %p59 = scmp.eq.s32.totalorder %s19, 0
      %p60 = por %p58, %p59
      %p61 = scmp.ne.s32.totalorder %s53, %s55
      %p62 = scmp.eq.s32.totalorder %s24, 1
      %p63 = por %p61, %p62
      %p64 = scmp.ne.s32.totalorder %s55, %s56
      %p65 = scmp.eq.s32.totalorder %s24, 0
      %p66 = por %p64, %p65
      %p67 = scmp.ne.s32.totalorder %s55, %s56
      %p68 = scmp.eq.s32.totalorder %s25, 1
      %p69 = por %p67, %p68
      %p71 = scmp.ne.s32.totalorder %s56, %s70
      %p72 = scmp.eq.s32.totalorder %s25, 0
      %p73 = por %p71, %p72
      %s75 = sadd.s32 %s74, 1
      %p78 = scmp.eq.s32.totalorder %s19, 1
      %p79 = scmp.ne.s32.totalorder %s74, %s76
      %p80 = scmp.eq.s32.totalorder %s19, 0
      %p81 = por %p79, %p80
      %p82 = scmp.ne.s32.totalorder %s74, %s76
      %p83 = scmp.eq.s32.totalorder %s24, 1
      %p84 = por %p82, %p83
      %p85 = scmp.ne.s32.totalorder %s76, %s77
      %p86 = scmp.eq.s32.totalorder %s24, 0
      %p87 = por %p85, %p86
      %p88 = scmp.ne.s32.totalorder %s76, %s77
      %p89 = scmp.eq.s32.totalorder %s25, 1
      %p90 = por %p88, %p89
      %p92 = scmp.ne.s32.totalorder %s77, %s91
      %p93 = scmp.eq.s32.totalorder %s25, 0
      %p94 = por %p92, %p93
      %s96 = sadd.s32 %s95, 1
      %p99 = scmp.eq.s32.totalorder %s19, 1
      %p100 = scmp.ne.s32.totalorder %s95, %s97
      %p101 = scmp.eq.s32.totalorder %s19, 0
      %p102 = por %p100, %p101
      %p103 = scmp.ne.s32.totalorder %s95, %s97
      %p104 = scmp.eq.s32.totalorder %s24, 1
      %p105 = por %p103, %p104
      %p106 = scmp.ne.s32.totalorder %s97, %s98
      %p107 = scmp.eq.s32.totalorder %s24, 0
      %p108 = por %p106, %p107
      %p109 = scmp.ne.s32.totalorder %s97, %s98
      %p110 = scmp.eq.s32.totalorder %s25, 1
      %p111 = por %p109, %p110
      %p113 = scmp.ne.s32.totalorder %s98, %s112
      %p114 = scmp.eq.s32.totalorder %s25, 0
      %p115 = por %p113, %p114
      %s117 = sadd.s32 %s116, 1
      %p120 = scmp.eq.s32.totalorder %s19, 1
      %p121 = scmp.ne.s32.totalorder %s116, %s118
      %p122 = scmp.eq.s32.totalorder %s19, 0
      %p123 = por %p121, %p122
      %p124 = scmp.ne.s32.totalorder %s116, %s118
      %p125 = scmp.eq.s32.totalorder %s24, 1
      %p126 = por %p124, %p125
      %p127 = scmp.ne.s32.totalorder %s118, %s119
      %p128 = scmp.eq.s32.totalorder %s24, 0
      %p129 = por %p127, %p128
      %p130 = scmp.ne.s32.totalorder %s118, %s119
      %p131 = scmp.eq.s32.totalorder %s25, 1
      %p132 = por %p130, %p131
      %p134 = scmp.ne.s32.totalorder %s119, %s133
      %p135 = scmp.eq.s32.totalorder %s25, 0
      %p136 = por %p134, %p135
      %s138 = sadd.s32 %s137, 1
      %p141 = scmp.eq.s32.totalorder %s19, 1
      %p142 = scmp.ne.s32.totalorder %s137, %s139
      %p143 = scmp.eq.s32.totalorder %s19, 0
      %p144 = por %p142, %p143
      %p145 = scmp.ne.s32.totalorder %s137, %s139
      %p146 = scmp.eq.s32.totalorder %s24, 1
      %p147 = por %p145, %p146
      %p148 = scmp.ne.s32.totalorder %s139, %s140
      %p149 = scmp.eq.s32.totalorder %s24, 0
      %p150 = por %p148, %p149
      %p151 = scmp.ne.s32.totalorder %s139, %s140
      %p152 = scmp.eq.s32.totalorder %s25, 1
      %p153 = por %p151, %p152
      %p155 = scmp.ne.s32.totalorder %s140, %s154
      %p156 = scmp.eq.s32.totalorder %s25, 0
      %p157 = por %p155, %p156
      %s159 = sadd.s32 %s158, 1
      %p162 = scmp.eq.s32.totalorder %s19, 1
      %p163 = scmp.ne.s32.totalorder %s158, %s160
      %p164 = scmp.eq.s32.totalorder %s19, 0
      %p165 = por %p163, %p164
      %p166 = scmp.ne.s32.totalorder %s158, %s160
      %p167 = scmp.eq.s32.totalorder %s24, 1
      %p168 = por %p166, %p167
      %p169 = scmp.ne.s32.totalorder %s160, %s161
      %p170 = scmp.eq.s32.totalorder %s24, 0
      %p171 = por %p169, %p170
      %p172 = scmp.ne.s32.totalorder %s160, %s161
      %p173 = scmp.eq.s32.totalorder %s25, 1
      %p174 = por %p172, %p173
      %p176 = scmp.ne.s32.totalorder %s161, %s175
      %p177 = scmp.eq.s32.totalorder %s25, 0
      %p178 = por %p176, %p177
      %s180 = sadd.s32 %s179, 1
      %p183 = scmp.eq.s32.totalorder %s19, 1
      %p184 = scmp.ne.s32.totalorder %s179, %s181
      %p185 = scmp.eq.s32.totalorder %s19, 0
      %p186 = por %p184, %p185
      %p187 = scmp.ne.s32.totalorder %s179, %s181
      %p188 = scmp.eq.s32.totalorder %s24, 1
      %p189 = por %p187, %p188
      %p190 = scmp.ne.s32.totalorder %s181, %s182
      %p191 = scmp.eq.s32.totalorder %s24, 0
      %p192 = por %p190, %p191
      %p193 = scmp.ne.s32.totalorder %s181, %s182
      %p194 = scmp.eq.s32.totalorder %s25, 1
      %p195 = por %p193, %p194
      %p197 = scmp.ne.s32.totalorder %s182, %s196
      %p198 = scmp.eq.s32.totalorder %s25, 0
      %p199 = por %p197, %p198
      %s201 = sadd.s32 %s200, 1
      %p204 = scmp.eq.s32.totalorder %s19, 1
      %p205 = scmp.ne.s32.totalorder %s200, %s202
      %p206 = scmp.eq.s32.totalorder %s19, 0
      %p207 = por %p205, %p206
      %p208 = scmp.ne.s32.totalorder %s200, %s202
      %p209 = scmp.eq.s32.totalorder %s24, 1
      %p210 = por %p208, %p209
      %p211 = scmp.ne.s32.totalorder %s202, %s203
      %p212 = scmp.eq.s32.totalorder %s24, 0
      %p213 = por %p211, %p212
      %p214 = scmp.ne.s32.totalorder %s202, %s203
      %p215 = scmp.eq.s32.totalorder %s25, 1
      %p216 = por %p214, %p215
      %p218 = scmp.ne.s32.totalorder %s203, %s217
      %p219 = scmp.eq.s32.totalorder %s25, 0
      %p220 = por %p218, %p219
      %s222 = sadd.s32 %s221, 1
      %p225 = scmp.eq.s32.totalorder %s19, 1
      %p226 = scmp.ne.s32.totalorder %s221, %s223
      %p227 = scmp.eq.s32.totalorder %s19, 0
      %p228 = por %p226, %p227
      %p229 = scmp.ne.s32.totalorder %s221, %s223
      %p230 = scmp.eq.s32.totalorder %s24, 1
      %p231 = por %p229, %p230
      %p232 = scmp.ne.s32.totalorder %s223, %s224
      %p233 = scmp.eq.s32.totalorder %s24, 0
      %p234 = por %p232, %p233
      %p235 = scmp.ne.s32.totalorder %s223, %s224
      %p236 = scmp.eq.s32.totalorder %s25, 1
      %p237 = por %p235, %p236
      %p239 = scmp.ne.s32.totalorder %s224, %s238
      %p240 = scmp.eq.s32.totalorder %s25, 0
      %p241 = por %p239, %p240
      %s242 = ssub.s32 %s19, %s26
      %p243 = scmp.eq.s32.totalorder %s242, 0
      %s245 = sadd.s32 %s244, 1
      %s246 = scalar_select %p243, %s244, %s245
      %p249 = pneg %p243
      %p250 = scmp.eq.s32.totalorder %s19, 1
      %p251 = por %p249, %p250
      %p252 = scmp.ne.s32.totalorder %s244, %s247
      %p253 = scmp.eq.s32.totalorder %s19, 0
      %p254 = por %p252, %p253
      %p255 = scmp.ne.s32.totalorder %s244, %s247
      %p256 = scmp.eq.s32.totalorder %s24, 1
      %p257 = por %p255, %p256
      %p258 = scmp.ne.s32.totalorder %s247, %s248
      %p259 = scmp.eq.s32.totalorder %s24, 0
      %p260 = por %p258, %p259
      %p261 = scmp.ne.s32.totalorder %s247, %s248
      %p262 = scmp.eq.s32.totalorder %s25, 1
      %p263 = por %p261, %p262
      %p265 = scmp.ne.s32.totalorder %s248, %s264
      %p266 = scmp.eq.s32.totalorder %s25, 0
      %p267 = por %p265, %p266
      %p268 = scmp.le.s32.totalorder 1, %s19
      %p269 = scmp.lt.s32.totalorder %s19, 3
      %p270 = pnand %p268, %p269
      %p271 = pneg %p270
      // Predicated region
      $region9: #{tpu_custom_call.1} parent=5 // pred_check
        _
      $region10: #{tpu_custom_call.1} parent=5 // pred_check_branch
        %273 = sbr.rel (%p270) target = $region12
      $region11: #{tpu_custom_call.1} parent=5 // pred_region
        %s274 = ssub.s32 %s19, 1
        // Predicated region
        $region13: #{tpu_custom_call.1} parent=11 // pred_check
          %p275 = pneg %p66
        $region14: #{tpu_custom_call.1} parent=11 // pred_check_branch
          %277 = sbr.rel (%p275) target = $region16
        $region15: #{tpu_custom_call.1} parent=11 // pred_region
          _
        $region16: #{tpu_custom_call.1} parent=11 // pred_fallthru
          _
        // Predicated region
        $region17: #{tpu_custom_call.1} parent=11 // pred_check
          %p278 = pneg %p87
        $region18: #{tpu_custom_call.1} parent=11 // pred_check_branch
          %280 = sbr.rel (%p278) target = $region20
        $region19: #{tpu_custom_call.1} parent=11 // pred_region
          _
        $region20: #{tpu_custom_call.1} parent=11 // pred_fallthru
          _
        // Predicated region
        $region21: #{tpu_custom_call.1} parent=11 // pred_check
          %p281 = pneg %p108
        $region22: #{tpu_custom_call.1} parent=11 // pred_check_branch
          %283 = sbr.rel (%p281) target = $region24
        $region23: #{tpu_custom_call.1} parent=11 // pred_region
          _
        $region24: #{tpu_custom_call.1} parent=11 // pred_fallthru
          _
        // Predicated region
        $region25: #{tpu_custom_call.1} parent=11 // pred_check
          %p284 = pneg %p129
        $region26: #{tpu_custom_call.1} parent=11 // pred_check_branch
          %286 = sbr.rel (%p284) target = $region28
        $region27: #{tpu_custom_call.1} parent=11 // pred_region
          _
        $region28: #{tpu_custom_call.1} parent=11 // pred_fallthru
          _
        // Predicated region
        $region29: #{tpu_custom_call.1} parent=11 // pred_check
          %p287 = pneg %p150
        $region30: #{tpu_custom_call.1} parent=11 // pred_check_branch
          %289 = sbr.rel (%p287) target = $region32
        $region31: #{tpu_custom_call.1} parent=11 // pred_region
          _
        $region32: #{tpu_custom_call.1} parent=11 // pred_fallthru
          _
        // Predicated region
        $region33: #{tpu_custom_call.1} parent=11 // pred_check
          %p290 = pneg %p171
        $region34: #{tpu_custom_call.1} parent=11 // pred_check_branch
          %292 = sbr.rel (%p290) target = $region36
        $region35: #{tpu_custom_call.1} parent=11 // pred_region
          _
        $region36: #{tpu_custom_call.1} parent=11 // pred_fallthru
          _
        // Predicated region
        $region37: #{tpu_custom_call.1} parent=11 // pred_check
          %p293 = pneg %p192
        $region38: #{tpu_custom_call.1} parent=11 // pred_check_branch
          %295 = sbr.rel (%p293) target = $region40
        $region39: #{tpu_custom_call.1} parent=11 // pred_region
          _
        $region40: #{tpu_custom_call.1} parent=11 // pred_fallthru
          _
        // Predicated region
        $region41: #{tpu_custom_call.1} parent=11 // pred_check
          %p296 = pneg %p213
        $region42: #{tpu_custom_call.1} parent=11 // pred_check_branch
          %298 = sbr.rel (%p296) target = $region44
        $region43: #{tpu_custom_call.1} parent=11 // pred_region
          _
        $region44: #{tpu_custom_call.1} parent=11 // pred_fallthru
          _
        // Predicated region
        $region45: #{tpu_custom_call.1} parent=11 // pred_check
          %p299 = pneg %p234
        $region46: #{tpu_custom_call.1} parent=11 // pred_check_branch
          %301 = sbr.rel (%p299) target = $region48
        $region47: #{tpu_custom_call.1} parent=11 // pred_region
          _
        $region48: #{tpu_custom_call.1} parent=11 // pred_fallthru
          _
      $region12: #{tpu_custom_call.1} parent=5 // pred_fallthru
        _
      %p302 = scmp.lt.s32.totalorder %s19, 2
      // Predicated region
      $region49: #{tpu_custom_call.1} parent=5 // pred_check
        %p303 = pneg %p302
      $region50: #{tpu_custom_call.1} parent=5 // pred_check_branch
        %305 = sbr.rel (%p303) target = $region52
      $region51: #{tpu_custom_call.1} parent=5 // pred_region
        // Predicated region
        $region53: #{tpu_custom_call.1} parent=51 // pred_check
          %p306 = pneg %p39
        $region54: #{tpu_custom_call.1} parent=51 // pred_check_branch
          %308 = sbr.rel (%p306) target = $region56
        $region55: #{tpu_custom_call.1} parent=51 // pred_region
          %s309 = sand.u32 %s29, 1
          %s310 = sand.u32 %s29, 1
          %s311 = smul.addr %s310, 816
          %s312 = scalar_lea.vmem [#allocation5], %s311
          %s313 = smul.addr %s19, 51
          %s314 = smul.addr %s313, 4
          %s315 = scalar_lea.vmem %s0, %s314
          // Predicated region
          $region57: #{tpu_custom_call.1} parent=55 // pred_check
            _
          $region58: #{tpu_custom_call.1} parent=55 // pred_check_branch
            %317 = sbr.rel (0) target = $region60
          $region59: #{tpu_custom_call.1} parent=55 // pred_region
            // Predicated region
            $region61: #{tpu_custom_call.1} parent=59 // pred_check
              _
            $region62: #{tpu_custom_call.1} parent=59 // pred_check_branch
              %319 = sbr.rel target = $region64
            $region63: #{tpu_custom_call.1} parent=59 // pred_region
              // Predicated region
              $region76: #{tpu_custom_call.1} parent=63 // pred_check
                _
              $region77: #{tpu_custom_call.1} parent=63 // pred_check_branch
                %741 = sbr.rel (0) target = $region79
              $region78: #{tpu_custom_call.1} parent=63 // pred_region
                loop: start=0, step=1, limit=1
                $region80: #{tpu_custom_call.1} parent=78 // loop_pre_header
                  _
                $region81: #{tpu_custom_call.1} parent=78 // loop_header
                  %s743 = sphi 0, %s747
                  %p744 = scmp.ge.s32.totalorder %s743, 1
                  %s748 = sphi %s315, %s315
                  %s749 = sphi %s312, %s312
                $region82: #{tpu_custom_call.1} parent=78 // loop_header_branch
                  %746 = sbr.rel (%p744) target = $region86
                $region83: #{tpu_custom_call.1} parent=78 // loop_body
                  _
                $region84: #{tpu_custom_call.1} parent=78 // loop_footer
                  %s747 = sadd.s32 1, %s743
                $region85: #{tpu_custom_call.1} parent=78 // loop_footer_branch
                  %742 = sbr.rel target = $region81
                $region86: #{tpu_custom_call.1} parent=78 // loop_exit
                  _
                %s751 = ssub.s32 16, 1
                loop: start=0, step=1, limit=1
                $region87: #{tpu_custom_call.1} parent=78 // loop_pre_header
                  _
                $region88: #{tpu_custom_call.1} parent=78 // loop_header
                  %s753 = sphi 0, %s757
                  %p754 = scmp.ge.s32.totalorder %s753, 1
                  %s758 = sphi %s315, %s315
                  %s759 = sphi %s312, %s312
                $region89: #{tpu_custom_call.1} parent=78 // loop_header_branch
                  %756 = sbr.rel (%p754) target = $region93
                $region90: #{tpu_custom_call.1} parent=78 // loop_body
                  %v760 = vld [vmem:[%s758] sm:%s751]
                  %761 = vst [vmem:[%s759] sm:%s751] %v760
                  %v762 = vld [vmem:[%s758 + $0x4] sm:%s751]
                  %763 = vst [vmem:[%s759 + $0x4] sm:%s751] %v762
                  %v764 = vld [vmem:[%s758 + $0x8] sm:%s751]
                  %765 = vst [vmem:[%s759 + $0x8] sm:%s751] %v764
                  %v766 = vld [vmem:[%s758 + $0xc] sm:%s751]
                  %767 = vst [vmem:[%s759 + $0xc] sm:%s751] %v766
                  %v768 = vld [vmem:[%s758 + $0x10] sm:%s751]
                  %769 = vst [vmem:[%s759 + $0x10] sm:%s751] %v768
                  %v770 = vld [vmem:[%s758 + $0x14] sm:%s751]
                  %771 = vst [vmem:[%s759 + $0x14] sm:%s751] %v770
                  %v772 = vld [vmem:[%s758 + $0x18] sm:%s751]
                  %773 = vst [vmem:[%s759 + $0x18] sm:%s751] %v772
                  %v774 = vld [vmem:[%s758 + $0x1c] sm:%s751]
                  %775 = vst [vmem:[%s759 + $0x1c] sm:%s751] %v774
                  %v776 = vld [vmem:[%s758 + $0x20] sm:%s751]
                  %777 = vst [vmem:[%s759 + $0x20] sm:%s751] %v776
                  %v778 = vld [vmem:[%s758 + $0x24] sm:%s751]
                  %779 = vst [vmem:[%s759 + $0x24] sm:%s751] %v778
                  %v780 = vld [vmem:[%s758 + $0x28] sm:%s751]
                  %781 = vst [vmem:[%s759 + $0x28] sm:%s751] %v780
                  %v782 = vld [vmem:[%s758 + $0x2c] sm:%s751]
                  %783 = vst [vmem:[%s759 + $0x2c] sm:%s751] %v782
                  %v784 = vld [vmem:[%s758 + $0x30] sm:%s751]
                  %785 = vst [vmem:[%s759 + $0x30] sm:%s751] %v784
                  %v786 = vld [vmem:[%s758 + $0x34] sm:%s751]
                  %787 = vst [vmem:[%s759 + $0x34] sm:%s751] %v786
                  %v788 = vld [vmem:[%s758 + $0x38] sm:%s751]
                  %789 = vst [vmem:[%s759 + $0x38] sm:%s751] %v788
                  %v790 = vld [vmem:[%s758 + $0x3c] sm:%s751]
                  %791 = vst [vmem:[%s759 + $0x3c] sm:%s751] %v790
                  %v792 = vld [vmem:[%s758 + $0x40] sm:%s751]
                  %793 = vst [vmem:[%s759 + $0x40] sm:%s751] %v792
                  %v794 = vld [vmem:[%s758 + $0x44] sm:%s751]
                  %795 = vst [vmem:[%s759 + $0x44] sm:%s751] %v794
                  %v796 = vld [vmem:[%s758 + $0x48] sm:%s751]
                  %797 = vst [vmem:[%s759 + $0x48] sm:%s751] %v796
                  %v798 = vld [vmem:[%s758 + $0x4c] sm:%s751]
                  %799 = vst [vmem:[%s759 + $0x4c] sm:%s751] %v798
                  %v800 = vld [vmem:[%s758 + $0x50] sm:%s751]
                  %801 = vst [vmem:[%s759 + $0x50] sm:%s751] %v800
                  %v802 = vld [vmem:[%s758 + $0x54] sm:%s751]
                  %803 = vst [vmem:[%s759 + $0x54] sm:%s751] %v802
                  %v804 = vld [vmem:[%s758 + $0x58] sm:%s751]
                  %805 = vst [vmem:[%s759 + $0x58] sm:%s751] %v804
                  %v806 = vld [vmem:[%s758 + $0x5c] sm:%s751]
                  %807 = vst [vmem:[%s759 + $0x5c] sm:%s751] %v806
                  %v808 = vld [vmem:[%s758 + $0x60] sm:%s751]
                  %809 = vst [vmem:[%s759 + $0x60] sm:%s751] %v808
                  %v810 = vld [vmem:[%s758 + $0x64] sm:%s751]
                  %811 = vst [vmem:[%s759 + $0x64] sm:%s751] %v810
                  %v812 = vld [vmem:[%s758 + $0x68] sm:%s751]
                  %813 = vst [vmem:[%s759 + $0x68] sm:%s751] %v812
                  %v814 = vld [vmem:[%s758 + $0x6c] sm:%s751]
                  %815 = vst [vmem:[%s759 + $0x6c] sm:%s751] %v814
                  %v816 = vld [vmem:[%s758 + $0x70] sm:%s751]
                  %817 = vst [vmem:[%s759 + $0x70] sm:%s751] %v816
                  %v818 = vld [vmem:[%s758 + $0x74] sm:%s751]
                  %819 = vst [vmem:[%s759 + $0x74] sm:%s751] %v818
                  %v820 = vld [vmem:[%s758 + $0x78] sm:%s751]
                  %821 = vst [vmem:[%s759 + $0x78] sm:%s751] %v820
                  %v822 = vld [vmem:[%s758 + $0x7c] sm:%s751]
                  %823 = vst [vmem:[%s759 + $0x7c] sm:%s751] %v822
                  %v824 = vld [vmem:[%s758 + $0x80] sm:%s751]
                  %825 = vst [vmem:[%s759 + $0x80] sm:%s751] %v824
                  %v826 = vld [vmem:[%s758 + $0x84] sm:%s751]
                  %827 = vst [vmem:[%s759 + $0x84] sm:%s751] %v826
                  %v828 = vld [vmem:[%s758 + $0x88] sm:%s751]
                  %829 = vst [vmem:[%s759 + $0x88] sm:%s751] %v828
                  %v830 = vld [vmem:[%s758 + $0x8c] sm:%s751]
                  %831 = vst [vmem:[%s759 + $0x8c] sm:%s751] %v830
                  %v832 = vld [vmem:[%s758 + $0x90] sm:%s751]
                  %833 = vst [vmem:[%s759 + $0x90] sm:%s751] %v832
                  %v834 = vld [vmem:[%s758 + $0x94] sm:%s751]
                  %835 = vst [vmem:[%s759 + $0x94] sm:%s751] %v834
                  %v836 = vld [vmem:[%s758 + $0x98] sm:%s751]
                  %837 = vst [vmem:[%s759 + $0x98] sm:%s751] %v836
                  %v838 = vld [vmem:[%s758 + $0x9c] sm:%s751]
                  %839 = vst [vmem:[%s759 + $0x9c] sm:%s751] %v838
                  %v840 = vld [vmem:[%s758 + $0xa0] sm:%s751]
                  %841 = vst [vmem:[%s759 + $0xa0] sm:%s751] %v840
                  %v842 = vld [vmem:[%s758 + $0xa4] sm:%s751]
                  %843 = vst [vmem:[%s759 + $0xa4] sm:%s751] %v842
                  %v844 = vld [vmem:[%s758 + $0xa8] sm:%s751]
                  %845 = vst [vmem:[%s759 + $0xa8] sm:%s751] %v844
                  %v846 = vld [vmem:[%s758 + $0xac] sm:%s751]
                  %847 = vst [vmem:[%s759 + $0xac] sm:%s751] %v846
                  %v848 = vld [vmem:[%s758 + $0xb0] sm:%s751]
                  %849 = vst [vmem:[%s759 + $0xb0] sm:%s751] %v848
                  %v850 = vld [vmem:[%s758 + $0xb4] sm:%s751]
                  %851 = vst [vmem:[%s759 + $0xb4] sm:%s751] %v850
                  %v852 = vld [vmem:[%s758 + $0xb8] sm:%s751]
                  %853 = vst [vmem:[%s759 + $0xb8] sm:%s751] %v852
                  %v854 = vld [vmem:[%s758 + $0xbc] sm:%s751]
                  %855 = vst [vmem:[%s759 + $0xbc] sm:%s751] %v854
                  %v856 = vld [vmem:[%s758 + $0xc0] sm:%s751]
                  %857 = vst [vmem:[%s759 + $0xc0] sm:%s751] %v856
                  %v858 = vld [vmem:[%s758 + $0xc4] sm:%s751]
                  %859 = vst [vmem:[%s759 + $0xc4] sm:%s751] %v858
                  %v860 = vld [vmem:[%s758 + $0xc8] sm:%s751]
                  %861 = vst [vmem:[%s759 + $0xc8] sm:%s751] %v860
                  %v862 = vld [vmem:[%s758 + $0x198] sm:%s751]
                  %863 = vst [vmem:[%s759 + $0xcc] sm:%s751] %v862
                  %v864 = vld [vmem:[%s758 + $0x19c] sm:%s751]
                  %865 = vst [vmem:[%s759 + $0xd0] sm:%s751] %v864
                  %v866 = vld [vmem:[%s758 + $0x1a0] sm:%s751]
                  %867 = vst [vmem:[%s759 + $0xd4] sm:%s751] %v866
                  %v868 = vld [vmem:[%s758 + $0x1a4] sm:%s751]
                  %869 = vst [vmem:[%s759 + $0xd8] sm:%s751] %v868
                  %v870 = vld [vmem:[%s758 + $0x1a8] sm:%s751]
                  %871 = vst [vmem:[%s759 + $0xdc] sm:%s751] %v870
                  %v872 = vld [vmem:[%s758 + $0x1ac] sm:%s751]
                  %873 = vst [vmem:[%s759 + $0xe0] sm:%s751] %v872
                  %v874 = vld [vmem:[%s758 + $0x1b0] sm:%s751]
                  %875 = vst [vmem:[%s759 + $0xe4] sm:%s751] %v874
                  %v876 = vld [vmem:[%s758 + $0x1b4] sm:%s751]
                  %877 = vst [vmem:[%s759 + $0xe8] sm:%s751] %v876
                  %v878 = vld [vmem:[%s758 + $0x1b8] sm:%s751]
                  %879 = vst [vmem:[%s759 + $0xec] sm:%s751] %v878
                  %v880 = vld [vmem:[%s758 + $0x1bc] sm:%s751]
                  %881 = vst [vmem:[%s759 + $0xf0] sm:%s751] %v880
                  %v882 = vld [vmem:[%s758 + $0x1c0] sm:%s751]
                  %883 = vst [vmem:[%s759 + $0xf4] sm:%s751] %v882
                  %v884 = vld [vmem:[%s758 + $0x1c4] sm:%s751]
                  %885 = vst [vmem:[%s759 + $0xf8] sm:%s751] %v884
                  %v886 = vld [vmem:[%s758 + $0x1c8] sm:%s751]
                  %887 = vst [vmem:[%s759 + $0xfc] sm:%s751] %v886
                  %v888 = vld [vmem:[%s758 + $0x1cc] sm:%s751]
                  %889 = vst [vmem:[%s759 + $0x100] sm:%s751] %v888
                  %v890 = vld [vmem:[%s758 + $0x1d0] sm:%s751]
                  %891 = vst [vmem:[%s759 + $0x104] sm:%s751] %v890
                  %v892 = vld [vmem:[%s758 + $0x1d4] sm:%s751]
                  %893 = vst [vmem:[%s759 + $0x108] sm:%s751] %v892
                  %v894 = vld [vmem:[%s758 + $0x1d8] sm:%s751]
                  %895 = vst [vmem:[%s759 + $0x10c] sm:%s751] %v894
                  %v896 = vld [vmem:[%s758 + $0x1dc] sm:%s751]
                  %897 = vst [vmem:[%s759 + $0x110] sm:%s751] %v896
                  %v898 = vld [vmem:[%s758 + $0x1e0] sm:%s751]
                  %899 = vst [vmem:[%s759 + $0x114] sm:%s751] %v898
                  %v900 = vld [vmem:[%s758 + $0x1e4] sm:%s751]
                  %901 = vst [vmem:[%s759 + $0x118] sm:%s751] %v900
                  %v902 = vld [vmem:[%s758 + $0x1e8] sm:%s751]
                  %903 = vst [vmem:[%s759 + $0x11c] sm:%s751] %v902
                  %v904 = vld [vmem:[%s758 + $0x1ec] sm:%s751]
                  %905 = vst [vmem:[%s759 + $0x120] sm:%s751] %v904
                  %v906 = vld [vmem:[%s758 + $0x1f0] sm:%s751]
                  %907 = vst [vmem:[%s759 + $0x124] sm:%s751] %v906
                  %v908 = vld [vmem:[%s758 + $0x1f4] sm:%s751]
                  %909 = vst [vmem:[%s759 + $0x128] sm:%s751] %v908
                  %v910 = vld [vmem:[%s758 + $0x1f8] sm:%s751]
                  %911 = vst [vmem:[%s759 + $0x12c] sm:%s751] %v910
                  %v912 = vld [vmem:[%s758 + $0x1fc] sm:%s751]
                  %913 = vst [vmem:[%s759 + $0x130] sm:%s751] %v912
                  %v914 = vld [vmem:[%s758 + $0x200] sm:%s751]
                  %915 = vst [vmem:[%s759 + $0x134] sm:%s751] %v914
                  %v916 = vld [vmem:[%s758 + $0x204] sm:%s751]
                  %917 = vst [vmem:[%s759 + $0x138] sm:%s751] %v916
                  %v918 = vld [vmem:[%s758 + $0x208] sm:%s751]
                  %919 = vst [vmem:[%s759 + $0x13c] sm:%s751] %v918
                  %v920 = vld [vmem:[%s758 + $0x20c] sm:%s751]
                  %921 = vst [vmem:[%s759 + $0x140] sm:%s751] %v920
                  %v922 = vld [vmem:[%s758 + $0x210] sm:%s751]
                  %923 = vst [vmem:[%s759 + $0x144] sm:%s751] %v922
                  %v924 = vld [vmem:[%s758 + $0x214] sm:%s751]
                  %925 = vst [vmem:[%s759 + $0x148] sm:%s751] %v924
                  %v926 = vld [vmem:[%s758 + $0x218] sm:%s751]
                  %927 = vst [vmem:[%s759 + $0x14c] sm:%s751] %v926
                  %v928 = vld [vmem:[%s758 + $0x21c] sm:%s751]
                  %929 = vst [vmem:[%s759 + $0x150] sm:%s751] %v928
                  %v930 = vld [vmem:[%s758 + $0x220] sm:%s751]
                  %931 = vst [vmem:[%s759 + $0x154] sm:%s751] %v930
                  %v932 = vld [vmem:[%s758 + $0x224] sm:%s751]
                  %933 = vst [vmem:[%s759 + $0x158] sm:%s751] %v932
                  %v934 = vld [vmem:[%s758 + $0x228] sm:%s751]
                  %935 = vst [vmem:[%s759 + $0x15c] sm:%s751] %v934
                  %v936 = vld [vmem:[%s758 + $0x22c] sm:%s751]
                  %937 = vst [vmem:[%s759 + $0x160] sm:%s751] %v936
                  %v938 = vld [vmem:[%s758 + $0x230] sm:%s751]
                  %939 = vst [vmem:[%s759 + $0x164] sm:%s751] %v938
                  %v940 = vld [vmem:[%s758 + $0x234] sm:%s751]
                  %941 = vst [vmem:[%s759 + $0x168] sm:%s751] %v940
                  %v942 = vld [vmem:[%s758 + $0x238] sm:%s751]
                  %943 = vst [vmem:[%s759 + $0x16c] sm:%s751] %v942
                  %v944 = vld [vmem:[%s758 + $0x23c] sm:%s751]
                  %945 = vst [vmem:[%s759 + $0x170] sm:%s751] %v944
                  %v946 = vld [vmem:[%s758 + $0x240] sm:%s751]
                  %947 = vst [vmem:[%s759 + $0x174] sm:%s751] %v946
                  %v948 = vld [vmem:[%s758 + $0x244] sm:%s751]
                  %949 = vst [vmem:[%s759 + $0x178] sm:%s751] %v948
                  %v950 = vld [vmem:[%s758 + $0x248] sm:%s751]
                  %951 = vst [vmem:[%s759 + $0x17c] sm:%s751] %v950
                  %v952 = vld [vmem:[%s758 + $0x24c] sm:%s751]
                  %953 = vst [vmem:[%s759 + $0x180] sm:%s751] %v952
                  %v954 = vld [vmem:[%s758 + $0x250] sm:%s751]
                  %955 = vst [vmem:[%s759 + $0x184] sm:%s751] %v954
                  %v956 = vld [vmem:[%s758 + $0x254] sm:%s751]
                  %957 = vst [vmem:[%s759 + $0x188] sm:%s751] %v956
                  %v958 = vld [vmem:[%s758 + $0x258] sm:%s751]
                  %959 = vst [vmem:[%s759 + $0x18c] sm:%s751] %v958
                  %v960 = vld [vmem:[%s758 + $0x25c] sm:%s751]
                  %961 = vst [vmem:[%s759 + $0x190] sm:%s751] %v960
                  %v962 = vld [vmem:[%s758 + $0x260] sm:%s751]
                  %963 = vst [vmem:[%s759 + $0x194] sm:%s751] %v962
                  %v964 = vld [vmem:[%s758 + $0x330] sm:%s751]
                  %965 = vst [vmem:[%s759 + $0x198] sm:%s751] %v964
                  %v966 = vld [vmem:[%s758 + $0x334] sm:%s751]
                  %967 = vst [vmem:[%s759 + $0x19c] sm:%s751] %v966
                  %v968 = vld [vmem:[%s758 + $0x338] sm:%s751]
                  %969 = vst [vmem:[%s759 + $0x1a0] sm:%s751] %v968
                  %v970 = vld [vmem:[%s758 + $0x33c] sm:%s751]
                  %971 = vst [vmem:[%s759 + $0x1a4] sm:%s751] %v970
                  %v972 = vld [vmem:[%s758 + $0x340] sm:%s751]
                  %973 = vst [vmem:[%s759 + $0x1a8] sm:%s751] %v972
                  %v974 = vld [vmem:[%s758 + $0x344] sm:%s751]
                  %975 = vst [vmem:[%s759 + $0x1ac] sm:%s751] %v974
                  %v976 = vld [vmem:[%s758 + $0x348] sm:%s751]
                  %977 = vst [vmem:[%s759 + $0x1b0] sm:%s751] %v976
                  %v978 = vld [vmem:[%s758 + $0x34c] sm:%s751]
                  %979 = vst [vmem:[%s759 + $0x1b4] sm:%s751] %v978
                  %v980 = vld [vmem:[%s758 + $0x350] sm:%s751]
                  %981 = vst [vmem:[%s759 + $0x1b8] sm:%s751] %v980
                  %v982 = vld [vmem:[%s758 + $0x354] sm:%s751]
                  %983 = vst [vmem:[%s759 + $0x1bc] sm:%s751] %v982
                  %v984 = vld [vmem:[%s758 + $0x358] sm:%s751]
                  %985 = vst [vmem:[%s759 + $0x1c0] sm:%s751] %v984
                  %v986 = vld [vmem:[%s758 + $0x35c] sm:%s751]
                  %987 = vst [vmem:[%s759 + $0x1c4] sm:%s751] %v986
                  %v988 = vld [vmem:[%s758 + $0x360] sm:%s751]
                  %989 = vst [vmem:[%s759 + $0x1c8] sm:%s751] %v988
                  %v990 = vld [vmem:[%s758 + $0x364] sm:%s751]
                  %991 = vst [vmem:[%s759 + $0x1cc] sm:%s751] %v990
                  %v992 = vld [vmem:[%s758 + $0x368] sm:%s751]
                  %993 = vst [vmem:[%s759 + $0x1d0] sm:%s751] %v992
                  %v994 = vld [vmem:[%s758 + $0x36c] sm:%s751]
                  %995 = vst [vmem:[%s759 + $0x1d4] sm:%s751] %v994
                  %v996 = vld [vmem:[%s758 + $0x370] sm:%s751]
                  %997 = vst [vmem:[%s759 + $0x1d8] sm:%s751] %v996
                  %v998 = vld [vmem:[%s758 + $0x374] sm:%s751]
                  %999 = vst [vmem:[%s759 + $0x1dc] sm:%s751] %v998
                  %v1000 = vld [vmem:[%s758 + $0x378] sm:%s751]
                  %1001 = vst [vmem:[%s759 + $0x1e0] sm:%s751] %v1000
                  %v1002 = vld [vmem:[%s758 + $0x37c] sm:%s751]
                  %1003 = vst [vmem:[%s759 + $0x1e4] sm:%s751] %v1002
                  %v1004 = vld [vmem:[%s758 + $0x380] sm:%s751]
                  %1005 = vst [vmem:[%s759 + $0x1e8] sm:%s751] %v1004
                  %v1006 = vld [vmem:[%s758 + $0x384] sm:%s751]
                  %1007 = vst [vmem:[%s759 + $0x1ec] sm:%s751] %v1006
                  %v1008 = vld [vmem:[%s758 + $0x388] sm:%s751]
                  %1009 = vst [vmem:[%s759 + $0x1f0] sm:%s751] %v1008
                  %v1010 = vld [vmem:[%s758 + $0x38c] sm:%s751]
                  %1011 = vst [vmem:[%s759 + $0x1f4] sm:%s751] %v1010
                  %v1012 = vld [vmem:[%s758 + $0x390] sm:%s751]
                  %1013 = vst [vmem:[%s759 + $0x1f8] sm:%s751] %v1012
                  %v1014 = vld [vmem:[%s758 + $0x394] sm:%s751]
                  %1015 = vst [vmem:[%s759 + $0x1fc] sm:%s751] %v1014
                  %v1016 = vld [vmem:[%s758 + $0x398] sm:%s751]
                  %1017 = vst [vmem:[%s759 + $0x200] sm:%s751] %v1016
                  %v1018 = vld [vmem:[%s758 + $0x39c] sm:%s751]
                  %1019 = vst [vmem:[%s759 + $0x204] sm:%s751] %v1018
                  %v1020 = vld [vmem:[%s758 + $0x3a0] sm:%s751]
                  %1021 = vst [vmem:[%s759 + $0x208] sm:%s751] %v1020
                  %v1022 = vld [vmem:[%s758 + $0x3a4] sm:%s751]
                  %1023 = vst [vmem:[%s759 + $0x20c] sm:%s751] %v1022
                  %v1024 = vld [vmem:[%s758 + $0x3a8] sm:%s751]
                  %1025 = vst [vmem:[%s759 + $0x210] sm:%s751] %v1024
                  %v1026 = vld [vmem:[%s758 + $0x3ac] sm:%s751]
                  %1027 = vst [vmem:[%s759 + $0x214] sm:%s751] %v1026
                  %v1028 = vld [vmem:[%s758 + $0x3b0] sm:%s751]
                  %1029 = vst [vmem:[%s759 + $0x218] sm:%s751] %v1028
                  %v1030 = vld [vmem:[%s758 + $0x3b4] sm:%s751]
                  %1031 = vst [vmem:[%s759 + $0x21c] sm:%s751] %v1030
                  %v1032 = vld [vmem:[%s758 + $0x3b8] sm:%s751]
                  %1033 = vst [vmem:[%s759 + $0x220] sm:%s751] %v1032
                  %v1034 = vld [vmem:[%s758 + $0x3bc] sm:%s751]
                  %1035 = vst [vmem:[%s759 + $0x224] sm:%s751] %v1034
                  %v1036 = vld [vmem:[%s758 + $0x3c0] sm:%s751]
                  %1037 = vst [vmem:[%s759 + $0x228] sm:%s751] %v1036
                  %v1038 = vld [vmem:[%s758 + $0x3c4] sm:%s751]
                  %1039 = vst [vmem:[%s759 + $0x22c] sm:%s751] %v1038
                  %v1040 = vld [vmem:[%s758 + $0x3c8] sm:%s751]
                  %1041 = vst [vmem:[%s759 + $0x230] sm:%s751] %v1040
                  %v1042 = vld [vmem:[%s758 + $0x3cc] sm:%s751]
                  %1043 = vst [vmem:[%s759 + $0x234] sm:%s751] %v1042
                  %v1044 = vld [vmem:[%s758 + $0x3d0] sm:%s751]
                  %1045 = vst [vmem:[%s759 + $0x238] sm:%s751] %v1044
                  %v1046 = vld [vmem:[%s758 + $0x3d4] sm:%s751]
                  %1047 = vst [vmem:[%s759 + $0x23c] sm:%s751] %v1046
                  %v1048 = vld [vmem:[%s758 + $0x3d8] sm:%s751]
                  %1049 = vst [vmem:[%s759 + $0x240] sm:%s751] %v1048
                  %v1050 = vld [vmem:[%s758 + $0x3dc] sm:%s751]
                  %1051 = vst [vmem:[%s759 + $0x244] sm:%s751] %v1050
                  %v1052 = vld [vmem:[%s758 + $0x3e0] sm:%s751]
                  %1053 = vst [vmem:[%s759 + $0x248] sm:%s751] %v1052
                  %v1054 = vld [vmem:[%s758 + $0x3e4] sm:%s751]
                  %1055 = vst [vmem:[%s759 + $0x24c] sm:%s751] %v1054
                  %v1056 = vld [vmem:[%s758 + $0x3e8] sm:%s751]
                  %1057 = vst [vmem:[%s759 + $0x250] sm:%s751] %v1056
                  %v1058 = vld [vmem:[%s758 + $0x3ec] sm:%s751]
                  %1059 = vst [vmem:[%s759 + $0x254] sm:%s751] %v1058
                  %v1060 = vld [vmem:[%s758 + $0x3f0] sm:%s751]
                  %1061 = vst [vmem:[%s759 + $0x258] sm:%s751] %v1060
                  %v1062 = vld [vmem:[%s758 + $0x3f4] sm:%s751]
                  %1063 = vst [vmem:[%s759 + $0x25c] sm:%s751] %v1062
                  %v1064 = vld [vmem:[%s758 + $0x3f8] sm:%s751]
                  %1065 = vst [vmem:[%s759 + $0x260] sm:%s751] %v1064
                  %v1066 = vld [vmem:[%s758 + $0x4c8] sm:%s751]
                  %1067 = vst [vmem:[%s759 + $0x264] sm:%s751] %v1066
                  %v1068 = vld [vmem:[%s758 + $0x4cc] sm:%s751]
                  %1069 = vst [vmem:[%s759 + $0x268] sm:%s751] %v1068
                  %v1070 = vld [vmem:[%s758 + $0x4d0] sm:%s751]
                  %1071 = vst [vmem:[%s759 + $0x26c] sm:%s751] %v1070
                  %v1072 = vld [vmem:[%s758 + $0x4d4] sm:%s751]
                  %1073 = vst [vmem:[%s759 + $0x270] sm:%s751] %v1072
                  %v1074 = vld [vmem:[%s758 + $0x4d8] sm:%s751]
                  %1075 = vst [vmem:[%s759 + $0x274] sm:%s751] %v1074
                  %v1076 = vld [vmem:[%s758 + $0x4dc] sm:%s751]
                  %1077 = vst [vmem:[%s759 + $0x278] sm:%s751] %v1076
                  %v1078 = vld [vmem:[%s758 + $0x4e0] sm:%s751]
                  %1079 = vst [vmem:[%s759 + $0x27c] sm:%s751] %v1078
                  %v1080 = vld [vmem:[%s758 + $0x4e4] sm:%s751]
                  %1081 = vst [vmem:[%s759 + $0x280] sm:%s751] %v1080
                  %v1082 = vld [vmem:[%s758 + $0x4e8] sm:%s751]
                  %1083 = vst [vmem:[%s759 + $0x284] sm:%s751] %v1082
                  %v1084 = vld [vmem:[%s758 + $0x4ec] sm:%s751]
                  %1085 = vst [vmem:[%s759 + $0x288] sm:%s751] %v1084
                  %v1086 = vld [vmem:[%s758 + $0x4f0] sm:%s751]
                  %1087 = vst [vmem:[%s759 + $0x28c] sm:%s751] %v1086
                  %v1088 = vld [vmem:[%s758 + $0x4f4] sm:%s751]
                  %1089 = vst [vmem:[%s759 + $0x290] sm:%s751] %v1088
                  %v1090 = vld [vmem:[%s758 + $0x4f8] sm:%s751]
                  %1091 = vst [vmem:[%s759 + $0x294] sm:%s751] %v1090
                  %v1092 = vld [vmem:[%s758 + $0x4fc] sm:%s751]
                  %1093 = vst [vmem:[%s759 + $0x298] sm:%s751] %v1092
                  %v1094 = vld [vmem:[%s758 + $0x500] sm:%s751]
                  %1095 = vst [vmem:[%s759 + $0x29c] sm:%s751] %v1094
                  %v1096 = vld [vmem:[%s758 + $0x504] sm:%s751]
                  %1097 = vst [vmem:[%s759 + $0x2a0] sm:%s751] %v1096
                  %v1098 = vld [vmem:[%s758 + $0x508] sm:%s751]
                  %1099 = vst [vmem:[%s759 + $0x2a4] sm:%s751] %v1098
                  %v1100 = vld [vmem:[%s758 + $0x50c] sm:%s751]
                  %1101 = vst [vmem:[%s759 + $0x2a8] sm:%s751] %v1100
                  %v1102 = vld [vmem:[%s758 + $0x510] sm:%s751]
                  %1103 = vst [vmem:[%s759 + $0x2ac] sm:%s751] %v1102
                  %v1104 = vld [vmem:[%s758 + $0x514] sm:%s751]
                  %1105 = vst [vmem:[%s759 + $0x2b0] sm:%s751] %v1104
                  %v1106 = vld [vmem:[%s758 + $0x518] sm:%s751]
                  %1107 = vst [vmem:[%s759 + $0x2b4] sm:%s751] %v1106
                  %v1108 = vld [vmem:[%s758 + $0x51c] sm:%s751]
                  %1109 = vst [vmem:[%s759 + $0x2b8] sm:%s751] %v1108
                  %v1110 = vld [vmem:[%s758 + $0x520] sm:%s751]
                  %1111 = vst [vmem:[%s759 + $0x2bc] sm:%s751] %v1110
                  %v1112 = vld [vmem:[%s758 + $0x524] sm:%s751]
                  %1113 = vst [vmem:[%s759 + $0x2c0] sm:%s751] %v1112
                  %v1114 = vld [vmem:[%s758 + $0x528] sm:%s751]
                  %1115 = vst [vmem:[%s759 + $0x2c4] sm:%s751] %v1114
                  %v1116 = vld [vmem:[%s758 + $0x52c] sm:%s751]
                  %1117 = vst [vmem:[%s759 + $0x2c8] sm:%s751] %v1116
                  %v1118 = vld [vmem:[%s758 + $0x530] sm:%s751]
                  %1119 = vst [vmem:[%s759 + $0x2cc] sm:%s751] %v1118
                  %v1120 = vld [vmem:[%s758 + $0x534] sm:%s751]
                  %1121 = vst [vmem:[%s759 + $0x2d0] sm:%s751] %v1120
                  %v1122 = vld [vmem:[%s758 + $0x538] sm:%s751]
                  %1123 = vst [vmem:[%s759 + $0x2d4] sm:%s751] %v1122
                  %v1124 = vld [vmem:[%s758 + $0x53c] sm:%s751]
                  %1125 = vst [vmem:[%s759 + $0x2d8] sm:%s751] %v1124
                  %v1126 = vld [vmem:[%s758 + $0x540] sm:%s751]
                  %1127 = vst [vmem:[%s759 + $0x2dc] sm:%s751] %v1126
                  %v1128 = vld [vmem:[%s758 + $0x544] sm:%s751]
                  %1129 = vst [vmem:[%s759 + $0x2e0] sm:%s751] %v1128
                  %v1130 = vld [vmem:[%s758 + $0x548] sm:%s751]
                  %1131 = vst [vmem:[%s759 + $0x2e4] sm:%s751] %v1130
                  %v1132 = vld [vmem:[%s758 + $0x54c] sm:%s751]
                  %1133 = vst [vmem:[%s759 + $0x2e8] sm:%s751] %v1132
                  %v1134 = vld [vmem:[%s758 + $0x550] sm:%s751]
                  %1135 = vst [vmem:[%s759 + $0x2ec] sm:%s751] %v1134
                  %v1136 = vld [vmem:[%s758 + $0x554] sm:%s751]
                  %1137 = vst [vmem:[%s759 + $0x2f0] sm:%s751] %v1136
                  %v1138 = vld [vmem:[%s758 + $0x558] sm:%s751]
                  %1139 = vst [vmem:[%s759 + $0x2f4] sm:%s751] %v1138
                  %v1140 = vld [vmem:[%s758 + $0x55c] sm:%s751]
                  %1141 = vst [vmem:[%s759 + $0x2f8] sm:%s751] %v1140
                  %v1142 = vld [vmem:[%s758 + $0x560] sm:%s751]
                  %1143 = vst [vmem:[%s759 + $0x2fc] sm:%s751] %v1142
                  %v1144 = vld [vmem:[%s758 + $0x564] sm:%s751]
                  %1145 = vst [vmem:[%s759 + $0x300] sm:%s751] %v1144
                  %v1146 = vld [vmem:[%s758 + $0x568] sm:%s751]
                  %1147 = vst [vmem:[%s759 + $0x304] sm:%s751] %v1146
                  %v1148 = vld [vmem:[%s758 + $0x56c] sm:%s751]
                  %1149 = vst [vmem:[%s759 + $0x308] sm:%s751] %v1148
                  %v1150 = vld [vmem:[%s758 + $0x570] sm:%s751]
                  %1151 = vst [vmem:[%s759 + $0x30c] sm:%s751] %v1150
                  %v1152 = vld [vmem:[%s758 + $0x574] sm:%s751]
                  %1153 = vst [vmem:[%s759 + $0x310] sm:%s751] %v1152
                  %v1154 = vld [vmem:[%s758 + $0x578] sm:%s751]
                  %1155 = vst [vmem:[%s759 + $0x314] sm:%s751] %v1154
                  %v1156 = vld [vmem:[%s758 + $0x57c] sm:%s751]
                  %1157 = vst [vmem:[%s759 + $0x318] sm:%s751] %v1156
                  %v1158 = vld [vmem:[%s758 + $0x580] sm:%s751]
                  %1159 = vst [vmem:[%s759 + $0x31c] sm:%s751] %v1158
                  %v1160 = vld [vmem:[%s758 + $0x584] sm:%s751]
                  %1161 = vst [vmem:[%s759 + $0x320] sm:%s751] %v1160
                  %v1162 = vld [vmem:[%s758 + $0x588] sm:%s751]
                  %1163 = vst [vmem:[%s759 + $0x324] sm:%s751] %v1162
                  %v1164 = vld [vmem:[%s758 + $0x58c] sm:%s751]
                  %1165 = vst [vmem:[%s759 + $0x328] sm:%s751] %v1164
                  %v1166 = vld [vmem:[%s758 + $0x590] sm:%s751]
                  %1167 = vst [vmem:[%s759 + $0x32c] sm:%s751] %v1166
                $region91: #{tpu_custom_call.1} parent=78 // loop_footer
                  %s757 = sadd.s32 1, %s753
                $region92: #{tpu_custom_call.1} parent=78 // loop_footer_branch
                  %752 = sbr.rel target = $region88
                $region93: #{tpu_custom_call.1} parent=78 // loop_exit
                  _
              $region79: #{tpu_custom_call.1} parent=63 // pred_fallthru
                _
            $region64: #{tpu_custom_call.1} parent=59 // pred_fallthru
              _
            // Predicated region
            $region65: #{tpu_custom_call.1} parent=59 // pred_check
              _
            $region66: #{tpu_custom_call.1} parent=59 // pred_check_branch
              %321 = sbr.rel (0) target = $region68
            $region67: #{tpu_custom_call.1} parent=59 // pred_region
              %s323 = ssub.s32 16, 1
              loop: start=0, step=1, limit=1
              $region69: #{tpu_custom_call.1} parent=67 // loop_pre_header
                _
              $region70: #{tpu_custom_call.1} parent=67 // loop_header
                %s325 = sphi 0, %s329
                %p326 = scmp.ge.s32.totalorder %s325, 1
                %s330 = sphi %s315, %s315
                %s331 = sphi %s312, %s312
              $region71: #{tpu_custom_call.1} parent=67 // loop_header_branch
                %328 = sbr.rel (%p326) target = $region75
              $region72: #{tpu_custom_call.1} parent=67 // loop_body
                %v332 = vld [vmem:[%s330] sm:%s323]
                %333 = vst [vmem:[%s331] sm:%s323] %v332
                %v334 = vld [vmem:[%s330 + $0x4] sm:%s323]
                %335 = vst [vmem:[%s331 + $0x4] sm:%s323] %v334
                %v336 = vld [vmem:[%s330 + $0x8] sm:%s323]
                %337 = vst [vmem:[%s331 + $0x8] sm:%s323] %v336
                %v338 = vld [vmem:[%s330 + $0xc] sm:%s323]
                %339 = vst [vmem:[%s331 + $0xc] sm:%s323] %v338
                %v340 = vld [vmem:[%s330 + $0x10] sm:%s323]
                %341 = vst [vmem:[%s331 + $0x10] sm:%s323] %v340
                %v342 = vld [vmem:[%s330 + $0x14] sm:%s323]
                %343 = vst [vmem:[%s331 + $0x14] sm:%s323] %v342
                %v344 = vld [vmem:[%s330 + $0x18] sm:%s323]
                %345 = vst [vmem:[%s331 + $0x18] sm:%s323] %v344
                %v346 = vld [vmem:[%s330 + $0x1c] sm:%s323]
                %347 = vst [vmem:[%s331 + $0x1c] sm:%s323] %v346
                %v348 = vld [vmem:[%s330 + $0x20] sm:%s323]
                %349 = vst [vmem:[%s331 + $0x20] sm:%s323] %v348
                %v350 = vld [vmem:[%s330 + $0x24] sm:%s323]
                %351 = vst [vmem:[%s331 + $0x24] sm:%s323] %v350
                %v352 = vld [vmem:[%s330 + $0x28] sm:%s323]
                %353 = vst [vmem:[%s331 + $0x28] sm:%s323] %v352
                %v354 = vld [vmem:[%s330 + $0x2c] sm:%s323]
                %355 = vst [vmem:[%s331 + $0x2c] sm:%s323] %v354
                %v356 = vld [vmem:[%s330 + $0x30] sm:%s323]
                %357 = vst [vmem:[%s331 + $0x30] sm:%s323] %v356
                %v358 = vld [vmem:[%s330 + $0x34] sm:%s323]
                %359 = vst [vmem:[%s331 + $0x34] sm:%s323] %v358
                %v360 = vld [vmem:[%s330 + $0x38] sm:%s323]
                %361 = vst [vmem:[%s331 + $0x38] sm:%s323] %v360
                %v362 = vld [vmem:[%s330 + $0x3c] sm:%s323]
                %363 = vst [vmem:[%s331 + $0x3c] sm:%s323] %v362
                %v364 = vld [vmem:[%s330 + $0x40] sm:%s323]
                %365 = vst [vmem:[%s331 + $0x40] sm:%s323] %v364
                %v366 = vld [vmem:[%s330 + $0x44] sm:%s323]
                %367 = vst [vmem:[%s331 + $0x44] sm:%s323] %v366
                %v368 = vld [vmem:[%s330 + $0x48] sm:%s323]
                %369 = vst [vmem:[%s331 + $0x48] sm:%s323] %v368
                %v370 = vld [vmem:[%s330 + $0x4c] sm:%s323]
                %371 = vst [vmem:[%s331 + $0x4c] sm:%s323] %v370
                %v372 = vld [vmem:[%s330 + $0x50] sm:%s323]
                %373 = vst [vmem:[%s331 + $0x50] sm:%s323] %v372
                %v374 = vld [vmem:[%s330 + $0x54] sm:%s323]
                %375 = vst [vmem:[%s331 + $0x54] sm:%s323] %v374
                %v376 = vld [vmem:[%s330 + $0x58] sm:%s323]
                %377 = vst [vmem:[%s331 + $0x58] sm:%s323] %v376
                %v378 = vld [vmem:[%s330 + $0x5c] sm:%s323]
                %379 = vst [vmem:[%s331 + $0x5c] sm:%s323] %v378
                %v380 = vld [vmem:[%s330 + $0x60] sm:%s323]
                %381 = vst [vmem:[%s331 + $0x60] sm:%s323] %v380
                %v382 = vld [vmem:[%s330 + $0x64] sm:%s323]
                %383 = vst [vmem:[%s331 + $0x64] sm:%s323] %v382
                %v384 = vld [vmem:[%s330 + $0x68] sm:%s323]
                %385 = vst [vmem:[%s331 + $0x68] sm:%s323] %v384
                %v386 = vld [vmem:[%s330 + $0x6c] sm:%s323]
                %387 = vst [vmem:[%s331 + $0x6c] sm:%s323] %v386
                %v388 = vld [vmem:[%s330 + $0x70] sm:%s323]
                %389 = vst [vmem:[%s331 + $0x70] sm:%s323] %v388
                %v390 = vld [vmem:[%s330 + $0x74] sm:%s323]
                %391 = vst [vmem:[%s331 + $0x74] sm:%s323] %v390
                %v392 = vld [vmem:[%s330 + $0x78] sm:%s323]
                %393 = vst [vmem:[%s331 + $0x78] sm:%s323] %v392
                %v394 = vld [vmem:[%s330 + $0x7c] sm:%s323]
                %395 = vst [vmem:[%s331 + $0x7c] sm:%s323] %v394
                %v396 = vld [vmem:[%s330 + $0x80] sm:%s323]
                %397 = vst [vmem:[%s331 + $0x80] sm:%s323] %v396
                %v398 = vld [vmem:[%s330 + $0x84] sm:%s323]
                %399 = vst [vmem:[%s331 + $0x84] sm:%s323] %v398
                %v400 = vld [vmem:[%s330 + $0x88] sm:%s323]
                %401 = vst [vmem:[%s331 + $0x88] sm:%s323] %v400
                %v402 = vld [vmem:[%s330 + $0x8c] sm:%s323]
                %403 = vst [vmem:[%s331 + $0x8c] sm:%s323] %v402
                %v404 = vld [vmem:[%s330 + $0x90] sm:%s323]
                %405 = vst [vmem:[%s331 + $0x90] sm:%s323] %v404
                %v406 = vld [vmem:[%s330 + $0x94] sm:%s323]
                %407 = vst [vmem:[%s331 + $0x94] sm:%s323] %v406
                %v408 = vld [vmem:[%s330 + $0x98] sm:%s323]
                %409 = vst [vmem:[%s331 + $0x98] sm:%s323] %v408
                %v410 = vld [vmem:[%s330 + $0x9c] sm:%s323]
                %411 = vst [vmem:[%s331 + $0x9c] sm:%s323] %v410
                %v412 = vld [vmem:[%s330 + $0xa0] sm:%s323]
                %413 = vst [vmem:[%s331 + $0xa0] sm:%s323] %v412
                %v414 = vld [vmem:[%s330 + $0xa4] sm:%s323]
                %415 = vst [vmem:[%s331 + $0xa4] sm:%s323] %v414
                %v416 = vld [vmem:[%s330 + $0xa8] sm:%s323]
                %417 = vst [vmem:[%s331 + $0xa8] sm:%s323] %v416
                %v418 = vld [vmem:[%s330 + $0xac] sm:%s323]
                %419 = vst [vmem:[%s331 + $0xac] sm:%s323] %v418
                %v420 = vld [vmem:[%s330 + $0xb0] sm:%s323]
                %421 = vst [vmem:[%s331 + $0xb0] sm:%s323] %v420
                %v422 = vld [vmem:[%s330 + $0xb4] sm:%s323]
                %423 = vst [vmem:[%s331 + $0xb4] sm:%s323] %v422
                %v424 = vld [vmem:[%s330 + $0xb8] sm:%s323]
                %425 = vst [vmem:[%s331 + $0xb8] sm:%s323] %v424
                %v426 = vld [vmem:[%s330 + $0xbc] sm:%s323]
                %427 = vst [vmem:[%s331 + $0xbc] sm:%s323] %v426
                %v428 = vld [vmem:[%s330 + $0xc0] sm:%s323]
                %429 = vst [vmem:[%s331 + $0xc0] sm:%s323] %v428
                %v430 = vld [vmem:[%s330 + $0xc4] sm:%s323]
                %431 = vst [vmem:[%s331 + $0xc4] sm:%s323] %v430
                %v432 = vld [vmem:[%s330 + $0xc8] sm:%s323]
                %433 = vst [vmem:[%s331 + $0xc8] sm:%s323] %v432
                %v434 = vld [vmem:[%s330 + $0x198] sm:%s323]
                %435 = vst [vmem:[%s331 + $0xcc] sm:%s323] %v434
                %v436 = vld [vmem:[%s330 + $0x19c] sm:%s323]
                %437 = vst [vmem:[%s331 + $0xd0] sm:%s323] %v436
                %v438 = vld [vmem:[%s330 + $0x1a0] sm:%s323]
                %439 = vst [vmem:[%s331 + $0xd4] sm:%s323] %v438
                %v440 = vld [vmem:[%s330 + $0x1a4] sm:%s323]
                %441 = vst [vmem:[%s331 + $0xd8] sm:%s323] %v440
                %v442 = vld [vmem:[%s330 + $0x1a8] sm:%s323]
                %443 = vst [vmem:[%s331 + $0xdc] sm:%s323] %v442
                %v444 = vld [vmem:[%s330 + $0x1ac] sm:%s323]
                %445 = vst [vmem:[%s331 + $0xe0] sm:%s323] %v444
                %v446 = vld [vmem:[%s330 + $0x1b0] sm:%s323]
                %447 = vst [vmem:[%s331 + $0xe4] sm:%s323] %v446
                %v448 = vld [vmem:[%s330 + $0x1b4] sm:%s323]
                %449 = vst [vmem:[%s331 + $0xe8] sm:%s323] %v448
                %v450 = vld [vmem:[%s330 + $0x1b8] sm:%s323]
                %451 = vst [vmem:[%s331 + $0xec] sm:%s323] %v450
                %v452 = vld [vmem:[%s330 + $0x1bc] sm:%s323]
                %453 = vst [vmem:[%s331 + $0xf0] sm:%s323] %v452
                %v454 = vld [vmem:[%s330 + $0x1c0] sm:%s323]
                %455 = vst [vmem:[%s331 + $0xf4] sm:%s323] %v454
                %v456 = vld [vmem:[%s330 + $0x1c4] sm:%s323]
                %457 = vst [vmem:[%s331 + $0xf8] sm:%s323] %v456
                %v458 = vld [vmem:[%s330 + $0x1c8] sm:%s323]
                %459 = vst [vmem:[%s331 + $0xfc] sm:%s323] %v458
                %v460 = vld [vmem:[%s330 + $0x1cc] sm:%s323]
                %461 = vst [vmem:[%s331 + $0x100] sm:%s323] %v460
                %v462 = vld [vmem:[%s330 + $0x1d0] sm:%s323]
                %463 = vst [vmem:[%s331 + $0x104] sm:%s323] %v462
                %v464 = vld [vmem:[%s330 + $0x1d4] sm:%s323]
                %465 = vst [vmem:[%s331 + $0x108] sm:%s323] %v464
                %v466 = vld [vmem:[%s330 + $0x1d8] sm:%s323]
                %467 = vst [vmem:[%s331 + $0x10c] sm:%s323] %v466
                %v468 = vld [vmem:[%s330 + $0x1dc] sm:%s323]
                %469 = vst [vmem:[%s331 + $0x110] sm:%s323] %v468
                %v470 = vld [vmem:[%s330 + $0x1e0] sm:%s323]
                %471 = vst [vmem:[%s331 + $0x114] sm:%s323] %v470
                %v472 = vld [vmem:[%s330 + $0x1e4] sm:%s323]
                %473 = vst [vmem:[%s331 + $0x118] sm:%s323] %v472
                %v474 = vld [vmem:[%s330 + $0x1e8] sm:%s323]
                %475 = vst [vmem:[%s331 + $0x11c] sm:%s323] %v474
                %v476 = vld [vmem:[%s330 + $0x1ec] sm:%s323]
                %477 = vst [vmem:[%s331 + $0x120] sm:%s323] %v476
                %v478 = vld [vmem:[%s330 + $0x1f0] sm:%s323]
                %479 = vst [vmem:[%s331 + $0x124] sm:%s323] %v478
                %v480 = vld [vmem:[%s330 + $0x1f4] sm:%s323]
                %481 = vst [vmem:[%s331 + $0x128] sm:%s323] %v480
                %v482 = vld [vmem:[%s330 + $0x1f8] sm:%s323]
                %483 = vst [vmem:[%s331 + $0x12c] sm:%s323] %v482
                %v484 = vld [vmem:[%s330 + $0x1fc] sm:%s323]
                %485 = vst [vmem:[%s331 + $0x130] sm:%s323] %v484
                %v486 = vld [vmem:[%s330 + $0x200] sm:%s323]
                %487 = vst [vmem:[%s331 + $0x134] sm:%s323] %v486
                %v488 = vld [vmem:[%s330 + $0x204] sm:%s323]
                %489 = vst [vmem:[%s331 + $0x138] sm:%s323] %v488
                %v490 = vld [vmem:[%s330 + $0x208] sm:%s323]
                %491 = vst [vmem:[%s331 + $0x13c] sm:%s323] %v490
                %v492 = vld [vmem:[%s330 + $0x20c] sm:%s323]
                %493 = vst [vmem:[%s331 + $0x140] sm:%s323] %v492
                %v494 = vld [vmem:[%s330 + $0x210] sm:%s323]
                %495 = vst [vmem:[%s331 + $0x144] sm:%s323] %v494
                %v496 = vld [vmem:[%s330 + $0x214] sm:%s323]
                %497 = vst [vmem:[%s331 + $0x148] sm:%s323] %v496
                %v498 = vld [vmem:[%s330 + $0x218] sm:%s323]
                %499 = vst [vmem:[%s331 + $0x14c] sm:%s323] %v498
                %v500 = vld [vmem:[%s330 + $0x21c] sm:%s323]
                %501 = vst [vmem:[%s331 + $0x150] sm:%s323] %v500
                %v502 = vld [vmem:[%s330 + $0x220] sm:%s323]
                %503 = vst [vmem:[%s331 + $0x154] sm:%s323] %v502
                %v504 = vld [vmem:[%s330 + $0x224] sm:%s323]
                %505 = vst [vmem:[%s331 + $0x158] sm:%s323] %v504
                %v506 = vld [vmem:[%s330 + $0x228] sm:%s323]
                %507 = vst [vmem:[%s331 + $0x15c] sm:%s323] %v506
                %v508 = vld [vmem:[%s330 + $0x22c] sm:%s323]
                %509 = vst [vmem:[%s331 + $0x160] sm:%s323] %v508
                %v510 = vld [vmem:[%s330 + $0x230] sm:%s323]
                %511 = vst [vmem:[%s331 + $0x164] sm:%s323] %v510
                %v512 = vld [vmem:[%s330 + $0x234] sm:%s323]
                %513 = vst [vmem:[%s331 + $0x168] sm:%s323] %v512
                %v514 = vld [vmem:[%s330 + $0x238] sm:%s323]
                %515 = vst [vmem:[%s331 + $0x16c] sm:%s323] %v514
                %v516 = vld [vmem:[%s330 + $0x23c] sm:%s323]
                %517 = vst [vmem:[%s331 + $0x170] sm:%s323] %v516
                %v518 = vld [vmem:[%s330 + $0x240] sm:%s323]
                %519 = vst [vmem:[%s331 + $0x174] sm:%s323] %v518
                %v520 = vld [vmem:[%s330 + $0x244] sm:%s323]
                %521 = vst [vmem:[%s331 + $0x178] sm:%s323] %v520
                %v522 = vld [vmem:[%s330 + $0x248] sm:%s323]
                %523 = vst [vmem:[%s331 + $0x17c] sm:%s323] %v522
                %v524 = vld [vmem:[%s330 + $0x24c] sm:%s323]
                %525 = vst [vmem:[%s331 + $0x180] sm:%s323] %v524
                %v526 = vld [vmem:[%s330 + $0x250] sm:%s323]
                %527 = vst [vmem:[%s331 + $0x184] sm:%s323] %v526
                %v528 = vld [vmem:[%s330 + $0x254] sm:%s323]
                %529 = vst [vmem:[%s331 + $0x188] sm:%s323] %v528
                %v530 = vld [vmem:[%s330 + $0x258] sm:%s323]
                %531 = vst [vmem:[%s331 + $0x18c] sm:%s323] %v530
                %v532 = vld [vmem:[%s330 + $0x25c] sm:%s323]
                %533 = vst [vmem:[%s331 + $0x190] sm:%s323] %v532
                %v534 = vld [vmem:[%s330 + $0x260] sm:%s323]
                %535 = vst [vmem:[%s331 + $0x194] sm:%s323] %v534
                %v536 = vld [vmem:[%s330 + $0x330] sm:%s323]
                %537 = vst [vmem:[%s331 + $0x198] sm:%s323] %v536
                %v538 = vld [vmem:[%s330 + $0x334] sm:%s323]
                %539 = vst [vmem:[%s331 + $0x19c] sm:%s323] %v538
                %v540 = vld [vmem:[%s330 + $0x338] sm:%s323]
                %541 = vst [vmem:[%s331 + $0x1a0] sm:%s323] %v540
                %v542 = vld [vmem:[%s330 + $0x33c] sm:%s323]
                %543 = vst [vmem:[%s331 + $0x1a4] sm:%s323] %v542
                %v544 = vld [vmem:[%s330 + $0x340] sm:%s323]
                %545 = vst [vmem:[%s331 + $0x1a8] sm:%s323] %v544
                %v546 = vld [vmem:[%s330 + $0x344] sm:%s323]
                %547 = vst [vmem:[%s331 + $0x1ac] sm:%s323] %v546
                %v548 = vld [vmem:[%s330 + $0x348] sm:%s323]
                %549 = vst [vmem:[%s331 + $0x1b0] sm:%s323] %v548
                %v550 = vld [vmem:[%s330 + $0x34c] sm:%s323]
                %551 = vst [vmem:[%s331 + $0x1b4] sm:%s323] %v550
                %v552 = vld [vmem:[%s330 + $0x350] sm:%s323]
                %553 = vst [vmem:[%s331 + $0x1b8] sm:%s323] %v552
                %v554 = vld [vmem:[%s330 + $0x354] sm:%s323]
                %555 = vst [vmem:[%s331 + $0x1bc] sm:%s323] %v554
                %v556 = vld [vmem:[%s330 + $0x358] sm:%s323]
                %557 = vst [vmem:[%s331 + $0x1c0] sm:%s323] %v556
                %v558 = vld [vmem:[%s330 + $0x35c] sm:%s323]
                %559 = vst [vmem:[%s331 + $0x1c4] sm:%s323] %v558
                %v560 = vld [vmem:[%s330 + $0x360] sm:%s323]
                %561 = vst [vmem:[%s331 + $0x1c8] sm:%s323] %v560
                %v562 = vld [vmem:[%s330 + $0x364] sm:%s323]
                %563 = vst [vmem:[%s331 + $0x1cc] sm:%s323] %v562
                %v564 = vld [vmem:[%s330 + $0x368] sm:%s323]
                %565 = vst [vmem:[%s331 + $0x1d0] sm:%s323] %v564
                %v566 = vld [vmem:[%s330 + $0x36c] sm:%s323]
                %567 = vst [vmem:[%s331 + $0x1d4] sm:%s323] %v566
                %v568 = vld [vmem:[%s330 + $0x370] sm:%s323]
                %569 = vst [vmem:[%s331 + $0x1d8] sm:%s323] %v568
                %v570 = vld [vmem:[%s330 + $0x374] sm:%s323]
                %571 = vst [vmem:[%s331 + $0x1dc] sm:%s323] %v570
                %v572 = vld [vmem:[%s330 + $0x378] sm:%s323]
                %573 = vst [vmem:[%s331 + $0x1e0] sm:%s323] %v572
                %v574 = vld [vmem:[%s330 + $0x37c] sm:%s323]
                %575 = vst [vmem:[%s331 + $0x1e4] sm:%s323] %v574
                %v576 = vld [vmem:[%s330 + $0x380] sm:%s323]
                %577 = vst [vmem:[%s331 + $0x1e8] sm:%s323] %v576
                %v578 = vld [vmem:[%s330 + $0x384] sm:%s323]
                %579 = vst [vmem:[%s331 + $0x1ec] sm:%s323] %v578
                %v580 = vld [vmem:[%s330 + $0x388] sm:%s323]
                %581 = vst [vmem:[%s331 + $0x1f0] sm:%s323] %v580
                %v582 = vld [vmem:[%s330 + $0x38c] sm:%s323]
                %583 = vst [vmem:[%s331 + $0x1f4] sm:%s323] %v582
                %v584 = vld [vmem:[%s330 + $0x390] sm:%s323]
                %585 = vst [vmem:[%s331 + $0x1f8] sm:%s323] %v584
                %v586 = vld [vmem:[%s330 + $0x394] sm:%s323]
                %587 = vst [vmem:[%s331 + $0x1fc] sm:%s323] %v586
                %v588 = vld [vmem:[%s330 + $0x398] sm:%s323]
                %589 = vst [vmem:[%s331 + $0x200] sm:%s323] %v588
                %v590 = vld [vmem:[%s330 + $0x39c] sm:%s323]
                %591 = vst [vmem:[%s331 + $0x204] sm:%s323] %v590
                %v592 = vld [vmem:[%s330 + $0x3a0] sm:%s323]
                %593 = vst [vmem:[%s331 + $0x208] sm:%s323] %v592
                %v594 = vld [vmem:[%s330 + $0x3a4] sm:%s323]
                %595 = vst [vmem:[%s331 + $0x20c] sm:%s323] %v594
                %v596 = vld [vmem:[%s330 + $0x3a8] sm:%s323]
                %597 = vst [vmem:[%s331 + $0x210] sm:%s323] %v596
                %v598 = vld [vmem:[%s330 + $0x3ac] sm:%s323]
                %599 = vst [vmem:[%s331 + $0x214] sm:%s323] %v598
                %v600 = vld [vmem:[%s330 + $0x3b0] sm:%s323]
                %601 = vst [vmem:[%s331 + $0x218] sm:%s323] %v600
                %v602 = vld [vmem:[%s330 + $0x3b4] sm:%s323]
                %603 = vst [vmem:[%s331 + $0x21c] sm:%s323] %v602
                %v604 = vld [vmem:[%s330 + $0x3b8] sm:%s323]
                %605 = vst [vmem:[%s331 + $0x220] sm:%s323] %v604
                %v606 = vld [vmem:[%s330 + $0x3bc] sm:%s323]
                %607 = vst [vmem:[%s331 + $0x224] sm:%s323] %v606
                %v608 = vld [vmem:[%s330 + $0x3c0] sm:%s323]
                %609 = vst [vmem:[%s331 + $0x228] sm:%s323] %v608
                %v610 = vld [vmem:[%s330 + $0x3c4] sm:%s323]
                %611 = vst [vmem:[%s331 + $0x22c] sm:%s323] %v610
                %v612 = vld [vmem:[%s330 + $0x3c8] sm:%s323]
                %613 = vst [vmem:[%s331 + $0x230] sm:%s323] %v612
                %v614 = vld [vmem:[%s330 + $0x3cc] sm:%s323]
                %615 = vst [vmem:[%s331 + $0x234] sm:%s323] %v614
                %v616 = vld [vmem:[%s330 + $0x3d0] sm:%s323]
                %617 = vst [vmem:[%s331 + $0x238] sm:%s323] %v616
                %v618 = vld [vmem:[%s330 + $0x3d4] sm:%s323]
                %619 = vst [vmem:[%s331 + $0x23c] sm:%s323] %v618
                %v620 = vld [vmem:[%s330 + $0x3d8] sm:%s323]
                %621 = vst [vmem:[%s331 + $0x240] sm:%s323] %v620
                %v622 = vld [vmem:[%s330 + $0x3dc] sm:%s323]
                %623 = vst [vmem:[%s331 + $0x244] sm:%s323] %v622
                %v624 = vld [vmem:[%s330 + $0x3e0] sm:%s323]
                %625 = vst [vmem:[%s331 + $0x248] sm:%s323] %v624
                %v626 = vld [vmem:[%s330 + $0x3e4] sm:%s323]
                %627 = vst [vmem:[%s331 + $0x24c] sm:%s323] %v626
                %v628 = vld [vmem:[%s330 + $0x3e8] sm:%s323]
                %629 = vst [vmem:[%s331 + $0x250] sm:%s323] %v628
                %v630 = vld [vmem:[%s330 + $0x3ec] sm:%s323]
                %631 = vst [vmem:[%s331 + $0x254] sm:%s323] %v630
                %v632 = vld [vmem:[%s330 + $0x3f0] sm:%s323]
                %633 = vst [vmem:[%s331 + $0x258] sm:%s323] %v632
                %v634 = vld [vmem:[%s330 + $0x3f4] sm:%s323]
                %635 = vst [vmem:[%s331 + $0x25c] sm:%s323] %v634
                %v636 = vld [vmem:[%s330 + $0x3f8] sm:%s323]
                %637 = vst [vmem:[%s331 + $0x260] sm:%s323] %v636
                %v638 = vld [vmem:[%s330 + $0x4c8] sm:%s323]
                %639 = vst [vmem:[%s331 + $0x264] sm:%s323] %v638
                %v640 = vld [vmem:[%s330 + $0x4cc] sm:%s323]
                %641 = vst [vmem:[%s331 + $0x268] sm:%s323] %v640
                %v642 = vld [vmem:[%s330 + $0x4d0] sm:%s323]
                %643 = vst [vmem:[%s331 + $0x26c] sm:%s323] %v642
                %v644 = vld [vmem:[%s330 + $0x4d4] sm:%s323]
                %645 = vst [vmem:[%s331 + $0x270] sm:%s323] %v644
                %v646 = vld [vmem:[%s330 + $0x4d8] sm:%s323]
                %647 = vst [vmem:[%s331 + $0x274] sm:%s323] %v646
                %v648 = vld [vmem:[%s330 + $0x4dc] sm:%s323]
                %649 = vst [vmem:[%s331 + $0x278] sm:%s323] %v648
                %v650 = vld [vmem:[%s330 + $0x4e0] sm:%s323]
                %651 = vst [vmem:[%s331 + $0x27c] sm:%s323] %v650
                %v652 = vld [vmem:[%s330 + $0x4e4] sm:%s323]
                %653 = vst [vmem:[%s331 + $0x280] sm:%s323] %v652
                %v654 = vld [vmem:[%s330 + $0x4e8] sm:%s323]
                %655 = vst [vmem:[%s331 + $0x284] sm:%s323] %v654
                %v656 = vld [vmem:[%s330 + $0x4ec] sm:%s323]
                %657 = vst [vmem:[%s331 + $0x288] sm:%s323] %v656
                %v658 = vld [vmem:[%s330 + $0x4f0] sm:%s323]
                %659 = vst [vmem:[%s331 + $0x28c] sm:%s323] %v658
                %v660 = vld [vmem:[%s330 + $0x4f4] sm:%s323]
                %661 = vst [vmem:[%s331 + $0x290] sm:%s323] %v660
                %v662 = vld [vmem:[%s330 + $0x4f8] sm:%s323]
                %663 = vst [vmem:[%s331 + $0x294] sm:%s323] %v662
                %v664 = vld [vmem:[%s330 + $0x4fc] sm:%s323]
                %665 = vst [vmem:[%s331 + $0x298] sm:%s323] %v664
                %v666 = vld [vmem:[%s330 + $0x500] sm:%s323]
                %667 = vst [vmem:[%s331 + $0x29c] sm:%s323] %v666
                %v668 = vld [vmem:[%s330 + $0x504] sm:%s323]
                %669 = vst [vmem:[%s331 + $0x2a0] sm:%s323] %v668
                %v670 = vld [vmem:[%s330 + $0x508] sm:%s323]
                %671 = vst [vmem:[%s331 + $0x2a4] sm:%s323] %v670
                %v672 = vld [vmem:[%s330 + $0x50c] sm:%s323]
                %673 = vst [vmem:[%s331 + $0x2a8] sm:%s323] %v672
                %v674 = vld [vmem:[%s330 + $0x510] sm:%s323]
                %675 = vst [vmem:[%s331 + $0x2ac] sm:%s323] %v674
                %v676 = vld [vmem:[%s330 + $0x514] sm:%s323]
                %677 = vst [vmem:[%s331 + $0x2b0] sm:%s323] %v676
                %v678 = vld [vmem:[%s330 + $0x518] sm:%s323]
                %679 = vst [vmem:[%s331 + $0x2b4] sm:%s323] %v678
                %v680 = vld [vmem:[%s330 + $0x51c] sm:%s323]
                %681 = vst [vmem:[%s331 + $0x2b8] sm:%s323] %v680
                %v682 = vld [vmem:[%s330 + $0x520] sm:%s323]
                %683 = vst [vmem:[%s331 + $0x2bc] sm:%s323] %v682
                %v684 = vld [vmem:[%s330 + $0x524] sm:%s323]
                %685 = vst [vmem:[%s331 + $0x2c0] sm:%s323] %v684
                %v686 = vld [vmem:[%s330 + $0x528] sm:%s323]
                %687 = vst [vmem:[%s331 + $0x2c4] sm:%s323] %v686
                %v688 = vld [vmem:[%s330 + $0x52c] sm:%s323]
                %689 = vst [vmem:[%s331 + $0x2c8] sm:%s323] %v688
                %v690 = vld [vmem:[%s330 + $0x530] sm:%s323]
                %691 = vst [vmem:[%s331 + $0x2cc] sm:%s323] %v690
                %v692 = vld [vmem:[%s330 + $0x534] sm:%s323]
                %693 = vst [vmem:[%s331 + $0x2d0] sm:%s323] %v692
                %v694 = vld [vmem:[%s330 + $0x538] sm:%s323]
                %695 = vst [vmem:[%s331 + $0x2d4] sm:%s323] %v694
                %v696 = vld [vmem:[%s330 + $0x53c] sm:%s323]
                %697 = vst [vmem:[%s331 + $0x2d8] sm:%s323] %v696
                %v698 = vld [vmem:[%s330 + $0x540] sm:%s323]
                %699 = vst [vmem:[%s331 + $0x2dc] sm:%s323] %v698
                %v700 = vld [vmem:[%s330 + $0x544] sm:%s323]
                %701 = vst [vmem:[%s331 + $0x2e0] sm:%s323] %v700
                %v702 = vld [vmem:[%s330 + $0x548] sm:%s323]
                %703 = vst [vmem:[%s331 + $0x2e4] sm:%s323] %v702
                %v704 = vld [vmem:[%s330 + $0x54c] sm:%s323]
                %705 = vst [vmem:[%s331 + $0x2e8] sm:%s323] %v704
                %v706 = vld [vmem:[%s330 + $0x550] sm:%s323]
                %707 = vst [vmem:[%s331 + $0x2ec] sm:%s323] %v706
                %v708 = vld [vmem:[%s330 + $0x554] sm:%s323]
                %709 = vst [vmem:[%s331 + $0x2f0] sm:%s323] %v708
                %v710 = vld [vmem:[%s330 + $0x558] sm:%s323]
                %711 = vst [vmem:[%s331 + $0x2f4] sm:%s323] %v710
                %v712 = vld [vmem:[%s330 + $0x55c] sm:%s323]
                %713 = vst [vmem:[%s331 + $0x2f8] sm:%s323] %v712
                %v714 = vld [vmem:[%s330 + $0x560] sm:%s323]
                %715 = vst [vmem:[%s331 + $0x2fc] sm:%s323] %v714
                %v716 = vld [vmem:[%s330 + $0x564] sm:%s323]
                %717 = vst [vmem:[%s331 + $0x300] sm:%s323] %v716
                %v718 = vld [vmem:[%s330 + $0x568] sm:%s323]
                %719 = vst [vmem:[%s331 + $0x304] sm:%s323] %v718
                %v720 = vld [vmem:[%s330 + $0x56c] sm:%s323]
                %721 = vst [vmem:[%s331 + $0x308] sm:%s323] %v720
                %v722 = vld [vmem:[%s330 + $0x570] sm:%s323]
                %723 = vst [vmem:[%s331 + $0x30c] sm:%s323] %v722
                %v724 = vld [vmem:[%s330 + $0x574] sm:%s323]
                %725 = vst [vmem:[%s331 + $0x310] sm:%s323] %v724
                %v726 = vld [vmem:[%s330 + $0x578] sm:%s323]
                %727 = vst [vmem:[%s331 + $0x314] sm:%s323] %v726
                %v728 = vld [vmem:[%s330 + $0x57c] sm:%s323]
                %729 = vst [vmem:[%s331 + $0x318] sm:%s323] %v728
                %v730 = vld [vmem:[%s330 + $0x580] sm:%s323]
                %731 = vst [vmem:[%s331 + $0x31c] sm:%s323] %v730
                %v732 = vld [vmem:[%s330 + $0x584] sm:%s323]
                %733 = vst [vmem:[%s331 + $0x320] sm:%s323] %v732
                %v734 = vld [vmem:[%s330 + $0x588] sm:%s323]
                %735 = vst [vmem:[%s331 + $0x324] sm:%s323] %v734
                %v736 = vld [vmem:[%s330 + $0x58c] sm:%s323]
                %737 = vst [vmem:[%s331 + $0x328] sm:%s323] %v736
                %v738 = vld [vmem:[%s330 + $0x590] sm:%s323]
                %739 = vst [vmem:[%s331 + $0x32c] sm:%s323] %v738
              $region73: #{tpu_custom_call.1} parent=67 // loop_footer
                %s329 = sadd.s32 1, %s325
              $region74: #{tpu_custom_call.1} parent=67 // loop_footer_branch
                %324 = sbr.rel target = $region70
              $region75: #{tpu_custom_call.1} parent=67 // loop_exit
                _
            $region68: #{tpu_custom_call.1} parent=59 // pred_fallthru
              _
          $region60: #{tpu_custom_call.1} parent=55 // pred_fallthru
            _
          %1168 = vnop
        $region56: #{tpu_custom_call.1} parent=51 // pred_fallthru
          _
      $region52: #{tpu_custom_call.1} parent=5 // pred_fallthru
        _
      %p1169 = scmp.le.s32.totalorder 1, %s19
      %p1170 = scmp.lt.s32.totalorder %s19, 3
      %p1171 = pnand %p1169, %p1170
      %p1172 = pneg %p1171
      // Predicated region
      $region94: #{tpu_custom_call.1} parent=5 // pred_check
        _
      $region95: #{tpu_custom_call.1} parent=5 // pred_check_branch
        %1174 = sbr.rel (%p1171) target = $region97
      $region96: #{tpu_custom_call.1} parent=5 // pred_region
        %s1175 = ssub.s32 %s19, 1
        %s1176 = sand.u32 %s32, 1
        %s1177 = sand.u32 %s32, 1
        %s1178 = smul.addr %s1177, 816
        %s1179 = scalar_lea.vmem [#allocation5], %s1178
        // Predicated region
        $region98: #{tpu_custom_call.1} parent=96 // pred_check
          %p1180 = pneg %p45
        $region99: #{tpu_custom_call.1} parent=96 // pred_check_branch
          %1182 = sbr.rel (%p1180) target = $region101
        $region100: #{tpu_custom_call.1} parent=96 // pred_region
          _
        $region101: #{tpu_custom_call.1} parent=96 // pred_fallthru
          _
        %s1183 = sand.u32 %s32, 1
        %s1184 = sand.u32 %s32, 1
        %s1185 = smul.addr %s1184, 816
        %s1186 = scalar_lea.vmem [#allocation5], %s1185
        %p1187 = pneg %p45
        %p1188 = pneg %p42
        %p1189 = pneg %p66
        %p1190 = pneg %p63
        %p1191 = pneg %p87
        %p1192 = pneg %p84
        %p1193 = pneg %p108
        %p1194 = pneg %p105
        %p1195 = pneg %p129
        %p1196 = pneg %p126
        %p1197 = pneg %p150
        %p1198 = pneg %p147
        %p1199 = pneg %p171
        %p1200 = pneg %p168
        %p1201 = pneg %p192
        %p1202 = pneg %p189
        %p1203 = pneg %p213
        %p1204 = pneg %p210
        %p1205 = pneg %p234
        %p1206 = pneg %p231
        %p1207 = pneg %p260
        %p1208 = pneg %p257
        %s1209 = sand.u32 %s247, 1
        %s1210 = scalar_lea.sflag [#allocation7], %s1209
        %s1211 = sand.u32 %s247, 1
        %s1212 = smul.addr %s1211, 256
        %s1213 = scalar_lea.vmem [#allocation6], %s1212
        %v1215 = vld [vmem:[%s1179] sm:$0xf]
        %v1216 = vld [vmem:[%s1179 + $0x4] sm:$0xf]
        %v1217 = vld [vmem:[%s1179 + $0xc] sm:$0xf]
        %v1218 = vld [vmem:[%s1179 + $0x10] sm:$0xf]
        %v1219 = vld [vmem:[%s1179 + $0x18] sm:$0xf]
        %v1220 = vld [vmem:[%s1179 + $0x1c] sm:$0xf]
        %v1221 = vld [vmem:[%s1179 + $0x24] sm:$0xf]
        %v1222 = vld [vmem:[%s1179 + $0x28] sm:$0xf]
        %v1223 = vld [vmem:[%s1179 + $0x30] sm:$0xf]
        %v1224 = vld [vmem:[%s1179 + $0x34] sm:$0xf]
        %v1225 = vld [vmem:[%s1179 + $0x3c] sm:$0xf]
        %v1226 = vld [vmem:[%s1179 + $0x40] sm:$0xf]
        %v1227 = vld [vmem:[%s1179 + $0x48] sm:$0xf]
        %v1228 = vld [vmem:[%s1179 + $0x4c] sm:$0xf]
        %v1229 = vld [vmem:[%s1179 + $0x54] sm:$0xf]
        %v1230 = vld [vmem:[%s1179 + $0x58] sm:$0xf]
        %v1231 = vld [vmem:[%s1179 + $0x60] sm:$0xf]
        %v1232 = vld [vmem:[%s1179 + $0x64] sm:$0xf]
        %v1233 = vld [vmem:[%s1179 + $0x6c] sm:$0xf]
        %v1234 = vld [vmem:[%s1179 + $0x70] sm:$0xf]
        %v1235 = vld [vmem:[%s1179 + $0x78] sm:$0xf]
        %v1236 = vld [vmem:[%s1179 + $0x7c] sm:$0xf]
        %v1237 = vld [vmem:[%s1179 + $0x84] sm:$0xf]
        %v1238 = vld [vmem:[%s1179 + $0x88] sm:$0xf]
        %v1239 = vld [vmem:[%s1179 + $0x90] sm:$0xf]
        %v1240 = vld [vmem:[%s1179 + $0x94] sm:$0xf]
        %v1241 = vld [vmem:[%s1179 + $0x9c] sm:$0xf]
        %v1242 = vld [vmem:[%s1179 + $0xa0] sm:$0xf]
        %v1243 = vld [vmem:[%s1179 + $0xa8] sm:$0xf]
        %v1244 = vld [vmem:[%s1179 + $0xac] sm:$0xf]
        %v1245 = vld [vmem:[%s1179 + $0xb4] sm:$0xf]
        %v1246 = vld [vmem:[%s1179 + $0xb8] sm:$0xf]
        %v1247 = vld [vmem:[%s1] sm:$0xf]
        %v1248 = vld [vmem:[%s1 + $0x4] sm:$0xf]
        %v1249 = vld [vmem:[%s1 + $0x8] sm:$0xf]
        %v1250 = vld [vmem:[%s1 + $0xc] sm:$0xf]
        %v1251 = vld [vmem:[%s1 + $0x10] sm:$0xf]
        %v1252 = vld [vmem:[%s1 + $0x14] sm:$0xf]
        %v1253 = vld [vmem:[%s1 + $0x18] sm:$0xf]
        %v1254 = vld [vmem:[%s1 + $0x1c] sm:$0xf]
        %s1255 = scalar_lea.vmem %s1179, 204 [#allocation5]
        %v1256 = vld [vmem:[%s1255] sm:$0xf]
        %v1257 = vld [vmem:[%s1255 + $0x4] sm:$0xf]
        %v1258 = vld [vmem:[%s1255 + $0xc] sm:$0xf]
        %v1259 = vld [vmem:[%s1255 + $0x10] sm:$0xf]
        %v1260 = vld [vmem:[%s1255 + $0x18] sm:$0xf]
        %v1261 = vld [vmem:[%s1255 + $0x1c] sm:$0xf]
        %v1262 = vld [vmem:[%s1255 + $0x24] sm:$0xf]
        %v1263 = vld [vmem:[%s1255 + $0x28] sm:$0xf]
        %v1264 = vld [vmem:[%s1255 + $0x30] sm:$0xf]
        %v1265 = vld [vmem:[%s1255 + $0x34] sm:$0xf]
        %v1266 = vld [vmem:[%s1255 + $0x3c] sm:$0xf]
        %v1267 = vld [vmem:[%s1255 + $0x40] sm:$0xf]
        %v1268 = vld [vmem:[%s1255 + $0x48] sm:$0xf]
        %v1269 = vld [vmem:[%s1255 + $0x4c] sm:$0xf]
        %v1270 = vld [vmem:[%s1255 + $0x54] sm:$0xf]
        %v1271 = vld [vmem:[%s1255 + $0x58] sm:$0xf]
        %v1272 = vld [vmem:[%s1255 + $0x60] sm:$0xf]
        %v1273 = vld [vmem:[%s1255 + $0x64] sm:$0xf]
        %v1274 = vld [vmem:[%s1255 + $0x6c] sm:$0xf]
        %v1275 = vld [vmem:[%s1255 + $0x70] sm:$0xf]
        %v1276 = vld [vmem:[%s1255 + $0x78] sm:$0xf]
        %v1277 = vld [vmem:[%s1255 + $0x7c] sm:$0xf]
        %v1278 = vld [vmem:[%s1255 + $0x84] sm:$0xf]
        %v1279 = vld [vmem:[%s1255 + $0x88] sm:$0xf]
        %v1280 = vld [vmem:[%s1255 + $0x90] sm:$0xf]
        %v1281 = vld [vmem:[%s1255 + $0x94] sm:$0xf]
        %v1282 = vld [vmem:[%s1255 + $0x9c] sm:$0xf]
        %v1283 = vld [vmem:[%s1255 + $0xa0] sm:$0xf]
        %v1284 = vld [vmem:[%s1255 + $0xa8] sm:$0xf]
        %v1285 = vld [vmem:[%s1255 + $0xac] sm:$0xf]
        %v1286 = vld [vmem:[%s1255 + $0xb4] sm:$0xf]
        %v1287 = vld [vmem:[%s1255 + $0xb8] sm:$0xf]
        %v1288 = vld [vmem:[%s1 + $0x20] sm:$0xf]
        %v1289 = vld [vmem:[%s1 + $0x24] sm:$0xf]
        %v1290 = vld [vmem:[%s1 + $0x28] sm:$0xf]
        %v1291 = vld [vmem:[%s1 + $0x2c] sm:$0xf]
        %v1292 = vld [vmem:[%s1 + $0x30] sm:$0xf]
        %v1293 = vld [vmem:[%s1 + $0x34] sm:$0xf]
        %v1294 = vld [vmem:[%s1 + $0x38] sm:$0xf]
        %v1295 = vld [vmem:[%s1 + $0x3c] sm:$0xf]
        %v1328 = vunpack.c.l.b16 %v1256
        %v1329 = vunpack.c.l.b16 %v1257
        %v1330 = vunpack.c.l.b16 %v1258
        %v1331 = vunpack.c.l.b16 %v1259
        %v1332 = vunpack.c.l.b16 %v1260
        %v1333 = vunpack.c.l.b16 %v1261
        %v1334 = vunpack.c.l.b16 %v1262
        %v1335 = vunpack.c.l.b16 %v1263
        %v1336 = vunpack.c.l.b16 %v1264
        %v1337 = vunpack.c.l.b16 %v1265
        %v1338 = vunpack.c.l.b16 %v1266
        %v1339 = vunpack.c.l.b16 %v1267
        %v1340 = vunpack.c.l.b16 %v1268
        %v1341 = vunpack.c.l.b16 %v1269
        %v1342 = vunpack.c.l.b16 %v1270
        %v1343 = vunpack.c.l.b16 %v1271
        %v1344 = vunpack.c.l.b16 %v1272
        %v1345 = vunpack.c.l.b16 %v1273
        %v1346 = vunpack.c.l.b16 %v1274
        %v1347 = vunpack.c.l.b16 %v1275
        %v1348 = vunpack.c.l.b16 %v1276
        %v1349 = vunpack.c.l.b16 %v1277
        %v1350 = vunpack.c.l.b16 %v1278
        %v1351 = vunpack.c.l.b16 %v1279
        %v1352 = vunpack.c.l.b16 %v1280
        %v1353 = vunpack.c.l.b16 %v1281
        %v1354 = vunpack.c.l.b16 %v1282
        %v1355 = vunpack.c.l.b16 %v1283
        %v1356 = vunpack.c.l.b16 %v1284
        %v1357 = vunpack.c.l.b16 %v1285
        %v1358 = vunpack.c.l.b16 %v1286
        %v1359 = vunpack.c.l.b16 %v1287
        %v1360 = vpack.c.b16 %v1329, %v1328
        %v1361 = vpack.c.b16 %v1331, %v1330
        %v1362 = vpack.c.b16 %v1333, %v1332
        %v1363 = vpack.c.b16 %v1335, %v1334
        %v1364 = vpack.c.b16 %v1337, %v1336
        %v1365 = vpack.c.b16 %v1339, %v1338
        %v1366 = vpack.c.b16 %v1341, %v1340
        %v1367 = vpack.c.b16 %v1343, %v1342
        %v1368 = vpack.c.b16 %v1345, %v1344
        %v1369 = vpack.c.b16 %v1347, %v1346
        %v1370 = vpack.c.b16 %v1349, %v1348
        %v1371 = vpack.c.b16 %v1351, %v1350
        %v1372 = vpack.c.b16 %v1353, %v1352
        %v1373 = vpack.c.b16 %v1355, %v1354
        %v1374 = vpack.c.b16 %v1357, %v1356
        %v1375 = vpack.c.b16 %v1359, %v1358
        %v1384 = vunpack.c.l.b16 %v1288
        %v1385 = vunpack.c.l.b16 %v1289
        %v1386 = vunpack.c.l.b16 %v1290
        %v1387 = vunpack.c.l.b16 %v1291
        %v1388 = vunpack.c.l.b16 %v1292
        %v1389 = vunpack.c.l.b16 %v1293
        %v1390 = vunpack.c.l.b16 %v1294
        %v1391 = vunpack.c.l.b16 %v1295
        %v1392 = vpack.c.b16 %v1385, %v1384
        %v1393 = vpack.c.b16 %v1387, %v1386
        %v1394 = vpack.c.b16 %v1389, %v1388
        %v1395 = vpack.c.b16 %v1391, %v1390
        %vm1400 = vcmask 523264
        %v1402 = vsel %vm1400, %v1360, 0
        %v1405 = vsel %vm1400, %v1361, 0
        %v1408 = vsel %vm1400, %v1362, 0
        %v1411 = vsel %vm1400, %v1363, 0
        %v1414 = vsel %vm1400, %v1364, 0
        %v1417 = vsel %vm1400, %v1365, 0
        %v1420 = vsel %vm1400, %v1366, 0
        %v1423 = vsel %vm1400, %v1367, 0
        %v1426 = vsel %vm1400, %v1368, 0
        %v1429 = vsel %vm1400, %v1369, 0
        %v1432 = vsel %vm1400, %v1370, 0
        %v1435 = vsel %vm1400, %v1371, 0
        %v1438 = vsel %vm1400, %v1372, 0
        %v1441 = vsel %vm1400, %v1373, 0
        %v1444 = vsel %vm1400, %v1374, 0
        %v1447 = vsel %vm1400, %v1375, 0
        %1449 = vmatpush.bf16.msra.mxu0 0
        %1450 = vmatpush.bf16.msra.mxu0 0
        %1451 = vmatpush.bf16.msra.mxu0 0
        %1452 = vmatpush.bf16.msra.mxu0 0
        %1453 = vmatpush.bf16.msra.mxu0 %v1395
        %1454 = vmatpush.bf16.msra.mxu0 %v1394
        %1455 = vmatpush.bf16.msra.mxu0 %v1393
        %1456 = vmatpush.bf16.msra.mxu0 %v1392
        %1457 = vmatmul.bf16.gmra.mxu0 %v1402
        %v1458 = vpop.f32.mrf.mxu0
        %v1459 = vadd.f32 0.0, %v1458
        %v1460 = vpop.f32.mrf.mxu0
        %v1461 = vadd.f32 0.0, %v1460
        %1462 = vmatmul.bf16.gmra.mxu0 %v1405
        %v1463 = vpop.f32.mrf.mxu0
        %v1464 = vadd.f32 0.0, %v1463
        %v1465 = vpop.f32.mrf.mxu0
        %v1466 = vadd.f32 0.0, %v1465
        %1467 = vmatmul.bf16.gmra.mxu0 %v1408
        %v1468 = vpop.f32.mrf.mxu0
        %v1469 = vadd.f32 0.0, %v1468
        %v1470 = vpop.f32.mrf.mxu0
        %v1471 = vadd.f32 0.0, %v1470
        %1472 = vmatmul.bf16.gmra.mxu0 %v1411
        %v1473 = vpop.f32.mrf.mxu0
        %v1474 = vadd.f32 0.0, %v1473
        %v1475 = vpop.f32.mrf.mxu0
        %v1476 = vadd.f32 0.0, %v1475
        %1477 = vmatmul.bf16.gmra.mxu0 %v1414
        %v1478 = vpop.f32.mrf.mxu0
        %v1479 = vadd.f32 0.0, %v1478
        %v1480 = vpop.f32.mrf.mxu0
        %v1481 = vadd.f32 0.0, %v1480
        %1482 = vmatmul.bf16.gmra.mxu0 %v1417
        %v1483 = vpop.f32.mrf.mxu0
        %v1484 = vadd.f32 0.0, %v1483
        %v1485 = vpop.f32.mrf.mxu0
        %v1486 = vadd.f32 0.0, %v1485
        %1487 = vmatmul.bf16.gmra.mxu0 %v1420
        %v1488 = vpop.f32.mrf.mxu0
        %v1489 = vadd.f32 0.0, %v1488
        %v1490 = vpop.f32.mrf.mxu0
        %v1491 = vadd.f32 0.0, %v1490
        %1492 = vmatmul.bf16.gmra.mxu0 %v1423
        %v1493 = vpop.f32.mrf.mxu0
        %v1494 = vadd.f32 0.0, %v1493
        %v1495 = vpop.f32.mrf.mxu0
        %v1496 = vadd.f32 0.0, %v1495
        %1497 = vmatmul.bf16.gmra.mxu0 %v1426
        %v1498 = vpop.f32.mrf.mxu0
        %v1499 = vadd.f32 0.0, %v1498
        %v1500 = vpop.f32.mrf.mxu0
        %v1501 = vadd.f32 0.0, %v1500
        %1502 = vmatmul.bf16.gmra.mxu0 %v1429
        %v1503 = vpop.f32.mrf.mxu0
        %v1504 = vadd.f32 0.0, %v1503
        %v1505 = vpop.f32.mrf.mxu0
        %v1506 = vadd.f32 0.0, %v1505
        %1507 = vmatmul.bf16.gmra.mxu0 %v1432
        %v1508 = vpop.f32.mrf.mxu0
        %v1509 = vadd.f32 0.0, %v1508
        %v1510 = vpop.f32.mrf.mxu0
        %v1511 = vadd.f32 0.0, %v1510
        %1512 = vmatmul.bf16.gmra.mxu0 %v1435
        %v1513 = vpop.f32.mrf.mxu0
        %v1514 = vadd.f32 0.0, %v1513
        %v1515 = vpop.f32.mrf.mxu0
        %v1516 = vadd.f32 0.0, %v1515
        %1517 = vmatmul.bf16.gmra.mxu0 %v1438
        %v1518 = vpop.f32.mrf.mxu0
        %v1519 = vadd.f32 0.0, %v1518
        %v1520 = vpop.f32.mrf.mxu0
        %v1521 = vadd.f32 0.0, %v1520
        %1522 = vmatmul.bf16.gmra.mxu0 %v1441
        %v1523 = vpop.f32.mrf.mxu0
        %v1524 = vadd.f32 0.0, %v1523
        %v1525 = vpop.f32.mrf.mxu0
        %v1526 = vadd.f32 0.0, %v1525
        %1527 = vmatmul.bf16.gmra.mxu0 %v1444
        %v1528 = vpop.f32.mrf.mxu0
        %v1529 = vadd.f32 0.0, %v1528
        %v1530 = vpop.f32.mrf.mxu0
        %v1531 = vadd.f32 0.0, %v1530
        %1532 = vmatmul.bf16.gmra.mxu0 %v1447
        %v1533 = vpop.f32.mrf.mxu0
        %v1534 = vadd.f32 0.0, %v1533
        %v1535 = vpop.f32.mrf.mxu0
        %v1536 = vadd.f32 0.0, %v1535
        %1537 = vdwg.mxu0
        %v1570 = vunpack.c.l.b16 %v1215
        %v1571 = vunpack.c.l.b16 %v1216
        %v1572 = vunpack.c.l.b16 %v1217
        %v1573 = vunpack.c.l.b16 %v1218
        %v1574 = vunpack.c.l.b16 %v1219
        %v1575 = vunpack.c.l.b16 %v1220
        %v1576 = vunpack.c.l.b16 %v1221
        %v1577 = vunpack.c.l.b16 %v1222
        %v1578 = vunpack.c.l.b16 %v1223
        %v1579 = vunpack.c.l.b16 %v1224
        %v1580 = vunpack.c.l.b16 %v1225
        %v1581 = vunpack.c.l.b16 %v1226
        %v1582 = vunpack.c.l.b16 %v1227
        %v1583 = vunpack.c.l.b16 %v1228
        %v1584 = vunpack.c.l.b16 %v1229
        %v1585 = vunpack.c.l.b16 %v1230
        %v1586 = vunpack.c.l.b16 %v1231
        %v1587 = vunpack.c.l.b16 %v1232
        %v1588 = vunpack.c.l.b16 %v1233
        %v1589 = vunpack.c.l.b16 %v1234
        %v1590 = vunpack.c.l.b16 %v1235
        %v1591 = vunpack.c.l.b16 %v1236
        %v1592 = vunpack.c.l.b16 %v1237
        %v1593 = vunpack.c.l.b16 %v1238
        %v1594 = vunpack.c.l.b16 %v1239
        %v1595 = vunpack.c.l.b16 %v1240
        %v1596 = vunpack.c.l.b16 %v1241
        %v1597 = vunpack.c.l.b16 %v1242
        %v1598 = vunpack.c.l.b16 %v1243
        %v1599 = vunpack.c.l.b16 %v1244
        %v1600 = vunpack.c.l.b16 %v1245
        %v1601 = vunpack.c.l.b16 %v1246
        %v1602 = vpack.c.b16 %v1571, %v1570
        %v1603 = vpack.c.b16 %v1573, %v1572
        %v1604 = vpack.c.b16 %v1575, %v1574
        %v1605 = vpack.c.b16 %v1577, %v1576
        %v1606 = vpack.c.b16 %v1579, %v1578
        %v1607 = vpack.c.b16 %v1581, %v1580
        %v1608 = vpack.c.b16 %v1583, %v1582
        %v1609 = vpack.c.b16 %v1585, %v1584
        %v1610 = vpack.c.b16 %v1587, %v1586
        %v1611 = vpack.c.b16 %v1589, %v1588
        %v1612 = vpack.c.b16 %v1591, %v1590
        %v1613 = vpack.c.b16 %v1593, %v1592
        %v1614 = vpack.c.b16 %v1595, %v1594
        %v1615 = vpack.c.b16 %v1597, %v1596
        %v1616 = vpack.c.b16 %v1599, %v1598
        %v1617 = vpack.c.b16 %v1601, %v1600
        %v1626 = vunpack.c.l.b16 %v1247
        %v1627 = vunpack.c.l.b16 %v1248
        %v1628 = vunpack.c.l.b16 %v1249
        %v1629 = vunpack.c.l.b16 %v1250
        %v1630 = vunpack.c.l.b16 %v1251
        %v1631 = vunpack.c.l.b16 %v1252
        %v1632 = vunpack.c.l.b16 %v1253
        %v1633 = vunpack.c.l.b16 %v1254
        %v1634 = vpack.c.b16 %v1627, %v1626
        %v1635 = vpack.c.b16 %v1629, %v1628
        %v1636 = vpack.c.b16 %v1631, %v1630
        %v1637 = vpack.c.b16 %v1633, %v1632
        %v1643 = vsel %vm1400, %v1602, 0
        %v1646 = vsel %vm1400, %v1603, 0
        %v1649 = vsel %vm1400, %v1604, 0
        %v1652 = vsel %vm1400, %v1605, 0
        %v1655 = vsel %vm1400, %v1606, 0
        %v1658 = vsel %vm1400, %v1607, 0
        %v1661 = vsel %vm1400, %v1608, 0
        %v1664 = vsel %vm1400, %v1609, 0
        %v1667 = vsel %vm1400, %v1610, 0
        %v1670 = vsel %vm1400, %v1611, 0
        %v1673 = vsel %vm1400, %v1612, 0
        %v1676 = vsel %vm1400, %v1613, 0
        %v1679 = vsel %vm1400, %v1614, 0
        %v1682 = vsel %vm1400, %v1615, 0
        %v1685 = vsel %vm1400, %v1616, 0
        %v1688 = vsel %vm1400, %v1617, 0
        %1690 = vmatpush.bf16.msra.mxu0 0
        %1691 = vmatpush.bf16.msra.mxu0 0
        %1692 = vmatpush.bf16.msra.mxu0 0
        %1693 = vmatpush.bf16.msra.mxu0 0
        %1694 = vmatpush.bf16.msra.mxu0 %v1637
        %1695 = vmatpush.bf16.msra.mxu0 %v1636
        %1696 = vmatpush.bf16.msra.mxu0 %v1635
        %1697 = vmatpush.bf16.msra.mxu0 %v1634
        %1698 = vmatmul.bf16.gmra.mxu0 %v1643
        %v1699 = vpop.f32.mrf.mxu0
        %v1700 = vadd.f32 %v1459, %v1699
        %v1701 = vpop.f32.mrf.mxu0
        %v1702 = vadd.f32 %v1461, %v1701
        %1703 = vmatmul.bf16.gmra.mxu0 %v1646
        %v1704 = vpop.f32.mrf.mxu0
        %v1705 = vadd.f32 %v1464, %v1704
        %v1706 = vpop.f32.mrf.mxu0
        %v1707 = vadd.f32 %v1466, %v1706
        %1708 = vmatmul.bf16.gmra.mxu0 %v1649
        %v1709 = vpop.f32.mrf.mxu0
        %v1710 = vadd.f32 %v1469, %v1709
        %v1711 = vpop.f32.mrf.mxu0
        %v1712 = vadd.f32 %v1471, %v1711
        %1713 = vmatmul.bf16.gmra.mxu0 %v1652
        %v1714 = vpop.f32.mrf.mxu0
        %v1715 = vadd.f32 %v1474, %v1714
        %v1716 = vpop.f32.mrf.mxu0
        %v1717 = vadd.f32 %v1476, %v1716
        %1718 = vmatmul.bf16.gmra.mxu0 %v1655
        %v1719 = vpop.f32.mrf.mxu0
        %v1720 = vadd.f32 %v1479, %v1719
        %v1721 = vpop.f32.mrf.mxu0
        %v1722 = vadd.f32 %v1481, %v1721
        %1723 = vmatmul.bf16.gmra.mxu0 %v1658
        %v1724 = vpop.f32.mrf.mxu0
        %v1725 = vadd.f32 %v1484, %v1724
        %v1726 = vpop.f32.mrf.mxu0
        %v1727 = vadd.f32 %v1486, %v1726
        %1728 = vmatmul.bf16.gmra.mxu0 %v1661
        %v1729 = vpop.f32.mrf.mxu0
        %v1730 = vadd.f32 %v1489, %v1729
        %v1731 = vpop.f32.mrf.mxu0
        %v1732 = vadd.f32 %v1491, %v1731
        %1733 = vmatmul.bf16.gmra.mxu0 %v1664
        %v1734 = vpop.f32.mrf.mxu0
        %v1735 = vadd.f32 %v1494, %v1734
        %v1736 = vpop.f32.mrf.mxu0
        %v1737 = vadd.f32 %v1496, %v1736
        %1738 = vmatmul.bf16.gmra.mxu0 %v1667
        %v1739 = vpop.f32.mrf.mxu0
        %v1740 = vadd.f32 %v1499, %v1739
        %v1741 = vpop.f32.mrf.mxu0
        %v1742 = vadd.f32 %v1501, %v1741
        %1743 = vmatmul.bf16.gmra.mxu0 %v1670
        %v1744 = vpop.f32.mrf.mxu0
        %v1745 = vadd.f32 %v1504, %v1744
        %v1746 = vpop.f32.mrf.mxu0
        %v1747 = vadd.f32 %v1506, %v1746
        %1748 = vmatmul.bf16.gmra.mxu0 %v1673
        %v1749 = vpop.f32.mrf.mxu0
        %v1750 = vadd.f32 %v1509, %v1749
        %v1751 = vpop.f32.mrf.mxu0
        %v1752 = vadd.f32 %v1511, %v1751
        %1753 = vmatmul.bf16.gmra.mxu0 %v1676
        %v1754 = vpop.f32.mrf.mxu0
        %v1755 = vadd.f32 %v1514, %v1754
        %v1756 = vpop.f32.mrf.mxu0
        %v1757 = vadd.f32 %v1516, %v1756
        %1758 = vmatmul.bf16.gmra.mxu0 %v1679
        %v1759 = vpop.f32.mrf.mxu0
        %v1760 = vadd.f32 %v1519, %v1759
        %v1761 = vpop.f32.mrf.mxu0
        %v1762 = vadd.f32 %v1521, %v1761
        %1763 = vmatmul.bf16.gmra.mxu0 %v1682
        %v1764 = vpop.f32.mrf.mxu0
        %v1765 = vadd.f32 %v1524, %v1764
        %v1766 = vpop.f32.mrf.mxu0
        %v1767 = vadd.f32 %v1526, %v1766
        %1768 = vmatmul.bf16.gmra.mxu0 %v1685
        %v1769 = vpop.f32.mrf.mxu0
        %v1770 = vadd.f32 %v1529, %v1769
        %v1771 = vpop.f32.mrf.mxu0
        %v1772 = vadd.f32 %v1531, %v1771
        %1773 = vmatmul.bf16.gmra.mxu0 %v1688
        %v1774 = vpop.f32.mrf.mxu0
        %v1775 = vadd.f32 %v1534, %v1774
        %v1776 = vpop.f32.mrf.mxu0
        %v1777 = vadd.f32 %v1536, %v1776
        %1778 = vdwg.mxu0
        %v1779 = vld [vmem:[%s1179] sm:$0xf]
        %v1780 = vld [vmem:[%s1179 + $0x4] sm:$0xf]
        %v1781 = vld [vmem:[%s1179 + $0x8] sm:$0x1]
        %v1782 = vld [vmem:[%s1179 + $0xc] sm:$0xf]
        %v1783 = vld [vmem:[%s1179 + $0x10] sm:$0xf]
        %v1784 = vld [vmem:[%s1179 + $0x14] sm:$0x1]
        %v1785 = vld [vmem:[%s1179 + $0x18] sm:$0xf]
        %v1786 = vld [vmem:[%s1179 + $0x1c] sm:$0xf]
        %v1787 = vld [vmem:[%s1179 + $0x20] sm:$0x1]
        %v1788 = vld [vmem:[%s1179 + $0x24] sm:$0xf]
        %v1789 = vld [vmem:[%s1179 + $0x28] sm:$0xf]
        %v1790 = vld [vmem:[%s1179 + $0x2c] sm:$0x1]
        %v1791 = vld [vmem:[%s1179 + $0x30] sm:$0xf]
        %v1792 = vld [vmem:[%s1179 + $0x34] sm:$0xf]
        %v1793 = vld [vmem:[%s1179 + $0x38] sm:$0x1]
        %v1794 = vld [vmem:[%s1179 + $0x3c] sm:$0xf]
        %v1795 = vld [vmem:[%s1179 + $0x40] sm:$0xf]
        %v1796 = vld [vmem:[%s1179 + $0x44] sm:$0x1]
        %v1797 = vld [vmem:[%s1179 + $0x48] sm:$0xf]
        %v1798 = vld [vmem:[%s1179 + $0x4c] sm:$0xf]
        %v1799 = vld [vmem:[%s1179 + $0x50] sm:$0x1]
        %v1800 = vld [vmem:[%s1179 + $0x54] sm:$0xf]
        %v1801 = vld [vmem:[%s1179 + $0x58] sm:$0xf]
        %v1802 = vld [vmem:[%s1179 + $0x5c] sm:$0x1]
        %v1803 = vld [vmem:[%s1179 + $0x60] sm:$0xf]
        %v1804 = vld [vmem:[%s1179 + $0x64] sm:$0xf]
        %v1805 = vld [vmem:[%s1179 + $0x68] sm:$0x1]
        %v1806 = vld [vmem:[%s1179 + $0x6c] sm:$0xf]
        %v1807 = vld [vmem:[%s1179 + $0x70] sm:$0xf]
        %v1808 = vld [vmem:[%s1179 + $0x74] sm:$0x1]
        %v1809 = vld [vmem:[%s1179 + $0x78] sm:$0xf]
        %v1810 = vld [vmem:[%s1179 + $0x7c] sm:$0xf]
        %v1811 = vld [vmem:[%s1179 + $0x80] sm:$0x1]
        %v1812 = vld [vmem:[%s1179 + $0x84] sm:$0xf]
        %v1813 = vld [vmem:[%s1179 + $0x88] sm:$0xf]
        %v1814 = vld [vmem:[%s1179 + $0x8c] sm:$0x1]
        %v1815 = vld [vmem:[%s1179 + $0x90] sm:$0xf]
        %v1816 = vld [vmem:[%s1179 + $0x94] sm:$0xf]
        %v1817 = vld [vmem:[%s1179 + $0x98] sm:$0x1]
        %v1818 = vld [vmem:[%s1179 + $0x9c] sm:$0xf]
        %v1819 = vld [vmem:[%s1179 + $0xa0] sm:$0xf]
        %v1820 = vld [vmem:[%s1179 + $0xa4] sm:$0x1]
        %v1821 = vld [vmem:[%s1179 + $0xa8] sm:$0xf]
        %v1822 = vld [vmem:[%s1179 + $0xac] sm:$0xf]
        %v1823 = vld [vmem:[%s1179 + $0xb0] sm:$0x1]
        %v1824 = vld [vmem:[%s1179 + $0xb4] sm:$0xf]
        %v1825 = vld [vmem:[%s1179 + $0xb8] sm:$0xf]
        %v1826 = vld [vmem:[%s1179 + $0xbc] sm:$0x1]
        %vm1827 = vsmask.f32 3328
        %vm1828 = vsmask.f32 7440
        %vm1829 = vmor %vm1827, %vm1828
        %v1831 = vshrl.u32 %v1779, 16
        %v1833 = vrot.slane %v1831, 4
        %v1834 = vshll.u32 %v1779, 16
        %v1836 = vrot.slane %v1834, 5
        %v1837 = vor.u32 %v1833, %v1836
        %v1838 = vrot.slane %v1837, 4
        %v1840 = vshll.u32 %v1780, 16
        %v1842 = vrot.slane %v1840, 5
        %v1843 = vsel %vm1829, %v1838, %v1842
        %v1844 = vshrl.u32 %v1780, 16
        %v1846 = vrot.slane %v1844, 4
        %v1847 = vor.u32 %v1846, %v1842
        %v1848 = vrot.slane %v1847, 4
        %v1850 = vshll.u32 %v1781, 16
        %v1852 = vrot.slane %v1850, 5
        %v1853 = vsel %vm1829, %v1848, %v1852
        %v1855 = vshrl.u32 %v1782, 16
        %v1857 = vrot.slane %v1855, 4
        %v1858 = vshll.u32 %v1782, 16
        %v1860 = vrot.slane %v1858, 5
        %v1861 = vor.u32 %v1857, %v1860
        %v1862 = vrot.slane %v1861, 4
        %v1864 = vshll.u32 %v1783, 16
        %v1866 = vrot.slane %v1864, 5
        %v1867 = vsel %vm1829, %v1862, %v1866
        %v1868 = vshrl.u32 %v1783, 16
        %v1870 = vrot.slane %v1868, 4
        %v1871 = vor.u32 %v1870, %v1866
        %v1872 = vrot.slane %v1871, 4
        %v1874 = vshll.u32 %v1784, 16
        %v1876 = vrot.slane %v1874, 5
        %v1877 = vsel %vm1829, %v1872, %v1876
        %v1879 = vshrl.u32 %v1785, 16
        %v1881 = vrot.slane %v1879, 4
        %v1882 = vshll.u32 %v1785, 16
        %v1884 = vrot.slane %v1882, 5
        %v1885 = vor.u32 %v1881, %v1884
        %v1886 = vrot.slane %v1885, 4
        %v1888 = vshll.u32 %v1786, 16
        %v1890 = vrot.slane %v1888, 5
        %v1891 = vsel %vm1829, %v1886, %v1890
        %v1892 = vshrl.u32 %v1786, 16
        %v1894 = vrot.slane %v1892, 4
        %v1895 = vor.u32 %v1894, %v1890
        %v1896 = vrot.slane %v1895, 4
        %v1898 = vshll.u32 %v1787, 16
        %v1900 = vrot.slane %v1898, 5
        %v1901 = vsel %vm1829, %v1896, %v1900
        %v1903 = vshrl.u32 %v1788, 16
        %v1905 = vrot.slane %v1903, 4
        %v1906 = vshll.u32 %v1788, 16
        %v1908 = vrot.slane %v1906, 5
        %v1909 = vor.u32 %v1905, %v1908
        %v1910 = vrot.slane %v1909, 4
        %v1912 = vshll.u32 %v1789, 16
        %v1914 = vrot.slane %v1912, 5
        %v1915 = vsel %vm1829, %v1910, %v1914
        %v1916 = vshrl.u32 %v1789, 16
        %v1918 = vrot.slane %v1916, 4
        %v1919 = vor.u32 %v1918, %v1914
        %v1920 = vrot.slane %v1919, 4
        %v1922 = vshll.u32 %v1790, 16
        %v1924 = vrot.slane %v1922, 5
        %v1925 = vsel %vm1829, %v1920, %v1924
        %v1927 = vshrl.u32 %v1791, 16
        %v1929 = vrot.slane %v1927, 4
        %v1930 = vshll.u32 %v1791, 16
        %v1932 = vrot.slane %v1930, 5
        %v1933 = vor.u32 %v1929, %v1932
        %v1934 = vrot.slane %v1933, 4
        %v1936 = vshll.u32 %v1792, 16
        %v1938 = vrot.slane %v1936, 5
        %v1939 = vsel %vm1829, %v1934, %v1938
        %v1940 = vshrl.u32 %v1792, 16
        %v1942 = vrot.slane %v1940, 4
        %v1943 = vor.u32 %v1942, %v1938
        %v1944 = vrot.slane %v1943, 4
        %v1946 = vshll.u32 %v1793, 16
        %v1948 = vrot.slane %v1946, 5
        %v1949 = vsel %vm1829, %v1944, %v1948
        %v1951 = vshrl.u32 %v1794, 16
        %v1953 = vrot.slane %v1951, 4
        %v1954 = vshll.u32 %v1794, 16
        %v1956 = vrot.slane %v1954, 5
        %v1957 = vor.u32 %v1953, %v1956
        %v1958 = vrot.slane %v1957, 4
        %v1960 = vshll.u32 %v1795, 16
        %v1962 = vrot.slane %v1960, 5
        %v1963 = vsel %vm1829, %v1958, %v1962
        %v1964 = vshrl.u32 %v1795, 16
        %v1966 = vrot.slane %v1964, 4
        %v1967 = vor.u32 %v1966, %v1962
        %v1968 = vrot.slane %v1967, 4
        %v1970 = vshll.u32 %v1796, 16
        %v1972 = vrot.slane %v1970, 5
        %v1973 = vsel %vm1829, %v1968, %v1972
        %v1975 = vshrl.u32 %v1797, 16
        %v1977 = vrot.slane %v1975, 4
        %v1978 = vshll.u32 %v1797, 16
        %v1980 = vrot.slane %v1978, 5
        %v1981 = vor.u32 %v1977, %v1980
        %v1982 = vrot.slane %v1981, 4
        %v1984 = vshll.u32 %v1798, 16
        %v1986 = vrot.slane %v1984, 5
        %v1987 = vsel %vm1829, %v1982, %v1986
        %v1988 = vshrl.u32 %v1798, 16
        %v1990 = vrot.slane %v1988, 4
        %v1991 = vor.u32 %v1990, %v1986
        %v1992 = vrot.slane %v1991, 4
        %v1994 = vshll.u32 %v1799, 16
        %v1996 = vrot.slane %v1994, 5
        %v1997 = vsel %vm1829, %v1992, %v1996
        %v1999 = vshrl.u32 %v1800, 16
        %v2001 = vrot.slane %v1999, 4
        %v2002 = vshll.u32 %v1800, 16
        %v2004 = vrot.slane %v2002, 5
        %v2005 = vor.u32 %v2001, %v2004
        %v2006 = vrot.slane %v2005, 4
        %v2008 = vshll.u32 %v1801, 16
        %v2010 = vrot.slane %v2008, 5
        %v2011 = vsel %vm1829, %v2006, %v2010
        %v2012 = vshrl.u32 %v1801, 16
        %v2014 = vrot.slane %v2012, 4
        %v2015 = vor.u32 %v2014, %v2010
        %v2016 = vrot.slane %v2015, 4
        %v2018 = vshll.u32 %v1802, 16
        %v2020 = vrot.slane %v2018, 5
        %v2021 = vsel %vm1829, %v2016, %v2020
        %v2023 = vshrl.u32 %v1803, 16
        %v2025 = vrot.slane %v2023, 4
        %v2026 = vshll.u32 %v1803, 16
        %v2028 = vrot.slane %v2026, 5
        %v2029 = vor.u32 %v2025, %v2028
        %v2030 = vrot.slane %v2029, 4
        %v2032 = vshll.u32 %v1804, 16
        %v2034 = vrot.slane %v2032, 5
        %v2035 = vsel %vm1829, %v2030, %v2034
        %v2036 = vshrl.u32 %v1804, 16
        %v2038 = vrot.slane %v2036, 4
        %v2039 = vor.u32 %v2038, %v2034
        %v2040 = vrot.slane %v2039, 4
        %v2042 = vshll.u32 %v1805, 16
        %v2044 = vrot.slane %v2042, 5
        %v2045 = vsel %vm1829, %v2040, %v2044
        %v2047 = vshrl.u32 %v1806, 16
        %v2049 = vrot.slane %v2047, 4
        %v2050 = vshll.u32 %v1806, 16
        %v2052 = vrot.slane %v2050, 5
        %v2053 = vor.u32 %v2049, %v2052
        %v2054 = vrot.slane %v2053, 4
        %v2056 = vshll.u32 %v1807, 16
        %v2058 = vrot.slane %v2056, 5
        %v2059 = vsel %vm1829, %v2054, %v2058
        %v2060 = vshrl.u32 %v1807, 16
        %v2062 = vrot.slane %v2060, 4
        %v2063 = vor.u32 %v2062, %v2058
        %v2064 = vrot.slane %v2063, 4
        %v2066 = vshll.u32 %v1808, 16
        %v2068 = vrot.slane %v2066, 5
        %v2069 = vsel %vm1829, %v2064, %v2068
        %v2071 = vshrl.u32 %v1809, 16
        %v2073 = vrot.slane %v2071, 4
        %v2074 = vshll.u32 %v1809, 16
        %v2076 = vrot.slane %v2074, 5
        %v2077 = vor.u32 %v2073, %v2076
        %v2078 = vrot.slane %v2077, 4
        %v2080 = vshll.u32 %v1810, 16
        %v2082 = vrot.slane %v2080, 5
        %v2083 = vsel %vm1829, %v2078, %v2082
        %v2084 = vshrl.u32 %v1810, 16
        %v2086 = vrot.slane %v2084, 4
        %v2087 = vor.u32 %v2086, %v2082
        %v2088 = vrot.slane %v2087, 4
        %v2090 = vshll.u32 %v1811, 16
        %v2092 = vrot.slane %v2090, 5
        %v2093 = vsel %vm1829, %v2088, %v2092
        %v2095 = vshrl.u32 %v1812, 16
        %v2097 = vrot.slane %v2095, 4
        %v2098 = vshll.u32 %v1812, 16
        %v2100 = vrot.slane %v2098, 5
        %v2101 = vor.u32 %v2097, %v2100
        %v2102 = vrot.slane %v2101, 4
        %v2104 = vshll.u32 %v1813, 16
        %v2106 = vrot.slane %v2104, 5
        %v2107 = vsel %vm1829, %v2102, %v2106
        %v2108 = vshrl.u32 %v1813, 16
        %v2110 = vrot.slane %v2108, 4
        %v2111 = vor.u32 %v2110, %v2106
        %v2112 = vrot.slane %v2111, 4
        %v2114 = vshll.u32 %v1814, 16
        %v2116 = vrot.slane %v2114, 5
        %v2117 = vsel %vm1829, %v2112, %v2116
        %v2119 = vshrl.u32 %v1815, 16
        %v2121 = vrot.slane %v2119, 4
        %v2122 = vshll.u32 %v1815, 16
        %v2124 = vrot.slane %v2122, 5
        %v2125 = vor.u32 %v2121, %v2124
        %v2126 = vrot.slane %v2125, 4
        %v2128 = vshll.u32 %v1816, 16
        %v2130 = vrot.slane %v2128, 5
        %v2131 = vsel %vm1829, %v2126, %v2130
        %v2132 = vshrl.u32 %v1816, 16
        %v2134 = vrot.slane %v2132, 4
        %v2135 = vor.u32 %v2134, %v2130
        %v2136 = vrot.slane %v2135, 4
        %v2138 = vshll.u32 %v1817, 16
        %v2140 = vrot.slane %v2138, 5
        %v2141 = vsel %vm1829, %v2136, %v2140
        %v2143 = vshrl.u32 %v1818, 16
        %v2145 = vrot.slane %v2143, 4
        %v2146 = vshll.u32 %v1818, 16
        %v2148 = vrot.slane %v2146, 5
        %v2149 = vor.u32 %v2145, %v2148
        %v2150 = vrot.slane %v2149, 4
        %v2152 = vshll.u32 %v1819, 16
        %v2154 = vrot.slane %v2152, 5
        %v2155 = vsel %vm1829, %v2150, %v2154
        %v2156 = vshrl.u32 %v1819, 16
        %v2158 = vrot.slane %v2156, 4
        %v2159 = vor.u32 %v2158, %v2154
        %v2160 = vrot.slane %v2159, 4
        %v2162 = vshll.u32 %v1820, 16
        %v2164 = vrot.slane %v2162, 5
        %v2165 = vsel %vm1829, %v2160, %v2164
        %v2167 = vshrl.u32 %v1821, 16
        %v2169 = vrot.slane %v2167, 4
        %v2170 = vshll.u32 %v1821, 16
        %v2172 = vrot.slane %v2170, 5
        %v2173 = vor.u32 %v2169, %v2172
        %v2174 = vrot.slane %v2173, 4
        %v2176 = vshll.u32 %v1822, 16
        %v2178 = vrot.slane %v2176, 5
        %v2179 = vsel %vm1829, %v2174, %v2178
        %v2180 = vshrl.u32 %v1822, 16
        %v2182 = vrot.slane %v2180, 4
        %v2183 = vor.u32 %v2182, %v2178
        %v2184 = vrot.slane %v2183, 4
        %v2186 = vshll.u32 %v1823, 16
        %v2188 = vrot.slane %v2186, 5
        %v2189 = vsel %vm1829, %v2184, %v2188
        %v2191 = vshrl.u32 %v1824, 16
        %v2193 = vrot.slane %v2191, 4
        %v2194 = vshll.u32 %v1824, 16
        %v2196 = vrot.slane %v2194, 5
        %v2197 = vor.u32 %v2193, %v2196
        %v2198 = vrot.slane %v2197, 4
        %v2200 = vshll.u32 %v1825, 16
        %v2202 = vrot.slane %v2200, 5
        %v2203 = vsel %vm1829, %v2198, %v2202
        %v2204 = vshrl.u32 %v1825, 16
        %v2206 = vrot.slane %v2204, 4
        %v2207 = vor.u32 %v2206, %v2202
        %v2208 = vrot.slane %v2207, 4
        %v2210 = vshll.u32 %v1826, 16
        %v2212 = vrot.slane %v2210, 5
        %v2213 = vsel %vm1829, %v2208, %v2212
        %v2214 = vld [vmem:[%s1 + $0x40] sm:$0xf]
        %v2215 = vld [vmem:[%s1 + $0x44] sm:$0xf]
        %v2216 = vld [vmem:[%s1 + $0x48] sm:$0xf]
        %v2217 = vld [vmem:[%s1 + $0x4c] sm:$0xf]
        %v2218 = vld [vmem:[%s1 + $0x50] sm:$0xf]
        %v2219 = vld [vmem:[%s1 + $0x54] sm:$0xf]
        %v2220 = vld [vmem:[%s1 + $0x58] sm:$0xf]
        %v2221 = vld [vmem:[%s1 + $0x5c] sm:$0xf]
        %v2222 = vunpack.c.l.b16 %v1843
        %v2223 = vunpack.c.l.b16 %v1853
        %v2224 = vunpack.c.l.b16 %v1867
        %v2225 = vunpack.c.l.b16 %v1877
        %v2226 = vunpack.c.l.b16 %v1891
        %v2227 = vunpack.c.l.b16 %v1901
        %v2228 = vunpack.c.l.b16 %v1915
        %v2229 = vunpack.c.l.b16 %v1925
        %v2230 = vunpack.c.l.b16 %v1939
        %v2231 = vunpack.c.l.b16 %v1949
        %v2232 = vunpack.c.l.b16 %v1963
        %v2233 = vunpack.c.l.b16 %v1973
        %v2234 = vunpack.c.l.b16 %v1987
        %v2235 = vunpack.c.l.b16 %v1997
        %v2236 = vunpack.c.l.b16 %v2011
        %v2237 = vunpack.c.l.b16 %v2021
        %v2238 = vunpack.c.l.b16 %v2035
        %v2239 = vunpack.c.l.b16 %v2045
        %v2240 = vunpack.c.l.b16 %v2059
        %v2241 = vunpack.c.l.b16 %v2069
        %v2242 = vunpack.c.l.b16 %v2083
        %v2243 = vunpack.c.l.b16 %v2093
        %v2244 = vunpack.c.l.b16 %v2107
        %v2245 = vunpack.c.l.b16 %v2117
        %v2246 = vunpack.c.l.b16 %v2131
        %v2247 = vunpack.c.l.b16 %v2141
        %v2248 = vunpack.c.l.b16 %v2155
        %v2249 = vunpack.c.l.b16 %v2165
        %v2250 = vunpack.c.l.b16 %v2179
        %v2251 = vunpack.c.l.b16 %v2189
        %v2252 = vunpack.c.l.b16 %v2203
        %v2253 = vunpack.c.l.b16 %v2213
        %v2254 = vpack.c.b16 %v2223, %v2222
        %v2255 = vpack.c.b16 %v2225, %v2224
        %v2256 = vpack.c.b16 %v2227, %v2226
        %v2257 = vpack.c.b16 %v2229, %v2228
        %v2258 = vpack.c.b16 %v2231, %v2230
        %v2259 = vpack.c.b16 %v2233, %v2232
        %v2260 = vpack.c.b16 %v2235, %v2234
        %v2261 = vpack.c.b16 %v2237, %v2236
        %v2262 = vpack.c.b16 %v2239, %v2238
        %v2263 = vpack.c.b16 %v2241, %v2240
        %v2264 = vpack.c.b16 %v2243, %v2242
        %v2265 = vpack.c.b16 %v2245, %v2244
        %v2266 = vpack.c.b16 %v2247, %v2246
        %v2267 = vpack.c.b16 %v2249, %v2248
        %v2268 = vpack.c.b16 %v2251, %v2250
        %v2269 = vpack.c.b16 %v2253, %v2252
        %v2278 = vunpack.c.l.b16 %v2214
        %v2279 = vunpack.c.l.b16 %v2215
        %v2280 = vunpack.c.l.b16 %v2216
        %v2281 = vunpack.c.l.b16 %v2217
        %v2282 = vunpack.c.l.b16 %v2218
        %v2283 = vunpack.c.l.b16 %v2219
        %v2284 = vunpack.c.l.b16 %v2220
        %v2285 = vunpack.c.l.b16 %v2221
        %v2286 = vpack.c.b16 %v2279, %v2278
        %v2287 = vpack.c.b16 %v2281, %v2280
        %v2288 = vpack.c.b16 %v2283, %v2282
        %v2289 = vpack.c.b16 %v2285, %v2284
        %v2295 = vsel %vm1400, %v2254, 0
        %v2298 = vsel %vm1400, %v2255, 0
        %v2301 = vsel %vm1400, %v2256, 0
        %v2304 = vsel %vm1400, %v2257, 0
        %v2307 = vsel %vm1400, %v2258, 0
        %v2310 = vsel %vm1400, %v2259, 0
        %v2313 = vsel %vm1400, %v2260, 0
        %v2316 = vsel %vm1400, %v2261, 0
        %v2319 = vsel %vm1400, %v2262, 0
        %v2322 = vsel %vm1400, %v2263, 0
        %v2325 = vsel %vm1400, %v2264, 0
        %v2328 = vsel %vm1400, %v2265, 0
        %v2331 = vsel %vm1400, %v2266, 0
        %v2334 = vsel %vm1400, %v2267, 0
        %v2337 = vsel %vm1400, %v2268, 0
        %v2340 = vsel %vm1400, %v2269, 0
        %2342 = vmatpush.bf16.msra.mxu0 0
        %2343 = vmatpush.bf16.msra.mxu0 0
        %2344 = vmatpush.bf16.msra.mxu0 0
        %2345 = vmatpush.bf16.msra.mxu0 0
        %2346 = vmatpush.bf16.msra.mxu0 %v2289
        %2347 = vmatpush.bf16.msra.mxu0 %v2288
        %2348 = vmatpush.bf16.msra.mxu0 %v2287
        %2349 = vmatpush.bf16.msra.mxu0 %v2286
        %2350 = vmatmul.bf16.gmra.mxu0 %v2295
        %v2351 = vpop.f32.mrf.mxu0
        %v2352 = vadd.f32 0.0, %v2351
        %v2353 = vpop.f32.mrf.mxu0
        %v2354 = vadd.f32 0.0, %v2353
        %2355 = vmatmul.bf16.gmra.mxu0 %v2298
        %v2356 = vpop.f32.mrf.mxu0
        %v2357 = vadd.f32 0.0, %v2356
        %v2358 = vpop.f32.mrf.mxu0
        %v2359 = vadd.f32 0.0, %v2358
        %2360 = vmatmul.bf16.gmra.mxu0 %v2301
        %v2361 = vpop.f32.mrf.mxu0
        %v2362 = vadd.f32 0.0, %v2361
        %v2363 = vpop.f32.mrf.mxu0
        %v2364 = vadd.f32 0.0, %v2363
        %2365 = vmatmul.bf16.gmra.mxu0 %v2304
        %v2366 = vpop.f32.mrf.mxu0
        %v2367 = vadd.f32 0.0, %v2366
        %v2368 = vpop.f32.mrf.mxu0
        %v2369 = vadd.f32 0.0, %v2368
        %2370 = vmatmul.bf16.gmra.mxu0 %v2307
        %v2371 = vpop.f32.mrf.mxu0
        %v2372 = vadd.f32 0.0, %v2371
        %v2373 = vpop.f32.mrf.mxu0
        %v2374 = vadd.f32 0.0, %v2373
        %2375 = vmatmul.bf16.gmra.mxu0 %v2310
        %v2376 = vpop.f32.mrf.mxu0
        %v2377 = vadd.f32 0.0, %v2376
        %v2378 = vpop.f32.mrf.mxu0
        %v2379 = vadd.f32 0.0, %v2378
        %2380 = vmatmul.bf16.gmra.mxu0 %v2313
        %v2381 = vpop.f32.mrf.mxu0
        %v2382 = vadd.f32 0.0, %v2381
        %v2383 = vpop.f32.mrf.mxu0
        %v2384 = vadd.f32 0.0, %v2383
        %2385 = vmatmul.bf16.gmra.mxu0 %v2316
        %v2386 = vpop.f32.mrf.mxu0
        %v2387 = vadd.f32 0.0, %v2386
        %v2388 = vpop.f32.mrf.mxu0
        %v2389 = vadd.f32 0.0, %v2388
        %2390 = vmatmul.bf16.gmra.mxu0 %v2319
        %v2391 = vpop.f32.mrf.mxu0
        %v2392 = vadd.f32 0.0, %v2391
        %v2393 = vpop.f32.mrf.mxu0
        %v2394 = vadd.f32 0.0, %v2393
        %2395 = vmatmul.bf16.gmra.mxu0 %v2322
        %v2396 = vpop.f32.mrf.mxu0
        %v2397 = vadd.f32 0.0, %v2396
        %v2398 = vpop.f32.mrf.mxu0
        %v2399 = vadd.f32 0.0, %v2398
        %2400 = vmatmul.bf16.gmra.mxu0 %v2325
        %v2401 = vpop.f32.mrf.mxu0
        %v2402 = vadd.f32 0.0, %v2401
        %v2403 = vpop.f32.mrf.mxu0
        %v2404 = vadd.f32 0.0, %v2403
        %2405 = vmatmul.bf16.gmra.mxu0 %v2328
        %v2406 = vpop.f32.mrf.mxu0
        %v2407 = vadd.f32 0.0, %v2406
        %v2408 = vpop.f32.mrf.mxu0
        %v2409 = vadd.f32 0.0, %v2408
        %2410 = vmatmul.bf16.gmra.mxu0 %v2331
        %v2411 = vpop.f32.mrf.mxu0
        %v2412 = vadd.f32 0.0, %v2411
        %v2413 = vpop.f32.mrf.mxu0
        %v2414 = vadd.f32 0.0, %v2413
        %2415 = vmatmul.bf16.gmra.mxu0 %v2334
        %v2416 = vpop.f32.mrf.mxu0
        %v2417 = vadd.f32 0.0, %v2416
        %v2418 = vpop.f32.mrf.mxu0
        %v2419 = vadd.f32 0.0, %v2418
        %2420 = vmatmul.bf16.gmra.mxu0 %v2337
        %v2421 = vpop.f32.mrf.mxu0
        %v2422 = vadd.f32 0.0, %v2421
        %v2423 = vpop.f32.mrf.mxu0
        %v2424 = vadd.f32 0.0, %v2423
        %2425 = vmatmul.bf16.gmra.mxu0 %v2340
        %v2426 = vpop.f32.mrf.mxu0
        %v2427 = vadd.f32 0.0, %v2426
        %v2428 = vpop.f32.mrf.mxu0
        %v2429 = vadd.f32 0.0, %v2428
        %2430 = vdwg.mxu0
        %v2431 = vadd.f32 %v1700, %v2352
        %v2432 = vadd.f32 %v1702, %v2354
        %v2433 = vadd.f32 %v1705, %v2357
        %v2434 = vadd.f32 %v1707, %v2359
        %v2435 = vadd.f32 %v1710, %v2362
        %v2436 = vadd.f32 %v1712, %v2364
        %v2437 = vadd.f32 %v1715, %v2367
        %v2438 = vadd.f32 %v1717, %v2369
        %v2439 = vadd.f32 %v1720, %v2372
        %v2440 = vadd.f32 %v1722, %v2374
        %v2441 = vadd.f32 %v1725, %v2377
        %v2442 = vadd.f32 %v1727, %v2379
        %v2443 = vadd.f32 %v1730, %v2382
        %v2444 = vadd.f32 %v1732, %v2384
        %v2445 = vadd.f32 %v1735, %v2387
        %v2446 = vadd.f32 %v1737, %v2389
        %v2447 = vadd.f32 %v1740, %v2392
        %v2448 = vadd.f32 %v1742, %v2394
        %v2449 = vadd.f32 %v1745, %v2397
        %v2450 = vadd.f32 %v1747, %v2399
        %v2451 = vadd.f32 %v1750, %v2402
        %v2452 = vadd.f32 %v1752, %v2404
        %v2453 = vadd.f32 %v1755, %v2407
        %v2454 = vadd.f32 %v1757, %v2409
        %v2455 = vadd.f32 %v1760, %v2412
        %v2456 = vadd.f32 %v1762, %v2414
        %v2457 = vadd.f32 %v1765, %v2417
        %v2458 = vadd.f32 %v1767, %v2419
        %v2459 = vadd.f32 %v1770, %v2422
        %v2460 = vadd.f32 %v1772, %v2424
        %v2461 = vadd.f32 %v1775, %v2427
        %v2462 = vadd.f32 %v1777, %v2429
        %s2463 = scalar_lea.vmem %s1179, 408 [#allocation5]
        %v2464 = vld [vmem:[%s2463] sm:$0xf]
        %v2465 = vld [vmem:[%s2463 + $0x4] sm:$0xf]
        %v2466 = vld [vmem:[%s2463 + $0xc] sm:$0xf]
        %v2467 = vld [vmem:[%s2463 + $0x10] sm:$0xf]
        %v2468 = vld [vmem:[%s2463 + $0x18] sm:$0xf]
        %v2469 = vld [vmem:[%s2463 + $0x1c] sm:$0xf]
        %v2470 = vld [vmem:[%s2463 + $0x24] sm:$0xf]
        %v2471 = vld [vmem:[%s2463 + $0x28] sm:$0xf]
        %v2472 = vld [vmem:[%s2463 + $0x30] sm:$0xf]
        %v2473 = vld [vmem:[%s2463 + $0x34] sm:$0xf]
        %v2474 = vld [vmem:[%s2463 + $0x3c] sm:$0xf]
        %v2475 = vld [vmem:[%s2463 + $0x40] sm:$0xf]
        %v2476 = vld [vmem:[%s2463 + $0x48] sm:$0xf]
        %v2477 = vld [vmem:[%s2463 + $0x4c] sm:$0xf]
        %v2478 = vld [vmem:[%s2463 + $0x54] sm:$0xf]
        %v2479 = vld [vmem:[%s2463 + $0x58] sm:$0xf]
        %v2480 = vld [vmem:[%s2463 + $0x60] sm:$0xf]
        %v2481 = vld [vmem:[%s2463 + $0x64] sm:$0xf]
        %v2482 = vld [vmem:[%s2463 + $0x6c] sm:$0xf]
        %v2483 = vld [vmem:[%s2463 + $0x70] sm:$0xf]
        %v2484 = vld [vmem:[%s2463 + $0x78] sm:$0xf]
        %v2485 = vld [vmem:[%s2463 + $0x7c] sm:$0xf]
        %v2486 = vld [vmem:[%s2463 + $0x84] sm:$0xf]
        %v2487 = vld [vmem:[%s2463 + $0x88] sm:$0xf]
        %v2488 = vld [vmem:[%s2463 + $0x90] sm:$0xf]
        %v2489 = vld [vmem:[%s2463 + $0x94] sm:$0xf]
        %v2490 = vld [vmem:[%s2463 + $0x9c] sm:$0xf]
        %v2491 = vld [vmem:[%s2463 + $0xa0] sm:$0xf]
        %v2492 = vld [vmem:[%s2463 + $0xa8] sm:$0xf]
        %v2493 = vld [vmem:[%s2463 + $0xac] sm:$0xf]
        %v2494 = vld [vmem:[%s2463 + $0xb4] sm:$0xf]
        %v2495 = vld [vmem:[%s2463 + $0xb8] sm:$0xf]
        %v2496 = vld [vmem:[%s1 + $0x60] sm:$0xf]
        %v2497 = vld [vmem:[%s1 + $0x64] sm:$0xf]
        %v2498 = vld [vmem:[%s1 + $0x68] sm:$0xf]
        %v2499 = vld [vmem:[%s1 + $0x6c] sm:$0xf]
        %v2500 = vld [vmem:[%s1 + $0x70] sm:$0xf]
        %v2501 = vld [vmem:[%s1 + $0x74] sm:$0xf]
        %v2502 = vld [vmem:[%s1 + $0x78] sm:$0xf]
        %v2503 = vld [vmem:[%s1 + $0x7c] sm:$0xf]
        %v2536 = vunpack.c.l.b16 %v2464
        %v2537 = vunpack.c.l.b16 %v2465
        %v2538 = vunpack.c.l.b16 %v2466
        %v2539 = vunpack.c.l.b16 %v2467
        %v2540 = vunpack.c.l.b16 %v2468
        %v2541 = vunpack.c.l.b16 %v2469
        %v2542 = vunpack.c.l.b16 %v2470
        %v2543 = vunpack.c.l.b16 %v2471
        %v2544 = vunpack.c.l.b16 %v2472
        %v2545 = vunpack.c.l.b16 %v2473
        %v2546 = vunpack.c.l.b16 %v2474
        %v2547 = vunpack.c.l.b16 %v2475
        %v2548 = vunpack.c.l.b16 %v2476
        %v2549 = vunpack.c.l.b16 %v2477
        %v2550 = vunpack.c.l.b16 %v2478
        %v2551 = vunpack.c.l.b16 %v2479
        %v2552 = vunpack.c.l.b16 %v2480
        %v2553 = vunpack.c.l.b16 %v2481
        %v2554 = vunpack.c.l.b16 %v2482
        %v2555 = vunpack.c.l.b16 %v2483
        %v2556 = vunpack.c.l.b16 %v2484
        %v2557 = vunpack.c.l.b16 %v2485
        %v2558 = vunpack.c.l.b16 %v2486
        %v2559 = vunpack.c.l.b16 %v2487
        %v2560 = vunpack.c.l.b16 %v2488
        %v2561 = vunpack.c.l.b16 %v2489
        %v2562 = vunpack.c.l.b16 %v2490
        %v2563 = vunpack.c.l.b16 %v2491
        %v2564 = vunpack.c.l.b16 %v2492
        %v2565 = vunpack.c.l.b16 %v2493
        %v2566 = vunpack.c.l.b16 %v2494
        %v2567 = vunpack.c.l.b16 %v2495
        %v2568 = vpack.c.b16 %v2537, %v2536
        %v2569 = vpack.c.b16 %v2539, %v2538
        %v2570 = vpack.c.b16 %v2541, %v2540
        %v2571 = vpack.c.b16 %v2543, %v2542
        %v2572 = vpack.c.b16 %v2545, %v2544
        %v2573 = vpack.c.b16 %v2547, %v2546
        %v2574 = vpack.c.b16 %v2549, %v2548
        %v2575 = vpack.c.b16 %v2551, %v2550
        %v2576 = vpack.c.b16 %v2553, %v2552
        %v2577 = vpack.c.b16 %v2555, %v2554
        %v2578 = vpack.c.b16 %v2557, %v2556
        %v2579 = vpack.c.b16 %v2559, %v2558
        %v2580 = vpack.c.b16 %v2561, %v2560
        %v2581 = vpack.c.b16 %v2563, %v2562
        %v2582 = vpack.c.b16 %v2565, %v2564
        %v2583 = vpack.c.b16 %v2567, %v2566
        %v2592 = vunpack.c.l.b16 %v2496
        %v2593 = vunpack.c.l.b16 %v2497
        %v2594 = vunpack.c.l.b16 %v2498
        %v2595 = vunpack.c.l.b16 %v2499
        %v2596 = vunpack.c.l.b16 %v2500
        %v2597 = vunpack.c.l.b16 %v2501
        %v2598 = vunpack.c.l.b16 %v2502
        %v2599 = vunpack.c.l.b16 %v2503
        %v2600 = vpack.c.b16 %v2593, %v2592
        %v2601 = vpack.c.b16 %v2595, %v2594
        %v2602 = vpack.c.b16 %v2597, %v2596
        %v2603 = vpack.c.b16 %v2599, %v2598
        %v2609 = vsel %vm1400, %v2568, 0
        %v2612 = vsel %vm1400, %v2569, 0
        %v2615 = vsel %vm1400, %v2570, 0
        %v2618 = vsel %vm1400, %v2571, 0
        %v2621 = vsel %vm1400, %v2572, 0
        %v2624 = vsel %vm1400, %v2573, 0
        %v2627 = vsel %vm1400, %v2574, 0
        %v2630 = vsel %vm1400, %v2575, 0
        %v2633 = vsel %vm1400, %v2576, 0
        %v2636 = vsel %vm1400, %v2577, 0
        %v2639 = vsel %vm1400, %v2578, 0
        %v2642 = vsel %vm1400, %v2579, 0
        %v2645 = vsel %vm1400, %v2580, 0
        %v2648 = vsel %vm1400, %v2581, 0
        %v2651 = vsel %vm1400, %v2582, 0
        %v2654 = vsel %vm1400, %v2583, 0
        %2656 = vmatpush.bf16.msra.mxu0 0
        %2657 = vmatpush.bf16.msra.mxu0 0
        %2658 = vmatpush.bf16.msra.mxu0 0
        %2659 = vmatpush.bf16.msra.mxu0 0
        %2660 = vmatpush.bf16.msra.mxu0 %v2603
        %2661 = vmatpush.bf16.msra.mxu0 %v2602
        %2662 = vmatpush.bf16.msra.mxu0 %v2601
        %2663 = vmatpush.bf16.msra.mxu0 %v2600
        %2664 = vmatmul.bf16.gmra.mxu0 %v2609
        %v2665 = vpop.f32.mrf.mxu0
        %v2666 = vadd.f32 0.0, %v2665
        %v2667 = vpop.f32.mrf.mxu0
        %v2668 = vadd.f32 0.0, %v2667
        %2669 = vmatmul.bf16.gmra.mxu0 %v2612
        %v2670 = vpop.f32.mrf.mxu0
        %v2671 = vadd.f32 0.0, %v2670
        %v2672 = vpop.f32.mrf.mxu0
        %v2673 = vadd.f32 0.0, %v2672
        %2674 = vmatmul.bf16.gmra.mxu0 %v2615
        %v2675 = vpop.f32.mrf.mxu0
        %v2676 = vadd.f32 0.0, %v2675
        %v2677 = vpop.f32.mrf.mxu0
        %v2678 = vadd.f32 0.0, %v2677
        %2679 = vmatmul.bf16.gmra.mxu0 %v2618
        %v2680 = vpop.f32.mrf.mxu0
        %v2681 = vadd.f32 0.0, %v2680
        %v2682 = vpop.f32.mrf.mxu0
        %v2683 = vadd.f32 0.0, %v2682
        %2684 = vmatmul.bf16.gmra.mxu0 %v2621
        %v2685 = vpop.f32.mrf.mxu0
        %v2686 = vadd.f32 0.0, %v2685
        %v2687 = vpop.f32.mrf.mxu0
        %v2688 = vadd.f32 0.0, %v2687
        %2689 = vmatmul.bf16.gmra.mxu0 %v2624
        %v2690 = vpop.f32.mrf.mxu0
        %v2691 = vadd.f32 0.0, %v2690
        %v2692 = vpop.f32.mrf.mxu0
        %v2693 = vadd.f32 0.0, %v2692
        %2694 = vmatmul.bf16.gmra.mxu0 %v2627
        %v2695 = vpop.f32.mrf.mxu0
        %v2696 = vadd.f32 0.0, %v2695
        %v2697 = vpop.f32.mrf.mxu0
        %v2698 = vadd.f32 0.0, %v2697
        %2699 = vmatmul.bf16.gmra.mxu0 %v2630
        %v2700 = vpop.f32.mrf.mxu0
        %v2701 = vadd.f32 0.0, %v2700
        %v2702 = vpop.f32.mrf.mxu0
        %v2703 = vadd.f32 0.0, %v2702
        %2704 = vmatmul.bf16.gmra.mxu0 %v2633
        %v2705 = vpop.f32.mrf.mxu0
        %v2706 = vadd.f32 0.0, %v2705
        %v2707 = vpop.f32.mrf.mxu0
        %v2708 = vadd.f32 0.0, %v2707
        %2709 = vmatmul.bf16.gmra.mxu0 %v2636
        %v2710 = vpop.f32.mrf.mxu0
        %v2711 = vadd.f32 0.0, %v2710
        %v2712 = vpop.f32.mrf.mxu0
        %v2713 = vadd.f32 0.0, %v2712
        %2714 = vmatmul.bf16.gmra.mxu0 %v2639
        %v2715 = vpop.f32.mrf.mxu0
        %v2716 = vadd.f32 0.0, %v2715
        %v2717 = vpop.f32.mrf.mxu0
        %v2718 = vadd.f32 0.0, %v2717
        %2719 = vmatmul.bf16.gmra.mxu0 %v2642
        %v2720 = vpop.f32.mrf.mxu0
        %v2721 = vadd.f32 0.0, %v2720
        %v2722 = vpop.f32.mrf.mxu0
        %v2723 = vadd.f32 0.0, %v2722
        %2724 = vmatmul.bf16.gmra.mxu0 %v2645
        %v2725 = vpop.f32.mrf.mxu0
        %v2726 = vadd.f32 0.0, %v2725
        %v2727 = vpop.f32.mrf.mxu0
        %v2728 = vadd.f32 0.0, %v2727
        %2729 = vmatmul.bf16.gmra.mxu0 %v2648
        %v2730 = vpop.f32.mrf.mxu0
        %v2731 = vadd.f32 0.0, %v2730
        %v2732 = vpop.f32.mrf.mxu0
        %v2733 = vadd.f32 0.0, %v2732
        %2734 = vmatmul.bf16.gmra.mxu0 %v2651
        %v2735 = vpop.f32.mrf.mxu0
        %v2736 = vadd.f32 0.0, %v2735
        %v2737 = vpop.f32.mrf.mxu0
        %v2738 = vadd.f32 0.0, %v2737
        %2739 = vmatmul.bf16.gmra.mxu0 %v2654
        %v2740 = vpop.f32.mrf.mxu0
        %v2741 = vadd.f32 0.0, %v2740
        %v2742 = vpop.f32.mrf.mxu0
        %v2743 = vadd.f32 0.0, %v2742
        %2744 = vdwg.mxu0
        %v2745 = vadd.f32 %v2431, %v2666
        %v2746 = vadd.f32 %v2432, %v2668
        %v2747 = vadd.f32 %v2433, %v2671
        %v2748 = vadd.f32 %v2434, %v2673
        %v2749 = vadd.f32 %v2435, %v2676
        %v2750 = vadd.f32 %v2436, %v2678
        %v2751 = vadd.f32 %v2437, %v2681
        %v2752 = vadd.f32 %v2438, %v2683
        %v2753 = vadd.f32 %v2439, %v2686
        %v2754 = vadd.f32 %v2440, %v2688
        %v2755 = vadd.f32 %v2441, %v2691
        %v2756 = vadd.f32 %v2442, %v2693
        %v2757 = vadd.f32 %v2443, %v2696
        %v2758 = vadd.f32 %v2444, %v2698
        %v2759 = vadd.f32 %v2445, %v2701
        %v2760 = vadd.f32 %v2446, %v2703
        %v2761 = vadd.f32 %v2447, %v2706
        %v2762 = vadd.f32 %v2448, %v2708
        %v2763 = vadd.f32 %v2449, %v2711
        %v2764 = vadd.f32 %v2450, %v2713
        %v2765 = vadd.f32 %v2451, %v2716
        %v2766 = vadd.f32 %v2452, %v2718
        %v2767 = vadd.f32 %v2453, %v2721
        %v2768 = vadd.f32 %v2454, %v2723
        %v2769 = vadd.f32 %v2455, %v2726
        %v2770 = vadd.f32 %v2456, %v2728
        %v2771 = vadd.f32 %v2457, %v2731
        %v2772 = vadd.f32 %v2458, %v2733
        %v2773 = vadd.f32 %v2459, %v2736
        %v2774 = vadd.f32 %v2460, %v2738
        %v2775 = vadd.f32 %v2461, %v2741
        %v2776 = vadd.f32 %v2462, %v2743
        %s2777 = scalar_lea.vmem %s1179, 612 [#allocation5]
        %v2778 = vld [vmem:[%s2777] sm:$0xf]
        %v2779 = vld [vmem:[%s2777 + $0x4] sm:$0xf]
        %v2780 = vld [vmem:[%s2777 + $0xc] sm:$0xf]
        %v2781 = vld [vmem:[%s2777 + $0x10] sm:$0xf]
        %v2782 = vld [vmem:[%s2777 + $0x18] sm:$0xf]
        %v2783 = vld [vmem:[%s2777 + $0x1c] sm:$0xf]
        %v2784 = vld [vmem:[%s2777 + $0x24] sm:$0xf]
        %v2785 = vld [vmem:[%s2777 + $0x28] sm:$0xf]
        %v2786 = vld [vmem:[%s2777 + $0x30] sm:$0xf]
        %v2787 = vld [vmem:[%s2777 + $0x34] sm:$0xf]
        %v2788 = vld [vmem:[%s2777 + $0x3c] sm:$0xf]
        %v2789 = vld [vmem:[%s2777 + $0x40] sm:$0xf]
        %v2790 = vld [vmem:[%s2777 + $0x48] sm:$0xf]
        %v2791 = vld [vmem:[%s2777 + $0x4c] sm:$0xf]
        %v2792 = vld [vmem:[%s2777 + $0x54] sm:$0xf]
        %v2793 = vld [vmem:[%s2777 + $0x58] sm:$0xf]
        %v2794 = vld [vmem:[%s2777 + $0x60] sm:$0xf]
        %v2795 = vld [vmem:[%s2777 + $0x64] sm:$0xf]
        %v2796 = vld [vmem:[%s2777 + $0x6c] sm:$0xf]
        %v2797 = vld [vmem:[%s2777 + $0x70] sm:$0xf]
        %v2798 = vld [vmem:[%s2777 + $0x78] sm:$0xf]
        %v2799 = vld [vmem:[%s2777 + $0x7c] sm:$0xf]
        %v2800 = vld [vmem:[%s2777 + $0x84] sm:$0xf]
        %v2801 = vld [vmem:[%s2777 + $0x88] sm:$0xf]
        %v2802 = vld [vmem:[%s2777 + $0x90] sm:$0xf]
        %v2803 = vld [vmem:[%s2777 + $0x94] sm:$0xf]
        %v2804 = vld [vmem:[%s2777 + $0x9c] sm:$0xf]
        %v2805 = vld [vmem:[%s2777 + $0xa0] sm:$0xf]
        %v2806 = vld [vmem:[%s2777 + $0xa8] sm:$0xf]
        %v2807 = vld [vmem:[%s2777 + $0xac] sm:$0xf]
        %v2808 = vld [vmem:[%s2777 + $0xb4] sm:$0xf]
        %v2809 = vld [vmem:[%s2777 + $0xb8] sm:$0xf]
        %v2810 = vld [vmem:[%s1 + $0x80] sm:$0xf]
        %v2811 = vld [vmem:[%s1 + $0x84] sm:$0xf]
        %v2812 = vld [vmem:[%s1 + $0x88] sm:$0xf]
        %v2813 = vld [vmem:[%s1 + $0x8c] sm:$0xf]
        %v2814 = vld [vmem:[%s1 + $0x90] sm:$0xf]
        %v2815 = vld [vmem:[%s1 + $0x94] sm:$0xf]
        %v2816 = vld [vmem:[%s1 + $0x98] sm:$0xf]
        %v2817 = vld [vmem:[%s1 + $0x9c] sm:$0xf]
        %v2850 = vunpack.c.l.b16 %v2778
        %v2851 = vunpack.c.l.b16 %v2779
        %v2852 = vunpack.c.l.b16 %v2780
        %v2853 = vunpack.c.l.b16 %v2781
        %v2854 = vunpack.c.l.b16 %v2782
        %v2855 = vunpack.c.l.b16 %v2783
        %v2856 = vunpack.c.l.b16 %v2784
        %v2857 = vunpack.c.l.b16 %v2785
        %v2858 = vunpack.c.l.b16 %v2786
        %v2859 = vunpack.c.l.b16 %v2787
        %v2860 = vunpack.c.l.b16 %v2788
        %v2861 = vunpack.c.l.b16 %v2789
        %v2862 = vunpack.c.l.b16 %v2790
        %v2863 = vunpack.c.l.b16 %v2791
        %v2864 = vunpack.c.l.b16 %v2792
        %v2865 = vunpack.c.l.b16 %v2793
        %v2866 = vunpack.c.l.b16 %v2794
        %v2867 = vunpack.c.l.b16 %v2795
        %v2868 = vunpack.c.l.b16 %v2796
        %v2869 = vunpack.c.l.b16 %v2797
        %v2870 = vunpack.c.l.b16 %v2798
        %v2871 = vunpack.c.l.b16 %v2799
        %v2872 = vunpack.c.l.b16 %v2800
        %v2873 = vunpack.c.l.b16 %v2801
        %v2874 = vunpack.c.l.b16 %v2802
        %v2875 = vunpack.c.l.b16 %v2803
        %v2876 = vunpack.c.l.b16 %v2804
        %v2877 = vunpack.c.l.b16 %v2805
        %v2878 = vunpack.c.l.b16 %v2806
        %v2879 = vunpack.c.l.b16 %v2807
        %v2880 = vunpack.c.l.b16 %v2808
        %v2881 = vunpack.c.l.b16 %v2809
        %v2882 = vpack.c.b16 %v2851, %v2850
        %v2883 = vpack.c.b16 %v2853, %v2852
        %v2884 = vpack.c.b16 %v2855, %v2854
        %v2885 = vpack.c.b16 %v2857, %v2856
        %v2886 = vpack.c.b16 %v2859, %v2858
        %v2887 = vpack.c.b16 %v2861, %v2860
        %v2888 = vpack.c.b16 %v2863, %v2862
        %v2889 = vpack.c.b16 %v2865, %v2864
        %v2890 = vpack.c.b16 %v2867, %v2866
        %v2891 = vpack.c.b16 %v2869, %v2868
        %v2892 = vpack.c.b16 %v2871, %v2870
        %v2893 = vpack.c.b16 %v2873, %v2872
        %v2894 = vpack.c.b16 %v2875, %v2874
        %v2895 = vpack.c.b16 %v2877, %v2876
        %v2896 = vpack.c.b16 %v2879, %v2878
        %v2897 = vpack.c.b16 %v2881, %v2880
        %v2906 = vunpack.c.l.b16 %v2810
        %v2907 = vunpack.c.l.b16 %v2811
        %v2908 = vunpack.c.l.b16 %v2812
        %v2909 = vunpack.c.l.b16 %v2813
        %v2910 = vunpack.c.l.b16 %v2814
        %v2911 = vunpack.c.l.b16 %v2815
        %v2912 = vunpack.c.l.b16 %v2816
        %v2913 = vunpack.c.l.b16 %v2817
        %v2914 = vpack.c.b16 %v2907, %v2906
        %v2915 = vpack.c.b16 %v2909, %v2908
        %v2916 = vpack.c.b16 %v2911, %v2910
        %v2917 = vpack.c.b16 %v2913, %v2912
        %v2923 = vsel %vm1400, %v2882, 0
        %v2926 = vsel %vm1400, %v2883, 0
        %v2929 = vsel %vm1400, %v2884, 0
        %v2932 = vsel %vm1400, %v2885, 0
        %v2935 = vsel %vm1400, %v2886, 0
        %v2938 = vsel %vm1400, %v2887, 0
        %v2941 = vsel %vm1400, %v2888, 0
        %v2944 = vsel %vm1400, %v2889, 0
        %v2947 = vsel %vm1400, %v2890, 0
        %v2950 = vsel %vm1400, %v2891, 0
        %v2953 = vsel %vm1400, %v2892, 0
        %v2956 = vsel %vm1400, %v2893, 0
        %v2959 = vsel %vm1400, %v2894, 0
        %v2962 = vsel %vm1400, %v2895, 0
        %v2965 = vsel %vm1400, %v2896, 0
        %v2968 = vsel %vm1400, %v2897, 0
        %2970 = vmatpush.bf16.msra.mxu0 0
        %2971 = vmatpush.bf16.msra.mxu0 0
        %2972 = vmatpush.bf16.msra.mxu0 0
        %2973 = vmatpush.bf16.msra.mxu0 0
        %2974 = vmatpush.bf16.msra.mxu0 %v2917
        %2975 = vmatpush.bf16.msra.mxu0 %v2916
        %2976 = vmatpush.bf16.msra.mxu0 %v2915
        %2977 = vmatpush.bf16.msra.mxu0 %v2914
        %2978 = vmatmul.bf16.gmra.mxu0 %v2923
        %v2979 = vpop.f32.mrf.mxu0
        %v2980 = vadd.f32 0.0, %v2979
        %v2981 = vpop.f32.mrf.mxu0
        %v2982 = vadd.f32 0.0, %v2981
        %2983 = vmatmul.bf16.gmra.mxu0 %v2926
        %v2984 = vpop.f32.mrf.mxu0
        %v2985 = vadd.f32 0.0, %v2984
        %v2986 = vpop.f32.mrf.mxu0
        %v2987 = vadd.f32 0.0, %v2986
        %2988 = vmatmul.bf16.gmra.mxu0 %v2929
        %v2989 = vpop.f32.mrf.mxu0
        %v2990 = vadd.f32 0.0, %v2989
        %v2991 = vpop.f32.mrf.mxu0
        %v2992 = vadd.f32 0.0, %v2991
        %2993 = vmatmul.bf16.gmra.mxu0 %v2932
        %v2994 = vpop.f32.mrf.mxu0
        %v2995 = vadd.f32 0.0, %v2994
        %v2996 = vpop.f32.mrf.mxu0
        %v2997 = vadd.f32 0.0, %v2996
        %2998 = vmatmul.bf16.gmra.mxu0 %v2935
        %v2999 = vpop.f32.mrf.mxu0
        %v3000 = vadd.f32 0.0, %v2999
        %v3001 = vpop.f32.mrf.mxu0
        %v3002 = vadd.f32 0.0, %v3001
        %3003 = vmatmul.bf16.gmra.mxu0 %v2938
        %v3004 = vpop.f32.mrf.mxu0
        %v3005 = vadd.f32 0.0, %v3004
        %v3006 = vpop.f32.mrf.mxu0
        %v3007 = vadd.f32 0.0, %v3006
        %3008 = vmatmul.bf16.gmra.mxu0 %v2941
        %v3009 = vpop.f32.mrf.mxu0
        %v3010 = vadd.f32 0.0, %v3009
        %v3011 = vpop.f32.mrf.mxu0
        %v3012 = vadd.f32 0.0, %v3011
        %3013 = vmatmul.bf16.gmra.mxu0 %v2944
        %v3014 = vpop.f32.mrf.mxu0
        %v3015 = vadd.f32 0.0, %v3014
        %v3016 = vpop.f32.mrf.mxu0
        %v3017 = vadd.f32 0.0, %v3016
        %3018 = vmatmul.bf16.gmra.mxu0 %v2947
        %v3019 = vpop.f32.mrf.mxu0
        %v3020 = vadd.f32 0.0, %v3019
        %v3021 = vpop.f32.mrf.mxu0
        %v3022 = vadd.f32 0.0, %v3021
        %3023 = vmatmul.bf16.gmra.mxu0 %v2950
        %v3024 = vpop.f32.mrf.mxu0
        %v3025 = vadd.f32 0.0, %v3024
        %v3026 = vpop.f32.mrf.mxu0
        %v3027 = vadd.f32 0.0, %v3026
        %3028 = vmatmul.bf16.gmra.mxu0 %v2953
        %v3029 = vpop.f32.mrf.mxu0
        %v3030 = vadd.f32 0.0, %v3029
        %v3031 = vpop.f32.mrf.mxu0
        %v3032 = vadd.f32 0.0, %v3031
        %3033 = vmatmul.bf16.gmra.mxu0 %v2956
        %v3034 = vpop.f32.mrf.mxu0
        %v3035 = vadd.f32 0.0, %v3034
        %v3036 = vpop.f32.mrf.mxu0
        %v3037 = vadd.f32 0.0, %v3036
        %3038 = vmatmul.bf16.gmra.mxu0 %v2959
        %v3039 = vpop.f32.mrf.mxu0
        %v3040 = vadd.f32 0.0, %v3039
        %v3041 = vpop.f32.mrf.mxu0
        %v3042 = vadd.f32 0.0, %v3041
        %3043 = vmatmul.bf16.gmra.mxu0 %v2962
        %v3044 = vpop.f32.mrf.mxu0
        %v3045 = vadd.f32 0.0, %v3044
        %v3046 = vpop.f32.mrf.mxu0
        %v3047 = vadd.f32 0.0, %v3046
        %3048 = vmatmul.bf16.gmra.mxu0 %v2965
        %v3049 = vpop.f32.mrf.mxu0
        %v3050 = vadd.f32 0.0, %v3049
        %v3051 = vpop.f32.mrf.mxu0
        %v3052 = vadd.f32 0.0, %v3051
        %3053 = vmatmul.bf16.gmra.mxu0 %v2968
        %v3054 = vpop.f32.mrf.mxu0
        %v3055 = vadd.f32 0.0, %v3054
        %v3056 = vpop.f32.mrf.mxu0
        %v3057 = vadd.f32 0.0, %v3056
        %3058 = vdwg.mxu0
        %v3059 = vadd.f32 %v2745, %v2980
        %v3060 = vadd.f32 %v2746, %v2982
        %v3061 = vadd.f32 %v2747, %v2985
        %v3062 = vadd.f32 %v2748, %v2987
        %v3063 = vadd.f32 %v2749, %v2990
        %v3064 = vadd.f32 %v2750, %v2992
        %v3065 = vadd.f32 %v2751, %v2995
        %v3066 = vadd.f32 %v2752, %v2997
        %v3067 = vadd.f32 %v2753, %v3000
        %v3068 = vadd.f32 %v2754, %v3002
        %v3069 = vadd.f32 %v2755, %v3005
        %v3070 = vadd.f32 %v2756, %v3007
        %v3071 = vadd.f32 %v2757, %v3010
        %v3072 = vadd.f32 %v2758, %v3012
        %v3073 = vadd.f32 %v2759, %v3015
        %v3074 = vadd.f32 %v2760, %v3017
        %v3075 = vadd.f32 %v2761, %v3020
        %v3076 = vadd.f32 %v2762, %v3022
        %v3077 = vadd.f32 %v2763, %v3025
        %v3078 = vadd.f32 %v2764, %v3027
        %v3079 = vadd.f32 %v2765, %v3030
        %v3080 = vadd.f32 %v2766, %v3032
        %v3081 = vadd.f32 %v2767, %v3035
        %v3082 = vadd.f32 %v2768, %v3037
        %v3083 = vadd.f32 %v2769, %v3040
        %v3084 = vadd.f32 %v2770, %v3042
        %v3085 = vadd.f32 %v2771, %v3045
        %v3086 = vadd.f32 %v2772, %v3047
        %v3087 = vadd.f32 %v2773, %v3050
        %v3088 = vadd.f32 %v2774, %v3052
        %v3089 = vadd.f32 %v2775, %v3055
        %v3090 = vadd.f32 %v2776, %v3057
        %v3091 = vld [vmem:[%s2463] sm:$0xf]
        %v3092 = vld [vmem:[%s2463 + $0x4] sm:$0xf]
        %v3093 = vld [vmem:[%s2463 + $0x8] sm:$0x1]
        %v3094 = vld [vmem:[%s2463 + $0xc] sm:$0xf]
        %v3095 = vld [vmem:[%s2463 + $0x10] sm:$0xf]
        %v3096 = vld [vmem:[%s2463 + $0x14] sm:$0x1]
        %v3097 = vld [vmem:[%s2463 + $0x18] sm:$0xf]
        %v3098 = vld [vmem:[%s2463 + $0x1c] sm:$0xf]
        %v3099 = vld [vmem:[%s2463 + $0x20] sm:$0x1]
        %v3100 = vld [vmem:[%s2463 + $0x24] sm:$0xf]
        %v3101 = vld [vmem:[%s2463 + $0x28] sm:$0xf]
        %v3102 = vld [vmem:[%s2463 + $0x2c] sm:$0x1]
        %v3103 = vld [vmem:[%s2463 + $0x30] sm:$0xf]
        %v3104 = vld [vmem:[%s2463 + $0x34] sm:$0xf]
        %v3105 = vld [vmem:[%s2463 + $0x38] sm:$0x1]
        %v3106 = vld [vmem:[%s2463 + $0x3c] sm:$0xf]
        %v3107 = vld [vmem:[%s2463 + $0x40] sm:$0xf]
        %v3108 = vld [vmem:[%s2463 + $0x44] sm:$0x1]
        %v3109 = vld [vmem:[%s2463 + $0x48] sm:$0xf]
        %v3110 = vld [vmem:[%s2463 + $0x4c] sm:$0xf]
        %v3111 = vld [vmem:[%s2463 + $0x50] sm:$0x1]
        %v3112 = vld [vmem:[%s2463 + $0x54] sm:$0xf]
        %v3113 = vld [vmem:[%s2463 + $0x58] sm:$0xf]
        %v3114 = vld [vmem:[%s2463 + $0x5c] sm:$0x1]
        %v3115 = vld [vmem:[%s2463 + $0x60] sm:$0xf]
        %v3116 = vld [vmem:[%s2463 + $0x64] sm:$0xf]
        %v3117 = vld [vmem:[%s2463 + $0x68] sm:$0x1]
        %v3118 = vld [vmem:[%s2463 + $0x6c] sm:$0xf]
        %v3119 = vld [vmem:[%s2463 + $0x70] sm:$0xf]
        %v3120 = vld [vmem:[%s2463 + $0x74] sm:$0x1]
        %v3121 = vld [vmem:[%s2463 + $0x78] sm:$0xf]
        %v3122 = vld [vmem:[%s2463 + $0x7c] sm:$0xf]
        %v3123 = vld [vmem:[%s2463 + $0x80] sm:$0x1]
        %v3124 = vld [vmem:[%s2463 + $0x84] sm:$0xf]
        %v3125 = vld [vmem:[%s2463 + $0x88] sm:$0xf]
        %v3126 = vld [vmem:[%s2463 + $0x8c] sm:$0x1]
        %v3127 = vld [vmem:[%s2463 + $0x90] sm:$0xf]
        %v3128 = vld [vmem:[%s2463 + $0x94] sm:$0xf]
        %v3129 = vld [vmem:[%s2463 + $0x98] sm:$0x1]
        %v3130 = vld [vmem:[%s2463 + $0x9c] sm:$0xf]
        %v3131 = vld [vmem:[%s2463 + $0xa0] sm:$0xf]
        %v3132 = vld [vmem:[%s2463 + $0xa4] sm:$0x1]
        %v3133 = vld [vmem:[%s2463 + $0xa8] sm:$0xf]
        %v3134 = vld [vmem:[%s2463 + $0xac] sm:$0xf]
        %v3135 = vld [vmem:[%s2463 + $0xb0] sm:$0x1]
        %v3136 = vld [vmem:[%s2463 + $0xb4] sm:$0xf]
        %v3137 = vld [vmem:[%s2463 + $0xb8] sm:$0xf]
        %v3138 = vld [vmem:[%s2463 + $0xbc] sm:$0x1]
        %v3140 = vshrl.u32 %v3091, 16
        %v3142 = vrot.slane %v3140, 4
        %v3143 = vshll.u32 %v3091, 16
        %v3145 = vrot.slane %v3143, 5
        %v3146 = vor.u32 %v3142, %v3145
        %v3147 = vrot.slane %v3146, 4
        %v3149 = vshll.u32 %v3092, 16
        %v3151 = vrot.slane %v3149, 5
        %v3152 = vsel %vm1829, %v3147, %v3151
        %v3153 = vshrl.u32 %v3092, 16
        %v3155 = vrot.slane %v3153, 4
        %v3156 = vor.u32 %v3155, %v3151
        %v3157 = vrot.slane %v3156, 4
        %v3159 = vshll.u32 %v3093, 16
        %v3161 = vrot.slane %v3159, 5
        %v3162 = vsel %vm1829, %v3157, %v3161
        %v3164 = vshrl.u32 %v3094, 16
        %v3166 = vrot.slane %v3164, 4
        %v3167 = vshll.u32 %v3094, 16
        %v3169 = vrot.slane %v3167, 5
        %v3170 = vor.u32 %v3166, %v3169
        %v3171 = vrot.slane %v3170, 4
        %v3173 = vshll.u32 %v3095, 16
        %v3175 = vrot.slane %v3173, 5
        %v3176 = vsel %vm1829, %v3171, %v3175
        %v3177 = vshrl.u32 %v3095, 16
        %v3179 = vrot.slane %v3177, 4
        %v3180 = vor.u32 %v3179, %v3175
        %v3181 = vrot.slane %v3180, 4
        %v3183 = vshll.u32 %v3096, 16
        %v3185 = vrot.slane %v3183, 5
        %v3186 = vsel %vm1829, %v3181, %v3185
        %v3188 = vshrl.u32 %v3097, 16
        %v3190 = vrot.slane %v3188, 4
        %v3191 = vshll.u32 %v3097, 16
        %v3193 = vrot.slane %v3191, 5
        %v3194 = vor.u32 %v3190, %v3193
        %v3195 = vrot.slane %v3194, 4
        %v3197 = vshll.u32 %v3098, 16
        %v3199 = vrot.slane %v3197, 5
        %v3200 = vsel %vm1829, %v3195, %v3199
        %v3201 = vshrl.u32 %v3098, 16
        %v3203 = vrot.slane %v3201, 4
        %v3204 = vor.u32 %v3203, %v3199
        %v3205 = vrot.slane %v3204, 4
        %v3207 = vshll.u32 %v3099, 16
        %v3209 = vrot.slane %v3207, 5
        %v3210 = vsel %vm1829, %v3205, %v3209
        %v3212 = vshrl.u32 %v3100, 16
        %v3214 = vrot.slane %v3212, 4
        %v3215 = vshll.u32 %v3100, 16
        %v3217 = vrot.slane %v3215, 5
        %v3218 = vor.u32 %v3214, %v3217
        %v3219 = vrot.slane %v3218, 4
        %v3221 = vshll.u32 %v3101, 16
        %v3223 = vrot.slane %v3221, 5
        %v3224 = vsel %vm1829, %v3219, %v3223
        %v3225 = vshrl.u32 %v3101, 16
        %v3227 = vrot.slane %v3225, 4
        %v3228 = vor.u32 %v3227, %v3223
        %v3229 = vrot.slane %v3228, 4
        %v3231 = vshll.u32 %v3102, 16
        %v3233 = vrot.slane %v3231, 5
        %v3234 = vsel %vm1829, %v3229, %v3233
        %v3236 = vshrl.u32 %v3103, 16
        %v3238 = vrot.slane %v3236, 4
        %v3239 = vshll.u32 %v3103, 16
        %v3241 = vrot.slane %v3239, 5
        %v3242 = vor.u32 %v3238, %v3241
        %v3243 = vrot.slane %v3242, 4
        %v3245 = vshll.u32 %v3104, 16
        %v3247 = vrot.slane %v3245, 5
        %v3248 = vsel %vm1829, %v3243, %v3247
        %v3249 = vshrl.u32 %v3104, 16
        %v3251 = vrot.slane %v3249, 4
        %v3252 = vor.u32 %v3251, %v3247
        %v3253 = vrot.slane %v3252, 4
        %v3255 = vshll.u32 %v3105, 16
        %v3257 = vrot.slane %v3255, 5
        %v3258 = vsel %vm1829, %v3253, %v3257
        %v3260 = vshrl.u32 %v3106, 16
        %v3262 = vrot.slane %v3260, 4
        %v3263 = vshll.u32 %v3106, 16
        %v3265 = vrot.slane %v3263, 5
        %v3266 = vor.u32 %v3262, %v3265
        %v3267 = vrot.slane %v3266, 4
        %v3269 = vshll.u32 %v3107, 16
        %v3271 = vrot.slane %v3269, 5
        %v3272 = vsel %vm1829, %v3267, %v3271
        %v3273 = vshrl.u32 %v3107, 16
        %v3275 = vrot.slane %v3273, 4
        %v3276 = vor.u32 %v3275, %v3271
        %v3277 = vrot.slane %v3276, 4
        %v3279 = vshll.u32 %v3108, 16
        %v3281 = vrot.slane %v3279, 5
        %v3282 = vsel %vm1829, %v3277, %v3281
        %v3284 = vshrl.u32 %v3109, 16
        %v3286 = vrot.slane %v3284, 4
        %v3287 = vshll.u32 %v3109, 16
        %v3289 = vrot.slane %v3287, 5
        %v3290 = vor.u32 %v3286, %v3289
        %v3291 = vrot.slane %v3290, 4
        %v3293 = vshll.u32 %v3110, 16
        %v3295 = vrot.slane %v3293, 5
        %v3296 = vsel %vm1829, %v3291, %v3295
        %v3297 = vshrl.u32 %v3110, 16
        %v3299 = vrot.slane %v3297, 4
        %v3300 = vor.u32 %v3299, %v3295
        %v3301 = vrot.slane %v3300, 4
        %v3303 = vshll.u32 %v3111, 16
        %v3305 = vrot.slane %v3303, 5
        %v3306 = vsel %vm1829, %v3301, %v3305
        %v3308 = vshrl.u32 %v3112, 16
        %v3310 = vrot.slane %v3308, 4
        %v3311 = vshll.u32 %v3112, 16
        %v3313 = vrot.slane %v3311, 5
        %v3314 = vor.u32 %v3310, %v3313
        %v3315 = vrot.slane %v3314, 4
        %v3317 = vshll.u32 %v3113, 16
        %v3319 = vrot.slane %v3317, 5
        %v3320 = vsel %vm1829, %v3315, %v3319
        %v3321 = vshrl.u32 %v3113, 16
        %v3323 = vrot.slane %v3321, 4
        %v3324 = vor.u32 %v3323, %v3319
        %v3325 = vrot.slane %v3324, 4
        %v3327 = vshll.u32 %v3114, 16
        %v3329 = vrot.slane %v3327, 5
        %v3330 = vsel %vm1829, %v3325, %v3329
        %v3332 = vshrl.u32 %v3115, 16
        %v3334 = vrot.slane %v3332, 4
        %v3335 = vshll.u32 %v3115, 16
        %v3337 = vrot.slane %v3335, 5
        %v3338 = vor.u32 %v3334, %v3337
        %v3339 = vrot.slane %v3338, 4
        %v3341 = vshll.u32 %v3116, 16
        %v3343 = vrot.slane %v3341, 5
        %v3344 = vsel %vm1829, %v3339, %v3343
        %v3345 = vshrl.u32 %v3116, 16
        %v3347 = vrot.slane %v3345, 4
        %v3348 = vor.u32 %v3347, %v3343
        %v3349 = vrot.slane %v3348, 4
        %v3351 = vshll.u32 %v3117, 16
        %v3353 = vrot.slane %v3351, 5
        %v3354 = vsel %vm1829, %v3349, %v3353
        %v3356 = vshrl.u32 %v3118, 16
        %v3358 = vrot.slane %v3356, 4
        %v3359 = vshll.u32 %v3118, 16
        %v3361 = vrot.slane %v3359, 5
        %v3362 = vor.u32 %v3358, %v3361
        %v3363 = vrot.slane %v3362, 4
        %v3365 = vshll.u32 %v3119, 16
        %v3367 = vrot.slane %v3365, 5
        %v3368 = vsel %vm1829, %v3363, %v3367
        %v3369 = vshrl.u32 %v3119, 16
        %v3371 = vrot.slane %v3369, 4
        %v3372 = vor.u32 %v3371, %v3367
        %v3373 = vrot.slane %v3372, 4
        %v3375 = vshll.u32 %v3120, 16
        %v3377 = vrot.slane %v3375, 5
        %v3378 = vsel %vm1829, %v3373, %v3377
        %v3380 = vshrl.u32 %v3121, 16
        %v3382 = vrot.slane %v3380, 4
        %v3383 = vshll.u32 %v3121, 16
        %v3385 = vrot.slane %v3383, 5
        %v3386 = vor.u32 %v3382, %v3385
        %v3387 = vrot.slane %v3386, 4
        %v3389 = vshll.u32 %v3122, 16
        %v3391 = vrot.slane %v3389, 5
        %v3392 = vsel %vm1829, %v3387, %v3391
        %v3393 = vshrl.u32 %v3122, 16
        %v3395 = vrot.slane %v3393, 4
        %v3396 = vor.u32 %v3395, %v3391
        %v3397 = vrot.slane %v3396, 4
        %v3399 = vshll.u32 %v3123, 16
        %v3401 = vrot.slane %v3399, 5
        %v3402 = vsel %vm1829, %v3397, %v3401
        %v3404 = vshrl.u32 %v3124, 16
        %v3406 = vrot.slane %v3404, 4
        %v3407 = vshll.u32 %v3124, 16
        %v3409 = vrot.slane %v3407, 5
        %v3410 = vor.u32 %v3406, %v3409
        %v3411 = vrot.slane %v3410, 4
        %v3413 = vshll.u32 %v3125, 16
        %v3415 = vrot.slane %v3413, 5
        %v3416 = vsel %vm1829, %v3411, %v3415
        %v3417 = vshrl.u32 %v3125, 16
        %v3419 = vrot.slane %v3417, 4
        %v3420 = vor.u32 %v3419, %v3415
        %v3421 = vrot.slane %v3420, 4
        %v3423 = vshll.u32 %v3126, 16
        %v3425 = vrot.slane %v3423, 5
        %v3426 = vsel %vm1829, %v3421, %v3425
        %v3428 = vshrl.u32 %v3127, 16
        %v3430 = vrot.slane %v3428, 4
        %v3431 = vshll.u32 %v3127, 16
        %v3433 = vrot.slane %v3431, 5
        %v3434 = vor.u32 %v3430, %v3433
        %v3435 = vrot.slane %v3434, 4
        %v3437 = vshll.u32 %v3128, 16
        %v3439 = vrot.slane %v3437, 5
        %v3440 = vsel %vm1829, %v3435, %v3439
        %v3441 = vshrl.u32 %v3128, 16
        %v3443 = vrot.slane %v3441, 4
        %v3444 = vor.u32 %v3443, %v3439
        %v3445 = vrot.slane %v3444, 4
        %v3447 = vshll.u32 %v3129, 16
        %v3449 = vrot.slane %v3447, 5
        %v3450 = vsel %vm1829, %v3445, %v3449
        %v3452 = vshrl.u32 %v3130, 16
        %v3454 = vrot.slane %v3452, 4
        %v3455 = vshll.u32 %v3130, 16
        %v3457 = vrot.slane %v3455, 5
        %v3458 = vor.u32 %v3454, %v3457
        %v3459 = vrot.slane %v3458, 4
        %v3461 = vshll.u32 %v3131, 16
        %v3463 = vrot.slane %v3461, 5
        %v3464 = vsel %vm1829, %v3459, %v3463
        %v3465 = vshrl.u32 %v3131, 16
        %v3467 = vrot.slane %v3465, 4
        %v3468 = vor.u32 %v3467, %v3463
        %v3469 = vrot.slane %v3468, 4
        %v3471 = vshll.u32 %v3132, 16
        %v3473 = vrot.slane %v3471, 5
        %v3474 = vsel %vm1829, %v3469, %v3473
        %v3476 = vshrl.u32 %v3133, 16
        %v3478 = vrot.slane %v3476, 4
        %v3479 = vshll.u32 %v3133, 16
        %v3481 = vrot.slane %v3479, 5
        %v3482 = vor.u32 %v3478, %v3481
        %v3483 = vrot.slane %v3482, 4
        %v3485 = vshll.u32 %v3134, 16
        %v3487 = vrot.slane %v3485, 5
        %v3488 = vsel %vm1829, %v3483, %v3487
        %v3489 = vshrl.u32 %v3134, 16
        %v3491 = vrot.slane %v3489, 4
        %v3492 = vor.u32 %v3491, %v3487
        %v3493 = vrot.slane %v3492, 4
        %v3495 = vshll.u32 %v3135, 16
        %v3497 = vrot.slane %v3495, 5
        %v3498 = vsel %vm1829, %v3493, %v3497
        %v3500 = vshrl.u32 %v3136, 16
        %v3502 = vrot.slane %v3500, 4
        %v3503 = vshll.u32 %v3136, 16
        %v3505 = vrot.slane %v3503, 5
        %v3506 = vor.u32 %v3502, %v3505
        %v3507 = vrot.slane %v3506, 4
        %v3509 = vshll.u32 %v3137, 16
        %v3511 = vrot.slane %v3509, 5
        %v3512 = vsel %vm1829, %v3507, %v3511
        %v3513 = vshrl.u32 %v3137, 16
        %v3515 = vrot.slane %v3513, 4
        %v3516 = vor.u32 %v3515, %v3511
        %v3517 = vrot.slane %v3516, 4
        %v3519 = vshll.u32 %v3138, 16
        %v3521 = vrot.slane %v3519, 5
        %v3522 = vsel %vm1829, %v3517, %v3521
        %v3523 = vld [vmem:[%s1 + $0xa0] sm:$0xf]
        %v3524 = vld [vmem:[%s1 + $0xa4] sm:$0xf]
        %v3525 = vld [vmem:[%s1 + $0xa8] sm:$0xf]
        %v3526 = vld [vmem:[%s1 + $0xac] sm:$0xf]
        %v3527 = vld [vmem:[%s1 + $0xb0] sm:$0xf]
        %v3528 = vld [vmem:[%s1 + $0xb4] sm:$0xf]
        %v3529 = vld [vmem:[%s1 + $0xb8] sm:$0xf]
        %v3530 = vld [vmem:[%s1 + $0xbc] sm:$0xf]
        %v3531 = vunpack.c.l.b16 %v3152
        %v3532 = vunpack.c.l.b16 %v3162
        %v3533 = vunpack.c.l.b16 %v3176
        %v3534 = vunpack.c.l.b16 %v3186
        %v3535 = vunpack.c.l.b16 %v3200
        %v3536 = vunpack.c.l.b16 %v3210
        %v3537 = vunpack.c.l.b16 %v3224
        %v3538 = vunpack.c.l.b16 %v3234
        %v3539 = vunpack.c.l.b16 %v3248
        %v3540 = vunpack.c.l.b16 %v3258
        %v3541 = vunpack.c.l.b16 %v3272
        %v3542 = vunpack.c.l.b16 %v3282
        %v3543 = vunpack.c.l.b16 %v3296
        %v3544 = vunpack.c.l.b16 %v3306
        %v3545 = vunpack.c.l.b16 %v3320
        %v3546 = vunpack.c.l.b16 %v3330
        %v3547 = vunpack.c.l.b16 %v3344
        %v3548 = vunpack.c.l.b16 %v3354
        %v3549 = vunpack.c.l.b16 %v3368
        %v3550 = vunpack.c.l.b16 %v3378
        %v3551 = vunpack.c.l.b16 %v3392
        %v3552 = vunpack.c.l.b16 %v3402
        %v3553 = vunpack.c.l.b16 %v3416
        %v3554 = vunpack.c.l.b16 %v3426
        %v3555 = vunpack.c.l.b16 %v3440
        %v3556 = vunpack.c.l.b16 %v3450
        %v3557 = vunpack.c.l.b16 %v3464
        %v3558 = vunpack.c.l.b16 %v3474
        %v3559 = vunpack.c.l.b16 %v3488
        %v3560 = vunpack.c.l.b16 %v3498
        %v3561 = vunpack.c.l.b16 %v3512
        %v3562 = vunpack.c.l.b16 %v3522
        %v3563 = vpack.c.b16 %v3532, %v3531
        %v3564 = vpack.c.b16 %v3534, %v3533
        %v3565 = vpack.c.b16 %v3536, %v3535
        %v3566 = vpack.c.b16 %v3538, %v3537
        %v3567 = vpack.c.b16 %v3540, %v3539
        %v3568 = vpack.c.b16 %v3542, %v3541
        %v3569 = vpack.c.b16 %v3544, %v3543
        %v3570 = vpack.c.b16 %v3546, %v3545
        %v3571 = vpack.c.b16 %v3548, %v3547
        %v3572 = vpack.c.b16 %v3550, %v3549
        %v3573 = vpack.c.b16 %v3552, %v3551
        %v3574 = vpack.c.b16 %v3554, %v3553
        %v3575 = vpack.c.b16 %v3556, %v3555
        %v3576 = vpack.c.b16 %v3558, %v3557
        %v3577 = vpack.c.b16 %v3560, %v3559
        %v3578 = vpack.c.b16 %v3562, %v3561
        %v3587 = vunpack.c.l.b16 %v3523
        %v3588 = vunpack.c.l.b16 %v3524
        %v3589 = vunpack.c.l.b16 %v3525
        %v3590 = vunpack.c.l.b16 %v3526
        %v3591 = vunpack.c.l.b16 %v3527
        %v3592 = vunpack.c.l.b16 %v3528
        %v3593 = vunpack.c.l.b16 %v3529
        %v3594 = vunpack.c.l.b16 %v3530
        %v3595 = vpack.c.b16 %v3588, %v3587
        %v3596 = vpack.c.b16 %v3590, %v3589
        %v3597 = vpack.c.b16 %v3592, %v3591
        %v3598 = vpack.c.b16 %v3594, %v3593
        %v3604 = vsel %vm1400, %v3563, 0
        %v3607 = vsel %vm1400, %v3564, 0
        %v3610 = vsel %vm1400, %v3565, 0
        %v3613 = vsel %vm1400, %v3566, 0
        %v3616 = vsel %vm1400, %v3567, 0
        %v3619 = vsel %vm1400, %v3568, 0
        %v3622 = vsel %vm1400, %v3569, 0
        %v3625 = vsel %vm1400, %v3570, 0
        %v3628 = vsel %vm1400, %v3571, 0
        %v3631 = vsel %vm1400, %v3572, 0
        %v3634 = vsel %vm1400, %v3573, 0
        %v3637 = vsel %vm1400, %v3574, 0
        %v3640 = vsel %vm1400, %v3575, 0
        %v3643 = vsel %vm1400, %v3576, 0
        %v3646 = vsel %vm1400, %v3577, 0
        %v3649 = vsel %vm1400, %v3578, 0
        %3651 = vmatpush.bf16.msra.mxu0 0
        %3652 = vmatpush.bf16.msra.mxu0 0
        %3653 = vmatpush.bf16.msra.mxu0 0
        %3654 = vmatpush.bf16.msra.mxu0 0
        %3655 = vmatpush.bf16.msra.mxu0 %v3598
        %3656 = vmatpush.bf16.msra.mxu0 %v3597
        %3657 = vmatpush.bf16.msra.mxu0 %v3596
        %3658 = vmatpush.bf16.msra.mxu0 %v3595
        %3659 = vmatmul.bf16.gmra.mxu0 %v3604
        %v3660 = vpop.f32.mrf.mxu0
        %v3661 = vadd.f32 0.0, %v3660
        %v3662 = vpop.f32.mrf.mxu0
        %v3663 = vadd.f32 0.0, %v3662
        %3664 = vmatmul.bf16.gmra.mxu0 %v3607
        %v3665 = vpop.f32.mrf.mxu0
        %v3666 = vadd.f32 0.0, %v3665
        %v3667 = vpop.f32.mrf.mxu0
        %v3668 = vadd.f32 0.0, %v3667
        %3669 = vmatmul.bf16.gmra.mxu0 %v3610
        %v3670 = vpop.f32.mrf.mxu0
        %v3671 = vadd.f32 0.0, %v3670
        %v3672 = vpop.f32.mrf.mxu0
        %v3673 = vadd.f32 0.0, %v3672
        %3674 = vmatmul.bf16.gmra.mxu0 %v3613
        %v3675 = vpop.f32.mrf.mxu0
        %v3676 = vadd.f32 0.0, %v3675
        %v3677 = vpop.f32.mrf.mxu0
        %v3678 = vadd.f32 0.0, %v3677
        %3679 = vmatmul.bf16.gmra.mxu0 %v3616
        %v3680 = vpop.f32.mrf.mxu0
        %v3681 = vadd.f32 0.0, %v3680
        %v3682 = vpop.f32.mrf.mxu0
        %v3683 = vadd.f32 0.0, %v3682
        %3684 = vmatmul.bf16.gmra.mxu0 %v3619
        %v3685 = vpop.f32.mrf.mxu0
        %v3686 = vadd.f32 0.0, %v3685
        %v3687 = vpop.f32.mrf.mxu0
        %v3688 = vadd.f32 0.0, %v3687
        %3689 = vmatmul.bf16.gmra.mxu0 %v3622
        %v3690 = vpop.f32.mrf.mxu0
        %v3691 = vadd.f32 0.0, %v3690
        %v3692 = vpop.f32.mrf.mxu0
        %v3693 = vadd.f32 0.0, %v3692
        %3694 = vmatmul.bf16.gmra.mxu0 %v3625
        %v3695 = vpop.f32.mrf.mxu0
        %v3696 = vadd.f32 0.0, %v3695
        %v3697 = vpop.f32.mrf.mxu0
        %v3698 = vadd.f32 0.0, %v3697
        %3699 = vmatmul.bf16.gmra.mxu0 %v3628
        %v3700 = vpop.f32.mrf.mxu0
        %v3701 = vadd.f32 0.0, %v3700
        %v3702 = vpop.f32.mrf.mxu0
        %v3703 = vadd.f32 0.0, %v3702
        %3704 = vmatmul.bf16.gmra.mxu0 %v3631
        %v3705 = vpop.f32.mrf.mxu0
        %v3706 = vadd.f32 0.0, %v3705
        %v3707 = vpop.f32.mrf.mxu0
        %v3708 = vadd.f32 0.0, %v3707
        %3709 = vmatmul.bf16.gmra.mxu0 %v3634
        %v3710 = vpop.f32.mrf.mxu0
        %v3711 = vadd.f32 0.0, %v3710
        %v3712 = vpop.f32.mrf.mxu0
        %v3713 = vadd.f32 0.0, %v3712
        %3714 = vmatmul.bf16.gmra.mxu0 %v3637
        %v3715 = vpop.f32.mrf.mxu0
        %v3716 = vadd.f32 0.0, %v3715
        %v3717 = vpop.f32.mrf.mxu0
        %v3718 = vadd.f32 0.0, %v3717
        %3719 = vmatmul.bf16.gmra.mxu0 %v3640
        %v3720 = vpop.f32.mrf.mxu0
        %v3721 = vadd.f32 0.0, %v3720
        %v3722 = vpop.f32.mrf.mxu0
        %v3723 = vadd.f32 0.0, %v3722
        %3724 = vmatmul.bf16.gmra.mxu0 %v3643
        %v3725 = vpop.f32.mrf.mxu0
        %v3726 = vadd.f32 0.0, %v3725
        %v3727 = vpop.f32.mrf.mxu0
        %v3728 = vadd.f32 0.0, %v3727
        %3729 = vmatmul.bf16.gmra.mxu0 %v3646
        %v3730 = vpop.f32.mrf.mxu0
        %v3731 = vadd.f32 0.0, %v3730
        %v3732 = vpop.f32.mrf.mxu0
        %v3733 = vadd.f32 0.0, %v3732
        %3734 = vmatmul.bf16.gmra.mxu0 %v3649
        %v3735 = vpop.f32.mrf.mxu0
        %v3736 = vadd.f32 0.0, %v3735
        %v3737 = vpop.f32.mrf.mxu0
        %v3738 = vadd.f32 0.0, %v3737
        %3739 = vdwg.mxu0
        %v3740 = vadd.f32 %v3059, %v3661
        %v3741 = vadd.f32 %v3060, %v3663
        %v3742 = vadd.f32 %v3061, %v3666
        %v3743 = vadd.f32 %v3062, %v3668
        %v3744 = vadd.f32 %v3063, %v3671
        %v3745 = vadd.f32 %v3064, %v3673
        %v3746 = vadd.f32 %v3065, %v3676
        %v3747 = vadd.f32 %v3066, %v3678
        %v3748 = vadd.f32 %v3067, %v3681
        %v3749 = vadd.f32 %v3068, %v3683
        %v3750 = vadd.f32 %v3069, %v3686
        %v3751 = vadd.f32 %v3070, %v3688
        %v3752 = vadd.f32 %v3071, %v3691
        %v3753 = vadd.f32 %v3072, %v3693
        %v3754 = vadd.f32 %v3073, %v3696
        %v3755 = vadd.f32 %v3074, %v3698
        %v3756 = vadd.f32 %v3075, %v3701
        %v3757 = vadd.f32 %v3076, %v3703
        %v3758 = vadd.f32 %v3077, %v3706
        %v3759 = vadd.f32 %v3078, %v3708
        %v3760 = vadd.f32 %v3079, %v3711
        %v3761 = vadd.f32 %v3080, %v3713
        %v3762 = vadd.f32 %v3081, %v3716
        %v3763 = vadd.f32 %v3082, %v3718
        %v3764 = vadd.f32 %v3083, %v3721
        %v3765 = vadd.f32 %v3084, %v3723
        %v3766 = vadd.f32 %v3085, %v3726
        %v3767 = vadd.f32 %v3086, %v3728
        %v3768 = vadd.f32 %v3087, %v3731
        %v3769 = vadd.f32 %v3088, %v3733
        %v3770 = vadd.f32 %v3089, %v3736
        %v3771 = vadd.f32 %v3090, %v3738
        %s3772 = scalar_lea.vmem %s1179, 12 [#allocation5]
        %v3773 = vld [vmem:[%s3772] sm:$0xf]
        %v3774 = vld [vmem:[%s3772 + $0x4] sm:$0xf]
        %v3775 = vld [vmem:[%s3772 + $0xc] sm:$0xf]
        %v3776 = vld [vmem:[%s3772 + $0x10] sm:$0xf]
        %v3777 = vld [vmem:[%s3772 + $0x18] sm:$0xf]
        %v3778 = vld [vmem:[%s3772 + $0x1c] sm:$0xf]
        %v3779 = vld [vmem:[%s3772 + $0x24] sm:$0xf]
        %v3780 = vld [vmem:[%s3772 + $0x28] sm:$0xf]
        %v3781 = vld [vmem:[%s3772 + $0x30] sm:$0xf]
        %v3782 = vld [vmem:[%s3772 + $0x34] sm:$0xf]
        %v3783 = vld [vmem:[%s3772 + $0x3c] sm:$0xf]
        %v3784 = vld [vmem:[%s3772 + $0x40] sm:$0xf]
        %v3785 = vld [vmem:[%s3772 + $0x48] sm:$0xf]
        %v3786 = vld [vmem:[%s3772 + $0x4c] sm:$0xf]
        %v3787 = vld [vmem:[%s3772 + $0x54] sm:$0xf]
        %v3788 = vld [vmem:[%s3772 + $0x58] sm:$0xf]
        %v3789 = vld [vmem:[%s3772 + $0x60] sm:$0xf]
        %v3790 = vld [vmem:[%s3772 + $0x64] sm:$0xf]
        %v3791 = vld [vmem:[%s3772 + $0x6c] sm:$0xf]
        %v3792 = vld [vmem:[%s3772 + $0x70] sm:$0xf]
        %v3793 = vld [vmem:[%s3772 + $0x78] sm:$0xf]
        %v3794 = vld [vmem:[%s3772 + $0x7c] sm:$0xf]
        %v3795 = vld [vmem:[%s3772 + $0x84] sm:$0xf]
        %v3796 = vld [vmem:[%s3772 + $0x88] sm:$0xf]
        %v3797 = vld [vmem:[%s3772 + $0x90] sm:$0xf]
        %v3798 = vld [vmem:[%s3772 + $0x94] sm:$0xf]
        %v3799 = vld [vmem:[%s3772 + $0x9c] sm:$0xf]
        %v3800 = vld [vmem:[%s3772 + $0xa0] sm:$0xf]
        %v3801 = vld [vmem:[%s3772 + $0xa8] sm:$0xf]
        %v3802 = vld [vmem:[%s3772 + $0xac] sm:$0xf]
        %v3803 = vld [vmem:[%s3772 + $0xb4] sm:$0xf]
        %v3804 = vld [vmem:[%s3772 + $0xb8] sm:$0xf]
        %v3805 = vld [vmem:[%s1 + $0xc0] sm:$0xf]
        %v3806 = vld [vmem:[%s1 + $0xc4] sm:$0xf]
        %v3807 = vld [vmem:[%s1 + $0xc8] sm:$0xf]
        %v3808 = vld [vmem:[%s1 + $0xcc] sm:$0xf]
        %v3809 = vld [vmem:[%s1 + $0xd0] sm:$0xf]
        %v3810 = vld [vmem:[%s1 + $0xd4] sm:$0xf]
        %v3811 = vld [vmem:[%s1 + $0xd8] sm:$0xf]
        %v3812 = vld [vmem:[%s1 + $0xdc] sm:$0xf]
        %v3845 = vunpack.c.l.b16 %v3773
        %v3846 = vunpack.c.l.b16 %v3774
        %v3847 = vunpack.c.l.b16 %v3775
        %v3848 = vunpack.c.l.b16 %v3776
        %v3849 = vunpack.c.l.b16 %v3777
        %v3850 = vunpack.c.l.b16 %v3778
        %v3851 = vunpack.c.l.b16 %v3779
        %v3852 = vunpack.c.l.b16 %v3780
        %v3853 = vunpack.c.l.b16 %v3781
        %v3854 = vunpack.c.l.b16 %v3782
        %v3855 = vunpack.c.l.b16 %v3783
        %v3856 = vunpack.c.l.b16 %v3784
        %v3857 = vunpack.c.l.b16 %v3785
        %v3858 = vunpack.c.l.b16 %v3786
        %v3859 = vunpack.c.l.b16 %v3787
        %v3860 = vunpack.c.l.b16 %v3788
        %v3861 = vunpack.c.l.b16 %v3789
        %v3862 = vunpack.c.l.b16 %v3790
        %v3863 = vunpack.c.l.b16 %v3791
        %v3864 = vunpack.c.l.b16 %v3792
        %v3865 = vunpack.c.l.b16 %v3793
        %v3866 = vunpack.c.l.b16 %v3794
        %v3867 = vunpack.c.l.b16 %v3795
        %v3868 = vunpack.c.l.b16 %v3796
        %v3869 = vunpack.c.l.b16 %v3797
        %v3870 = vunpack.c.l.b16 %v3798
        %v3871 = vunpack.c.l.b16 %v3799
        %v3872 = vunpack.c.l.b16 %v3800
        %v3873 = vunpack.c.l.b16 %v3801
        %v3874 = vunpack.c.l.b16 %v3802
        %v3875 = vunpack.c.l.b16 %v3803
        %v3876 = vunpack.c.l.b16 %v3804
        %v3877 = vpack.c.b16 %v3846, %v3845
        %v3878 = vpack.c.b16 %v3848, %v3847
        %v3879 = vpack.c.b16 %v3850, %v3849
        %v3880 = vpack.c.b16 %v3852, %v3851
        %v3881 = vpack.c.b16 %v3854, %v3853
        %v3882 = vpack.c.b16 %v3856, %v3855
        %v3883 = vpack.c.b16 %v3858, %v3857
        %v3884 = vpack.c.b16 %v3860, %v3859
        %v3885 = vpack.c.b16 %v3862, %v3861
        %v3886 = vpack.c.b16 %v3864, %v3863
        %v3887 = vpack.c.b16 %v3866, %v3865
        %v3888 = vpack.c.b16 %v3868, %v3867
        %v3889 = vpack.c.b16 %v3870, %v3869
        %v3890 = vpack.c.b16 %v3872, %v3871
        %v3891 = vpack.c.b16 %v3874, %v3873
        %v3892 = vpack.c.b16 %v3876, %v3875
        %v3901 = vunpack.c.l.b16 %v3805
        %v3902 = vunpack.c.l.b16 %v3806
        %v3903 = vunpack.c.l.b16 %v3807
        %v3904 = vunpack.c.l.b16 %v3808
        %v3905 = vunpack.c.l.b16 %v3809
        %v3906 = vunpack.c.l.b16 %v3810
        %v3907 = vunpack.c.l.b16 %v3811
        %v3908 = vunpack.c.l.b16 %v3812
        %v3909 = vpack.c.b16 %v3902, %v3901
        %v3910 = vpack.c.b16 %v3904, %v3903
        %v3911 = vpack.c.b16 %v3906, %v3905
        %v3912 = vpack.c.b16 %v3908, %v3907
        %v3918 = vsel %vm1400, %v3877, 0
        %v3921 = vsel %vm1400, %v3878, 0
        %v3924 = vsel %vm1400, %v3879, 0
        %v3927 = vsel %vm1400, %v3880, 0
        %v3930 = vsel %vm1400, %v3881, 0
        %v3933 = vsel %vm1400, %v3882, 0
        %v3936 = vsel %vm1400, %v3883, 0
        %v3939 = vsel %vm1400, %v3884, 0
        %v3942 = vsel %vm1400, %v3885, 0
        %v3945 = vsel %vm1400, %v3886, 0
        %v3948 = vsel %vm1400, %v3887, 0
        %v3951 = vsel %vm1400, %v3888, 0
        %v3954 = vsel %vm1400, %v3889, 0
        %v3957 = vsel %vm1400, %v3890, 0
        %v3960 = vsel %vm1400, %v3891, 0
        %v3963 = vsel %vm1400, %v3892, 0
        %3965 = vmatpush.bf16.msra.mxu0 0
        %3966 = vmatpush.bf16.msra.mxu0 0
        %3967 = vmatpush.bf16.msra.mxu0 0
        %3968 = vmatpush.bf16.msra.mxu0 0
        %3969 = vmatpush.bf16.msra.mxu0 %v3912
        %3970 = vmatpush.bf16.msra.mxu0 %v3911
        %3971 = vmatpush.bf16.msra.mxu0 %v3910
        %3972 = vmatpush.bf16.msra.mxu0 %v3909
        %3973 = vmatmul.bf16.gmra.mxu0 %v3918
        %v3974 = vpop.f32.mrf.mxu0
        %v3975 = vadd.f32 0.0, %v3974
        %v3976 = vpop.f32.mrf.mxu0
        %v3977 = vadd.f32 0.0, %v3976
        %3978 = vmatmul.bf16.gmra.mxu0 %v3921
        %v3979 = vpop.f32.mrf.mxu0
        %v3980 = vadd.f32 0.0, %v3979
        %v3981 = vpop.f32.mrf.mxu0
        %v3982 = vadd.f32 0.0, %v3981
        %3983 = vmatmul.bf16.gmra.mxu0 %v3924
        %v3984 = vpop.f32.mrf.mxu0
        %v3985 = vadd.f32 0.0, %v3984
        %v3986 = vpop.f32.mrf.mxu0
        %v3987 = vadd.f32 0.0, %v3986
        %3988 = vmatmul.bf16.gmra.mxu0 %v3927
        %v3989 = vpop.f32.mrf.mxu0
        %v3990 = vadd.f32 0.0, %v3989
        %v3991 = vpop.f32.mrf.mxu0
        %v3992 = vadd.f32 0.0, %v3991
        %3993 = vmatmul.bf16.gmra.mxu0 %v3930
        %v3994 = vpop.f32.mrf.mxu0
        %v3995 = vadd.f32 0.0, %v3994
        %v3996 = vpop.f32.mrf.mxu0
        %v3997 = vadd.f32 0.0, %v3996
        %3998 = vmatmul.bf16.gmra.mxu0 %v3933
        %v3999 = vpop.f32.mrf.mxu0
        %v4000 = vadd.f32 0.0, %v3999
        %v4001 = vpop.f32.mrf.mxu0
        %v4002 = vadd.f32 0.0, %v4001
        %4003 = vmatmul.bf16.gmra.mxu0 %v3936
        %v4004 = vpop.f32.mrf.mxu0
        %v4005 = vadd.f32 0.0, %v4004
        %v4006 = vpop.f32.mrf.mxu0
        %v4007 = vadd.f32 0.0, %v4006
        %4008 = vmatmul.bf16.gmra.mxu0 %v3939
        %v4009 = vpop.f32.mrf.mxu0
        %v4010 = vadd.f32 0.0, %v4009
        %v4011 = vpop.f32.mrf.mxu0
        %v4012 = vadd.f32 0.0, %v4011
        %4013 = vmatmul.bf16.gmra.mxu0 %v3942
        %v4014 = vpop.f32.mrf.mxu0
        %v4015 = vadd.f32 0.0, %v4014
        %v4016 = vpop.f32.mrf.mxu0
        %v4017 = vadd.f32 0.0, %v4016
        %4018 = vmatmul.bf16.gmra.mxu0 %v3945
        %v4019 = vpop.f32.mrf.mxu0
        %v4020 = vadd.f32 0.0, %v4019
        %v4021 = vpop.f32.mrf.mxu0
        %v4022 = vadd.f32 0.0, %v4021
        %4023 = vmatmul.bf16.gmra.mxu0 %v3948
        %v4024 = vpop.f32.mrf.mxu0
        %v4025 = vadd.f32 0.0, %v4024
        %v4026 = vpop.f32.mrf.mxu0
        %v4027 = vadd.f32 0.0, %v4026
        %4028 = vmatmul.bf16.gmra.mxu0 %v3951
        %v4029 = vpop.f32.mrf.mxu0
        %v4030 = vadd.f32 0.0, %v4029
        %v4031 = vpop.f32.mrf.mxu0
        %v4032 = vadd.f32 0.0, %v4031
        %4033 = vmatmul.bf16.gmra.mxu0 %v3954
        %v4034 = vpop.f32.mrf.mxu0
        %v4035 = vadd.f32 0.0, %v4034
        %v4036 = vpop.f32.mrf.mxu0
        %v4037 = vadd.f32 0.0, %v4036
        %4038 = vmatmul.bf16.gmra.mxu0 %v3957
        %v4039 = vpop.f32.mrf.mxu0
        %v4040 = vadd.f32 0.0, %v4039
        %v4041 = vpop.f32.mrf.mxu0
        %v4042 = vadd.f32 0.0, %v4041
        %4043 = vmatmul.bf16.gmra.mxu0 %v3960
        %v4044 = vpop.f32.mrf.mxu0
        %v4045 = vadd.f32 0.0, %v4044
        %v4046 = vpop.f32.mrf.mxu0
        %v4047 = vadd.f32 0.0, %v4046
        %4048 = vmatmul.bf16.gmra.mxu0 %v3963
        %v4049 = vpop.f32.mrf.mxu0
        %v4050 = vadd.f32 0.0, %v4049
        %v4051 = vpop.f32.mrf.mxu0
        %v4052 = vadd.f32 0.0, %v4051
        %4053 = vdwg.mxu0
        %v4054 = vadd.f32 %v3740, %v3975
        %v4055 = vadd.f32 %v3741, %v3977
        %v4056 = vadd.f32 %v3742, %v3980
        %v4057 = vadd.f32 %v3743, %v3982
        %v4058 = vadd.f32 %v3744, %v3985
        %v4059 = vadd.f32 %v3745, %v3987
        %v4060 = vadd.f32 %v3746, %v3990
        %v4061 = vadd.f32 %v3747, %v3992
        %v4062 = vadd.f32 %v3748, %v3995
        %v4063 = vadd.f32 %v3749, %v3997
        %v4064 = vadd.f32 %v3750, %v4000
        %v4065 = vadd.f32 %v3751, %v4002
        %v4066 = vadd.f32 %v3752, %v4005
        %v4067 = vadd.f32 %v3753, %v4007
        %v4068 = vadd.f32 %v3754, %v4010
        %v4069 = vadd.f32 %v3755, %v4012
        %v4070 = vadd.f32 %v3756, %v4015
        %v4071 = vadd.f32 %v3757, %v4017
        %v4072 = vadd.f32 %v3758, %v4020
        %v4073 = vadd.f32 %v3759, %v4022
        %v4074 = vadd.f32 %v3760, %v4025
        %v4075 = vadd.f32 %v3761, %v4027
        %v4076 = vadd.f32 %v3762, %v4030
        %v4077 = vadd.f32 %v3763, %v4032
        %v4078 = vadd.f32 %v3764, %v4035
        %v4079 = vadd.f32 %v3765, %v4037
        %v4080 = vadd.f32 %v3766, %v4040
        %v4081 = vadd.f32 %v3767, %v4042
        %v4082 = vadd.f32 %v3768, %v4045
        %v4083 = vadd.f32 %v3769, %v4047
        %v4084 = vadd.f32 %v3770, %v4050
        %v4085 = vadd.f32 %v3771, %v4052
        %s4086 = scalar_lea.vmem %s1179, 216 [#allocation5]
        %v4087 = vld [vmem:[%s4086] sm:$0xf]
        %v4088 = vld [vmem:[%s4086 + $0x4] sm:$0xf]
        %v4089 = vld [vmem:[%s4086 + $0xc] sm:$0xf]
        %v4090 = vld [vmem:[%s4086 + $0x10] sm:$0xf]
        %v4091 = vld [vmem:[%s4086 + $0x18] sm:$0xf]
        %v4092 = vld [vmem:[%s4086 + $0x1c] sm:$0xf]
        %v4093 = vld [vmem:[%s4086 + $0x24] sm:$0xf]
        %v4094 = vld [vmem:[%s4086 + $0x28] sm:$0xf]
        %v4095 = vld [vmem:[%s4086 + $0x30] sm:$0xf]
        %v4096 = vld [vmem:[%s4086 + $0x34] sm:$0xf]
        %v4097 = vld [vmem:[%s4086 + $0x3c] sm:$0xf]
        %v4098 = vld [vmem:[%s4086 + $0x40] sm:$0xf]
        %v4099 = vld [vmem:[%s4086 + $0x48] sm:$0xf]
        %v4100 = vld [vmem:[%s4086 + $0x4c] sm:$0xf]
        %v4101 = vld [vmem:[%s4086 + $0x54] sm:$0xf]
        %v4102 = vld [vmem:[%s4086 + $0x58] sm:$0xf]
        %v4103 = vld [vmem:[%s4086 + $0x60] sm:$0xf]
        %v4104 = vld [vmem:[%s4086 + $0x64] sm:$0xf]
        %v4105 = vld [vmem:[%s4086 + $0x6c] sm:$0xf]
        %v4106 = vld [vmem:[%s4086 + $0x70] sm:$0xf]
        %v4107 = vld [vmem:[%s4086 + $0x78] sm:$0xf]
        %v4108 = vld [vmem:[%s4086 + $0x7c] sm:$0xf]
        %v4109 = vld [vmem:[%s4086 + $0x84] sm:$0xf]
        %v4110 = vld [vmem:[%s4086 + $0x88] sm:$0xf]
        %v4111 = vld [vmem:[%s4086 + $0x90] sm:$0xf]
        %v4112 = vld [vmem:[%s4086 + $0x94] sm:$0xf]
        %v4113 = vld [vmem:[%s4086 + $0x9c] sm:$0xf]
        %v4114 = vld [vmem:[%s4086 + $0xa0] sm:$0xf]
        %v4115 = vld [vmem:[%s4086 + $0xa8] sm:$0xf]
        %v4116 = vld [vmem:[%s4086 + $0xac] sm:$0xf]
        %v4117 = vld [vmem:[%s4086 + $0xb4] sm:$0xf]
        %v4118 = vld [vmem:[%s4086 + $0xb8] sm:$0xf]
        %v4119 = vld [vmem:[%s1 + $0xe0] sm:$0xf]
        %v4120 = vld [vmem:[%s1 + $0xe4] sm:$0xf]
        %v4121 = vld [vmem:[%s1 + $0xe8] sm:$0xf]
        %v4122 = vld [vmem:[%s1 + $0xec] sm:$0xf]
        %v4123 = vld [vmem:[%s1 + $0xf0] sm:$0xf]
        %v4124 = vld [vmem:[%s1 + $0xf4] sm:$0xf]
        %v4125 = vld [vmem:[%s1 + $0xf8] sm:$0xf]
        %v4126 = vld [vmem:[%s1 + $0xfc] sm:$0xf]
        %v4159 = vunpack.c.l.b16 %v4087
        %v4160 = vunpack.c.l.b16 %v4088
        %v4161 = vunpack.c.l.b16 %v4089
        %v4162 = vunpack.c.l.b16 %v4090
        %v4163 = vunpack.c.l.b16 %v4091
        %v4164 = vunpack.c.l.b16 %v4092
        %v4165 = vunpack.c.l.b16 %v4093
        %v4166 = vunpack.c.l.b16 %v4094
        %v4167 = vunpack.c.l.b16 %v4095
        %v4168 = vunpack.c.l.b16 %v4096
        %v4169 = vunpack.c.l.b16 %v4097
        %v4170 = vunpack.c.l.b16 %v4098
        %v4171 = vunpack.c.l.b16 %v4099
        %v4172 = vunpack.c.l.b16 %v4100
        %v4173 = vunpack.c.l.b16 %v4101
        %v4174 = vunpack.c.l.b16 %v4102
        %v4175 = vunpack.c.l.b16 %v4103
        %v4176 = vunpack.c.l.b16 %v4104
        %v4177 = vunpack.c.l.b16 %v4105
        %v4178 = vunpack.c.l.b16 %v4106
        %v4179 = vunpack.c.l.b16 %v4107
        %v4180 = vunpack.c.l.b16 %v4108
        %v4181 = vunpack.c.l.b16 %v4109
        %v4182 = vunpack.c.l.b16 %v4110
        %v4183 = vunpack.c.l.b16 %v4111
        %v4184 = vunpack.c.l.b16 %v4112
        %v4185 = vunpack.c.l.b16 %v4113
        %v4186 = vunpack.c.l.b16 %v4114
        %v4187 = vunpack.c.l.b16 %v4115
        %v4188 = vunpack.c.l.b16 %v4116
        %v4189 = vunpack.c.l.b16 %v4117
        %v4190 = vunpack.c.l.b16 %v4118
        %v4191 = vpack.c.b16 %v4160, %v4159
        %v4192 = vpack.c.b16 %v4162, %v4161
        %v4193 = vpack.c.b16 %v4164, %v4163
        %v4194 = vpack.c.b16 %v4166, %v4165
        %v4195 = vpack.c.b16 %v4168, %v4167
        %v4196 = vpack.c.b16 %v4170, %v4169
        %v4197 = vpack.c.b16 %v4172, %v4171
        %v4198 = vpack.c.b16 %v4174, %v4173
        %v4199 = vpack.c.b16 %v4176, %v4175
        %v4200 = vpack.c.b16 %v4178, %v4177
        %v4201 = vpack.c.b16 %v4180, %v4179
        %v4202 = vpack.c.b16 %v4182, %v4181
        %v4203 = vpack.c.b16 %v4184, %v4183
        %v4204 = vpack.c.b16 %v4186, %v4185
        %v4205 = vpack.c.b16 %v4188, %v4187
        %v4206 = vpack.c.b16 %v4190, %v4189
        %v4215 = vunpack.c.l.b16 %v4119
        %v4216 = vunpack.c.l.b16 %v4120
        %v4217 = vunpack.c.l.b16 %v4121
        %v4218 = vunpack.c.l.b16 %v4122
        %v4219 = vunpack.c.l.b16 %v4123
        %v4220 = vunpack.c.l.b16 %v4124
        %v4221 = vunpack.c.l.b16 %v4125
        %v4222 = vunpack.c.l.b16 %v4126
        %v4223 = vpack.c.b16 %v4216, %v4215
        %v4224 = vpack.c.b16 %v4218, %v4217
        %v4225 = vpack.c.b16 %v4220, %v4219
        %v4226 = vpack.c.b16 %v4222, %v4221
        %v4232 = vsel %vm1400, %v4191, 0
        %v4235 = vsel %vm1400, %v4192, 0
        %v4238 = vsel %vm1400, %v4193, 0
        %v4241 = vsel %vm1400, %v4194, 0
        %v4244 = vsel %vm1400, %v4195, 0
        %v4247 = vsel %vm1400, %v4196, 0
        %v4250 = vsel %vm1400, %v4197, 0
        %v4253 = vsel %vm1400, %v4198, 0
        %v4256 = vsel %vm1400, %v4199, 0
        %v4259 = vsel %vm1400, %v4200, 0
        %v4262 = vsel %vm1400, %v4201, 0
        %v4265 = vsel %vm1400, %v4202, 0
        %v4268 = vsel %vm1400, %v4203, 0
        %v4271 = vsel %vm1400, %v4204, 0
        %v4274 = vsel %vm1400, %v4205, 0
        %v4277 = vsel %vm1400, %v4206, 0
        %4279 = vmatpush.bf16.msra.mxu0 0
        %4280 = vmatpush.bf16.msra.mxu0 0
        %4281 = vmatpush.bf16.msra.mxu0 0
        %4282 = vmatpush.bf16.msra.mxu0 0
        %4283 = vmatpush.bf16.msra.mxu0 %v4226
        %4284 = vmatpush.bf16.msra.mxu0 %v4225
        %4285 = vmatpush.bf16.msra.mxu0 %v4224
        %4286 = vmatpush.bf16.msra.mxu0 %v4223
        %4287 = vmatmul.bf16.gmra.mxu0 %v4232
        %v4288 = vpop.f32.mrf.mxu0
        %v4289 = vadd.f32 0.0, %v4288
        %v4290 = vpop.f32.mrf.mxu0
        %v4291 = vadd.f32 0.0, %v4290
        %4292 = vmatmul.bf16.gmra.mxu0 %v4235
        %v4293 = vpop.f32.mrf.mxu0
        %v4294 = vadd.f32 0.0, %v4293
        %v4295 = vpop.f32.mrf.mxu0
        %v4296 = vadd.f32 0.0, %v4295
        %4297 = vmatmul.bf16.gmra.mxu0 %v4238
        %v4298 = vpop.f32.mrf.mxu0
        %v4299 = vadd.f32 0.0, %v4298
        %v4300 = vpop.f32.mrf.mxu0
        %v4301 = vadd.f32 0.0, %v4300
        %4302 = vmatmul.bf16.gmra.mxu0 %v4241
        %v4303 = vpop.f32.mrf.mxu0
        %v4304 = vadd.f32 0.0, %v4303
        %v4305 = vpop.f32.mrf.mxu0
        %v4306 = vadd.f32 0.0, %v4305
        %4307 = vmatmul.bf16.gmra.mxu0 %v4244
        %v4308 = vpop.f32.mrf.mxu0
        %v4309 = vadd.f32 0.0, %v4308
        %v4310 = vpop.f32.mrf.mxu0
        %v4311 = vadd.f32 0.0, %v4310
        %4312 = vmatmul.bf16.gmra.mxu0 %v4247
        %v4313 = vpop.f32.mrf.mxu0
        %v4314 = vadd.f32 0.0, %v4313
        %v4315 = vpop.f32.mrf.mxu0
        %v4316 = vadd.f32 0.0, %v4315
        %4317 = vmatmul.bf16.gmra.mxu0 %v4250
        %v4318 = vpop.f32.mrf.mxu0
        %v4319 = vadd.f32 0.0, %v4318
        %v4320 = vpop.f32.mrf.mxu0
        %v4321 = vadd.f32 0.0, %v4320
        %4322 = vmatmul.bf16.gmra.mxu0 %v4253
        %v4323 = vpop.f32.mrf.mxu0
        %v4324 = vadd.f32 0.0, %v4323
        %v4325 = vpop.f32.mrf.mxu0
        %v4326 = vadd.f32 0.0, %v4325
        %4327 = vmatmul.bf16.gmra.mxu0 %v4256
        %v4328 = vpop.f32.mrf.mxu0
        %v4329 = vadd.f32 0.0, %v4328
        %v4330 = vpop.f32.mrf.mxu0
        %v4331 = vadd.f32 0.0, %v4330
        %4332 = vmatmul.bf16.gmra.mxu0 %v4259
        %v4333 = vpop.f32.mrf.mxu0
        %v4334 = vadd.f32 0.0, %v4333
        %v4335 = vpop.f32.mrf.mxu0
        %v4336 = vadd.f32 0.0, %v4335
        %4337 = vmatmul.bf16.gmra.mxu0 %v4262
        %v4338 = vpop.f32.mrf.mxu0
        %v4339 = vadd.f32 0.0, %v4338
        %v4340 = vpop.f32.mrf.mxu0
        %v4341 = vadd.f32 0.0, %v4340
        %4342 = vmatmul.bf16.gmra.mxu0 %v4265
        %v4343 = vpop.f32.mrf.mxu0
        %v4344 = vadd.f32 0.0, %v4343
        %v4345 = vpop.f32.mrf.mxu0
        %v4346 = vadd.f32 0.0, %v4345
        %4347 = vmatmul.bf16.gmra.mxu0 %v4268
        %v4348 = vpop.f32.mrf.mxu0
        %v4349 = vadd.f32 0.0, %v4348
        %v4350 = vpop.f32.mrf.mxu0
        %v4351 = vadd.f32 0.0, %v4350
        %4352 = vmatmul.bf16.gmra.mxu0 %v4271
        %v4353 = vpop.f32.mrf.mxu0
        %v4354 = vadd.f32 0.0, %v4353
        %v4355 = vpop.f32.mrf.mxu0
        %v4356 = vadd.f32 0.0, %v4355
        %4357 = vmatmul.bf16.gmra.mxu0 %v4274
        %v4358 = vpop.f32.mrf.mxu0
        %v4359 = vadd.f32 0.0, %v4358
        %v4360 = vpop.f32.mrf.mxu0
        %v4361 = vadd.f32 0.0, %v4360
        %4362 = vmatmul.bf16.gmra.mxu0 %v4277
        %v4363 = vpop.f32.mrf.mxu0
        %v4364 = vadd.f32 0.0, %v4363
        %v4365 = vpop.f32.mrf.mxu0
        %v4366 = vadd.f32 0.0, %v4365
        %4367 = vdwg.mxu0
        %v4368 = vadd.f32 %v4054, %v4289
        %v4369 = vadd.f32 %v4055, %v4291
        %v4370 = vadd.f32 %v4056, %v4294
        %v4371 = vadd.f32 %v4057, %v4296
        %v4372 = vadd.f32 %v4058, %v4299
        %v4373 = vadd.f32 %v4059, %v4301
        %v4374 = vadd.f32 %v4060, %v4304
        %v4375 = vadd.f32 %v4061, %v4306
        %v4376 = vadd.f32 %v4062, %v4309
        %v4377 = vadd.f32 %v4063, %v4311
        %v4378 = vadd.f32 %v4064, %v4314
        %v4379 = vadd.f32 %v4065, %v4316
        %v4380 = vadd.f32 %v4066, %v4319
        %v4381 = vadd.f32 %v4067, %v4321
        %v4382 = vadd.f32 %v4068, %v4324
        %v4383 = vadd.f32 %v4069, %v4326
        %v4384 = vadd.f32 %v4070, %v4329
        %v4385 = vadd.f32 %v4071, %v4331
        %v4386 = vadd.f32 %v4072, %v4334
        %v4387 = vadd.f32 %v4073, %v4336
        %v4388 = vadd.f32 %v4074, %v4339
        %v4389 = vadd.f32 %v4075, %v4341
        %v4390 = vadd.f32 %v4076, %v4344
        %v4391 = vadd.f32 %v4077, %v4346
        %v4392 = vadd.f32 %v4078, %v4349
        %v4393 = vadd.f32 %v4079, %v4351
        %v4394 = vadd.f32 %v4080, %v4354
        %v4395 = vadd.f32 %v4081, %v4356
        %v4396 = vadd.f32 %v4082, %v4359
        %v4397 = vadd.f32 %v4083, %v4361
        %v4398 = vadd.f32 %v4084, %v4364
        %v4399 = vadd.f32 %v4085, %v4366
        %v4400 = vld [vmem:[%s3772] sm:$0xf]
        %v4401 = vld [vmem:[%s3772 + $0x4] sm:$0xf]
        %v4402 = vld [vmem:[%s3772 + $0x8] sm:$0x1]
        %v4403 = vld [vmem:[%s3772 + $0xc] sm:$0xf]
        %v4404 = vld [vmem:[%s3772 + $0x10] sm:$0xf]
        %v4405 = vld [vmem:[%s3772 + $0x14] sm:$0x1]
        %v4406 = vld [vmem:[%s3772 + $0x18] sm:$0xf]
        %v4407 = vld [vmem:[%s3772 + $0x1c] sm:$0xf]
        %v4408 = vld [vmem:[%s3772 + $0x20] sm:$0x1]
        %v4409 = vld [vmem:[%s3772 + $0x24] sm:$0xf]
        %v4410 = vld [vmem:[%s3772 + $0x28] sm:$0xf]
        %v4411 = vld [vmem:[%s3772 + $0x2c] sm:$0x1]
        %v4412 = vld [vmem:[%s3772 + $0x30] sm:$0xf]
        %v4413 = vld [vmem:[%s3772 + $0x34] sm:$0xf]
        %v4414 = vld [vmem:[%s3772 + $0x38] sm:$0x1]
        %v4415 = vld [vmem:[%s3772 + $0x3c] sm:$0xf]
        %v4416 = vld [vmem:[%s3772 + $0x40] sm:$0xf]
        %v4417 = vld [vmem:[%s3772 + $0x44] sm:$0x1]
        %v4418 = vld [vmem:[%s3772 + $0x48] sm:$0xf]
        %v4419 = vld [vmem:[%s3772 + $0x4c] sm:$0xf]
        %v4420 = vld [vmem:[%s3772 + $0x50] sm:$0x1]
        %v4421 = vld [vmem:[%s3772 + $0x54] sm:$0xf]
        %v4422 = vld [vmem:[%s3772 + $0x58] sm:$0xf]
        %v4423 = vld [vmem:[%s3772 + $0x5c] sm:$0x1]
        %v4424 = vld [vmem:[%s3772 + $0x60] sm:$0xf]
        %v4425 = vld [vmem:[%s3772 + $0x64] sm:$0xf]
        %v4426 = vld [vmem:[%s3772 + $0x68] sm:$0x1]
        %v4427 = vld [vmem:[%s3772 + $0x6c] sm:$0xf]
        %v4428 = vld [vmem:[%s3772 + $0x70] sm:$0xf]
        %v4429 = vld [vmem:[%s3772 + $0x74] sm:$0x1]
        %v4430 = vld [vmem:[%s3772 + $0x78] sm:$0xf]
        %v4431 = vld [vmem:[%s3772 + $0x7c] sm:$0xf]
        %v4432 = vld [vmem:[%s3772 + $0x80] sm:$0x1]
        %v4433 = vld [vmem:[%s3772 + $0x84] sm:$0xf]
        %v4434 = vld [vmem:[%s3772 + $0x88] sm:$0xf]
        %v4435 = vld [vmem:[%s3772 + $0x8c] sm:$0x1]
        %v4436 = vld [vmem:[%s3772 + $0x90] sm:$0xf]
        %v4437 = vld [vmem:[%s3772 + $0x94] sm:$0xf]
        %v4438 = vld [vmem:[%s3772 + $0x98] sm:$0x1]
        %v4439 = vld [vmem:[%s3772 + $0x9c] sm:$0xf]
        %v4440 = vld [vmem:[%s3772 + $0xa0] sm:$0xf]
        %v4441 = vld [vmem:[%s3772 + $0xa4] sm:$0x1]
        %v4442 = vld [vmem:[%s3772 + $0xa8] sm:$0xf]
        %v4443 = vld [vmem:[%s3772 + $0xac] sm:$0xf]
        %v4444 = vld [vmem:[%s3772 + $0xb0] sm:$0x1]
        %v4445 = vld [vmem:[%s3772 + $0xb4] sm:$0xf]
        %v4446 = vld [vmem:[%s3772 + $0xb8] sm:$0xf]
        %v4447 = vld [vmem:[%s3772 + $0xbc] sm:$0x1]
        %v4449 = vshrl.u32 %v4400, 16
        %v4451 = vrot.slane %v4449, 4
        %v4452 = vshll.u32 %v4400, 16
        %v4454 = vrot.slane %v4452, 5
        %v4455 = vor.u32 %v4451, %v4454
        %v4456 = vrot.slane %v4455, 4
        %v4458 = vshll.u32 %v4401, 16
        %v4460 = vrot.slane %v4458, 5
        %v4461 = vsel %vm1829, %v4456, %v4460
        %v4462 = vshrl.u32 %v4401, 16
        %v4464 = vrot.slane %v4462, 4
        %v4465 = vor.u32 %v4464, %v4460
        %v4466 = vrot.slane %v4465, 4
        %v4468 = vshll.u32 %v4402, 16
        %v4470 = vrot.slane %v4468, 5
        %v4471 = vsel %vm1829, %v4466, %v4470
        %v4473 = vshrl.u32 %v4403, 16
        %v4475 = vrot.slane %v4473, 4
        %v4476 = vshll.u32 %v4403, 16
        %v4478 = vrot.slane %v4476, 5
        %v4479 = vor.u32 %v4475, %v4478
        %v4480 = vrot.slane %v4479, 4
        %v4482 = vshll.u32 %v4404, 16
        %v4484 = vrot.slane %v4482, 5
        %v4485 = vsel %vm1829, %v4480, %v4484
        %v4486 = vshrl.u32 %v4404, 16
        %v4488 = vrot.slane %v4486, 4
        %v4489 = vor.u32 %v4488, %v4484
        %v4490 = vrot.slane %v4489, 4
        %v4492 = vshll.u32 %v4405, 16
        %v4494 = vrot.slane %v4492, 5
        %v4495 = vsel %vm1829, %v4490, %v4494
        %v4497 = vshrl.u32 %v4406, 16
        %v4499 = vrot.slane %v4497, 4
        %v4500 = vshll.u32 %v4406, 16
        %v4502 = vrot.slane %v4500, 5
        %v4503 = vor.u32 %v4499, %v4502
        %v4504 = vrot.slane %v4503, 4
        %v4506 = vshll.u32 %v4407, 16
        %v4508 = vrot.slane %v4506, 5
        %v4509 = vsel %vm1829, %v4504, %v4508
        %v4510 = vshrl.u32 %v4407, 16
        %v4512 = vrot.slane %v4510, 4
        %v4513 = vor.u32 %v4512, %v4508
        %v4514 = vrot.slane %v4513, 4
        %v4516 = vshll.u32 %v4408, 16
        %v4518 = vrot.slane %v4516, 5
        %v4519 = vsel %vm1829, %v4514, %v4518
        %v4521 = vshrl.u32 %v4409, 16
        %v4523 = vrot.slane %v4521, 4
        %v4524 = vshll.u32 %v4409, 16
        %v4526 = vrot.slane %v4524, 5
        %v4527 = vor.u32 %v4523, %v4526
        %v4528 = vrot.slane %v4527, 4
        %v4530 = vshll.u32 %v4410, 16
        %v4532 = vrot.slane %v4530, 5
        %v4533 = vsel %vm1829, %v4528, %v4532
        %v4534 = vshrl.u32 %v4410, 16
        %v4536 = vrot.slane %v4534, 4
        %v4537 = vor.u32 %v4536, %v4532
        %v4538 = vrot.slane %v4537, 4
        %v4540 = vshll.u32 %v4411, 16
        %v4542 = vrot.slane %v4540, 5
        %v4543 = vsel %vm1829, %v4538, %v4542
        %v4545 = vshrl.u32 %v4412, 16
        %v4547 = vrot.slane %v4545, 4
        %v4548 = vshll.u32 %v4412, 16
        %v4550 = vrot.slane %v4548, 5
        %v4551 = vor.u32 %v4547, %v4550
        %v4552 = vrot.slane %v4551, 4
        %v4554 = vshll.u32 %v4413, 16
        %v4556 = vrot.slane %v4554, 5
        %v4557 = vsel %vm1829, %v4552, %v4556
        %v4558 = vshrl.u32 %v4413, 16
        %v4560 = vrot.slane %v4558, 4
        %v4561 = vor.u32 %v4560, %v4556
        %v4562 = vrot.slane %v4561, 4
        %v4564 = vshll.u32 %v4414, 16
        %v4566 = vrot.slane %v4564, 5
        %v4567 = vsel %vm1829, %v4562, %v4566
        %v4569 = vshrl.u32 %v4415, 16
        %v4571 = vrot.slane %v4569, 4
        %v4572 = vshll.u32 %v4415, 16
        %v4574 = vrot.slane %v4572, 5
        %v4575 = vor.u32 %v4571, %v4574
        %v4576 = vrot.slane %v4575, 4
        %v4578 = vshll.u32 %v4416, 16
        %v4580 = vrot.slane %v4578, 5
        %v4581 = vsel %vm1829, %v4576, %v4580
        %v4582 = vshrl.u32 %v4416, 16
        %v4584 = vrot.slane %v4582, 4
        %v4585 = vor.u32 %v4584, %v4580
        %v4586 = vrot.slane %v4585, 4
        %v4588 = vshll.u32 %v4417, 16
        %v4590 = vrot.slane %v4588, 5
        %v4591 = vsel %vm1829, %v4586, %v4590
        %v4593 = vshrl.u32 %v4418, 16
        %v4595 = vrot.slane %v4593, 4
        %v4596 = vshll.u32 %v4418, 16
        %v4598 = vrot.slane %v4596, 5
        %v4599 = vor.u32 %v4595, %v4598
        %v4600 = vrot.slane %v4599, 4
        %v4602 = vshll.u32 %v4419, 16
        %v4604 = vrot.slane %v4602, 5
        %v4605 = vsel %vm1829, %v4600, %v4604
        %v4606 = vshrl.u32 %v4419, 16
        %v4608 = vrot.slane %v4606, 4
        %v4609 = vor.u32 %v4608, %v4604
        %v4610 = vrot.slane %v4609, 4
        %v4612 = vshll.u32 %v4420, 16
        %v4614 = vrot.slane %v4612, 5
        %v4615 = vsel %vm1829, %v4610, %v4614
        %v4617 = vshrl.u32 %v4421, 16
        %v4619 = vrot.slane %v4617, 4
        %v4620 = vshll.u32 %v4421, 16
        %v4622 = vrot.slane %v4620, 5
        %v4623 = vor.u32 %v4619, %v4622
        %v4624 = vrot.slane %v4623, 4
        %v4626 = vshll.u32 %v4422, 16
        %v4628 = vrot.slane %v4626, 5
        %v4629 = vsel %vm1829, %v4624, %v4628
        %v4630 = vshrl.u32 %v4422, 16
        %v4632 = vrot.slane %v4630, 4
        %v4633 = vor.u32 %v4632, %v4628
        %v4634 = vrot.slane %v4633, 4
        %v4636 = vshll.u32 %v4423, 16
        %v4638 = vrot.slane %v4636, 5
        %v4639 = vsel %vm1829, %v4634, %v4638
        %v4641 = vshrl.u32 %v4424, 16
        %v4643 = vrot.slane %v4641, 4
        %v4644 = vshll.u32 %v4424, 16
        %v4646 = vrot.slane %v4644, 5
        %v4647 = vor.u32 %v4643, %v4646
        %v4648 = vrot.slane %v4647, 4
        %v4650 = vshll.u32 %v4425, 16
        %v4652 = vrot.slane %v4650, 5
        %v4653 = vsel %vm1829, %v4648, %v4652
        %v4654 = vshrl.u32 %v4425, 16
        %v4656 = vrot.slane %v4654, 4
        %v4657 = vor.u32 %v4656, %v4652
        %v4658 = vrot.slane %v4657, 4
        %v4660 = vshll.u32 %v4426, 16
        %v4662 = vrot.slane %v4660, 5
        %v4663 = vsel %vm1829, %v4658, %v4662
        %v4665 = vshrl.u32 %v4427, 16
        %v4667 = vrot.slane %v4665, 4
        %v4668 = vshll.u32 %v4427, 16
        %v4670 = vrot.slane %v4668, 5
        %v4671 = vor.u32 %v4667, %v4670
        %v4672 = vrot.slane %v4671, 4
        %v4674 = vshll.u32 %v4428, 16
        %v4676 = vrot.slane %v4674, 5
        %v4677 = vsel %vm1829, %v4672, %v4676
        %v4678 = vshrl.u32 %v4428, 16
        %v4680 = vrot.slane %v4678, 4
        %v4681 = vor.u32 %v4680, %v4676
        %v4682 = vrot.slane %v4681, 4
        %v4684 = vshll.u32 %v4429, 16
        %v4686 = vrot.slane %v4684, 5
        %v4687 = vsel %vm1829, %v4682, %v4686
        %v4689 = vshrl.u32 %v4430, 16
        %v4691 = vrot.slane %v4689, 4
        %v4692 = vshll.u32 %v4430, 16
        %v4694 = vrot.slane %v4692, 5
        %v4695 = vor.u32 %v4691, %v4694
        %v4696 = vrot.slane %v4695, 4
        %v4698 = vshll.u32 %v4431, 16
        %v4700 = vrot.slane %v4698, 5
        %v4701 = vsel %vm1829, %v4696, %v4700
        %v4702 = vshrl.u32 %v4431, 16
        %v4704 = vrot.slane %v4702, 4
        %v4705 = vor.u32 %v4704, %v4700
        %v4706 = vrot.slane %v4705, 4
        %v4708 = vshll.u32 %v4432, 16
        %v4710 = vrot.slane %v4708, 5
        %v4711 = vsel %vm1829, %v4706, %v4710
        %v4713 = vshrl.u32 %v4433, 16
        %v4715 = vrot.slane %v4713, 4
        %v4716 = vshll.u32 %v4433, 16
        %v4718 = vrot.slane %v4716, 5
        %v4719 = vor.u32 %v4715, %v4718
        %v4720 = vrot.slane %v4719, 4
        %v4722 = vshll.u32 %v4434, 16
        %v4724 = vrot.slane %v4722, 5
        %v4725 = vsel %vm1829, %v4720, %v4724
        %v4726 = vshrl.u32 %v4434, 16
        %v4728 = vrot.slane %v4726, 4
        %v4729 = vor.u32 %v4728, %v4724
        %v4730 = vrot.slane %v4729, 4
        %v4732 = vshll.u32 %v4435, 16
        %v4734 = vrot.slane %v4732, 5
        %v4735 = vsel %vm1829, %v4730, %v4734
        %v4737 = vshrl.u32 %v4436, 16
        %v4739 = vrot.slane %v4737, 4
        %v4740 = vshll.u32 %v4436, 16
        %v4742 = vrot.slane %v4740, 5
        %v4743 = vor.u32 %v4739, %v4742
        %v4744 = vrot.slane %v4743, 4
        %v4746 = vshll.u32 %v4437, 16
        %v4748 = vrot.slane %v4746, 5
        %v4749 = vsel %vm1829, %v4744, %v4748
        %v4750 = vshrl.u32 %v4437, 16
        %v4752 = vrot.slane %v4750, 4
        %v4753 = vor.u32 %v4752, %v4748
        %v4754 = vrot.slane %v4753, 4
        %v4756 = vshll.u32 %v4438, 16
        %v4758 = vrot.slane %v4756, 5
        %v4759 = vsel %vm1829, %v4754, %v4758
        %v4761 = vshrl.u32 %v4439, 16
        %v4763 = vrot.slane %v4761, 4
        %v4764 = vshll.u32 %v4439, 16
        %v4766 = vrot.slane %v4764, 5
        %v4767 = vor.u32 %v4763, %v4766
        %v4768 = vrot.slane %v4767, 4
        %v4770 = vshll.u32 %v4440, 16
        %v4772 = vrot.slane %v4770, 5
        %v4773 = vsel %vm1829, %v4768, %v4772
        %v4774 = vshrl.u32 %v4440, 16
        %v4776 = vrot.slane %v4774, 4
        %v4777 = vor.u32 %v4776, %v4772
        %v4778 = vrot.slane %v4777, 4
        %v4780 = vshll.u32 %v4441, 16
        %v4782 = vrot.slane %v4780, 5
        %v4783 = vsel %vm1829, %v4778, %v4782
        %v4785 = vshrl.u32 %v4442, 16
        %v4787 = vrot.slane %v4785, 4
        %v4788 = vshll.u32 %v4442, 16
        %v4790 = vrot.slane %v4788, 5
        %v4791 = vor.u32 %v4787, %v4790
        %v4792 = vrot.slane %v4791, 4
        %v4794 = vshll.u32 %v4443, 16
        %v4796 = vrot.slane %v4794, 5
        %v4797 = vsel %vm1829, %v4792, %v4796
        %v4798 = vshrl.u32 %v4443, 16
        %v4800 = vrot.slane %v4798, 4
        %v4801 = vor.u32 %v4800, %v4796
        %v4802 = vrot.slane %v4801, 4
        %v4804 = vshll.u32 %v4444, 16
        %v4806 = vrot.slane %v4804, 5
        %v4807 = vsel %vm1829, %v4802, %v4806
        %v4809 = vshrl.u32 %v4445, 16
        %v4811 = vrot.slane %v4809, 4
        %v4812 = vshll.u32 %v4445, 16
        %v4814 = vrot.slane %v4812, 5
        %v4815 = vor.u32 %v4811, %v4814
        %v4816 = vrot.slane %v4815, 4
        %v4818 = vshll.u32 %v4446, 16
        %v4820 = vrot.slane %v4818, 5
        %v4821 = vsel %vm1829, %v4816, %v4820
        %v4822 = vshrl.u32 %v4446, 16
        %v4824 = vrot.slane %v4822, 4
        %v4825 = vor.u32 %v4824, %v4820
        %v4826 = vrot.slane %v4825, 4
        %v4828 = vshll.u32 %v4447, 16
        %v4830 = vrot.slane %v4828, 5
        %v4831 = vsel %vm1829, %v4826, %v4830
        %v4832 = vld [vmem:[%s1 + $0x100] sm:$0xf]
        %v4833 = vld [vmem:[%s1 + $0x104] sm:$0xf]
        %v4834 = vld [vmem:[%s1 + $0x108] sm:$0xf]
        %v4835 = vld [vmem:[%s1 + $0x10c] sm:$0xf]
        %v4836 = vld [vmem:[%s1 + $0x110] sm:$0xf]
        %v4837 = vld [vmem:[%s1 + $0x114] sm:$0xf]
        %v4838 = vld [vmem:[%s1 + $0x118] sm:$0xf]
        %v4839 = vld [vmem:[%s1 + $0x11c] sm:$0xf]
        %v4840 = vunpack.c.l.b16 %v4461
        %v4841 = vunpack.c.l.b16 %v4471
        %v4842 = vunpack.c.l.b16 %v4485
        %v4843 = vunpack.c.l.b16 %v4495
        %v4844 = vunpack.c.l.b16 %v4509
        %v4845 = vunpack.c.l.b16 %v4519
        %v4846 = vunpack.c.l.b16 %v4533
        %v4847 = vunpack.c.l.b16 %v4543
        %v4848 = vunpack.c.l.b16 %v4557
        %v4849 = vunpack.c.l.b16 %v4567
        %v4850 = vunpack.c.l.b16 %v4581
        %v4851 = vunpack.c.l.b16 %v4591
        %v4852 = vunpack.c.l.b16 %v4605
        %v4853 = vunpack.c.l.b16 %v4615
        %v4854 = vunpack.c.l.b16 %v4629
        %v4855 = vunpack.c.l.b16 %v4639
        %v4856 = vunpack.c.l.b16 %v4653
        %v4857 = vunpack.c.l.b16 %v4663
        %v4858 = vunpack.c.l.b16 %v4677
        %v4859 = vunpack.c.l.b16 %v4687
        %v4860 = vunpack.c.l.b16 %v4701
        %v4861 = vunpack.c.l.b16 %v4711
        %v4862 = vunpack.c.l.b16 %v4725
        %v4863 = vunpack.c.l.b16 %v4735
        %v4864 = vunpack.c.l.b16 %v4749
        %v4865 = vunpack.c.l.b16 %v4759
        %v4866 = vunpack.c.l.b16 %v4773
        %v4867 = vunpack.c.l.b16 %v4783
        %v4868 = vunpack.c.l.b16 %v4797
        %v4869 = vunpack.c.l.b16 %v4807
        %v4870 = vunpack.c.l.b16 %v4821
        %v4871 = vunpack.c.l.b16 %v4831
        %v4872 = vpack.c.b16 %v4841, %v4840
        %v4873 = vpack.c.b16 %v4843, %v4842
        %v4874 = vpack.c.b16 %v4845, %v4844
        %v4875 = vpack.c.b16 %v4847, %v4846
        %v4876 = vpack.c.b16 %v4849, %v4848
        %v4877 = vpack.c.b16 %v4851, %v4850
        %v4878 = vpack.c.b16 %v4853, %v4852
        %v4879 = vpack.c.b16 %v4855, %v4854
        %v4880 = vpack.c.b16 %v4857, %v4856
        %v4881 = vpack.c.b16 %v4859, %v4858
        %v4882 = vpack.c.b16 %v4861, %v4860
        %v4883 = vpack.c.b16 %v4863, %v4862
        %v4884 = vpack.c.b16 %v4865, %v4864
        %v4885 = vpack.c.b16 %v4867, %v4866
        %v4886 = vpack.c.b16 %v4869, %v4868
        %v4887 = vpack.c.b16 %v4871, %v4870
        %v4896 = vunpack.c.l.b16 %v4832
        %v4897 = vunpack.c.l.b16 %v4833
        %v4898 = vunpack.c.l.b16 %v4834
        %v4899 = vunpack.c.l.b16 %v4835
        %v4900 = vunpack.c.l.b16 %v4836
        %v4901 = vunpack.c.l.b16 %v4837
        %v4902 = vunpack.c.l.b16 %v4838
        %v4903 = vunpack.c.l.b16 %v4839
        %v4904 = vpack.c.b16 %v4897, %v4896
        %v4905 = vpack.c.b16 %v4899, %v4898
        %v4906 = vpack.c.b16 %v4901, %v4900
        %v4907 = vpack.c.b16 %v4903, %v4902
        %v4913 = vsel %vm1400, %v4872, 0
        %v4916 = vsel %vm1400, %v4873, 0
        %v4919 = vsel %vm1400, %v4874, 0
        %v4922 = vsel %vm1400, %v4875, 0
        %v4925 = vsel %vm1400, %v4876, 0
        %v4928 = vsel %vm1400, %v4877, 0
        %v4931 = vsel %vm1400, %v4878, 0
        %v4934 = vsel %vm1400, %v4879, 0
        %v4937 = vsel %vm1400, %v4880, 0
        %v4940 = vsel %vm1400, %v4881, 0
        %v4943 = vsel %vm1400, %v4882, 0
        %v4946 = vsel %vm1400, %v4883, 0
        %v4949 = vsel %vm1400, %v4884, 0
        %v4952 = vsel %vm1400, %v4885, 0
        %v4955 = vsel %vm1400, %v4886, 0
        %v4958 = vsel %vm1400, %v4887, 0
        %4960 = vmatpush.bf16.msra.mxu0 0
        %4961 = vmatpush.bf16.msra.mxu0 0
        %4962 = vmatpush.bf16.msra.mxu0 0
        %4963 = vmatpush.bf16.msra.mxu0 0
        %4964 = vmatpush.bf16.msra.mxu0 %v4907
        %4965 = vmatpush.bf16.msra.mxu0 %v4906
        %4966 = vmatpush.bf16.msra.mxu0 %v4905
        %4967 = vmatpush.bf16.msra.mxu0 %v4904
        %4968 = vmatmul.bf16.gmra.mxu0 %v4913
        %v4969 = vpop.f32.mrf.mxu0
        %v4970 = vadd.f32 0.0, %v4969
        %v4971 = vpop.f32.mrf.mxu0
        %v4972 = vadd.f32 0.0, %v4971
        %4973 = vmatmul.bf16.gmra.mxu0 %v4916
        %v4974 = vpop.f32.mrf.mxu0
        %v4975 = vadd.f32 0.0, %v4974
        %v4976 = vpop.f32.mrf.mxu0
        %v4977 = vadd.f32 0.0, %v4976
        %4978 = vmatmul.bf16.gmra.mxu0 %v4919
        %v4979 = vpop.f32.mrf.mxu0
        %v4980 = vadd.f32 0.0, %v4979
        %v4981 = vpop.f32.mrf.mxu0
        %v4982 = vadd.f32 0.0, %v4981
        %4983 = vmatmul.bf16.gmra.mxu0 %v4922
        %v4984 = vpop.f32.mrf.mxu0
        %v4985 = vadd.f32 0.0, %v4984
        %v4986 = vpop.f32.mrf.mxu0
        %v4987 = vadd.f32 0.0, %v4986
        %4988 = vmatmul.bf16.gmra.mxu0 %v4925
        %v4989 = vpop.f32.mrf.mxu0
        %v4990 = vadd.f32 0.0, %v4989
        %v4991 = vpop.f32.mrf.mxu0
        %v4992 = vadd.f32 0.0, %v4991
        %4993 = vmatmul.bf16.gmra.mxu0 %v4928
        %v4994 = vpop.f32.mrf.mxu0
        %v4995 = vadd.f32 0.0, %v4994
        %v4996 = vpop.f32.mrf.mxu0
        %v4997 = vadd.f32 0.0, %v4996
        %4998 = vmatmul.bf16.gmra.mxu0 %v4931
        %v4999 = vpop.f32.mrf.mxu0
        %v5000 = vadd.f32 0.0, %v4999
        %v5001 = vpop.f32.mrf.mxu0
        %v5002 = vadd.f32 0.0, %v5001
        %5003 = vmatmul.bf16.gmra.mxu0 %v4934
        %v5004 = vpop.f32.mrf.mxu0
        %v5005 = vadd.f32 0.0, %v5004
        %v5006 = vpop.f32.mrf.mxu0
        %v5007 = vadd.f32 0.0, %v5006
        %5008 = vmatmul.bf16.gmra.mxu0 %v4937
        %v5009 = vpop.f32.mrf.mxu0
        %v5010 = vadd.f32 0.0, %v5009
        %v5011 = vpop.f32.mrf.mxu0
        %v5012 = vadd.f32 0.0, %v5011
        %5013 = vmatmul.bf16.gmra.mxu0 %v4940
        %v5014 = vpop.f32.mrf.mxu0
        %v5015 = vadd.f32 0.0, %v5014
        %v5016 = vpop.f32.mrf.mxu0
        %v5017 = vadd.f32 0.0, %v5016
        %5018 = vmatmul.bf16.gmra.mxu0 %v4943
        %v5019 = vpop.f32.mrf.mxu0
        %v5020 = vadd.f32 0.0, %v5019
        %v5021 = vpop.f32.mrf.mxu0
        %v5022 = vadd.f32 0.0, %v5021
        %5023 = vmatmul.bf16.gmra.mxu0 %v4946
        %v5024 = vpop.f32.mrf.mxu0
        %v5025 = vadd.f32 0.0, %v5024
        %v5026 = vpop.f32.mrf.mxu0
        %v5027 = vadd.f32 0.0, %v5026
        %5028 = vmatmul.bf16.gmra.mxu0 %v4949
        %v5029 = vpop.f32.mrf.mxu0
        %v5030 = vadd.f32 0.0, %v5029
        %v5031 = vpop.f32.mrf.mxu0
        %v5032 = vadd.f32 0.0, %v5031
        %5033 = vmatmul.bf16.gmra.mxu0 %v4952
        %v5034 = vpop.f32.mrf.mxu0
        %v5035 = vadd.f32 0.0, %v5034
        %v5036 = vpop.f32.mrf.mxu0
        %v5037 = vadd.f32 0.0, %v5036
        %5038 = vmatmul.bf16.gmra.mxu0 %v4955
        %v5039 = vpop.f32.mrf.mxu0
        %v5040 = vadd.f32 0.0, %v5039
        %v5041 = vpop.f32.mrf.mxu0
        %v5042 = vadd.f32 0.0, %v5041
        %5043 = vmatmul.bf16.gmra.mxu0 %v4958
        %v5044 = vpop.f32.mrf.mxu0
        %v5045 = vadd.f32 0.0, %v5044
        %v5046 = vpop.f32.mrf.mxu0
        %v5047 = vadd.f32 0.0, %v5046
        %5048 = vdwg.mxu0
        %v5049 = vadd.f32 %v4368, %v4970
        %v5050 = vadd.f32 %v4369, %v4972
        %v5051 = vadd.f32 %v4370, %v4975
        %v5052 = vadd.f32 %v4371, %v4977
        %v5053 = vadd.f32 %v4372, %v4980
        %v5054 = vadd.f32 %v4373, %v4982
        %v5055 = vadd.f32 %v4374, %v4985
        %v5056 = vadd.f32 %v4375, %v4987
        %v5057 = vadd.f32 %v4376, %v4990
        %v5058 = vadd.f32 %v4377, %v4992
        %v5059 = vadd.f32 %v4378, %v4995
        %v5060 = vadd.f32 %v4379, %v4997
        %v5061 = vadd.f32 %v4380, %v5000
        %v5062 = vadd.f32 %v4381, %v5002
        %v5063 = vadd.f32 %v4382, %v5005
        %v5064 = vadd.f32 %v4383, %v5007
        %v5065 = vadd.f32 %v4384, %v5010
        %v5066 = vadd.f32 %v4385, %v5012
        %v5067 = vadd.f32 %v4386, %v5015
        %v5068 = vadd.f32 %v4387, %v5017
        %v5069 = vadd.f32 %v4388, %v5020
        %v5070 = vadd.f32 %v4389, %v5022
        %v5071 = vadd.f32 %v4390, %v5025
        %v5072 = vadd.f32 %v4391, %v5027
        %v5073 = vadd.f32 %v4392, %v5030
        %v5074 = vadd.f32 %v4393, %v5032
        %v5075 = vadd.f32 %v4394, %v5035
        %v5076 = vadd.f32 %v4395, %v5037
        %v5077 = vadd.f32 %v4396, %v5040
        %v5078 = vadd.f32 %v4397, %v5042
        %v5079 = vadd.f32 %v4398, %v5045
        %v5080 = vadd.f32 %v4399, %v5047
        %v5081 = vld [vmem:[%s2] sm:$0x1]
        %v5083 = vperm.slane %v5081, 0
        %v5085 = vmul.f32 %v5049, %v5083
        %v5086 = vmul.f32 %v5050, %v5083
        %v5087 = vmul.f32 %v5051, %v5083
        %v5088 = vmul.f32 %v5052, %v5083
        %v5089 = vmul.f32 %v5053, %v5083
        %v5090 = vmul.f32 %v5054, %v5083
        %v5091 = vmul.f32 %v5055, %v5083
        %v5092 = vmul.f32 %v5056, %v5083
        %v5093 = vmul.f32 %v5057, %v5083
        %v5094 = vmul.f32 %v5058, %v5083
        %v5095 = vmul.f32 %v5059, %v5083
        %v5096 = vmul.f32 %v5060, %v5083
        %v5097 = vmul.f32 %v5061, %v5083
        %v5098 = vmul.f32 %v5062, %v5083
        %v5099 = vmul.f32 %v5063, %v5083
        %v5100 = vmul.f32 %v5064, %v5083
        %v5101 = vmul.f32 %v5065, %v5083
        %v5102 = vmul.f32 %v5066, %v5083
        %v5103 = vmul.f32 %v5067, %v5083
        %v5104 = vmul.f32 %v5068, %v5083
        %v5105 = vmul.f32 %v5069, %v5083
        %v5106 = vmul.f32 %v5070, %v5083
        %v5107 = vmul.f32 %v5071, %v5083
        %v5108 = vmul.f32 %v5072, %v5083
        %v5109 = vmul.f32 %v5073, %v5083
        %v5110 = vmul.f32 %v5074, %v5083
        %v5111 = vmul.f32 %v5075, %v5083
        %v5112 = vmul.f32 %v5076, %v5083
        %v5113 = vmul.f32 %v5077, %v5083
        %v5114 = vmul.f32 %v5078, %v5083
        %v5115 = vmul.f32 %v5079, %v5083
        %v5116 = vmul.f32 %v5080, %v5083
        %v5117 = vld [vmem:[%s3] sm:$0x1]
        %v5119 = vperm.slane %v5117, 0
        %v5121 = vadd.f32 %v5085, %v5119
        %v5122 = vadd.f32 %v5086, %v5119
        %v5123 = vadd.f32 %v5087, %v5119
        %v5124 = vadd.f32 %v5088, %v5119
        %v5125 = vadd.f32 %v5089, %v5119
        %v5126 = vadd.f32 %v5090, %v5119
        %v5127 = vadd.f32 %v5091, %v5119
        %v5128 = vadd.f32 %v5092, %v5119
        %v5129 = vadd.f32 %v5093, %v5119
        %v5130 = vadd.f32 %v5094, %v5119
        %v5131 = vadd.f32 %v5095, %v5119
        %v5132 = vadd.f32 %v5096, %v5119
        %v5133 = vadd.f32 %v5097, %v5119
        %v5134 = vadd.f32 %v5098, %v5119
        %v5135 = vadd.f32 %v5099, %v5119
        %v5136 = vadd.f32 %v5100, %v5119
        %v5137 = vadd.f32 %v5101, %v5119
        %v5138 = vadd.f32 %v5102, %v5119
        %v5139 = vadd.f32 %v5103, %v5119
        %v5140 = vadd.f32 %v5104, %v5119
        %v5141 = vadd.f32 %v5105, %v5119
        %v5142 = vadd.f32 %v5106, %v5119
        %v5143 = vadd.f32 %v5107, %v5119
        %v5144 = vadd.f32 %v5108, %v5119
        %v5145 = vadd.f32 %v5109, %v5119
        %v5146 = vadd.f32 %v5110, %v5119
        %v5147 = vadd.f32 %v5111, %v5119
        %v5148 = vadd.f32 %v5112, %v5119
        %v5149 = vadd.f32 %v5113, %v5119
        %v5150 = vadd.f32 %v5114, %v5119
        %v5151 = vadd.f32 %v5115, %v5119
        %v5152 = vadd.f32 %v5116, %v5119
        %v5153 = vmax.f32 %v5121, 0.0
        %v5154 = vmax.f32 %v5122, 0.0
        %v5155 = vmax.f32 %v5123, 0.0
        %v5156 = vmax.f32 %v5124, 0.0
        %v5157 = vmax.f32 %v5125, 0.0
        %v5158 = vmax.f32 %v5126, 0.0
        %v5159 = vmax.f32 %v5127, 0.0
        %v5160 = vmax.f32 %v5128, 0.0
        %v5161 = vmax.f32 %v5129, 0.0
        %v5162 = vmax.f32 %v5130, 0.0
        %v5163 = vmax.f32 %v5131, 0.0
        %v5164 = vmax.f32 %v5132, 0.0
        %v5165 = vmax.f32 %v5133, 0.0
        %v5166 = vmax.f32 %v5134, 0.0
        %v5167 = vmax.f32 %v5135, 0.0
        %v5168 = vmax.f32 %v5136, 0.0
        %v5169 = vmax.f32 %v5137, 0.0
        %v5170 = vmax.f32 %v5138, 0.0
        %v5171 = vmax.f32 %v5139, 0.0
        %v5172 = vmax.f32 %v5140, 0.0
        %v5173 = vmax.f32 %v5141, 0.0
        %v5174 = vmax.f32 %v5142, 0.0
        %v5175 = vmax.f32 %v5143, 0.0
        %v5176 = vmax.f32 %v5144, 0.0
        %v5177 = vmax.f32 %v5145, 0.0
        %v5178 = vmax.f32 %v5146, 0.0
        %v5179 = vmax.f32 %v5147, 0.0
        %v5180 = vmax.f32 %v5148, 0.0
        %v5181 = vmax.f32 %v5149, 0.0
        %v5182 = vmax.f32 %v5150, 0.0
        %v5183 = vmax.f32 %v5151, 0.0
        %v5184 = vmax.f32 %v5152, 0.0
        %5185 = vst [vmem:[#allocation2] sm:$0xf] 0
        %5186 = vst [vmem:[#allocation2 + $0x4] sm:$0xf] 0
        %5187 = vst [vmem:[#allocation2 + $0x8] sm:$0x1] 0
        %5188 = vst [vmem:[#allocation2 + $0xc] sm:$0xf] 0
        %5189 = vst [vmem:[#allocation2 + $0x10] sm:$0xf] 0
        %5190 = vst [vmem:[#allocation2 + $0x14] sm:$0x1] 0
        %5191 = vst [vmem:[#allocation2 + $0x18] sm:$0xf] 0
        %5192 = vst [vmem:[#allocation2 + $0x1c] sm:$0xf] 0
        %5193 = vst [vmem:[#allocation2 + $0x20] sm:$0x1] 0
        %5194 = vst [vmem:[#allocation2 + $0x24] sm:$0xf] 0
        %5195 = vst [vmem:[#allocation2 + $0x28] sm:$0xf] 0
        %5196 = vst [vmem:[#allocation2 + $0x2c] sm:$0x1] 0
        %5197 = vst [vmem:[#allocation2 + $0x30] sm:$0xf] 0
        %5198 = vst [vmem:[#allocation2 + $0x34] sm:$0xf] 0
        %5199 = vst [vmem:[#allocation2 + $0x38] sm:$0x1] 0
        %5200 = vst [vmem:[#allocation2 + $0x3c] sm:$0xf] 0
        %5201 = vst [vmem:[#allocation2 + $0x40] sm:$0xf] 0
        %5202 = vst [vmem:[#allocation2 + $0x44] sm:$0x1] 0
        %5203 = vst [vmem:[#allocation2 + $0x48] sm:$0xf] 0
        %5204 = vst [vmem:[#allocation2 + $0x4c] sm:$0xf] 0
        %5205 = vst [vmem:[#allocation2 + $0x50] sm:$0x1] 0
        %5206 = vst [vmem:[#allocation2 + $0x54] sm:$0xf] 0
        %5207 = vst [vmem:[#allocation2 + $0x58] sm:$0xf] 0
        %5208 = vst [vmem:[#allocation2 + $0x5c] sm:$0x1] 0
        %5209 = vst [vmem:[#allocation2 + $0x60] sm:$0xf] 0
        %5210 = vst [vmem:[#allocation2 + $0x64] sm:$0xf] 0
        %5211 = vst [vmem:[#allocation2 + $0x68] sm:$0x1] 0
        %5212 = vst [vmem:[#allocation2 + $0x6c] sm:$0xf] 0
        %5213 = vst [vmem:[#allocation2 + $0x70] sm:$0xf] 0
        %5214 = vst [vmem:[#allocation2 + $0x74] sm:$0x1] 0
        %5215 = vst [vmem:[#allocation2 + $0x78] sm:$0xf] 0
        %5216 = vst [vmem:[#allocation2 + $0x7c] sm:$0xf] 0
        %5217 = vst [vmem:[#allocation2 + $0x80] sm:$0x1] 0
        %5218 = vst [vmem:[#allocation2 + $0x84] sm:$0xf] 0
        %5219 = vst [vmem:[#allocation2 + $0x88] sm:$0xf] 0
        %5220 = vst [vmem:[#allocation2 + $0x8c] sm:$0x1] 0
        %5221 = vst [vmem:[#allocation2 + $0x90] sm:$0xf] 0
        %5222 = vst [vmem:[#allocation2 + $0x94] sm:$0xf] 0
        %5223 = vst [vmem:[#allocation2 + $0x98] sm:$0x1] 0
        %5224 = vst [vmem:[#allocation2 + $0x9c] sm:$0xf] 0
        %5225 = vst [vmem:[#allocation2 + $0xa0] sm:$0xf] 0
        %5226 = vst [vmem:[#allocation2 + $0xa4] sm:$0x1] 0
        %5227 = vst [vmem:[#allocation2 + $0xa8] sm:$0xf] 0
        %5228 = vst [vmem:[#allocation2 + $0xac] sm:$0xf] 0
        %5229 = vst [vmem:[#allocation2 + $0xb0] sm:$0x1] 0
        %5230 = vst [vmem:[#allocation2 + $0xb4] sm:$0xf] 0
        %5231 = vst [vmem:[#allocation2 + $0xb8] sm:$0xf] 0
        %5232 = vst [vmem:[#allocation2 + $0xbc] sm:$0x1] 0
        %5233 = vst [vmem:[#allocation2 + $0xc0] sm:$0xf] 0
        %5234 = vst [vmem:[#allocation2 + $0xc4] sm:$0xf] 0
        %5235 = vst [vmem:[#allocation2 + $0xc8] sm:$0x1] 0
        %5236 = vst [vmem:[#allocation2 + $0xcc] sm:$0xf] 0
        %5237 = vst [vmem:[#allocation2 + $0xd0] sm:$0xf] 0
        %5238 = vst [vmem:[#allocation2 + $0xd4] sm:$0x1] 0
        %v5239 = vpack.c.bf16 %v5153, %v5153
        %v5240 = vpack.c.bf16 %v5154, %v5154
        %v5241 = vpack.c.bf16 %v5155, %v5155
        %v5242 = vpack.c.bf16 %v5156, %v5156
        %v5243 = vpack.c.bf16 %v5157, %v5157
        %v5244 = vpack.c.bf16 %v5158, %v5158
        %v5245 = vpack.c.bf16 %v5159, %v5159
        %v5246 = vpack.c.bf16 %v5160, %v5160
        %v5247 = vpack.c.bf16 %v5161, %v5161
        %v5248 = vpack.c.bf16 %v5162, %v5162
        %v5249 = vpack.c.bf16 %v5163, %v5163
        %v5250 = vpack.c.bf16 %v5164, %v5164
        %v5251 = vpack.c.bf16 %v5165, %v5165
        %v5252 = vpack.c.bf16 %v5166, %v5166
        %v5253 = vpack.c.bf16 %v5167, %v5167
        %v5254 = vpack.c.bf16 %v5168, %v5168
        %v5255 = vpack.c.bf16 %v5169, %v5169
        %v5256 = vpack.c.bf16 %v5170, %v5170
        %v5257 = vpack.c.bf16 %v5171, %v5171
        %v5258 = vpack.c.bf16 %v5172, %v5172
        %v5259 = vpack.c.bf16 %v5173, %v5173
        %v5260 = vpack.c.bf16 %v5174, %v5174
        %v5261 = vpack.c.bf16 %v5175, %v5175
        %v5262 = vpack.c.bf16 %v5176, %v5176
        %v5263 = vpack.c.bf16 %v5177, %v5177
        %v5264 = vpack.c.bf16 %v5178, %v5178
        %v5265 = vpack.c.bf16 %v5179, %v5179
        %v5266 = vpack.c.bf16 %v5180, %v5180
        %v5267 = vpack.c.bf16 %v5181, %v5181
        %v5268 = vpack.c.bf16 %v5182, %v5182
        %v5269 = vpack.c.bf16 %v5183, %v5183
        %v5270 = vpack.c.bf16 %v5184, %v5184
        %vm5271 = vsmask.f32 256
        %vm5272 = vsmask.f32 4368
        %vm5273 = vmor %vm5271, %vm5272
        %v5275 = vshrl.u32 %v5239, 16
        %v5277 = vrot.slane %v5275, 7
        %v5278 = vshll.u32 %v5239, 16
        %v5280 = vor.u32 %v5277, %v5278
        %v5281 = vrot.slane %v5277, 4
        %v5283 = vshrl.u32 %v5240, 16
        %v5285 = vrot.slane %v5283, 7
        %v5286 = vshll.u32 %v5240, 16
        %v5288 = vor.u32 %v5285, %v5286
        %v5289 = vsel %vm5273, %v5281, %v5288
        %v5290 = vrot.slane %v5285, 4
        %v5292 = vshrl.u32 %v5241, 16
        %v5294 = vrot.slane %v5292, 7
        %v5295 = vshll.u32 %v5241, 16
        %v5297 = vor.u32 %v5294, %v5295
        %v5298 = vrot.slane %v5294, 4
        %v5300 = vshrl.u32 %v5242, 16
        %v5302 = vrot.slane %v5300, 7
        %v5303 = vshll.u32 %v5242, 16
        %v5305 = vor.u32 %v5302, %v5303
        %v5306 = vsel %vm5273, %v5298, %v5305
        %v5307 = vrot.slane %v5302, 4
        %v5309 = vshrl.u32 %v5243, 16
        %v5311 = vrot.slane %v5309, 7
        %v5312 = vshll.u32 %v5243, 16
        %v5314 = vor.u32 %v5311, %v5312
        %v5315 = vrot.slane %v5311, 4
        %v5317 = vshrl.u32 %v5244, 16
        %v5319 = vrot.slane %v5317, 7
        %v5320 = vshll.u32 %v5244, 16
        %v5322 = vor.u32 %v5319, %v5320
        %v5323 = vsel %vm5273, %v5315, %v5322
        %v5324 = vrot.slane %v5319, 4
        %v5326 = vshrl.u32 %v5245, 16
        %v5328 = vrot.slane %v5326, 7
        %v5329 = vshll.u32 %v5245, 16
        %v5331 = vor.u32 %v5328, %v5329
        %v5332 = vrot.slane %v5328, 4
        %v5334 = vshrl.u32 %v5246, 16
        %v5336 = vrot.slane %v5334, 7
        %v5337 = vshll.u32 %v5246, 16
        %v5339 = vor.u32 %v5336, %v5337
        %v5340 = vsel %vm5273, %v5332, %v5339
        %v5341 = vrot.slane %v5336, 4
        %v5343 = vshrl.u32 %v5247, 16
        %v5345 = vrot.slane %v5343, 7
        %v5346 = vshll.u32 %v5247, 16
        %v5348 = vor.u32 %v5345, %v5346
        %v5349 = vrot.slane %v5345, 4
        %v5351 = vshrl.u32 %v5248, 16
        %v5353 = vrot.slane %v5351, 7
        %v5354 = vshll.u32 %v5248, 16
        %v5356 = vor.u32 %v5353, %v5354
        %v5357 = vsel %vm5273, %v5349, %v5356
        %v5358 = vrot.slane %v5353, 4
        %v5360 = vshrl.u32 %v5249, 16
        %v5362 = vrot.slane %v5360, 7
        %v5363 = vshll.u32 %v5249, 16
        %v5365 = vor.u32 %v5362, %v5363
        %v5366 = vrot.slane %v5362, 4
        %v5368 = vshrl.u32 %v5250, 16
        %v5370 = vrot.slane %v5368, 7
        %v5371 = vshll.u32 %v5250, 16
        %v5373 = vor.u32 %v5370, %v5371
        %v5374 = vsel %vm5273, %v5366, %v5373
        %v5375 = vrot.slane %v5370, 4
        %v5377 = vshrl.u32 %v5251, 16
        %v5379 = vrot.slane %v5377, 7
        %v5380 = vshll.u32 %v5251, 16
        %v5382 = vor.u32 %v5379, %v5380
        %v5383 = vrot.slane %v5379, 4
        %v5385 = vshrl.u32 %v5252, 16
        %v5387 = vrot.slane %v5385, 7
        %v5388 = vshll.u32 %v5252, 16
        %v5390 = vor.u32 %v5387, %v5388
        %v5391 = vsel %vm5273, %v5383, %v5390
        %v5392 = vrot.slane %v5387, 4
        %v5394 = vshrl.u32 %v5253, 16
        %v5396 = vrot.slane %v5394, 7
        %v5397 = vshll.u32 %v5253, 16
        %v5399 = vor.u32 %v5396, %v5397
        %v5400 = vrot.slane %v5396, 4
        %v5402 = vshrl.u32 %v5254, 16
        %v5404 = vrot.slane %v5402, 7
        %v5405 = vshll.u32 %v5254, 16
        %v5407 = vor.u32 %v5404, %v5405
        %v5408 = vsel %vm5273, %v5400, %v5407
        %v5409 = vrot.slane %v5404, 4
        %v5411 = vshrl.u32 %v5255, 16
        %v5413 = vrot.slane %v5411, 7
        %v5414 = vshll.u32 %v5255, 16
        %v5416 = vor.u32 %v5413, %v5414
        %v5417 = vrot.slane %v5413, 4
        %v5419 = vshrl.u32 %v5256, 16
        %v5421 = vrot.slane %v5419, 7
        %v5422 = vshll.u32 %v5256, 16
        %v5424 = vor.u32 %v5421, %v5422
        %v5425 = vsel %vm5273, %v5417, %v5424
        %v5426 = vrot.slane %v5421, 4
        %v5428 = vshrl.u32 %v5257, 16
        %v5430 = vrot.slane %v5428, 7
        %v5431 = vshll.u32 %v5257, 16
        %v5433 = vor.u32 %v5430, %v5431
        %v5434 = vrot.slane %v5430, 4
        %v5436 = vshrl.u32 %v5258, 16
        %v5438 = vrot.slane %v5436, 7
        %v5439 = vshll.u32 %v5258, 16
        %v5441 = vor.u32 %v5438, %v5439
        %v5442 = vsel %vm5273, %v5434, %v5441
        %v5443 = vrot.slane %v5438, 4
        %v5445 = vshrl.u32 %v5259, 16
        %v5447 = vrot.slane %v5445, 7
        %v5448 = vshll.u32 %v5259, 16
        %v5450 = vor.u32 %v5447, %v5448
        %v5451 = vrot.slane %v5447, 4
        %v5453 = vshrl.u32 %v5260, 16
        %v5455 = vrot.slane %v5453, 7
        %v5456 = vshll.u32 %v5260, 16
        %v5458 = vor.u32 %v5455, %v5456
        %v5459 = vsel %vm5273, %v5451, %v5458
        %v5460 = vrot.slane %v5455, 4
        %v5462 = vshrl.u32 %v5261, 16
        %v5464 = vrot.slane %v5462, 7
        %v5465 = vshll.u32 %v5261, 16
        %v5467 = vor.u32 %v5464, %v5465
        %v5468 = vrot.slane %v5464, 4
        %v5470 = vshrl.u32 %v5262, 16
        %v5472 = vrot.slane %v5470, 7
        %v5473 = vshll.u32 %v5262, 16
        %v5475 = vor.u32 %v5472, %v5473
        %v5476 = vsel %vm5273, %v5468, %v5475
        %v5477 = vrot.slane %v5472, 4
        %v5479 = vshrl.u32 %v5263, 16
        %v5481 = vrot.slane %v5479, 7
        %v5482 = vshll.u32 %v5263, 16
        %v5484 = vor.u32 %v5481, %v5482
        %v5485 = vrot.slane %v5481, 4
        %v5487 = vshrl.u32 %v5264, 16
        %v5489 = vrot.slane %v5487, 7
        %v5490 = vshll.u32 %v5264, 16
        %v5492 = vor.u32 %v5489, %v5490
        %v5493 = vsel %vm5273, %v5485, %v5492
        %v5494 = vrot.slane %v5489, 4
        %v5496 = vshrl.u32 %v5265, 16
        %v5498 = vrot.slane %v5496, 7
        %v5499 = vshll.u32 %v5265, 16
        %v5501 = vor.u32 %v5498, %v5499
        %v5502 = vrot.slane %v5498, 4
        %v5504 = vshrl.u32 %v5266, 16
        %v5506 = vrot.slane %v5504, 7
        %v5507 = vshll.u32 %v5266, 16
        %v5509 = vor.u32 %v5506, %v5507
        %v5510 = vsel %vm5273, %v5502, %v5509
        %v5511 = vrot.slane %v5506, 4
        %v5513 = vshrl.u32 %v5267, 16
        %v5515 = vrot.slane %v5513, 7
        %v5516 = vshll.u32 %v5267, 16
        %v5518 = vor.u32 %v5515, %v5516
        %v5519 = vrot.slane %v5515, 4
        %v5521 = vshrl.u32 %v5268, 16
        %v5523 = vrot.slane %v5521, 7
        %v5524 = vshll.u32 %v5268, 16
        %v5526 = vor.u32 %v5523, %v5524
        %v5527 = vsel %vm5273, %v5519, %v5526
        %v5528 = vrot.slane %v5523, 4
        %v5530 = vshrl.u32 %v5269, 16
        %v5532 = vrot.slane %v5530, 7
        %v5533 = vshll.u32 %v5269, 16
        %v5535 = vor.u32 %v5532, %v5533
        %v5536 = vrot.slane %v5532, 4
        %v5538 = vshrl.u32 %v5270, 16
        %v5540 = vrot.slane %v5538, 7
        %v5541 = vshll.u32 %v5270, 16
        %v5543 = vor.u32 %v5540, %v5541
        %v5544 = vsel %vm5273, %v5536, %v5543
        %v5545 = vrot.slane %v5540, 4
        %s5594 = scalar_lea.vmem [#allocation2], 12
        %vm5595 = vcmask 1043456
        %vm5596 = vsmask.f32 7938
        %vm5597 = vmand %vm5595, %vm5596
        %v5598 = vld [vmem:[%s5594] sm:$0xf]
        %v5599 = vsel %vm5597, %v5280, %v5598
        %5600 = vst [vmem:[%s5594] sm:$0xf] %v5599
        %5601 = vst [vmem:[%s5594 + $0x4] sm:$0xf] %v5289
        %vm5602 = vcmask 1040384
        %vm5603 = vmand %vm5602, %vm5271
        %v5604 = vld [vmem:[%s5594 + $0x8] sm:$0x1]
        %v5605 = vsel %vm5603, %v5290, %v5604
        %5606 = vst [vmem:[%s5594 + $0x8] sm:$0x1] %v5605
        %v5607 = vld [vmem:[%s5594 + $0xc] sm:$0xf]
        %v5608 = vsel %vm5597, %v5297, %v5607
        %5609 = vst [vmem:[%s5594 + $0xc] sm:$0xf] %v5608
        %5610 = vst [vmem:[%s5594 + $0x10] sm:$0xf] %v5306
        %v5611 = vld [vmem:[%s5594 + $0x14] sm:$0x1]
        %v5612 = vsel %vm5603, %v5307, %v5611
        %5613 = vst [vmem:[%s5594 + $0x14] sm:$0x1] %v5612
        %v5614 = vld [vmem:[%s5594 + $0x18] sm:$0xf]
        %v5615 = vsel %vm5597, %v5314, %v5614
        %5616 = vst [vmem:[%s5594 + $0x18] sm:$0xf] %v5615
        %5617 = vst [vmem:[%s5594 + $0x1c] sm:$0xf] %v5323
        %v5618 = vld [vmem:[%s5594 + $0x20] sm:$0x1]
        %v5619 = vsel %vm5603, %v5324, %v5618
        %5620 = vst [vmem:[%s5594 + $0x20] sm:$0x1] %v5619
        %v5621 = vld [vmem:[%s5594 + $0x24] sm:$0xf]
        %v5622 = vsel %vm5597, %v5331, %v5621
        %5623 = vst [vmem:[%s5594 + $0x24] sm:$0xf] %v5622
        %5624 = vst [vmem:[%s5594 + $0x28] sm:$0xf] %v5340
        %v5625 = vld [vmem:[%s5594 + $0x2c] sm:$0x1]
        %v5626 = vsel %vm5603, %v5341, %v5625
        %5627 = vst [vmem:[%s5594 + $0x2c] sm:$0x1] %v5626
        %v5628 = vld [vmem:[%s5594 + $0x30] sm:$0xf]
        %v5629 = vsel %vm5597, %v5348, %v5628
        %5630 = vst [vmem:[%s5594 + $0x30] sm:$0xf] %v5629
        %5631 = vst [vmem:[%s5594 + $0x34] sm:$0xf] %v5357
        %v5632 = vld [vmem:[%s5594 + $0x38] sm:$0x1]
        %v5633 = vsel %vm5603, %v5358, %v5632
        %5634 = vst [vmem:[%s5594 + $0x38] sm:$0x1] %v5633
        %v5635 = vld [vmem:[%s5594 + $0x3c] sm:$0xf]
        %v5636 = vsel %vm5597, %v5365, %v5635
        %5637 = vst [vmem:[%s5594 + $0x3c] sm:$0xf] %v5636
        %5638 = vst [vmem:[%s5594 + $0x40] sm:$0xf] %v5374
        %v5639 = vld [vmem:[%s5594 + $0x44] sm:$0x1]
        %v5640 = vsel %vm5603, %v5375, %v5639
        %5641 = vst [vmem:[%s5594 + $0x44] sm:$0x1] %v5640
        %v5642 = vld [vmem:[%s5594 + $0x48] sm:$0xf]
        %v5643 = vsel %vm5597, %v5382, %v5642
        %5644 = vst [vmem:[%s5594 + $0x48] sm:$0xf] %v5643
        %5645 = vst [vmem:[%s5594 + $0x4c] sm:$0xf] %v5391
        %v5646 = vld [vmem:[%s5594 + $0x50] sm:$0x1]
        %v5647 = vsel %vm5603, %v5392, %v5646
        %5648 = vst [vmem:[%s5594 + $0x50] sm:$0x1] %v5647
        %v5649 = vld [vmem:[%s5594 + $0x54] sm:$0xf]
        %v5650 = vsel %vm5597, %v5399, %v5649
        %5651 = vst [vmem:[%s5594 + $0x54] sm:$0xf] %v5650
        %5652 = vst [vmem:[%s5594 + $0x58] sm:$0xf] %v5408
        %v5653 = vld [vmem:[%s5594 + $0x5c] sm:$0x1]
        %v5654 = vsel %vm5603, %v5409, %v5653
        %5655 = vst [vmem:[%s5594 + $0x5c] sm:$0x1] %v5654
        %v5656 = vld [vmem:[%s5594 + $0x60] sm:$0xf]
        %v5657 = vsel %vm5597, %v5416, %v5656
        %5658 = vst [vmem:[%s5594 + $0x60] sm:$0xf] %v5657
        %5659 = vst [vmem:[%s5594 + $0x64] sm:$0xf] %v5425
        %v5660 = vld [vmem:[%s5594 + $0x68] sm:$0x1]
        %v5661 = vsel %vm5603, %v5426, %v5660
        %5662 = vst [vmem:[%s5594 + $0x68] sm:$0x1] %v5661
        %v5663 = vld [vmem:[%s5594 + $0x6c] sm:$0xf]
        %v5664 = vsel %vm5597, %v5433, %v5663
        %5665 = vst [vmem:[%s5594 + $0x6c] sm:$0xf] %v5664
        %5666 = vst [vmem:[%s5594 + $0x70] sm:$0xf] %v5442
        %v5667 = vld [vmem:[%s5594 + $0x74] sm:$0x1]
        %v5668 = vsel %vm5603, %v5443, %v5667
        %5669 = vst [vmem:[%s5594 + $0x74] sm:$0x1] %v5668
        %v5670 = vld [vmem:[%s5594 + $0x78] sm:$0xf]
        %v5671 = vsel %vm5597, %v5450, %v5670
        %5672 = vst [vmem:[%s5594 + $0x78] sm:$0xf] %v5671
        %5673 = vst [vmem:[%s5594 + $0x7c] sm:$0xf] %v5459
        %v5674 = vld [vmem:[%s5594 + $0x80] sm:$0x1]
        %v5675 = vsel %vm5603, %v5460, %v5674
        %5676 = vst [vmem:[%s5594 + $0x80] sm:$0x1] %v5675
        %v5677 = vld [vmem:[%s5594 + $0x84] sm:$0xf]
        %v5678 = vsel %vm5597, %v5467, %v5677
        %5679 = vst [vmem:[%s5594 + $0x84] sm:$0xf] %v5678
        %5680 = vst [vmem:[%s5594 + $0x88] sm:$0xf] %v5476
        %v5681 = vld [vmem:[%s5594 + $0x8c] sm:$0x1]
        %v5682 = vsel %vm5603, %v5477, %v5681
        %5683 = vst [vmem:[%s5594 + $0x8c] sm:$0x1] %v5682
        %v5684 = vld [vmem:[%s5594 + $0x90] sm:$0xf]
        %v5685 = vsel %vm5597, %v5484, %v5684
        %5686 = vst [vmem:[%s5594 + $0x90] sm:$0xf] %v5685
        %5687 = vst [vmem:[%s5594 + $0x94] sm:$0xf] %v5493
        %v5688 = vld [vmem:[%s5594 + $0x98] sm:$0x1]
        %v5689 = vsel %vm5603, %v5494, %v5688
        %5690 = vst [vmem:[%s5594 + $0x98] sm:$0x1] %v5689
        %v5691 = vld [vmem:[%s5594 + $0x9c] sm:$0xf]
        %v5692 = vsel %vm5597, %v5501, %v5691
        %5693 = vst [vmem:[%s5594 + $0x9c] sm:$0xf] %v5692
        %5694 = vst [vmem:[%s5594 + $0xa0] sm:$0xf] %v5510
        %v5695 = vld [vmem:[%s5594 + $0xa4] sm:$0x1]
        %v5696 = vsel %vm5603, %v5511, %v5695
        %5697 = vst [vmem:[%s5594 + $0xa4] sm:$0x1] %v5696
        %v5698 = vld [vmem:[%s5594 + $0xa8] sm:$0xf]
        %v5699 = vsel %vm5597, %v5518, %v5698
        %5700 = vst [vmem:[%s5594 + $0xa8] sm:$0xf] %v5699
        %5701 = vst [vmem:[%s5594 + $0xac] sm:$0xf] %v5527
        %v5702 = vld [vmem:[%s5594 + $0xb0] sm:$0x1]
        %v5703 = vsel %vm5603, %v5528, %v5702
        %5704 = vst [vmem:[%s5594 + $0xb0] sm:$0x1] %v5703
        %v5705 = vld [vmem:[%s5594 + $0xb4] sm:$0xf]
        %v5706 = vsel %vm5597, %v5535, %v5705
        %5707 = vst [vmem:[%s5594 + $0xb4] sm:$0xf] %v5706
        %5708 = vst [vmem:[%s5594 + $0xb8] sm:$0xf] %v5544
        %v5709 = vld [vmem:[%s5594 + $0xbc] sm:$0x1]
        %v5710 = vsel %vm5603, %v5545, %v5709
        %5711 = vst [vmem:[%s5594 + $0xbc] sm:$0x1] %v5710
        %v5712 = vld [vmem:[#allocation2] sm:$0xf]
        %v5713 = vld [vmem:[#allocation2 + $0x4] sm:$0xf]
        %v5714 = vld [vmem:[#allocation2 + $0xc] sm:$0xf]
        %v5715 = vld [vmem:[#allocation2 + $0x10] sm:$0xf]
        %v5716 = vld [vmem:[#allocation2 + $0x18] sm:$0xf]
        %v5717 = vld [vmem:[#allocation2 + $0x1c] sm:$0xf]
        %v5718 = vld [vmem:[#allocation2 + $0x24] sm:$0xf]
        %v5719 = vld [vmem:[#allocation2 + $0x28] sm:$0xf]
        %v5720 = vld [vmem:[#allocation2 + $0x30] sm:$0xf]
        %v5721 = vld [vmem:[#allocation2 + $0x34] sm:$0xf]
        %v5722 = vld [vmem:[#allocation2 + $0x3c] sm:$0xf]
        %v5723 = vld [vmem:[#allocation2 + $0x40] sm:$0xf]
        %v5724 = vld [vmem:[#allocation2 + $0x48] sm:$0xf]
        %v5725 = vld [vmem:[#allocation2 + $0x4c] sm:$0xf]
        %v5726 = vld [vmem:[#allocation2 + $0x54] sm:$0xf]
        %v5727 = vld [vmem:[#allocation2 + $0x58] sm:$0xf]
        %v5728 = vld [vmem:[#allocation2 + $0x60] sm:$0xf]
        %v5729 = vld [vmem:[#allocation2 + $0x64] sm:$0xf]
        %v5730 = vld [vmem:[#allocation2 + $0x6c] sm:$0xf]
        %v5731 = vld [vmem:[#allocation2 + $0x70] sm:$0xf]
        %v5732 = vld [vmem:[#allocation2 + $0x78] sm:$0xf]
        %v5733 = vld [vmem:[#allocation2 + $0x7c] sm:$0xf]
        %v5734 = vld [vmem:[#allocation2 + $0x84] sm:$0xf]
        %v5735 = vld [vmem:[#allocation2 + $0x88] sm:$0xf]
        %v5736 = vld [vmem:[#allocation2 + $0x90] sm:$0xf]
        %v5737 = vld [vmem:[#allocation2 + $0x94] sm:$0xf]
        %v5738 = vld [vmem:[#allocation2 + $0x9c] sm:$0xf]
        %v5739 = vld [vmem:[#allocation2 + $0xa0] sm:$0xf]
        %v5740 = vld [vmem:[#allocation2 + $0xa8] sm:$0xf]
        %v5741 = vld [vmem:[#allocation2 + $0xac] sm:$0xf]
        %v5742 = vld [vmem:[#allocation2 + $0xb4] sm:$0xf]
        %v5743 = vld [vmem:[#allocation2 + $0xb8] sm:$0xf]
        %5744 = vst [vmem:[#allocation4] sm:$0xf] %v5712
        %5745 = vst [vmem:[#allocation4 + $0x24] sm:$0xf] %v5713
        %5746 = vst [vmem:[#allocation4 + $0x48] sm:$0xf] %v5714
        %5747 = vst [vmem:[#allocation4 + $0x6c] sm:$0xf] %v5715
        %5748 = vst [vmem:[#allocation4 + $0x90] sm:$0xf] %v5716
        %5749 = vst [vmem:[#allocation4 + $0xb4] sm:$0xf] %v5717
        %5750 = vst [vmem:[#allocation4 + $0xd8] sm:$0xf] %v5718
        %5751 = vst [vmem:[#allocation4 + $0xfc] sm:$0xf] %v5719
        %5752 = vst [vmem:[#allocation4 + $0x120] sm:$0xf] %v5720
        %5753 = vst [vmem:[#allocation4 + $0x144] sm:$0xf] %v5721
        %5754 = vst [vmem:[#allocation4 + $0x168] sm:$0xf] %v5722
        %5755 = vst [vmem:[#allocation4 + $0x18c] sm:$0xf] %v5723
        %5756 = vst [vmem:[#allocation4 + $0x1b0] sm:$0xf] %v5724
        %5757 = vst [vmem:[#allocation4 + $0x1d4] sm:$0xf] %v5725
        %5758 = vst [vmem:[#allocation4 + $0x1f8] sm:$0xf] %v5726
        %5759 = vst [vmem:[#allocation4 + $0x21c] sm:$0xf] %v5727
        %5760 = vst [vmem:[#allocation4 + $0x240] sm:$0xf] %v5728
        %5761 = vst [vmem:[#allocation4 + $0x264] sm:$0xf] %v5729
        %5762 = vst [vmem:[#allocation4 + $0x288] sm:$0xf] %v5730
        %5763 = vst [vmem:[#allocation4 + $0x2ac] sm:$0xf] %v5731
        %5764 = vst [vmem:[#allocation4 + $0x2d0] sm:$0xf] %v5732
        %5765 = vst [vmem:[#allocation4 + $0x2f4] sm:$0xf] %v5733
        %5766 = vst [vmem:[#allocation4 + $0x318] sm:$0xf] %v5734
        %5767 = vst [vmem:[#allocation4 + $0x33c] sm:$0xf] %v5735
        %5768 = vst [vmem:[#allocation4 + $0x360] sm:$0xf] %v5736
        %5769 = vst [vmem:[#allocation4 + $0x384] sm:$0xf] %v5737
        %5770 = vst [vmem:[#allocation4 + $0x3a8] sm:$0xf] %v5738
        %5771 = vst [vmem:[#allocation4 + $0x3cc] sm:$0xf] %v5739
        %5772 = vst [vmem:[#allocation4 + $0x3f0] sm:$0xf] %v5740
        %5773 = vst [vmem:[#allocation4 + $0x414] sm:$0xf] %v5741
        %5774 = vst [vmem:[#allocation4 + $0x438] sm:$0xf] %v5742
        %5775 = vst [vmem:[#allocation4 + $0x45c] sm:$0xf] %v5743
        %v5776 = vld [vmem:[#allocation2] sm:$0xf]
        %v5777 = vld [vmem:[#allocation2 + $0x4] sm:$0xf]
        %v5778 = vld [vmem:[#allocation2 + $0x8] sm:$0x1]
        %v5779 = vld [vmem:[#allocation2 + $0xc] sm:$0xf]
        %v5780 = vld [vmem:[#allocation2 + $0x10] sm:$0xf]
        %v5781 = vld [vmem:[#allocation2 + $0x14] sm:$0x1]
        %v5782 = vld [vmem:[#allocation2 + $0x18] sm:$0xf]
        %v5783 = vld [vmem:[#allocation2 + $0x1c] sm:$0xf]
        %v5784 = vld [vmem:[#allocation2 + $0x20] sm:$0x1]
        %v5785 = vld [vmem:[#allocation2 + $0x24] sm:$0xf]
        %v5786 = vld [vmem:[#allocation2 + $0x28] sm:$0xf]
        %v5787 = vld [vmem:[#allocation2 + $0x2c] sm:$0x1]
        %v5788 = vld [vmem:[#allocation2 + $0x30] sm:$0xf]
        %v5789 = vld [vmem:[#allocation2 + $0x34] sm:$0xf]
        %v5790 = vld [vmem:[#allocation2 + $0x38] sm:$0x1]
        %v5791 = vld [vmem:[#allocation2 + $0x3c] sm:$0xf]
        %v5792 = vld [vmem:[#allocation2 + $0x40] sm:$0xf]
        %v5793 = vld [vmem:[#allocation2 + $0x44] sm:$0x1]
        %v5794 = vld [vmem:[#allocation2 + $0x48] sm:$0xf]
        %v5795 = vld [vmem:[#allocation2 + $0x4c] sm:$0xf]
        %v5796 = vld [vmem:[#allocation2 + $0x50] sm:$0x1]
        %v5797 = vld [vmem:[#allocation2 + $0x54] sm:$0xf]
        %v5798 = vld [vmem:[#allocation2 + $0x58] sm:$0xf]
        %v5799 = vld [vmem:[#allocation2 + $0x5c] sm:$0x1]
        %v5800 = vld [vmem:[#allocation2 + $0x60] sm:$0xf]
        %v5801 = vld [vmem:[#allocation2 + $0x64] sm:$0xf]
        %v5802 = vld [vmem:[#allocation2 + $0x68] sm:$0x1]
        %v5803 = vld [vmem:[#allocation2 + $0x6c] sm:$0xf]
        %v5804 = vld [vmem:[#allocation2 + $0x70] sm:$0xf]
        %v5805 = vld [vmem:[#allocation2 + $0x74] sm:$0x1]
        %v5806 = vld [vmem:[#allocation2 + $0x78] sm:$0xf]
        %v5807 = vld [vmem:[#allocation2 + $0x7c] sm:$0xf]
        %v5808 = vld [vmem:[#allocation2 + $0x80] sm:$0x1]
        %v5809 = vld [vmem:[#allocation2 + $0x84] sm:$0xf]
        %v5810 = vld [vmem:[#allocation2 + $0x88] sm:$0xf]
        %v5811 = vld [vmem:[#allocation2 + $0x8c] sm:$0x1]
        %v5812 = vld [vmem:[#allocation2 + $0x90] sm:$0xf]
        %v5813 = vld [vmem:[#allocation2 + $0x94] sm:$0xf]
        %v5814 = vld [vmem:[#allocation2 + $0x98] sm:$0x1]
        %v5815 = vld [vmem:[#allocation2 + $0x9c] sm:$0xf]
        %v5816 = vld [vmem:[#allocation2 + $0xa0] sm:$0xf]
        %v5817 = vld [vmem:[#allocation2 + $0xa4] sm:$0x1]
        %v5818 = vld [vmem:[#allocation2 + $0xa8] sm:$0xf]
        %v5819 = vld [vmem:[#allocation2 + $0xac] sm:$0xf]
        %v5820 = vld [vmem:[#allocation2 + $0xb0] sm:$0x1]
        %v5821 = vld [vmem:[#allocation2 + $0xb4] sm:$0xf]
        %v5822 = vld [vmem:[#allocation2 + $0xb8] sm:$0xf]
        %v5823 = vld [vmem:[#allocation2 + $0xbc] sm:$0x1]
        %v5825 = vshrl.u32 %v5776, 16
        %v5827 = vrot.slane %v5825, 4
        %v5828 = vshll.u32 %v5776, 16
        %v5830 = vrot.slane %v5828, 5
        %v5831 = vor.u32 %v5827, %v5830
        %v5832 = vrot.slane %v5831, 4
        %v5834 = vshll.u32 %v5777, 16
        %v5836 = vrot.slane %v5834, 5
        %v5837 = vsel %vm1829, %v5832, %v5836
        %v5838 = vshrl.u32 %v5777, 16
        %v5840 = vrot.slane %v5838, 4
        %v5841 = vor.u32 %v5840, %v5836
        %v5842 = vrot.slane %v5841, 4
        %v5844 = vshll.u32 %v5778, 16
        %v5846 = vrot.slane %v5844, 5
        %v5847 = vsel %vm1829, %v5842, %v5846
        %v5849 = vshrl.u32 %v5779, 16
        %v5851 = vrot.slane %v5849, 4
        %v5852 = vshll.u32 %v5779, 16
        %v5854 = vrot.slane %v5852, 5
        %v5855 = vor.u32 %v5851, %v5854
        %v5856 = vrot.slane %v5855, 4
        %v5858 = vshll.u32 %v5780, 16
        %v5860 = vrot.slane %v5858, 5
        %v5861 = vsel %vm1829, %v5856, %v5860
        %v5862 = vshrl.u32 %v5780, 16
        %v5864 = vrot.slane %v5862, 4
        %v5865 = vor.u32 %v5864, %v5860
        %v5866 = vrot.slane %v5865, 4
        %v5868 = vshll.u32 %v5781, 16
        %v5870 = vrot.slane %v5868, 5
        %v5871 = vsel %vm1829, %v5866, %v5870
        %v5873 = vshrl.u32 %v5782, 16
        %v5875 = vrot.slane %v5873, 4
        %v5876 = vshll.u32 %v5782, 16
        %v5878 = vrot.slane %v5876, 5
        %v5879 = vor.u32 %v5875, %v5878
        %v5880 = vrot.slane %v5879, 4
        %v5882 = vshll.u32 %v5783, 16
        %v5884 = vrot.slane %v5882, 5
        %v5885 = vsel %vm1829, %v5880, %v5884
        %v5886 = vshrl.u32 %v5783, 16
        %v5888 = vrot.slane %v5886, 4
        %v5889 = vor.u32 %v5888, %v5884
        %v5890 = vrot.slane %v5889, 4
        %v5892 = vshll.u32 %v5784, 16
        %v5894 = vrot.slane %v5892, 5
        %v5895 = vsel %vm1829, %v5890, %v5894
        %v5897 = vshrl.u32 %v5785, 16
        %v5899 = vrot.slane %v5897, 4
        %v5900 = vshll.u32 %v5785, 16
        %v5902 = vrot.slane %v5900, 5
        %v5903 = vor.u32 %v5899, %v5902
        %v5904 = vrot.slane %v5903, 4
        %v5906 = vshll.u32 %v5786, 16
        %v5908 = vrot.slane %v5906, 5
        %v5909 = vsel %vm1829, %v5904, %v5908
        %v5910 = vshrl.u32 %v5786, 16
        %v5912 = vrot.slane %v5910, 4
        %v5913 = vor.u32 %v5912, %v5908
        %v5914 = vrot.slane %v5913, 4
        %v5916 = vshll.u32 %v5787, 16
        %v5918 = vrot.slane %v5916, 5
        %v5919 = vsel %vm1829, %v5914, %v5918
        %v5921 = vshrl.u32 %v5788, 16
        %v5923 = vrot.slane %v5921, 4
        %v5924 = vshll.u32 %v5788, 16
        %v5926 = vrot.slane %v5924, 5
        %v5927 = vor.u32 %v5923, %v5926
        %v5928 = vrot.slane %v5927, 4
        %v5930 = vshll.u32 %v5789, 16
        %v5932 = vrot.slane %v5930, 5
        %v5933 = vsel %vm1829, %v5928, %v5932
        %v5934 = vshrl.u32 %v5789, 16
        %v5936 = vrot.slane %v5934, 4
        %v5937 = vor.u32 %v5936, %v5932
        %v5938 = vrot.slane %v5937, 4
        %v5940 = vshll.u32 %v5790, 16
        %v5942 = vrot.slane %v5940, 5
        %v5943 = vsel %vm1829, %v5938, %v5942
        %v5945 = vshrl.u32 %v5791, 16
        %v5947 = vrot.slane %v5945, 4
        %v5948 = vshll.u32 %v5791, 16
        %v5950 = vrot.slane %v5948, 5
        %v5951 = vor.u32 %v5947, %v5950
        %v5952 = vrot.slane %v5951, 4
        %v5954 = vshll.u32 %v5792, 16
        %v5956 = vrot.slane %v5954, 5
        %v5957 = vsel %vm1829, %v5952, %v5956
        %v5958 = vshrl.u32 %v5792, 16
        %v5960 = vrot.slane %v5958, 4
        %v5961 = vor.u32 %v5960, %v5956
        %v5962 = vrot.slane %v5961, 4
        %v5964 = vshll.u32 %v5793, 16
        %v5966 = vrot.slane %v5964, 5
        %v5967 = vsel %vm1829, %v5962, %v5966
        %v5969 = vshrl.u32 %v5794, 16
        %v5971 = vrot.slane %v5969, 4
        %v5972 = vshll.u32 %v5794, 16
        %v5974 = vrot.slane %v5972, 5
        %v5975 = vor.u32 %v5971, %v5974
        %v5976 = vrot.slane %v5975, 4
        %v5978 = vshll.u32 %v5795, 16
        %v5980 = vrot.slane %v5978, 5
        %v5981 = vsel %vm1829, %v5976, %v5980
        %v5982 = vshrl.u32 %v5795, 16
        %v5984 = vrot.slane %v5982, 4
        %v5985 = vor.u32 %v5984, %v5980
        %v5986 = vrot.slane %v5985, 4
        %v5988 = vshll.u32 %v5796, 16
        %v5990 = vrot.slane %v5988, 5
        %v5991 = vsel %vm1829, %v5986, %v5990
        %v5993 = vshrl.u32 %v5797, 16
        %v5995 = vrot.slane %v5993, 4
        %v5996 = vshll.u32 %v5797, 16
        %v5998 = vrot.slane %v5996, 5
        %v5999 = vor.u32 %v5995, %v5998
        %v6000 = vrot.slane %v5999, 4
        %v6002 = vshll.u32 %v5798, 16
        %v6004 = vrot.slane %v6002, 5
        %v6005 = vsel %vm1829, %v6000, %v6004
        %v6006 = vshrl.u32 %v5798, 16
        %v6008 = vrot.slane %v6006, 4
        %v6009 = vor.u32 %v6008, %v6004
        %v6010 = vrot.slane %v6009, 4
        %v6012 = vshll.u32 %v5799, 16
        %v6014 = vrot.slane %v6012, 5
        %v6015 = vsel %vm1829, %v6010, %v6014
        %v6017 = vshrl.u32 %v5800, 16
        %v6019 = vrot.slane %v6017, 4
        %v6020 = vshll.u32 %v5800, 16
        %v6022 = vrot.slane %v6020, 5
        %v6023 = vor.u32 %v6019, %v6022
        %v6024 = vrot.slane %v6023, 4
        %v6026 = vshll.u32 %v5801, 16
        %v6028 = vrot.slane %v6026, 5
        %v6029 = vsel %vm1829, %v6024, %v6028
        %v6030 = vshrl.u32 %v5801, 16
        %v6032 = vrot.slane %v6030, 4
        %v6033 = vor.u32 %v6032, %v6028
        %v6034 = vrot.slane %v6033, 4
        %v6036 = vshll.u32 %v5802, 16
        %v6038 = vrot.slane %v6036, 5
        %v6039 = vsel %vm1829, %v6034, %v6038
        %v6041 = vshrl.u32 %v5803, 16
        %v6043 = vrot.slane %v6041, 4
        %v6044 = vshll.u32 %v5803, 16
        %v6046 = vrot.slane %v6044, 5
        %v6047 = vor.u32 %v6043, %v6046
        %v6048 = vrot.slane %v6047, 4
        %v6050 = vshll.u32 %v5804, 16
        %v6052 = vrot.slane %v6050, 5
        %v6053 = vsel %vm1829, %v6048, %v6052
        %v6054 = vshrl.u32 %v5804, 16
        %v6056 = vrot.slane %v6054, 4
        %v6057 = vor.u32 %v6056, %v6052
        %v6058 = vrot.slane %v6057, 4
        %v6060 = vshll.u32 %v5805, 16
        %v6062 = vrot.slane %v6060, 5
        %v6063 = vsel %vm1829, %v6058, %v6062
        %v6065 = vshrl.u32 %v5806, 16
        %v6067 = vrot.slane %v6065, 4
        %v6068 = vshll.u32 %v5806, 16
        %v6070 = vrot.slane %v6068, 5
        %v6071 = vor.u32 %v6067, %v6070
        %v6072 = vrot.slane %v6071, 4
        %v6074 = vshll.u32 %v5807, 16
        %v6076 = vrot.slane %v6074, 5
        %v6077 = vsel %vm1829, %v6072, %v6076
        %v6078 = vshrl.u32 %v5807, 16
        %v6080 = vrot.slane %v6078, 4
        %v6081 = vor.u32 %v6080, %v6076
        %v6082 = vrot.slane %v6081, 4
        %v6084 = vshll.u32 %v5808, 16
        %v6086 = vrot.slane %v6084, 5
        %v6087 = vsel %vm1829, %v6082, %v6086
        %v6089 = vshrl.u32 %v5809, 16
        %v6091 = vrot.slane %v6089, 4
        %v6092 = vshll.u32 %v5809, 16
        %v6094 = vrot.slane %v6092, 5
        %v6095 = vor.u32 %v6091, %v6094
        %v6096 = vrot.slane %v6095, 4
        %v6098 = vshll.u32 %v5810, 16
        %v6100 = vrot.slane %v6098, 5
        %v6101 = vsel %vm1829, %v6096, %v6100
        %v6102 = vshrl.u32 %v5810, 16
        %v6104 = vrot.slane %v6102, 4
        %v6105 = vor.u32 %v6104, %v6100
        %v6106 = vrot.slane %v6105, 4
        %v6108 = vshll.u32 %v5811, 16
        %v6110 = vrot.slane %v6108, 5
        %v6111 = vsel %vm1829, %v6106, %v6110
        %v6113 = vshrl.u32 %v5812, 16
        %v6115 = vrot.slane %v6113, 4
        %v6116 = vshll.u32 %v5812, 16
        %v6118 = vrot.slane %v6116, 5
        %v6119 = vor.u32 %v6115, %v6118
        %v6120 = vrot.slane %v6119, 4
        %v6122 = vshll.u32 %v5813, 16
        %v6124 = vrot.slane %v6122, 5
        %v6125 = vsel %vm1829, %v6120, %v6124
        %v6126 = vshrl.u32 %v5813, 16
        %v6128 = vrot.slane %v6126, 4
        %v6129 = vor.u32 %v6128, %v6124
        %v6130 = vrot.slane %v6129, 4
        %v6132 = vshll.u32 %v5814, 16
        %v6134 = vrot.slane %v6132, 5
        %v6135 = vsel %vm1829, %v6130, %v6134
        %v6137 = vshrl.u32 %v5815, 16
        %v6139 = vrot.slane %v6137, 4
        %v6140 = vshll.u32 %v5815, 16
        %v6142 = vrot.slane %v6140, 5
        %v6143 = vor.u32 %v6139, %v6142
        %v6144 = vrot.slane %v6143, 4
        %v6146 = vshll.u32 %v5816, 16
        %v6148 = vrot.slane %v6146, 5
        %v6149 = vsel %vm1829, %v6144, %v6148
        %v6150 = vshrl.u32 %v5816, 16
        %v6152 = vrot.slane %v6150, 4
        %v6153 = vor.u32 %v6152, %v6148
        %v6154 = vrot.slane %v6153, 4
        %v6156 = vshll.u32 %v5817, 16
        %v6158 = vrot.slane %v6156, 5
        %v6159 = vsel %vm1829, %v6154, %v6158
        %v6161 = vshrl.u32 %v5818, 16
        %v6163 = vrot.slane %v6161, 4
        %v6164 = vshll.u32 %v5818, 16
        %v6166 = vrot.slane %v6164, 5
        %v6167 = vor.u32 %v6163, %v6166
        %v6168 = vrot.slane %v6167, 4
        %v6170 = vshll.u32 %v5819, 16
        %v6172 = vrot.slane %v6170, 5
        %v6173 = vsel %vm1829, %v6168, %v6172
        %v6174 = vshrl.u32 %v5819, 16
        %v6176 = vrot.slane %v6174, 4
        %v6177 = vor.u32 %v6176, %v6172
        %v6178 = vrot.slane %v6177, 4
        %v6180 = vshll.u32 %v5820, 16
        %v6182 = vrot.slane %v6180, 5
        %v6183 = vsel %vm1829, %v6178, %v6182
        %v6185 = vshrl.u32 %v5821, 16
        %v6187 = vrot.slane %v6185, 4
        %v6188 = vshll.u32 %v5821, 16
        %v6190 = vrot.slane %v6188, 5
        %v6191 = vor.u32 %v6187, %v6190
        %v6192 = vrot.slane %v6191, 4
        %v6194 = vshll.u32 %v5822, 16
        %v6196 = vrot.slane %v6194, 5
        %v6197 = vsel %vm1829, %v6192, %v6196
        %v6198 = vshrl.u32 %v5822, 16
        %v6200 = vrot.slane %v6198, 4
        %v6201 = vor.u32 %v6200, %v6196
        %v6202 = vrot.slane %v6201, 4
        %v6204 = vshll.u32 %v5823, 16
        %v6206 = vrot.slane %v6204, 5
        %v6207 = vsel %vm1829, %v6202, %v6206
        %6240 = vst [vmem:[#allocation4 + $0x4] sm:$0xf] %v5837
        %6241 = vst [vmem:[#allocation4 + $0x28] sm:$0xf] %v5847
        %6242 = vst [vmem:[#allocation4 + $0x4c] sm:$0xf] %v5861
        %6243 = vst [vmem:[#allocation4 + $0x70] sm:$0xf] %v5871
        %6244 = vst [vmem:[#allocation4 + $0x94] sm:$0xf] %v5885
        %6245 = vst [vmem:[#allocation4 + $0xb8] sm:$0xf] %v5895
        %6246 = vst [vmem:[#allocation4 + $0xdc] sm:$0xf] %v5909
        %6247 = vst [vmem:[#allocation4 + $0x100] sm:$0xf] %v5919
        %6248 = vst [vmem:[#allocation4 + $0x124] sm:$0xf] %v5933
        %6249 = vst [vmem:[#allocation4 + $0x148] sm:$0xf] %v5943
        %6250 = vst [vmem:[#allocation4 + $0x16c] sm:$0xf] %v5957
        %6251 = vst [vmem:[#allocation4 + $0x190] sm:$0xf] %v5967
        %6252 = vst [vmem:[#allocation4 + $0x1b4] sm:$0xf] %v5981
        %6253 = vst [vmem:[#allocation4 + $0x1d8] sm:$0xf] %v5991
        %6254 = vst [vmem:[#allocation4 + $0x1fc] sm:$0xf] %v6005
        %6255 = vst [vmem:[#allocation4 + $0x220] sm:$0xf] %v6015
        %6256 = vst [vmem:[#allocation4 + $0x244] sm:$0xf] %v6029
        %6257 = vst [vmem:[#allocation4 + $0x268] sm:$0xf] %v6039
        %6258 = vst [vmem:[#allocation4 + $0x28c] sm:$0xf] %v6053
        %6259 = vst [vmem:[#allocation4 + $0x2b0] sm:$0xf] %v6063
        %6260 = vst [vmem:[#allocation4 + $0x2d4] sm:$0xf] %v6077
        %6261 = vst [vmem:[#allocation4 + $0x2f8] sm:$0xf] %v6087
        %6262 = vst [vmem:[#allocation4 + $0x31c] sm:$0xf] %v6101
        %6263 = vst [vmem:[#allocation4 + $0x340] sm:$0xf] %v6111
        %6264 = vst [vmem:[#allocation4 + $0x364] sm:$0xf] %v6125
        %6265 = vst [vmem:[#allocation4 + $0x388] sm:$0xf] %v6135
        %6266 = vst [vmem:[#allocation4 + $0x3ac] sm:$0xf] %v6149
        %6267 = vst [vmem:[#allocation4 + $0x3d0] sm:$0xf] %v6159
        %6268 = vst [vmem:[#allocation4 + $0x3f4] sm:$0xf] %v6173
        %6269 = vst [vmem:[#allocation4 + $0x418] sm:$0xf] %v6183
        %6270 = vst [vmem:[#allocation4 + $0x43c] sm:$0xf] %v6197
        %6271 = vst [vmem:[#allocation4 + $0x460] sm:$0xf] %v6207
        %v6272 = vld [vmem:[#allocation2] sm:$0xe]
        %v6273 = vld [vmem:[#allocation2 + $0x4] sm:$0xf]
        %v6274 = vld [vmem:[#allocation2 + $0x8] sm:$0x1]
        %v6275 = vld [vmem:[#allocation2 + $0xc] sm:$0xe]
        %v6276 = vld [vmem:[#allocation2 + $0x10] sm:$0xf]
        %v6277 = vld [vmem:[#allocation2 + $0x14] sm:$0x1]
        %v6278 = vld [vmem:[#allocation2 + $0x18] sm:$0xe]
        %v6279 = vld [vmem:[#allocation2 + $0x1c] sm:$0xf]
        %v6280 = vld [vmem:[#allocation2 + $0x20] sm:$0x1]
        %v6281 = vld [vmem:[#allocation2 + $0x24] sm:$0xe]
        %v6282 = vld [vmem:[#allocation2 + $0x28] sm:$0xf]
        %v6283 = vld [vmem:[#allocation2 + $0x2c] sm:$0x1]
        %v6284 = vld [vmem:[#allocation2 + $0x30] sm:$0xe]
        %v6285 = vld [vmem:[#allocation2 + $0x34] sm:$0xf]
        %v6286 = vld [vmem:[#allocation2 + $0x38] sm:$0x1]
        %v6287 = vld [vmem:[#allocation2 + $0x3c] sm:$0xe]
        %v6288 = vld [vmem:[#allocation2 + $0x40] sm:$0xf]
        %v6289 = vld [vmem:[#allocation2 + $0x44] sm:$0x1]
        %v6290 = vld [vmem:[#allocation2 + $0x48] sm:$0xe]
        %v6291 = vld [vmem:[#allocation2 + $0x4c] sm:$0xf]
        %v6292 = vld [vmem:[#allocation2 + $0x50] sm:$0x1]
        %v6293 = vld [vmem:[#allocation2 + $0x54] sm:$0xe]
        %v6294 = vld [vmem:[#allocation2 + $0x58] sm:$0xf]
        %v6295 = vld [vmem:[#allocation2 + $0x5c] sm:$0x1]
        %v6296 = vld [vmem:[#allocation2 + $0x60] sm:$0xe]
        %v6297 = vld [vmem:[#allocation2 + $0x64] sm:$0xf]
        %v6298 = vld [vmem:[#allocation2 + $0x68] sm:$0x1]
        %v6299 = vld [vmem:[#allocation2 + $0x6c] sm:$0xe]
        %v6300 = vld [vmem:[#allocation2 + $0x70] sm:$0xf]
        %v6301 = vld [vmem:[#allocation2 + $0x74] sm:$0x1]
        %v6302 = vld [vmem:[#allocation2 + $0x78] sm:$0xe]
        %v6303 = vld [vmem:[#allocation2 + $0x7c] sm:$0xf]
        %v6304 = vld [vmem:[#allocation2 + $0x80] sm:$0x1]
        %v6305 = vld [vmem:[#allocation2 + $0x84] sm:$0xe]
        %v6306 = vld [vmem:[#allocation2 + $0x88] sm:$0xf]
        %v6307 = vld [vmem:[#allocation2 + $0x8c] sm:$0x1]
        %v6308 = vld [vmem:[#allocation2 + $0x90] sm:$0xe]
        %v6309 = vld [vmem:[#allocation2 + $0x94] sm:$0xf]
        %v6310 = vld [vmem:[#allocation2 + $0x98] sm:$0x1]
        %v6311 = vld [vmem:[#allocation2 + $0x9c] sm:$0xe]
        %v6312 = vld [vmem:[#allocation2 + $0xa0] sm:$0xf]
        %v6313 = vld [vmem:[#allocation2 + $0xa4] sm:$0x1]
        %v6314 = vld [vmem:[#allocation2 + $0xa8] sm:$0xe]
        %v6315 = vld [vmem:[#allocation2 + $0xac] sm:$0xf]
        %v6316 = vld [vmem:[#allocation2 + $0xb0] sm:$0x1]
        %v6317 = vld [vmem:[#allocation2 + $0xb4] sm:$0xe]
        %v6318 = vld [vmem:[#allocation2 + $0xb8] sm:$0xf]
        %v6319 = vld [vmem:[#allocation2 + $0xbc] sm:$0x1]
        %vm6368 = vcmask 1042432
        %vm6369 = vcmask 1046532
        %vm6370 = vmor %vm6368, %vm6369
        %v6371 = vrot.slane %v6272, 5
        %v6372 = vrot.slane %v6371, 4
        %v6373 = vrot.slane %v6273, 5
        %v6374 = vsel %vm6370, %v6372, %v6373
        %v6375 = vrot.slane %v6373, 4
        %v6376 = vrot.slane %v6274, 5
        %v6377 = vsel %vm6370, %v6375, %v6376
        %v6378 = vrot.slane %v6275, 5
        %v6379 = vrot.slane %v6378, 4
        %v6380 = vrot.slane %v6276, 5
        %v6381 = vsel %vm6370, %v6379, %v6380
        %v6382 = vrot.slane %v6380, 4
        %v6383 = vrot.slane %v6277, 5
        %v6384 = vsel %vm6370, %v6382, %v6383
        %v6385 = vrot.slane %v6278, 5
        %v6386 = vrot.slane %v6385, 4
        %v6387 = vrot.slane %v6279, 5
        %v6388 = vsel %vm6370, %v6386, %v6387
        %v6389 = vrot.slane %v6387, 4
        %v6390 = vrot.slane %v6280, 5
        %v6391 = vsel %vm6370, %v6389, %v6390
        %v6392 = vrot.slane %v6281, 5
        %v6393 = vrot.slane %v6392, 4
        %v6394 = vrot.slane %v6282, 5
        %v6395 = vsel %vm6370, %v6393, %v6394
        %v6396 = vrot.slane %v6394, 4
        %v6397 = vrot.slane %v6283, 5
        %v6398 = vsel %vm6370, %v6396, %v6397
        %v6399 = vrot.slane %v6284, 5
        %v6400 = vrot.slane %v6399, 4
        %v6401 = vrot.slane %v6285, 5
        %v6402 = vsel %vm6370, %v6400, %v6401
        %v6403 = vrot.slane %v6401, 4
        %v6404 = vrot.slane %v6286, 5
        %v6405 = vsel %vm6370, %v6403, %v6404
        %v6406 = vrot.slane %v6287, 5
        %v6407 = vrot.slane %v6406, 4
        %v6408 = vrot.slane %v6288, 5
        %v6409 = vsel %vm6370, %v6407, %v6408
        %v6410 = vrot.slane %v6408, 4
        %v6411 = vrot.slane %v6289, 5
        %v6412 = vsel %vm6370, %v6410, %v6411
        %v6413 = vrot.slane %v6290, 5
        %v6414 = vrot.slane %v6413, 4
        %v6415 = vrot.slane %v6291, 5
        %v6416 = vsel %vm6370, %v6414, %v6415
        %v6417 = vrot.slane %v6415, 4
        %v6418 = vrot.slane %v6292, 5
        %v6419 = vsel %vm6370, %v6417, %v6418
        %v6420 = vrot.slane %v6293, 5
        %v6421 = vrot.slane %v6420, 4
        %v6422 = vrot.slane %v6294, 5
        %v6423 = vsel %vm6370, %v6421, %v6422
        %v6424 = vrot.slane %v6422, 4
        %v6425 = vrot.slane %v6295, 5
        %v6426 = vsel %vm6370, %v6424, %v6425
        %v6427 = vrot.slane %v6296, 5
        %v6428 = vrot.slane %v6427, 4
        %v6429 = vrot.slane %v6297, 5
        %v6430 = vsel %vm6370, %v6428, %v6429
        %v6431 = vrot.slane %v6429, 4
        %v6432 = vrot.slane %v6298, 5
        %v6433 = vsel %vm6370, %v6431, %v6432
        %v6434 = vrot.slane %v6299, 5
        %v6435 = vrot.slane %v6434, 4
        %v6436 = vrot.slane %v6300, 5
        %v6437 = vsel %vm6370, %v6435, %v6436
        %v6438 = vrot.slane %v6436, 4
        %v6439 = vrot.slane %v6301, 5
        %v6440 = vsel %vm6370, %v6438, %v6439
        %v6441 = vrot.slane %v6302, 5
        %v6442 = vrot.slane %v6441, 4
        %v6443 = vrot.slane %v6303, 5
        %v6444 = vsel %vm6370, %v6442, %v6443
        %v6445 = vrot.slane %v6443, 4
        %v6446 = vrot.slane %v6304, 5
        %v6447 = vsel %vm6370, %v6445, %v6446
        %v6448 = vrot.slane %v6305, 5
        %v6449 = vrot.slane %v6448, 4
        %v6450 = vrot.slane %v6306, 5
        %v6451 = vsel %vm6370, %v6449, %v6450
        %v6452 = vrot.slane %v6450, 4
        %v6453 = vrot.slane %v6307, 5
        %v6454 = vsel %vm6370, %v6452, %v6453
        %v6455 = vrot.slane %v6308, 5
        %v6456 = vrot.slane %v6455, 4
        %v6457 = vrot.slane %v6309, 5
        %v6458 = vsel %vm6370, %v6456, %v6457
        %v6459 = vrot.slane %v6457, 4
        %v6460 = vrot.slane %v6310, 5
        %v6461 = vsel %vm6370, %v6459, %v6460
        %v6462 = vrot.slane %v6311, 5
        %v6463 = vrot.slane %v6462, 4
        %v6464 = vrot.slane %v6312, 5
        %v6465 = vsel %vm6370, %v6463, %v6464
        %v6466 = vrot.slane %v6464, 4
        %v6467 = vrot.slane %v6313, 5
        %v6468 = vsel %vm6370, %v6466, %v6467
        %v6469 = vrot.slane %v6314, 5
        %v6470 = vrot.slane %v6469, 4
        %v6471 = vrot.slane %v6315, 5
        %v6472 = vsel %vm6370, %v6470, %v6471
        %v6473 = vrot.slane %v6471, 4
        %v6474 = vrot.slane %v6316, 5
        %v6475 = vsel %vm6370, %v6473, %v6474
        %v6476 = vrot.slane %v6317, 5
        %v6477 = vrot.slane %v6476, 4
        %v6478 = vrot.slane %v6318, 5
        %v6479 = vsel %vm6370, %v6477, %v6478
        %v6480 = vrot.slane %v6478, 4
        %v6481 = vrot.slane %v6319, 5
        %v6482 = vsel %vm6370, %v6480, %v6481
        %6515 = vst [vmem:[#allocation4 + $0x8] sm:$0xf] %v6374
        %6516 = vst [vmem:[#allocation4 + $0x2c] sm:$0xf] %v6377
        %6517 = vst [vmem:[#allocation4 + $0x50] sm:$0xf] %v6381
        %6518 = vst [vmem:[#allocation4 + $0x74] sm:$0xf] %v6384
        %6519 = vst [vmem:[#allocation4 + $0x98] sm:$0xf] %v6388
        %6520 = vst [vmem:[#allocation4 + $0xbc] sm:$0xf] %v6391
        %6521 = vst [vmem:[#allocation4 + $0xe0] sm:$0xf] %v6395
        %6522 = vst [vmem:[#allocation4 + $0x104] sm:$0xf] %v6398
        %6523 = vst [vmem:[#allocation4 + $0x128] sm:$0xf] %v6402
        %6524 = vst [vmem:[#allocation4 + $0x14c] sm:$0xf] %v6405
        %6525 = vst [vmem:[#allocation4 + $0x170] sm:$0xf] %v6409
        %6526 = vst [vmem:[#allocation4 + $0x194] sm:$0xf] %v6412
        %6527 = vst [vmem:[#allocation4 + $0x1b8] sm:$0xf] %v6416
        %6528 = vst [vmem:[#allocation4 + $0x1dc] sm:$0xf] %v6419
        %6529 = vst [vmem:[#allocation4 + $0x200] sm:$0xf] %v6423
        %6530 = vst [vmem:[#allocation4 + $0x224] sm:$0xf] %v6426
        %6531 = vst [vmem:[#allocation4 + $0x248] sm:$0xf] %v6430
        %6532 = vst [vmem:[#allocation4 + $0x26c] sm:$0xf] %v6433
        %6533 = vst [vmem:[#allocation4 + $0x290] sm:$0xf] %v6437
        %6534 = vst [vmem:[#allocation4 + $0x2b4] sm:$0xf] %v6440
        %6535 = vst [vmem:[#allocation4 + $0x2d8] sm:$0xf] %v6444
        %6536 = vst [vmem:[#allocation4 + $0x2fc] sm:$0xf] %v6447
        %6537 = vst [vmem:[#allocation4 + $0x320] sm:$0xf] %v6451
        %6538 = vst [vmem:[#allocation4 + $0x344] sm:$0xf] %v6454
        %6539 = vst [vmem:[#allocation4 + $0x368] sm:$0xf] %v6458
        %6540 = vst [vmem:[#allocation4 + $0x38c] sm:$0xf] %v6461
        %6541 = vst [vmem:[#allocation4 + $0x3b0] sm:$0xf] %v6465
        %6542 = vst [vmem:[#allocation4 + $0x3d4] sm:$0xf] %v6468
        %6543 = vst [vmem:[#allocation4 + $0x3f8] sm:$0xf] %v6472
        %6544 = vst [vmem:[#allocation4 + $0x41c] sm:$0xf] %v6475
        %6545 = vst [vmem:[#allocation4 + $0x440] sm:$0xf] %v6479
        %6546 = vst [vmem:[#allocation4 + $0x464] sm:$0xf] %v6482
        %v6547 = vld [vmem:[%s5594] sm:$0xf]
        %v6548 = vld [vmem:[%s5594 + $0x4] sm:$0xf]
        %v6549 = vld [vmem:[%s5594 + $0xc] sm:$0xf]
        %v6550 = vld [vmem:[%s5594 + $0x10] sm:$0xf]
        %v6551 = vld [vmem:[%s5594 + $0x18] sm:$0xf]
        %v6552 = vld [vmem:[%s5594 + $0x1c] sm:$0xf]
        %v6553 = vld [vmem:[%s5594 + $0x24] sm:$0xf]
        %v6554 = vld [vmem:[%s5594 + $0x28] sm:$0xf]
        %v6555 = vld [vmem:[%s5594 + $0x30] sm:$0xf]
        %v6556 = vld [vmem:[%s5594 + $0x34] sm:$0xf]
        %v6557 = vld [vmem:[%s5594 + $0x3c] sm:$0xf]
        %v6558 = vld [vmem:[%s5594 + $0x40] sm:$0xf]
        %v6559 = vld [vmem:[%s5594 + $0x48] sm:$0xf]
        %v6560 = vld [vmem:[%s5594 + $0x4c] sm:$0xf]
        %v6561 = vld [vmem:[%s5594 + $0x54] sm:$0xf]
        %v6562 = vld [vmem:[%s5594 + $0x58] sm:$0xf]
        %v6563 = vld [vmem:[%s5594 + $0x60] sm:$0xf]
        %v6564 = vld [vmem:[%s5594 + $0x64] sm:$0xf]
        %v6565 = vld [vmem:[%s5594 + $0x6c] sm:$0xf]
        %v6566 = vld [vmem:[%s5594 + $0x70] sm:$0xf]
        %v6567 = vld [vmem:[%s5594 + $0x78] sm:$0xf]
        %v6568 = vld [vmem:[%s5594 + $0x7c] sm:$0xf]
        %v6569 = vld [vmem:[%s5594 + $0x84] sm:$0xf]
        %v6570 = vld [vmem:[%s5594 + $0x88] sm:$0xf]
        %v6571 = vld [vmem:[%s5594 + $0x90] sm:$0xf]
        %v6572 = vld [vmem:[%s5594 + $0x94] sm:$0xf]
        %v6573 = vld [vmem:[%s5594 + $0x9c] sm:$0xf]
        %v6574 = vld [vmem:[%s5594 + $0xa0] sm:$0xf]
        %v6575 = vld [vmem:[%s5594 + $0xa8] sm:$0xf]
        %v6576 = vld [vmem:[%s5594 + $0xac] sm:$0xf]
        %v6577 = vld [vmem:[%s5594 + $0xb4] sm:$0xf]
        %v6578 = vld [vmem:[%s5594 + $0xb8] sm:$0xf]
        %6579 = vst [vmem:[#allocation4 + $0xc] sm:$0xf] %v6547
        %6580 = vst [vmem:[#allocation4 + $0x30] sm:$0xf] %v6548
        %6581 = vst [vmem:[#allocation4 + $0x54] sm:$0xf] %v6549
        %6582 = vst [vmem:[#allocation4 + $0x78] sm:$0xf] %v6550
        %6583 = vst [vmem:[#allocation4 + $0x9c] sm:$0xf] %v6551
        %6584 = vst [vmem:[#allocation4 + $0xc0] sm:$0xf] %v6552
        %6585 = vst [vmem:[#allocation4 + $0xe4] sm:$0xf] %v6553
        %6586 = vst [vmem:[#allocation4 + $0x108] sm:$0xf] %v6554
        %6587 = vst [vmem:[#allocation4 + $0x12c] sm:$0xf] %v6555
        %6588 = vst [vmem:[#allocation4 + $0x150] sm:$0xf] %v6556
        %6589 = vst [vmem:[#allocation4 + $0x174] sm:$0xf] %v6557
        %6590 = vst [vmem:[#allocation4 + $0x198] sm:$0xf] %v6558
        %6591 = vst [vmem:[#allocation4 + $0x1bc] sm:$0xf] %v6559
        %6592 = vst [vmem:[#allocation4 + $0x1e0] sm:$0xf] %v6560
        %6593 = vst [vmem:[#allocation4 + $0x204] sm:$0xf] %v6561
        %6594 = vst [vmem:[#allocation4 + $0x228] sm:$0xf] %v6562
        %6595 = vst [vmem:[#allocation4 + $0x24c] sm:$0xf] %v6563
        %6596 = vst [vmem:[#allocation4 + $0x270] sm:$0xf] %v6564
        %6597 = vst [vmem:[#allocation4 + $0x294] sm:$0xf] %v6565
        %6598 = vst [vmem:[#allocation4 + $0x2b8] sm:$0xf] %v6566
        %6599 = vst [vmem:[#allocation4 + $0x2dc] sm:$0xf] %v6567
        %6600 = vst [vmem:[#allocation4 + $0x300] sm:$0xf] %v6568
        %6601 = vst [vmem:[#allocation4 + $0x324] sm:$0xf] %v6569
        %6602 = vst [vmem:[#allocation4 + $0x348] sm:$0xf] %v6570
        %6603 = vst [vmem:[#allocation4 + $0x36c] sm:$0xf] %v6571
        %6604 = vst [vmem:[#allocation4 + $0x390] sm:$0xf] %v6572
        %6605 = vst [vmem:[#allocation4 + $0x3b4] sm:$0xf] %v6573
        %6606 = vst [vmem:[#allocation4 + $0x3d8] sm:$0xf] %v6574
        %6607 = vst [vmem:[#allocation4 + $0x3fc] sm:$0xf] %v6575
        %6608 = vst [vmem:[#allocation4 + $0x420] sm:$0xf] %v6576
        %6609 = vst [vmem:[#allocation4 + $0x444] sm:$0xf] %v6577
        %6610 = vst [vmem:[#allocation4 + $0x468] sm:$0xf] %v6578
        %v6611 = vld [vmem:[%s5594] sm:$0xf]
        %v6612 = vld [vmem:[%s5594 + $0x4] sm:$0xf]
        %v6613 = vld [vmem:[%s5594 + $0x8] sm:$0x1]
        %v6614 = vld [vmem:[%s5594 + $0xc] sm:$0xf]
        %v6615 = vld [vmem:[%s5594 + $0x10] sm:$0xf]
        %v6616 = vld [vmem:[%s5594 + $0x14] sm:$0x1]
        %v6617 = vld [vmem:[%s5594 + $0x18] sm:$0xf]
        %v6618 = vld [vmem:[%s5594 + $0x1c] sm:$0xf]
        %v6619 = vld [vmem:[%s5594 + $0x20] sm:$0x1]
        %v6620 = vld [vmem:[%s5594 + $0x24] sm:$0xf]
        %v6621 = vld [vmem:[%s5594 + $0x28] sm:$0xf]
        %v6622 = vld [vmem:[%s5594 + $0x2c] sm:$0x1]
        %v6623 = vld [vmem:[%s5594 + $0x30] sm:$0xf]
        %v6624 = vld [vmem:[%s5594 + $0x34] sm:$0xf]
        %v6625 = vld [vmem:[%s5594 + $0x38] sm:$0x1]
        %v6626 = vld [vmem:[%s5594 + $0x3c] sm:$0xf]
        %v6627 = vld [vmem:[%s5594 + $0x40] sm:$0xf]
        %v6628 = vld [vmem:[%s5594 + $0x44] sm:$0x1]
        %v6629 = vld [vmem:[%s5594 + $0x48] sm:$0xf]
        %v6630 = vld [vmem:[%s5594 + $0x4c] sm:$0xf]
        %v6631 = vld [vmem:[%s5594 + $0x50] sm:$0x1]
        %v6632 = vld [vmem:[%s5594 + $0x54] sm:$0xf]
        %v6633 = vld [vmem:[%s5594 + $0x58] sm:$0xf]
        %v6634 = vld [vmem:[%s5594 + $0x5c] sm:$0x1]
        %v6635 = vld [vmem:[%s5594 + $0x60] sm:$0xf]
        %v6636 = vld [vmem:[%s5594 + $0x64] sm:$0xf]
        %v6637 = vld [vmem:[%s5594 + $0x68] sm:$0x1]
        %v6638 = vld [vmem:[%s5594 + $0x6c] sm:$0xf]
        %v6639 = vld [vmem:[%s5594 + $0x70] sm:$0xf]
        %v6640 = vld [vmem:[%s5594 + $0x74] sm:$0x1]
        %v6641 = vld [vmem:[%s5594 + $0x78] sm:$0xf]
        %v6642 = vld [vmem:[%s5594 + $0x7c] sm:$0xf]
        %v6643 = vld [vmem:[%s5594 + $0x80] sm:$0x1]
        %v6644 = vld [vmem:[%s5594 + $0x84] sm:$0xf]
        %v6645 = vld [vmem:[%s5594 + $0x88] sm:$0xf]
        %v6646 = vld [vmem:[%s5594 + $0x8c] sm:$0x1]
        %v6647 = vld [vmem:[%s5594 + $0x90] sm:$0xf]
        %v6648 = vld [vmem:[%s5594 + $0x94] sm:$0xf]
        %v6649 = vld [vmem:[%s5594 + $0x98] sm:$0x1]
        %v6650 = vld [vmem:[%s5594 + $0x9c] sm:$0xf]
        %v6651 = vld [vmem:[%s5594 + $0xa0] sm:$0xf]
        %v6652 = vld [vmem:[%s5594 + $0xa4] sm:$0x1]
        %v6653 = vld [vmem:[%s5594 + $0xa8] sm:$0xf]
        %v6654 = vld [vmem:[%s5594 + $0xac] sm:$0xf]
        %v6655 = vld [vmem:[%s5594 + $0xb0] sm:$0x1]
        %v6656 = vld [vmem:[%s5594 + $0xb4] sm:$0xf]
        %v6657 = vld [vmem:[%s5594 + $0xb8] sm:$0xf]
        %v6658 = vld [vmem:[%s5594 + $0xbc] sm:$0x1]
        %v6660 = vshrl.u32 %v6611, 16
        %v6662 = vrot.slane %v6660, 4
        %v6663 = vshll.u32 %v6611, 16
        %v6665 = vrot.slane %v6663, 5
        %v6666 = vor.u32 %v6662, %v6665
        %v6667 = vrot.slane %v6666, 4
        %v6669 = vshll.u32 %v6612, 16
        %v6671 = vrot.slane %v6669, 5
        %v6672 = vsel %vm1829, %v6667, %v6671
        %v6673 = vshrl.u32 %v6612, 16
        %v6675 = vrot.slane %v6673, 4
        %v6676 = vor.u32 %v6675, %v6671
        %v6677 = vrot.slane %v6676, 4
        %v6679 = vshll.u32 %v6613, 16
        %v6681 = vrot.slane %v6679, 5
        %v6682 = vsel %vm1829, %v6677, %v6681
        %v6684 = vshrl.u32 %v6614, 16
        %v6686 = vrot.slane %v6684, 4
        %v6687 = vshll.u32 %v6614, 16
        %v6689 = vrot.slane %v6687, 5
        %v6690 = vor.u32 %v6686, %v6689
        %v6691 = vrot.slane %v6690, 4
        %v6693 = vshll.u32 %v6615, 16
        %v6695 = vrot.slane %v6693, 5
        %v6696 = vsel %vm1829, %v6691, %v6695
        %v6697 = vshrl.u32 %v6615, 16
        %v6699 = vrot.slane %v6697, 4
        %v6700 = vor.u32 %v6699, %v6695
        %v6701 = vrot.slane %v6700, 4
        %v6703 = vshll.u32 %v6616, 16
        %v6705 = vrot.slane %v6703, 5
        %v6706 = vsel %vm1829, %v6701, %v6705
        %v6708 = vshrl.u32 %v6617, 16
        %v6710 = vrot.slane %v6708, 4
        %v6711 = vshll.u32 %v6617, 16
        %v6713 = vrot.slane %v6711, 5
        %v6714 = vor.u32 %v6710, %v6713
        %v6715 = vrot.slane %v6714, 4
        %v6717 = vshll.u32 %v6618, 16
        %v6719 = vrot.slane %v6717, 5
        %v6720 = vsel %vm1829, %v6715, %v6719
        %v6721 = vshrl.u32 %v6618, 16
        %v6723 = vrot.slane %v6721, 4
        %v6724 = vor.u32 %v6723, %v6719
        %v6725 = vrot.slane %v6724, 4
        %v6727 = vshll.u32 %v6619, 16
        %v6729 = vrot.slane %v6727, 5
        %v6730 = vsel %vm1829, %v6725, %v6729
        %v6732 = vshrl.u32 %v6620, 16
        %v6734 = vrot.slane %v6732, 4
        %v6735 = vshll.u32 %v6620, 16
        %v6737 = vrot.slane %v6735, 5
        %v6738 = vor.u32 %v6734, %v6737
        %v6739 = vrot.slane %v6738, 4
        %v6741 = vshll.u32 %v6621, 16
        %v6743 = vrot.slane %v6741, 5
        %v6744 = vsel %vm1829, %v6739, %v6743
        %v6745 = vshrl.u32 %v6621, 16
        %v6747 = vrot.slane %v6745, 4
        %v6748 = vor.u32 %v6747, %v6743
        %v6749 = vrot.slane %v6748, 4
        %v6751 = vshll.u32 %v6622, 16
        %v6753 = vrot.slane %v6751, 5
        %v6754 = vsel %vm1829, %v6749, %v6753
        %v6756 = vshrl.u32 %v6623, 16
        %v6758 = vrot.slane %v6756, 4
        %v6759 = vshll.u32 %v6623, 16
        %v6761 = vrot.slane %v6759, 5
        %v6762 = vor.u32 %v6758, %v6761
        %v6763 = vrot.slane %v6762, 4
        %v6765 = vshll.u32 %v6624, 16
        %v6767 = vrot.slane %v6765, 5
        %v6768 = vsel %vm1829, %v6763, %v6767
        %v6769 = vshrl.u32 %v6624, 16
        %v6771 = vrot.slane %v6769, 4
        %v6772 = vor.u32 %v6771, %v6767
        %v6773 = vrot.slane %v6772, 4
        %v6775 = vshll.u32 %v6625, 16
        %v6777 = vrot.slane %v6775, 5
        %v6778 = vsel %vm1829, %v6773, %v6777
        %v6780 = vshrl.u32 %v6626, 16
        %v6782 = vrot.slane %v6780, 4
        %v6783 = vshll.u32 %v6626, 16
        %v6785 = vrot.slane %v6783, 5
        %v6786 = vor.u32 %v6782, %v6785
        %v6787 = vrot.slane %v6786, 4
        %v6789 = vshll.u32 %v6627, 16
        %v6791 = vrot.slane %v6789, 5
        %v6792 = vsel %vm1829, %v6787, %v6791
        %v6793 = vshrl.u32 %v6627, 16
        %v6795 = vrot.slane %v6793, 4
        %v6796 = vor.u32 %v6795, %v6791
        %v6797 = vrot.slane %v6796, 4
        %v6799 = vshll.u32 %v6628, 16
        %v6801 = vrot.slane %v6799, 5
        %v6802 = vsel %vm1829, %v6797, %v6801
        %v6804 = vshrl.u32 %v6629, 16
        %v6806 = vrot.slane %v6804, 4
        %v6807 = vshll.u32 %v6629, 16
        %v6809 = vrot.slane %v6807, 5
        %v6810 = vor.u32 %v6806, %v6809
        %v6811 = vrot.slane %v6810, 4
        %v6813 = vshll.u32 %v6630, 16
        %v6815 = vrot.slane %v6813, 5
        %v6816 = vsel %vm1829, %v6811, %v6815
        %v6817 = vshrl.u32 %v6630, 16
        %v6819 = vrot.slane %v6817, 4
        %v6820 = vor.u32 %v6819, %v6815
        %v6821 = vrot.slane %v6820, 4
        %v6823 = vshll.u32 %v6631, 16
        %v6825 = vrot.slane %v6823, 5
        %v6826 = vsel %vm1829, %v6821, %v6825
        %v6828 = vshrl.u32 %v6632, 16
        %v6830 = vrot.slane %v6828, 4
        %v6831 = vshll.u32 %v6632, 16
        %v6833 = vrot.slane %v6831, 5
        %v6834 = vor.u32 %v6830, %v6833
        %v6835 = vrot.slane %v6834, 4
        %v6837 = vshll.u32 %v6633, 16
        %v6839 = vrot.slane %v6837, 5
        %v6840 = vsel %vm1829, %v6835, %v6839
        %v6841 = vshrl.u32 %v6633, 16
        %v6843 = vrot.slane %v6841, 4
        %v6844 = vor.u32 %v6843, %v6839
        %v6845 = vrot.slane %v6844, 4
        %v6847 = vshll.u32 %v6634, 16
        %v6849 = vrot.slane %v6847, 5
        %v6850 = vsel %vm1829, %v6845, %v6849
        %v6852 = vshrl.u32 %v6635, 16
        %v6854 = vrot.slane %v6852, 4
        %v6855 = vshll.u32 %v6635, 16
        %v6857 = vrot.slane %v6855, 5
        %v6858 = vor.u32 %v6854, %v6857
        %v6859 = vrot.slane %v6858, 4
        %v6861 = vshll.u32 %v6636, 16
        %v6863 = vrot.slane %v6861, 5
        %v6864 = vsel %vm1829, %v6859, %v6863
        %v6865 = vshrl.u32 %v6636, 16
        %v6867 = vrot.slane %v6865, 4
        %v6868 = vor.u32 %v6867, %v6863
        %v6869 = vrot.slane %v6868, 4
        %v6871 = vshll.u32 %v6637, 16
        %v6873 = vrot.slane %v6871, 5
        %v6874 = vsel %vm1829, %v6869, %v6873
        %v6876 = vshrl.u32 %v6638, 16
        %v6878 = vrot.slane %v6876, 4
        %v6879 = vshll.u32 %v6638, 16
        %v6881 = vrot.slane %v6879, 5
        %v6882 = vor.u32 %v6878, %v6881
        %v6883 = vrot.slane %v6882, 4
        %v6885 = vshll.u32 %v6639, 16
        %v6887 = vrot.slane %v6885, 5
        %v6888 = vsel %vm1829, %v6883, %v6887
        %v6889 = vshrl.u32 %v6639, 16
        %v6891 = vrot.slane %v6889, 4
        %v6892 = vor.u32 %v6891, %v6887
        %v6893 = vrot.slane %v6892, 4
        %v6895 = vshll.u32 %v6640, 16
        %v6897 = vrot.slane %v6895, 5
        %v6898 = vsel %vm1829, %v6893, %v6897
        %v6900 = vshrl.u32 %v6641, 16
        %v6902 = vrot.slane %v6900, 4
        %v6903 = vshll.u32 %v6641, 16
        %v6905 = vrot.slane %v6903, 5
        %v6906 = vor.u32 %v6902, %v6905
        %v6907 = vrot.slane %v6906, 4
        %v6909 = vshll.u32 %v6642, 16
        %v6911 = vrot.slane %v6909, 5
        %v6912 = vsel %vm1829, %v6907, %v6911
        %v6913 = vshrl.u32 %v6642, 16
        %v6915 = vrot.slane %v6913, 4
        %v6916 = vor.u32 %v6915, %v6911
        %v6917 = vrot.slane %v6916, 4
        %v6919 = vshll.u32 %v6643, 16
        %v6921 = vrot.slane %v6919, 5
        %v6922 = vsel %vm1829, %v6917, %v6921
        %v6924 = vshrl.u32 %v6644, 16
        %v6926 = vrot.slane %v6924, 4
        %v6927 = vshll.u32 %v6644, 16
        %v6929 = vrot.slane %v6927, 5
        %v6930 = vor.u32 %v6926, %v6929
        %v6931 = vrot.slane %v6930, 4
        %v6933 = vshll.u32 %v6645, 16
        %v6935 = vrot.slane %v6933, 5
        %v6936 = vsel %vm1829, %v6931, %v6935
        %v6937 = vshrl.u32 %v6645, 16
        %v6939 = vrot.slane %v6937, 4
        %v6940 = vor.u32 %v6939, %v6935
        %v6941 = vrot.slane %v6940, 4
        %v6943 = vshll.u32 %v6646, 16
        %v6945 = vrot.slane %v6943, 5
        %v6946 = vsel %vm1829, %v6941, %v6945
        %v6948 = vshrl.u32 %v6647, 16
        %v6950 = vrot.slane %v6948, 4
        %v6951 = vshll.u32 %v6647, 16
        %v6953 = vrot.slane %v6951, 5
        %v6954 = vor.u32 %v6950, %v6953
        %v6955 = vrot.slane %v6954, 4
        %v6957 = vshll.u32 %v6648, 16
        %v6959 = vrot.slane %v6957, 5
        %v6960 = vsel %vm1829, %v6955, %v6959
        %v6961 = vshrl.u32 %v6648, 16
        %v6963 = vrot.slane %v6961, 4
        %v6964 = vor.u32 %v6963, %v6959
        %v6965 = vrot.slane %v6964, 4
        %v6967 = vshll.u32 %v6649, 16
        %v6969 = vrot.slane %v6967, 5
        %v6970 = vsel %vm1829, %v6965, %v6969
        %v6972 = vshrl.u32 %v6650, 16
        %v6974 = vrot.slane %v6972, 4
        %v6975 = vshll.u32 %v6650, 16
        %v6977 = vrot.slane %v6975, 5
        %v6978 = vor.u32 %v6974, %v6977
        %v6979 = vrot.slane %v6978, 4
        %v6981 = vshll.u32 %v6651, 16
        %v6983 = vrot.slane %v6981, 5
        %v6984 = vsel %vm1829, %v6979, %v6983
        %v6985 = vshrl.u32 %v6651, 16
        %v6987 = vrot.slane %v6985, 4
        %v6988 = vor.u32 %v6987, %v6983
        %v6989 = vrot.slane %v6988, 4
        %v6991 = vshll.u32 %v6652, 16
        %v6993 = vrot.slane %v6991, 5
        %v6994 = vsel %vm1829, %v6989, %v6993
        %v6996 = vshrl.u32 %v6653, 16
        %v6998 = vrot.slane %v6996, 4
        %v6999 = vshll.u32 %v6653, 16
        %v7001 = vrot.slane %v6999, 5
        %v7002 = vor.u32 %v6998, %v7001
        %v7003 = vrot.slane %v7002, 4
        %v7005 = vshll.u32 %v6654, 16
        %v7007 = vrot.slane %v7005, 5
        %v7008 = vsel %vm1829, %v7003, %v7007
        %v7009 = vshrl.u32 %v6654, 16
        %v7011 = vrot.slane %v7009, 4
        %v7012 = vor.u32 %v7011, %v7007
        %v7013 = vrot.slane %v7012, 4
        %v7015 = vshll.u32 %v6655, 16
        %v7017 = vrot.slane %v7015, 5
        %v7018 = vsel %vm1829, %v7013, %v7017
        %v7020 = vshrl.u32 %v6656, 16
        %v7022 = vrot.slane %v7020, 4
        %v7023 = vshll.u32 %v6656, 16
        %v7025 = vrot.slane %v7023, 5
        %v7026 = vor.u32 %v7022, %v7025
        %v7027 = vrot.slane %v7026, 4
        %v7029 = vshll.u32 %v6657, 16
        %v7031 = vrot.slane %v7029, 5
        %v7032 = vsel %vm1829, %v7027, %v7031
        %v7033 = vshrl.u32 %v6657, 16
        %v7035 = vrot.slane %v7033, 4
        %v7036 = vor.u32 %v7035, %v7031
        %v7037 = vrot.slane %v7036, 4
        %v7039 = vshll.u32 %v6658, 16
        %v7041 = vrot.slane %v7039, 5
        %v7042 = vsel %vm1829, %v7037, %v7041
        %7075 = vst [vmem:[#allocation4 + $0x10] sm:$0xf] %v6672
        %7076 = vst [vmem:[#allocation4 + $0x34] sm:$0xf] %v6682
        %7077 = vst [vmem:[#allocation4 + $0x58] sm:$0xf] %v6696
        %7078 = vst [vmem:[#allocation4 + $0x7c] sm:$0xf] %v6706
        %7079 = vst [vmem:[#allocation4 + $0xa0] sm:$0xf] %v6720
        %7080 = vst [vmem:[#allocation4 + $0xc4] sm:$0xf] %v6730
        %7081 = vst [vmem:[#allocation4 + $0xe8] sm:$0xf] %v6744
        %7082 = vst [vmem:[#allocation4 + $0x10c] sm:$0xf] %v6754
        %7083 = vst [vmem:[#allocation4 + $0x130] sm:$0xf] %v6768
        %7084 = vst [vmem:[#allocation4 + $0x154] sm:$0xf] %v6778
        %7085 = vst [vmem:[#allocation4 + $0x178] sm:$0xf] %v6792
        %7086 = vst [vmem:[#allocation4 + $0x19c] sm:$0xf] %v6802
        %7087 = vst [vmem:[#allocation4 + $0x1c0] sm:$0xf] %v6816
        %7088 = vst [vmem:[#allocation4 + $0x1e4] sm:$0xf] %v6826
        %7089 = vst [vmem:[#allocation4 + $0x208] sm:$0xf] %v6840
        %7090 = vst [vmem:[#allocation4 + $0x22c] sm:$0xf] %v6850
        %7091 = vst [vmem:[#allocation4 + $0x250] sm:$0xf] %v6864
        %7092 = vst [vmem:[#allocation4 + $0x274] sm:$0xf] %v6874
        %7093 = vst [vmem:[#allocation4 + $0x298] sm:$0xf] %v6888
        %7094 = vst [vmem:[#allocation4 + $0x2bc] sm:$0xf] %v6898
        %7095 = vst [vmem:[#allocation4 + $0x2e0] sm:$0xf] %v6912
        %7096 = vst [vmem:[#allocation4 + $0x304] sm:$0xf] %v6922
        %7097 = vst [vmem:[#allocation4 + $0x328] sm:$0xf] %v6936
        %7098 = vst [vmem:[#allocation4 + $0x34c] sm:$0xf] %v6946
        %7099 = vst [vmem:[#allocation4 + $0x370] sm:$0xf] %v6960
        %7100 = vst [vmem:[#allocation4 + $0x394] sm:$0xf] %v6970
        %7101 = vst [vmem:[#allocation4 + $0x3b8] sm:$0xf] %v6984
        %7102 = vst [vmem:[#allocation4 + $0x3dc] sm:$0xf] %v6994
        %7103 = vst [vmem:[#allocation4 + $0x400] sm:$0xf] %v7008
        %7104 = vst [vmem:[#allocation4 + $0x424] sm:$0xf] %v7018
        %7105 = vst [vmem:[#allocation4 + $0x448] sm:$0xf] %v7032
        %7106 = vst [vmem:[#allocation4 + $0x46c] sm:$0xf] %v7042
        %v7107 = vld [vmem:[%s5594] sm:$0xe]
        %v7108 = vld [vmem:[%s5594 + $0x4] sm:$0xf]
        %v7109 = vld [vmem:[%s5594 + $0x8] sm:$0x1]
        %v7110 = vld [vmem:[%s5594 + $0xc] sm:$0xe]
        %v7111 = vld [vmem:[%s5594 + $0x10] sm:$0xf]
        %v7112 = vld [vmem:[%s5594 + $0x14] sm:$0x1]
        %v7113 = vld [vmem:[%s5594 + $0x18] sm:$0xe]
        %v7114 = vld [vmem:[%s5594 + $0x1c] sm:$0xf]
        %v7115 = vld [vmem:[%s5594 + $0x20] sm:$0x1]
        %v7116 = vld [vmem:[%s5594 + $0x24] sm:$0xe]
        %v7117 = vld [vmem:[%s5594 + $0x28] sm:$0xf]
        %v7118 = vld [vmem:[%s5594 + $0x2c] sm:$0x1]
        %v7119 = vld [vmem:[%s5594 + $0x30] sm:$0xe]
        %v7120 = vld [vmem:[%s5594 + $0x34] sm:$0xf]
        %v7121 = vld [vmem:[%s5594 + $0x38] sm:$0x1]
        %v7122 = vld [vmem:[%s5594 + $0x3c] sm:$0xe]
        %v7123 = vld [vmem:[%s5594 + $0x40] sm:$0xf]
        %v7124 = vld [vmem:[%s5594 + $0x44] sm:$0x1]
        %v7125 = vld [vmem:[%s5594 + $0x48] sm:$0xe]
        %v7126 = vld [vmem:[%s5594 + $0x4c] sm:$0xf]
        %v7127 = vld [vmem:[%s5594 + $0x50] sm:$0x1]
        %v7128 = vld [vmem:[%s5594 + $0x54] sm:$0xe]
        %v7129 = vld [vmem:[%s5594 + $0x58] sm:$0xf]
        %v7130 = vld [vmem:[%s5594 + $0x5c] sm:$0x1]
        %v7131 = vld [vmem:[%s5594 + $0x60] sm:$0xe]
        %v7132 = vld [vmem:[%s5594 + $0x64] sm:$0xf]
        %v7133 = vld [vmem:[%s5594 + $0x68] sm:$0x1]
        %v7134 = vld [vmem:[%s5594 + $0x6c] sm:$0xe]
        %v7135 = vld [vmem:[%s5594 + $0x70] sm:$0xf]
        %v7136 = vld [vmem:[%s5594 + $0x74] sm:$0x1]
        %v7137 = vld [vmem:[%s5594 + $0x78] sm:$0xe]
        %v7138 = vld [vmem:[%s5594 + $0x7c] sm:$0xf]
        %v7139 = vld [vmem:[%s5594 + $0x80] sm:$0x1]
        %v7140 = vld [vmem:[%s5594 + $0x84] sm:$0xe]
        %v7141 = vld [vmem:[%s5594 + $0x88] sm:$0xf]
        %v7142 = vld [vmem:[%s5594 + $0x8c] sm:$0x1]
        %v7143 = vld [vmem:[%s5594 + $0x90] sm:$0xe]
        %v7144 = vld [vmem:[%s5594 + $0x94] sm:$0xf]
        %v7145 = vld [vmem:[%s5594 + $0x98] sm:$0x1]
        %v7146 = vld [vmem:[%s5594 + $0x9c] sm:$0xe]
        %v7147 = vld [vmem:[%s5594 + $0xa0] sm:$0xf]
        %v7148 = vld [vmem:[%s5594 + $0xa4] sm:$0x1]
        %v7149 = vld [vmem:[%s5594 + $0xa8] sm:$0xe]
        %v7150 = vld [vmem:[%s5594 + $0xac] sm:$0xf]
        %v7151 = vld [vmem:[%s5594 + $0xb0] sm:$0x1]
        %v7152 = vld [vmem:[%s5594 + $0xb4] sm:$0xe]
        %v7153 = vld [vmem:[%s5594 + $0xb8] sm:$0xf]
        %v7154 = vld [vmem:[%s5594 + $0xbc] sm:$0x1]
        %v7203 = vrot.slane %v7107, 5
        %v7204 = vrot.slane %v7203, 4
        %v7205 = vrot.slane %v7108, 5
        %v7206 = vsel %vm6370, %v7204, %v7205
        %v7207 = vrot.slane %v7205, 4
        %v7208 = vrot.slane %v7109, 5
        %v7209 = vsel %vm6370, %v7207, %v7208
        %v7210 = vrot.slane %v7110, 5
        %v7211 = vrot.slane %v7210, 4
        %v7212 = vrot.slane %v7111, 5
        %v7213 = vsel %vm6370, %v7211, %v7212
        %v7214 = vrot.slane %v7212, 4
        %v7215 = vrot.slane %v7112, 5
        %v7216 = vsel %vm6370, %v7214, %v7215
        %v7217 = vrot.slane %v7113, 5
        %v7218 = vrot.slane %v7217, 4
        %v7219 = vrot.slane %v7114, 5
        %v7220 = vsel %vm6370, %v7218, %v7219
        %v7221 = vrot.slane %v7219, 4
        %v7222 = vrot.slane %v7115, 5
        %v7223 = vsel %vm6370, %v7221, %v7222
        %v7224 = vrot.slane %v7116, 5
        %v7225 = vrot.slane %v7224, 4
        %v7226 = vrot.slane %v7117, 5
        %v7227 = vsel %vm6370, %v7225, %v7226
        %v7228 = vrot.slane %v7226, 4
        %v7229 = vrot.slane %v7118, 5
        %v7230 = vsel %vm6370, %v7228, %v7229
        %v7231 = vrot.slane %v7119, 5
        %v7232 = vrot.slane %v7231, 4
        %v7233 = vrot.slane %v7120, 5
        %v7234 = vsel %vm6370, %v7232, %v7233
        %v7235 = vrot.slane %v7233, 4
        %v7236 = vrot.slane %v7121, 5
        %v7237 = vsel %vm6370, %v7235, %v7236
        %v7238 = vrot.slane %v7122, 5
        %v7239 = vrot.slane %v7238, 4
        %v7240 = vrot.slane %v7123, 5
        %v7241 = vsel %vm6370, %v7239, %v7240
        %v7242 = vrot.slane %v7240, 4
        %v7243 = vrot.slane %v7124, 5
        %v7244 = vsel %vm6370, %v7242, %v7243
        %v7245 = vrot.slane %v7125, 5
        %v7246 = vrot.slane %v7245, 4
        %v7247 = vrot.slane %v7126, 5
        %v7248 = vsel %vm6370, %v7246, %v7247
        %v7249 = vrot.slane %v7247, 4
        %v7250 = vrot.slane %v7127, 5
        %v7251 = vsel %vm6370, %v7249, %v7250
        %v7252 = vrot.slane %v7128, 5
        %v7253 = vrot.slane %v7252, 4
        %v7254 = vrot.slane %v7129, 5
        %v7255 = vsel %vm6370, %v7253, %v7254
        %v7256 = vrot.slane %v7254, 4
        %v7257 = vrot.slane %v7130, 5
        %v7258 = vsel %vm6370, %v7256, %v7257
        %v7259 = vrot.slane %v7131, 5
        %v7260 = vrot.slane %v7259, 4
        %v7261 = vrot.slane %v7132, 5
        %v7262 = vsel %vm6370, %v7260, %v7261
        %v7263 = vrot.slane %v7261, 4
        %v7264 = vrot.slane %v7133, 5
        %v7265 = vsel %vm6370, %v7263, %v7264
        %v7266 = vrot.slane %v7134, 5
        %v7267 = vrot.slane %v7266, 4
        %v7268 = vrot.slane %v7135, 5
        %v7269 = vsel %vm6370, %v7267, %v7268
        %v7270 = vrot.slane %v7268, 4
        %v7271 = vrot.slane %v7136, 5
        %v7272 = vsel %vm6370, %v7270, %v7271
        %v7273 = vrot.slane %v7137, 5
        %v7274 = vrot.slane %v7273, 4
        %v7275 = vrot.slane %v7138, 5
        %v7276 = vsel %vm6370, %v7274, %v7275
        %v7277 = vrot.slane %v7275, 4
        %v7278 = vrot.slane %v7139, 5
        %v7279 = vsel %vm6370, %v7277, %v7278
        %v7280 = vrot.slane %v7140, 5
        %v7281 = vrot.slane %v7280, 4
        %v7282 = vrot.slane %v7141, 5
        %v7283 = vsel %vm6370, %v7281, %v7282
        %v7284 = vrot.slane %v7282, 4
        %v7285 = vrot.slane %v7142, 5
        %v7286 = vsel %vm6370, %v7284, %v7285
        %v7287 = vrot.slane %v7143, 5
        %v7288 = vrot.slane %v7287, 4
        %v7289 = vrot.slane %v7144, 5
        %v7290 = vsel %vm6370, %v7288, %v7289
        %v7291 = vrot.slane %v7289, 4
        %v7292 = vrot.slane %v7145, 5
        %v7293 = vsel %vm6370, %v7291, %v7292
        %v7294 = vrot.slane %v7146, 5
        %v7295 = vrot.slane %v7294, 4
        %v7296 = vrot.slane %v7147, 5
        %v7297 = vsel %vm6370, %v7295, %v7296
        %v7298 = vrot.slane %v7296, 4
        %v7299 = vrot.slane %v7148, 5
        %v7300 = vsel %vm6370, %v7298, %v7299
        %v7301 = vrot.slane %v7149, 5
        %v7302 = vrot.slane %v7301, 4
        %v7303 = vrot.slane %v7150, 5
        %v7304 = vsel %vm6370, %v7302, %v7303
        %v7305 = vrot.slane %v7303, 4
        %v7306 = vrot.slane %v7151, 5
        %v7307 = vsel %vm6370, %v7305, %v7306
        %v7308 = vrot.slane %v7152, 5
        %v7309 = vrot.slane %v7308, 4
        %v7310 = vrot.slane %v7153, 5
        %v7311 = vsel %vm6370, %v7309, %v7310
        %v7312 = vrot.slane %v7310, 4
        %v7313 = vrot.slane %v7154, 5
        %v7314 = vsel %vm6370, %v7312, %v7313
        %7347 = vst [vmem:[#allocation4 + $0x14] sm:$0xf] %v7206
        %7348 = vst [vmem:[#allocation4 + $0x38] sm:$0xf] %v7209
        %7349 = vst [vmem:[#allocation4 + $0x5c] sm:$0xf] %v7213
        %7350 = vst [vmem:[#allocation4 + $0x80] sm:$0xf] %v7216
        %7351 = vst [vmem:[#allocation4 + $0xa4] sm:$0xf] %v7220
        %7352 = vst [vmem:[#allocation4 + $0xc8] sm:$0xf] %v7223
        %7353 = vst [vmem:[#allocation4 + $0xec] sm:$0xf] %v7227
        %7354 = vst [vmem:[#allocation4 + $0x110] sm:$0xf] %v7230
        %7355 = vst [vmem:[#allocation4 + $0x134] sm:$0xf] %v7234
        %7356 = vst [vmem:[#allocation4 + $0x158] sm:$0xf] %v7237
        %7357 = vst [vmem:[#allocation4 + $0x17c] sm:$0xf] %v7241
        %7358 = vst [vmem:[#allocation4 + $0x1a0] sm:$0xf] %v7244
        %7359 = vst [vmem:[#allocation4 + $0x1c4] sm:$0xf] %v7248
        %7360 = vst [vmem:[#allocation4 + $0x1e8] sm:$0xf] %v7251
        %7361 = vst [vmem:[#allocation4 + $0x20c] sm:$0xf] %v7255
        %7362 = vst [vmem:[#allocation4 + $0x230] sm:$0xf] %v7258
        %7363 = vst [vmem:[#allocation4 + $0x254] sm:$0xf] %v7262
        %7364 = vst [vmem:[#allocation4 + $0x278] sm:$0xf] %v7265
        %7365 = vst [vmem:[#allocation4 + $0x29c] sm:$0xf] %v7269
        %7366 = vst [vmem:[#allocation4 + $0x2c0] sm:$0xf] %v7272
        %7367 = vst [vmem:[#allocation4 + $0x2e4] sm:$0xf] %v7276
        %7368 = vst [vmem:[#allocation4 + $0x308] sm:$0xf] %v7279
        %7369 = vst [vmem:[#allocation4 + $0x32c] sm:$0xf] %v7283
        %7370 = vst [vmem:[#allocation4 + $0x350] sm:$0xf] %v7286
        %7371 = vst [vmem:[#allocation4 + $0x374] sm:$0xf] %v7290
        %7372 = vst [vmem:[#allocation4 + $0x398] sm:$0xf] %v7293
        %7373 = vst [vmem:[#allocation4 + $0x3bc] sm:$0xf] %v7297
        %7374 = vst [vmem:[#allocation4 + $0x3e0] sm:$0xf] %v7300
        %7375 = vst [vmem:[#allocation4 + $0x404] sm:$0xf] %v7304
        %7376 = vst [vmem:[#allocation4 + $0x428] sm:$0xf] %v7307
        %7377 = vst [vmem:[#allocation4 + $0x44c] sm:$0xf] %v7311
        %7378 = vst [vmem:[#allocation4 + $0x470] sm:$0xf] %v7314
        %s7379 = scalar_lea.vmem [#allocation2], 24
        %v7380 = vld [vmem:[%s7379] sm:$0xf]
        %v7381 = vld [vmem:[%s7379 + $0x4] sm:$0xf]
        %v7382 = vld [vmem:[%s7379 + $0xc] sm:$0xf]
        %v7383 = vld [vmem:[%s7379 + $0x10] sm:$0xf]
        %v7384 = vld [vmem:[%s7379 + $0x18] sm:$0xf]
        %v7385 = vld [vmem:[%s7379 + $0x1c] sm:$0xf]
        %v7386 = vld [vmem:[%s7379 + $0x24] sm:$0xf]
        %v7387 = vld [vmem:[%s7379 + $0x28] sm:$0xf]
        %v7388 = vld [vmem:[%s7379 + $0x30] sm:$0xf]
        %v7389 = vld [vmem:[%s7379 + $0x34] sm:$0xf]
        %v7390 = vld [vmem:[%s7379 + $0x3c] sm:$0xf]
        %v7391 = vld [vmem:[%s7379 + $0x40] sm:$0xf]
        %v7392 = vld [vmem:[%s7379 + $0x48] sm:$0xf]
        %v7393 = vld [vmem:[%s7379 + $0x4c] sm:$0xf]
        %v7394 = vld [vmem:[%s7379 + $0x54] sm:$0xf]
        %v7395 = vld [vmem:[%s7379 + $0x58] sm:$0xf]
        %v7396 = vld [vmem:[%s7379 + $0x60] sm:$0xf]
        %v7397 = vld [vmem:[%s7379 + $0x64] sm:$0xf]
        %v7398 = vld [vmem:[%s7379 + $0x6c] sm:$0xf]
        %v7399 = vld [vmem:[%s7379 + $0x70] sm:$0xf]
        %v7400 = vld [vmem:[%s7379 + $0x78] sm:$0xf]
        %v7401 = vld [vmem:[%s7379 + $0x7c] sm:$0xf]
        %v7402 = vld [vmem:[%s7379 + $0x84] sm:$0xf]
        %v7403 = vld [vmem:[%s7379 + $0x88] sm:$0xf]
        %v7404 = vld [vmem:[%s7379 + $0x90] sm:$0xf]
        %v7405 = vld [vmem:[%s7379 + $0x94] sm:$0xf]
        %v7406 = vld [vmem:[%s7379 + $0x9c] sm:$0xf]
        %v7407 = vld [vmem:[%s7379 + $0xa0] sm:$0xf]
        %v7408 = vld [vmem:[%s7379 + $0xa8] sm:$0xf]
        %v7409 = vld [vmem:[%s7379 + $0xac] sm:$0xf]
        %v7410 = vld [vmem:[%s7379 + $0xb4] sm:$0xf]
        %v7411 = vld [vmem:[%s7379 + $0xb8] sm:$0xf]
        %7412 = vst [vmem:[#allocation4 + $0x18] sm:$0xf] %v7380
        %7413 = vst [vmem:[#allocation4 + $0x3c] sm:$0xf] %v7381
        %7414 = vst [vmem:[#allocation4 + $0x60] sm:$0xf] %v7382
        %7415 = vst [vmem:[#allocation4 + $0x84] sm:$0xf] %v7383
        %7416 = vst [vmem:[#allocation4 + $0xa8] sm:$0xf] %v7384
        %7417 = vst [vmem:[#allocation4 + $0xcc] sm:$0xf] %v7385
        %7418 = vst [vmem:[#allocation4 + $0xf0] sm:$0xf] %v7386
        %7419 = vst [vmem:[#allocation4 + $0x114] sm:$0xf] %v7387
        %7420 = vst [vmem:[#allocation4 + $0x138] sm:$0xf] %v7388
        %7421 = vst [vmem:[#allocation4 + $0x15c] sm:$0xf] %v7389
        %7422 = vst [vmem:[#allocation4 + $0x180] sm:$0xf] %v7390
        %7423 = vst [vmem:[#allocation4 + $0x1a4] sm:$0xf] %v7391
        %7424 = vst [vmem:[#allocation4 + $0x1c8] sm:$0xf] %v7392
        %7425 = vst [vmem:[#allocation4 + $0x1ec] sm:$0xf] %v7393
        %7426 = vst [vmem:[#allocation4 + $0x210] sm:$0xf] %v7394
        %7427 = vst [vmem:[#allocation4 + $0x234] sm:$0xf] %v7395
        %7428 = vst [vmem:[#allocation4 + $0x258] sm:$0xf] %v7396
        %7429 = vst [vmem:[#allocation4 + $0x27c] sm:$0xf] %v7397
        %7430 = vst [vmem:[#allocation4 + $0x2a0] sm:$0xf] %v7398
        %7431 = vst [vmem:[#allocation4 + $0x2c4] sm:$0xf] %v7399
        %7432 = vst [vmem:[#allocation4 + $0x2e8] sm:$0xf] %v7400
        %7433 = vst [vmem:[#allocation4 + $0x30c] sm:$0xf] %v7401
        %7434 = vst [vmem:[#allocation4 + $0x330] sm:$0xf] %v7402
        %7435 = vst [vmem:[#allocation4 + $0x354] sm:$0xf] %v7403
        %7436 = vst [vmem:[#allocation4 + $0x378] sm:$0xf] %v7404
        %7437 = vst [vmem:[#allocation4 + $0x39c] sm:$0xf] %v7405
        %7438 = vst [vmem:[#allocation4 + $0x3c0] sm:$0xf] %v7406
        %7439 = vst [vmem:[#allocation4 + $0x3e4] sm:$0xf] %v7407
        %7440 = vst [vmem:[#allocation4 + $0x408] sm:$0xf] %v7408
        %7441 = vst [vmem:[#allocation4 + $0x42c] sm:$0xf] %v7409
        %7442 = vst [vmem:[#allocation4 + $0x450] sm:$0xf] %v7410
        %7443 = vst [vmem:[#allocation4 + $0x474] sm:$0xf] %v7411
        %v7444 = vld [vmem:[%s7379] sm:$0xf]
        %v7445 = vld [vmem:[%s7379 + $0x4] sm:$0xf]
        %v7446 = vld [vmem:[%s7379 + $0x8] sm:$0x1]
        %v7447 = vld [vmem:[%s7379 + $0xc] sm:$0xf]
        %v7448 = vld [vmem:[%s7379 + $0x10] sm:$0xf]
        %v7449 = vld [vmem:[%s7379 + $0x14] sm:$0x1]
        %v7450 = vld [vmem:[%s7379 + $0x18] sm:$0xf]
        %v7451 = vld [vmem:[%s7379 + $0x1c] sm:$0xf]
        %v7452 = vld [vmem:[%s7379 + $0x20] sm:$0x1]
        %v7453 = vld [vmem:[%s7379 + $0x24] sm:$0xf]
        %v7454 = vld [vmem:[%s7379 + $0x28] sm:$0xf]
        %v7455 = vld [vmem:[%s7379 + $0x2c] sm:$0x1]
        %v7456 = vld [vmem:[%s7379 + $0x30] sm:$0xf]
        %v7457 = vld [vmem:[%s7379 + $0x34] sm:$0xf]
        %v7458 = vld [vmem:[%s7379 + $0x38] sm:$0x1]
        %v7459 = vld [vmem:[%s7379 + $0x3c] sm:$0xf]
        %v7460 = vld [vmem:[%s7379 + $0x40] sm:$0xf]
        %v7461 = vld [vmem:[%s7379 + $0x44] sm:$0x1]
        %v7462 = vld [vmem:[%s7379 + $0x48] sm:$0xf]
        %v7463 = vld [vmem:[%s7379 + $0x4c] sm:$0xf]
        %v7464 = vld [vmem:[%s7379 + $0x50] sm:$0x1]
        %v7465 = vld [vmem:[%s7379 + $0x54] sm:$0xf]
        %v7466 = vld [vmem:[%s7379 + $0x58] sm:$0xf]
        %v7467 = vld [vmem:[%s7379 + $0x5c] sm:$0x1]
        %v7468 = vld [vmem:[%s7379 + $0x60] sm:$0xf]
        %v7469 = vld [vmem:[%s7379 + $0x64] sm:$0xf]
        %v7470 = vld [vmem:[%s7379 + $0x68] sm:$0x1]
        %v7471 = vld [vmem:[%s7379 + $0x6c] sm:$0xf]
        %v7472 = vld [vmem:[%s7379 + $0x70] sm:$0xf]
        %v7473 = vld [vmem:[%s7379 + $0x74] sm:$0x1]
        %v7474 = vld [vmem:[%s7379 + $0x78] sm:$0xf]
        %v7475 = vld [vmem:[%s7379 + $0x7c] sm:$0xf]
        %v7476 = vld [vmem:[%s7379 + $0x80] sm:$0x1]
        %v7477 = vld [vmem:[%s7379 + $0x84] sm:$0xf]
        %v7478 = vld [vmem:[%s7379 + $0x88] sm:$0xf]
        %v7479 = vld [vmem:[%s7379 + $0x8c] sm:$0x1]
        %v7480 = vld [vmem:[%s7379 + $0x90] sm:$0xf]
        %v7481 = vld [vmem:[%s7379 + $0x94] sm:$0xf]
        %v7482 = vld [vmem:[%s7379 + $0x98] sm:$0x1]
        %v7483 = vld [vmem:[%s7379 + $0x9c] sm:$0xf]
        %v7484 = vld [vmem:[%s7379 + $0xa0] sm:$0xf]
        %v7485 = vld [vmem:[%s7379 + $0xa4] sm:$0x1]
        %v7486 = vld [vmem:[%s7379 + $0xa8] sm:$0xf]
        %v7487 = vld [vmem:[%s7379 + $0xac] sm:$0xf]
        %v7488 = vld [vmem:[%s7379 + $0xb0] sm:$0x1]
        %v7489 = vld [vmem:[%s7379 + $0xb4] sm:$0xf]
        %v7490 = vld [vmem:[%s7379 + $0xb8] sm:$0xf]
        %v7491 = vld [vmem:[%s7379 + $0xbc] sm:$0x1]
        %v7493 = vshrl.u32 %v7444, 16
        %v7495 = vrot.slane %v7493, 4
        %v7496 = vshll.u32 %v7444, 16
        %v7498 = vrot.slane %v7496, 5
        %v7499 = vor.u32 %v7495, %v7498
        %v7500 = vrot.slane %v7499, 4
        %v7502 = vshll.u32 %v7445, 16
        %v7504 = vrot.slane %v7502, 5
        %v7505 = vsel %vm1829, %v7500, %v7504
        %v7506 = vshrl.u32 %v7445, 16
        %v7508 = vrot.slane %v7506, 4
        %v7509 = vor.u32 %v7508, %v7504
        %v7510 = vrot.slane %v7509, 4
        %v7512 = vshll.u32 %v7446, 16
        %v7514 = vrot.slane %v7512, 5
        %v7515 = vsel %vm1829, %v7510, %v7514
        %v7517 = vshrl.u32 %v7447, 16
        %v7519 = vrot.slane %v7517, 4
        %v7520 = vshll.u32 %v7447, 16
        %v7522 = vrot.slane %v7520, 5
        %v7523 = vor.u32 %v7519, %v7522
        %v7524 = vrot.slane %v7523, 4
        %v7526 = vshll.u32 %v7448, 16
        %v7528 = vrot.slane %v7526, 5
        %v7529 = vsel %vm1829, %v7524, %v7528
        %v7530 = vshrl.u32 %v7448, 16
        %v7532 = vrot.slane %v7530, 4
        %v7533 = vor.u32 %v7532, %v7528
        %v7534 = vrot.slane %v7533, 4
        %v7536 = vshll.u32 %v7449, 16
        %v7538 = vrot.slane %v7536, 5
        %v7539 = vsel %vm1829, %v7534, %v7538
        %v7541 = vshrl.u32 %v7450, 16
        %v7543 = vrot.slane %v7541, 4
        %v7544 = vshll.u32 %v7450, 16
        %v7546 = vrot.slane %v7544, 5
        %v7547 = vor.u32 %v7543, %v7546
        %v7548 = vrot.slane %v7547, 4
        %v7550 = vshll.u32 %v7451, 16
        %v7552 = vrot.slane %v7550, 5
        %v7553 = vsel %vm1829, %v7548, %v7552
        %v7554 = vshrl.u32 %v7451, 16
        %v7556 = vrot.slane %v7554, 4
        %v7557 = vor.u32 %v7556, %v7552
        %v7558 = vrot.slane %v7557, 4
        %v7560 = vshll.u32 %v7452, 16
        %v7562 = vrot.slane %v7560, 5
        %v7563 = vsel %vm1829, %v7558, %v7562
        %v7565 = vshrl.u32 %v7453, 16
        %v7567 = vrot.slane %v7565, 4
        %v7568 = vshll.u32 %v7453, 16
        %v7570 = vrot.slane %v7568, 5
        %v7571 = vor.u32 %v7567, %v7570
        %v7572 = vrot.slane %v7571, 4
        %v7574 = vshll.u32 %v7454, 16
        %v7576 = vrot.slane %v7574, 5
        %v7577 = vsel %vm1829, %v7572, %v7576
        %v7578 = vshrl.u32 %v7454, 16
        %v7580 = vrot.slane %v7578, 4
        %v7581 = vor.u32 %v7580, %v7576
        %v7582 = vrot.slane %v7581, 4
        %v7584 = vshll.u32 %v7455, 16
        %v7586 = vrot.slane %v7584, 5
        %v7587 = vsel %vm1829, %v7582, %v7586
        %v7589 = vshrl.u32 %v7456, 16
        %v7591 = vrot.slane %v7589, 4
        %v7592 = vshll.u32 %v7456, 16
        %v7594 = vrot.slane %v7592, 5
        %v7595 = vor.u32 %v7591, %v7594
        %v7596 = vrot.slane %v7595, 4
        %v7598 = vshll.u32 %v7457, 16
        %v7600 = vrot.slane %v7598, 5
        %v7601 = vsel %vm1829, %v7596, %v7600
        %v7602 = vshrl.u32 %v7457, 16
        %v7604 = vrot.slane %v7602, 4
        %v7605 = vor.u32 %v7604, %v7600
        %v7606 = vrot.slane %v7605, 4
        %v7608 = vshll.u32 %v7458, 16
        %v7610 = vrot.slane %v7608, 5
        %v7611 = vsel %vm1829, %v7606, %v7610
        %v7613 = vshrl.u32 %v7459, 16
        %v7615 = vrot.slane %v7613, 4
        %v7616 = vshll.u32 %v7459, 16
        %v7618 = vrot.slane %v7616, 5
        %v7619 = vor.u32 %v7615, %v7618
        %v7620 = vrot.slane %v7619, 4
        %v7622 = vshll.u32 %v7460, 16
        %v7624 = vrot.slane %v7622, 5
        %v7625 = vsel %vm1829, %v7620, %v7624
        %v7626 = vshrl.u32 %v7460, 16
        %v7628 = vrot.slane %v7626, 4
        %v7629 = vor.u32 %v7628, %v7624
        %v7630 = vrot.slane %v7629, 4
        %v7632 = vshll.u32 %v7461, 16
        %v7634 = vrot.slane %v7632, 5
        %v7635 = vsel %vm1829, %v7630, %v7634
        %v7637 = vshrl.u32 %v7462, 16
        %v7639 = vrot.slane %v7637, 4
        %v7640 = vshll.u32 %v7462, 16
        %v7642 = vrot.slane %v7640, 5
        %v7643 = vor.u32 %v7639, %v7642
        %v7644 = vrot.slane %v7643, 4
        %v7646 = vshll.u32 %v7463, 16
        %v7648 = vrot.slane %v7646, 5
        %v7649 = vsel %vm1829, %v7644, %v7648
        %v7650 = vshrl.u32 %v7463, 16
        %v7652 = vrot.slane %v7650, 4
        %v7653 = vor.u32 %v7652, %v7648
        %v7654 = vrot.slane %v7653, 4
        %v7656 = vshll.u32 %v7464, 16
        %v7658 = vrot.slane %v7656, 5
        %v7659 = vsel %vm1829, %v7654, %v7658
        %v7661 = vshrl.u32 %v7465, 16
        %v7663 = vrot.slane %v7661, 4
        %v7664 = vshll.u32 %v7465, 16
        %v7666 = vrot.slane %v7664, 5
        %v7667 = vor.u32 %v7663, %v7666
        %v7668 = vrot.slane %v7667, 4
        %v7670 = vshll.u32 %v7466, 16
        %v7672 = vrot.slane %v7670, 5
        %v7673 = vsel %vm1829, %v7668, %v7672
        %v7674 = vshrl.u32 %v7466, 16
        %v7676 = vrot.slane %v7674, 4
        %v7677 = vor.u32 %v7676, %v7672
        %v7678 = vrot.slane %v7677, 4
        %v7680 = vshll.u32 %v7467, 16
        %v7682 = vrot.slane %v7680, 5
        %v7683 = vsel %vm1829, %v7678, %v7682
        %v7685 = vshrl.u32 %v7468, 16
        %v7687 = vrot.slane %v7685, 4
        %v7688 = vshll.u32 %v7468, 16
        %v7690 = vrot.slane %v7688, 5
        %v7691 = vor.u32 %v7687, %v7690
        %v7692 = vrot.slane %v7691, 4
        %v7694 = vshll.u32 %v7469, 16
        %v7696 = vrot.slane %v7694, 5
        %v7697 = vsel %vm1829, %v7692, %v7696
        %v7698 = vshrl.u32 %v7469, 16
        %v7700 = vrot.slane %v7698, 4
        %v7701 = vor.u32 %v7700, %v7696
        %v7702 = vrot.slane %v7701, 4
        %v7704 = vshll.u32 %v7470, 16
        %v7706 = vrot.slane %v7704, 5
        %v7707 = vsel %vm1829, %v7702, %v7706
        %v7709 = vshrl.u32 %v7471, 16
        %v7711 = vrot.slane %v7709, 4
        %v7712 = vshll.u32 %v7471, 16
        %v7714 = vrot.slane %v7712, 5
        %v7715 = vor.u32 %v7711, %v7714
        %v7716 = vrot.slane %v7715, 4
        %v7718 = vshll.u32 %v7472, 16
        %v7720 = vrot.slane %v7718, 5
        %v7721 = vsel %vm1829, %v7716, %v7720
        %v7722 = vshrl.u32 %v7472, 16
        %v7724 = vrot.slane %v7722, 4
        %v7725 = vor.u32 %v7724, %v7720
        %v7726 = vrot.slane %v7725, 4
        %v7728 = vshll.u32 %v7473, 16
        %v7730 = vrot.slane %v7728, 5
        %v7731 = vsel %vm1829, %v7726, %v7730
        %v7733 = vshrl.u32 %v7474, 16
        %v7735 = vrot.slane %v7733, 4
        %v7736 = vshll.u32 %v7474, 16
        %v7738 = vrot.slane %v7736, 5
        %v7739 = vor.u32 %v7735, %v7738
        %v7740 = vrot.slane %v7739, 4
        %v7742 = vshll.u32 %v7475, 16
        %v7744 = vrot.slane %v7742, 5
        %v7745 = vsel %vm1829, %v7740, %v7744
        %v7746 = vshrl.u32 %v7475, 16
        %v7748 = vrot.slane %v7746, 4
        %v7749 = vor.u32 %v7748, %v7744
        %v7750 = vrot.slane %v7749, 4
        %v7752 = vshll.u32 %v7476, 16
        %v7754 = vrot.slane %v7752, 5
        %v7755 = vsel %vm1829, %v7750, %v7754
        %v7757 = vshrl.u32 %v7477, 16
        %v7759 = vrot.slane %v7757, 4
        %v7760 = vshll.u32 %v7477, 16
        %v7762 = vrot.slane %v7760, 5
        %v7763 = vor.u32 %v7759, %v7762
        %v7764 = vrot.slane %v7763, 4
        %v7766 = vshll.u32 %v7478, 16
        %v7768 = vrot.slane %v7766, 5
        %v7769 = vsel %vm1829, %v7764, %v7768
        %v7770 = vshrl.u32 %v7478, 16
        %v7772 = vrot.slane %v7770, 4
        %v7773 = vor.u32 %v7772, %v7768
        %v7774 = vrot.slane %v7773, 4
        %v7776 = vshll.u32 %v7479, 16
        %v7778 = vrot.slane %v7776, 5
        %v7779 = vsel %vm1829, %v7774, %v7778
        %v7781 = vshrl.u32 %v7480, 16
        %v7783 = vrot.slane %v7781, 4
        %v7784 = vshll.u32 %v7480, 16
        %v7786 = vrot.slane %v7784, 5
        %v7787 = vor.u32 %v7783, %v7786
        %v7788 = vrot.slane %v7787, 4
        %v7790 = vshll.u32 %v7481, 16
        %v7792 = vrot.slane %v7790, 5
        %v7793 = vsel %vm1829, %v7788, %v7792
        %v7794 = vshrl.u32 %v7481, 16
        %v7796 = vrot.slane %v7794, 4
        %v7797 = vor.u32 %v7796, %v7792
        %v7798 = vrot.slane %v7797, 4
        %v7800 = vshll.u32 %v7482, 16
        %v7802 = vrot.slane %v7800, 5
        %v7803 = vsel %vm1829, %v7798, %v7802
        %v7805 = vshrl.u32 %v7483, 16
        %v7807 = vrot.slane %v7805, 4
        %v7808 = vshll.u32 %v7483, 16
        %v7810 = vrot.slane %v7808, 5
        %v7811 = vor.u32 %v7807, %v7810
        %v7812 = vrot.slane %v7811, 4
        %v7814 = vshll.u32 %v7484, 16
        %v7816 = vrot.slane %v7814, 5
        %v7817 = vsel %vm1829, %v7812, %v7816
        %v7818 = vshrl.u32 %v7484, 16
        %v7820 = vrot.slane %v7818, 4
        %v7821 = vor.u32 %v7820, %v7816
        %v7822 = vrot.slane %v7821, 4
        %v7824 = vshll.u32 %v7485, 16
        %v7826 = vrot.slane %v7824, 5
        %v7827 = vsel %vm1829, %v7822, %v7826
        %v7829 = vshrl.u32 %v7486, 16
        %v7831 = vrot.slane %v7829, 4
        %v7832 = vshll.u32 %v7486, 16
        %v7834 = vrot.slane %v7832, 5
        %v7835 = vor.u32 %v7831, %v7834
        %v7836 = vrot.slane %v7835, 4
        %v7838 = vshll.u32 %v7487, 16
        %v7840 = vrot.slane %v7838, 5
        %v7841 = vsel %vm1829, %v7836, %v7840
        %v7842 = vshrl.u32 %v7487, 16
        %v7844 = vrot.slane %v7842, 4
        %v7845 = vor.u32 %v7844, %v7840
        %v7846 = vrot.slane %v7845, 4
        %v7848 = vshll.u32 %v7488, 16
        %v7850 = vrot.slane %v7848, 5
        %v7851 = vsel %vm1829, %v7846, %v7850
        %v7853 = vshrl.u32 %v7489, 16
        %v7855 = vrot.slane %v7853, 4
        %v7856 = vshll.u32 %v7489, 16
        %v7858 = vrot.slane %v7856, 5
        %v7859 = vor.u32 %v7855, %v7858
        %v7860 = vrot.slane %v7859, 4
        %v7862 = vshll.u32 %v7490, 16
        %v7864 = vrot.slane %v7862, 5
        %v7865 = vsel %vm1829, %v7860, %v7864
        %v7866 = vshrl.u32 %v7490, 16
        %v7868 = vrot.slane %v7866, 4
        %v7869 = vor.u32 %v7868, %v7864
        %v7870 = vrot.slane %v7869, 4
        %v7872 = vshll.u32 %v7491, 16
        %v7874 = vrot.slane %v7872, 5
        %v7875 = vsel %vm1829, %v7870, %v7874
        %7908 = vst [vmem:[#allocation4 + $0x1c] sm:$0xf] %v7505
        %7909 = vst [vmem:[#allocation4 + $0x40] sm:$0xf] %v7515
        %7910 = vst [vmem:[#allocation4 + $0x64] sm:$0xf] %v7529
        %7911 = vst [vmem:[#allocation4 + $0x88] sm:$0xf] %v7539
        %7912 = vst [vmem:[#allocation4 + $0xac] sm:$0xf] %v7553
        %7913 = vst [vmem:[#allocation4 + $0xd0] sm:$0xf] %v7563
        %7914 = vst [vmem:[#allocation4 + $0xf4] sm:$0xf] %v7577
        %7915 = vst [vmem:[#allocation4 + $0x118] sm:$0xf] %v7587
        %7916 = vst [vmem:[#allocation4 + $0x13c] sm:$0xf] %v7601
        %7917 = vst [vmem:[#allocation4 + $0x160] sm:$0xf] %v7611
        %7918 = vst [vmem:[#allocation4 + $0x184] sm:$0xf] %v7625
        %7919 = vst [vmem:[#allocation4 + $0x1a8] sm:$0xf] %v7635
        %7920 = vst [vmem:[#allocation4 + $0x1cc] sm:$0xf] %v7649
        %7921 = vst [vmem:[#allocation4 + $0x1f0] sm:$0xf] %v7659
        %7922 = vst [vmem:[#allocation4 + $0x214] sm:$0xf] %v7673
        %7923 = vst [vmem:[#allocation4 + $0x238] sm:$0xf] %v7683
        %7924 = vst [vmem:[#allocation4 + $0x25c] sm:$0xf] %v7697
        %7925 = vst [vmem:[#allocation4 + $0x280] sm:$0xf] %v7707
        %7926 = vst [vmem:[#allocation4 + $0x2a4] sm:$0xf] %v7721
        %7927 = vst [vmem:[#allocation4 + $0x2c8] sm:$0xf] %v7731
        %7928 = vst [vmem:[#allocation4 + $0x2ec] sm:$0xf] %v7745
        %7929 = vst [vmem:[#allocation4 + $0x310] sm:$0xf] %v7755
        %7930 = vst [vmem:[#allocation4 + $0x334] sm:$0xf] %v7769
        %7931 = vst [vmem:[#allocation4 + $0x358] sm:$0xf] %v7779
        %7932 = vst [vmem:[#allocation4 + $0x37c] sm:$0xf] %v7793
        %7933 = vst [vmem:[#allocation4 + $0x3a0] sm:$0xf] %v7803
        %7934 = vst [vmem:[#allocation4 + $0x3c4] sm:$0xf] %v7817
        %7935 = vst [vmem:[#allocation4 + $0x3e8] sm:$0xf] %v7827
        %7936 = vst [vmem:[#allocation4 + $0x40c] sm:$0xf] %v7841
        %7937 = vst [vmem:[#allocation4 + $0x430] sm:$0xf] %v7851
        %7938 = vst [vmem:[#allocation4 + $0x454] sm:$0xf] %v7865
        %7939 = vst [vmem:[#allocation4 + $0x478] sm:$0xf] %v7875
        %v7940 = vld [vmem:[%s7379] sm:$0xe]
        %v7941 = vld [vmem:[%s7379 + $0x4] sm:$0xf]
        %v7942 = vld [vmem:[%s7379 + $0x8] sm:$0x1]
        %v7943 = vld [vmem:[%s7379 + $0xc] sm:$0xe]
        %v7944 = vld [vmem:[%s7379 + $0x10] sm:$0xf]
        %v7945 = vld [vmem:[%s7379 + $0x14] sm:$0x1]
        %v7946 = vld [vmem:[%s7379 + $0x18] sm:$0xe]
        %v7947 = vld [vmem:[%s7379 + $0x1c] sm:$0xf]
        %v7948 = vld [vmem:[%s7379 + $0x20] sm:$0x1]
        %v7949 = vld [vmem:[%s7379 + $0x24] sm:$0xe]
        %v7950 = vld [vmem:[%s7379 + $0x28] sm:$0xf]
        %v7951 = vld [vmem:[%s7379 + $0x2c] sm:$0x1]
        %v7952 = vld [vmem:[%s7379 + $0x30] sm:$0xe]
        %v7953 = vld [vmem:[%s7379 + $0x34] sm:$0xf]
        %v7954 = vld [vmem:[%s7379 + $0x38] sm:$0x1]
        %v7955 = vld [vmem:[%s7379 + $0x3c] sm:$0xe]
        %v7956 = vld [vmem:[%s7379 + $0x40] sm:$0xf]
        %v7957 = vld [vmem:[%s7379 + $0x44] sm:$0x1]
        %v7958 = vld [vmem:[%s7379 + $0x48] sm:$0xe]
        %v7959 = vld [vmem:[%s7379 + $0x4c] sm:$0xf]
        %v7960 = vld [vmem:[%s7379 + $0x50] sm:$0x1]
        %v7961 = vld [vmem:[%s7379 + $0x54] sm:$0xe]
        %v7962 = vld [vmem:[%s7379 + $0x58] sm:$0xf]
        %v7963 = vld [vmem:[%s7379 + $0x5c] sm:$0x1]
        %v7964 = vld [vmem:[%s7379 + $0x60] sm:$0xe]
        %v7965 = vld [vmem:[%s7379 + $0x64] sm:$0xf]
        %v7966 = vld [vmem:[%s7379 + $0x68] sm:$0x1]
        %v7967 = vld [vmem:[%s7379 + $0x6c] sm:$0xe]
        %v7968 = vld [vmem:[%s7379 + $0x70] sm:$0xf]
        %v7969 = vld [vmem:[%s7379 + $0x74] sm:$0x1]
        %v7970 = vld [vmem:[%s7379 + $0x78] sm:$0xe]
        %v7971 = vld [vmem:[%s7379 + $0x7c] sm:$0xf]
        %v7972 = vld [vmem:[%s7379 + $0x80] sm:$0x1]
        %v7973 = vld [vmem:[%s7379 + $0x84] sm:$0xe]
        %v7974 = vld [vmem:[%s7379 + $0x88] sm:$0xf]
        %v7975 = vld [vmem:[%s7379 + $0x8c] sm:$0x1]
        %v7976 = vld [vmem:[%s7379 + $0x90] sm:$0xe]
        %v7977 = vld [vmem:[%s7379 + $0x94] sm:$0xf]
        %v7978 = vld [vmem:[%s7379 + $0x98] sm:$0x1]
        %v7979 = vld [vmem:[%s7379 + $0x9c] sm:$0xe]
        %v7980 = vld [vmem:[%s7379 + $0xa0] sm:$0xf]
        %v7981 = vld [vmem:[%s7379 + $0xa4] sm:$0x1]
        %v7982 = vld [vmem:[%s7379 + $0xa8] sm:$0xe]
        %v7983 = vld [vmem:[%s7379 + $0xac] sm:$0xf]
        %v7984 = vld [vmem:[%s7379 + $0xb0] sm:$0x1]
        %v7985 = vld [vmem:[%s7379 + $0xb4] sm:$0xe]
        %v7986 = vld [vmem:[%s7379 + $0xb8] sm:$0xf]
        %v7987 = vld [vmem:[%s7379 + $0xbc] sm:$0x1]
        %v8036 = vrot.slane %v7940, 5
        %v8037 = vrot.slane %v8036, 4
        %v8038 = vrot.slane %v7941, 5
        %v8039 = vsel %vm6370, %v8037, %v8038
        %v8040 = vrot.slane %v8038, 4
        %v8041 = vrot.slane %v7942, 5
        %v8042 = vsel %vm6370, %v8040, %v8041
        %v8043 = vrot.slane %v7943, 5
        %v8044 = vrot.slane %v8043, 4
        %v8045 = vrot.slane %v7944, 5
        %v8046 = vsel %vm6370, %v8044, %v8045
        %v8047 = vrot.slane %v8045, 4
        %v8048 = vrot.slane %v7945, 5
        %v8049 = vsel %vm6370, %v8047, %v8048
        %v8050 = vrot.slane %v7946, 5
        %v8051 = vrot.slane %v8050, 4
        %v8052 = vrot.slane %v7947, 5
        %v8053 = vsel %vm6370, %v8051, %v8052
        %v8054 = vrot.slane %v8052, 4
        %v8055 = vrot.slane %v7948, 5
        %v8056 = vsel %vm6370, %v8054, %v8055
        %v8057 = vrot.slane %v7949, 5
        %v8058 = vrot.slane %v8057, 4
        %v8059 = vrot.slane %v7950, 5
        %v8060 = vsel %vm6370, %v8058, %v8059
        %v8061 = vrot.slane %v8059, 4
        %v8062 = vrot.slane %v7951, 5
        %v8063 = vsel %vm6370, %v8061, %v8062
        %v8064 = vrot.slane %v7952, 5
        %v8065 = vrot.slane %v8064, 4
        %v8066 = vrot.slane %v7953, 5
        %v8067 = vsel %vm6370, %v8065, %v8066
        %v8068 = vrot.slane %v8066, 4
        %v8069 = vrot.slane %v7954, 5
        %v8070 = vsel %vm6370, %v8068, %v8069
        %v8071 = vrot.slane %v7955, 5
        %v8072 = vrot.slane %v8071, 4
        %v8073 = vrot.slane %v7956, 5
        %v8074 = vsel %vm6370, %v8072, %v8073
        %v8075 = vrot.slane %v8073, 4
        %v8076 = vrot.slane %v7957, 5
        %v8077 = vsel %vm6370, %v8075, %v8076
        %v8078 = vrot.slane %v7958, 5
        %v8079 = vrot.slane %v8078, 4
        %v8080 = vrot.slane %v7959, 5
        %v8081 = vsel %vm6370, %v8079, %v8080
        %v8082 = vrot.slane %v8080, 4
        %v8083 = vrot.slane %v7960, 5
        %v8084 = vsel %vm6370, %v8082, %v8083
        %v8085 = vrot.slane %v7961, 5
        %v8086 = vrot.slane %v8085, 4
        %v8087 = vrot.slane %v7962, 5
        %v8088 = vsel %vm6370, %v8086, %v8087
        %v8089 = vrot.slane %v8087, 4
        %v8090 = vrot.slane %v7963, 5
        %v8091 = vsel %vm6370, %v8089, %v8090
        %v8092 = vrot.slane %v7964, 5
        %v8093 = vrot.slane %v8092, 4
        %v8094 = vrot.slane %v7965, 5
        %v8095 = vsel %vm6370, %v8093, %v8094
        %v8096 = vrot.slane %v8094, 4
        %v8097 = vrot.slane %v7966, 5
        %v8098 = vsel %vm6370, %v8096, %v8097
        %v8099 = vrot.slane %v7967, 5
        %v8100 = vrot.slane %v8099, 4
        %v8101 = vrot.slane %v7968, 5
        %v8102 = vsel %vm6370, %v8100, %v8101
        %v8103 = vrot.slane %v8101, 4
        %v8104 = vrot.slane %v7969, 5
        %v8105 = vsel %vm6370, %v8103, %v8104
        %v8106 = vrot.slane %v7970, 5
        %v8107 = vrot.slane %v8106, 4
        %v8108 = vrot.slane %v7971, 5
        %v8109 = vsel %vm6370, %v8107, %v8108
        %v8110 = vrot.slane %v8108, 4
        %v8111 = vrot.slane %v7972, 5
        %v8112 = vsel %vm6370, %v8110, %v8111
        %v8113 = vrot.slane %v7973, 5
        %v8114 = vrot.slane %v8113, 4
        %v8115 = vrot.slane %v7974, 5
        %v8116 = vsel %vm6370, %v8114, %v8115
        %v8117 = vrot.slane %v8115, 4
        %v8118 = vrot.slane %v7975, 5
        %v8119 = vsel %vm6370, %v8117, %v8118
        %v8120 = vrot.slane %v7976, 5
        %v8121 = vrot.slane %v8120, 4
        %v8122 = vrot.slane %v7977, 5
        %v8123 = vsel %vm6370, %v8121, %v8122
        %v8124 = vrot.slane %v8122, 4
        %v8125 = vrot.slane %v7978, 5
        %v8126 = vsel %vm6370, %v8124, %v8125
        %v8127 = vrot.slane %v7979, 5
        %v8128 = vrot.slane %v8127, 4
        %v8129 = vrot.slane %v7980, 5
        %v8130 = vsel %vm6370, %v8128, %v8129
        %v8131 = vrot.slane %v8129, 4
        %v8132 = vrot.slane %v7981, 5
        %v8133 = vsel %vm6370, %v8131, %v8132
        %v8134 = vrot.slane %v7982, 5
        %v8135 = vrot.slane %v8134, 4
        %v8136 = vrot.slane %v7983, 5
        %v8137 = vsel %vm6370, %v8135, %v8136
        %v8138 = vrot.slane %v8136, 4
        %v8139 = vrot.slane %v7984, 5
        %v8140 = vsel %vm6370, %v8138, %v8139
        %v8141 = vrot.slane %v7985, 5
        %v8142 = vrot.slane %v8141, 4
        %v8143 = vrot.slane %v7986, 5
        %v8144 = vsel %vm6370, %v8142, %v8143
        %v8145 = vrot.slane %v8143, 4
        %v8146 = vrot.slane %v7987, 5
        %v8147 = vsel %vm6370, %v8145, %v8146
        %8180 = vst [vmem:[#allocation4 + $0x20] sm:$0xf] %v8039
        %8181 = vst [vmem:[#allocation4 + $0x44] sm:$0xf] %v8042
        %8182 = vst [vmem:[#allocation4 + $0x68] sm:$0xf] %v8046
        %8183 = vst [vmem:[#allocation4 + $0x8c] sm:$0xf] %v8049
        %8184 = vst [vmem:[#allocation4 + $0xb0] sm:$0xf] %v8053
        %8185 = vst [vmem:[#allocation4 + $0xd4] sm:$0xf] %v8056
        %8186 = vst [vmem:[#allocation4 + $0xf8] sm:$0xf] %v8060
        %8187 = vst [vmem:[#allocation4 + $0x11c] sm:$0xf] %v8063
        %8188 = vst [vmem:[#allocation4 + $0x140] sm:$0xf] %v8067
        %8189 = vst [vmem:[#allocation4 + $0x164] sm:$0xf] %v8070
        %8190 = vst [vmem:[#allocation4 + $0x188] sm:$0xf] %v8074
        %8191 = vst [vmem:[#allocation4 + $0x1ac] sm:$0xf] %v8077
        %8192 = vst [vmem:[#allocation4 + $0x1d0] sm:$0xf] %v8081
        %8193 = vst [vmem:[#allocation4 + $0x1f4] sm:$0xf] %v8084
        %8194 = vst [vmem:[#allocation4 + $0x218] sm:$0xf] %v8088
        %8195 = vst [vmem:[#allocation4 + $0x23c] sm:$0xf] %v8091
        %8196 = vst [vmem:[#allocation4 + $0x260] sm:$0xf] %v8095
        %8197 = vst [vmem:[#allocation4 + $0x284] sm:$0xf] %v8098
        %8198 = vst [vmem:[#allocation4 + $0x2a8] sm:$0xf] %v8102
        %8199 = vst [vmem:[#allocation4 + $0x2cc] sm:$0xf] %v8105
        %8200 = vst [vmem:[#allocation4 + $0x2f0] sm:$0xf] %v8109
        %8201 = vst [vmem:[#allocation4 + $0x314] sm:$0xf] %v8112
        %8202 = vst [vmem:[#allocation4 + $0x338] sm:$0xf] %v8116
        %8203 = vst [vmem:[#allocation4 + $0x35c] sm:$0xf] %v8119
        %8204 = vst [vmem:[#allocation4 + $0x380] sm:$0xf] %v8123
        %8205 = vst [vmem:[#allocation4 + $0x3a4] sm:$0xf] %v8126
        %8206 = vst [vmem:[#allocation4 + $0x3c8] sm:$0xf] %v8130
        %8207 = vst [vmem:[#allocation4 + $0x3ec] sm:$0xf] %v8133
        %8208 = vst [vmem:[#allocation4 + $0x410] sm:$0xf] %v8137
        %8209 = vst [vmem:[#allocation4 + $0x434] sm:$0xf] %v8140
        %8210 = vst [vmem:[#allocation4 + $0x458] sm:$0xf] %v8144
        %8211 = vst [vmem:[#allocation4 + $0x47c] sm:$0xf] %v8147
        %v8212 = vld [vmem:[#allocation4] sm:$0xff]
        %v8213 = vld [vmem:[#allocation4 + $0x8] sm:$0xff]
        %v8214 = vld [vmem:[#allocation4 + $0x10] sm:$0xff]
        %v8215 = vld [vmem:[#allocation4 + $0x18] sm:$0xff]
        %v8216 = vld [vmem:[#allocation4 + $0x20] sm:$0xf]
        %v8217 = vld [vmem:[#allocation4 + $0x24] sm:$0xff]
        %v8218 = vld [vmem:[#allocation4 + $0x2c] sm:$0xff]
        %v8219 = vld [vmem:[#allocation4 + $0x34] sm:$0xff]
        %v8220 = vld [vmem:[#allocation4 + $0x3c] sm:$0xff]
        %v8221 = vld [vmem:[#allocation4 + $0x44] sm:$0xf]
        %v8222 = vld [vmem:[#allocation4 + $0x48] sm:$0xff]
        %v8223 = vld [vmem:[#allocation4 + $0x50] sm:$0xff]
        %v8224 = vld [vmem:[#allocation4 + $0x58] sm:$0xff]
        %v8225 = vld [vmem:[#allocation4 + $0x60] sm:$0xff]
        %v8226 = vld [vmem:[#allocation4 + $0x68] sm:$0xf]
        %v8227 = vld [vmem:[#allocation4 + $0x6c] sm:$0xff]
        %v8228 = vld [vmem:[#allocation4 + $0x74] sm:$0xff]
        %v8229 = vld [vmem:[#allocation4 + $0x7c] sm:$0xff]
        %v8230 = vld [vmem:[#allocation4 + $0x84] sm:$0xff]
        %v8231 = vld [vmem:[#allocation4 + $0x8c] sm:$0xf]
        %v8232 = vld [vmem:[#allocation4 + $0x90] sm:$0xff]
        %v8233 = vld [vmem:[#allocation4 + $0x98] sm:$0xff]
        %v8234 = vld [vmem:[#allocation4 + $0xa0] sm:$0xff]
        %v8235 = vld [vmem:[#allocation4 + $0xa8] sm:$0xff]
        %v8236 = vld [vmem:[#allocation4 + $0xb0] sm:$0xf]
        %v8237 = vld [vmem:[#allocation4 + $0xb4] sm:$0xff]
        %v8238 = vld [vmem:[#allocation4 + $0xbc] sm:$0xff]
        %v8239 = vld [vmem:[#allocation4 + $0xc4] sm:$0xff]
        %v8240 = vld [vmem:[#allocation4 + $0xcc] sm:$0xff]
        %v8241 = vld [vmem:[#allocation4 + $0xd4] sm:$0xf]
        %v8242 = vld [vmem:[#allocation4 + $0xd8] sm:$0xff]
        %v8243 = vld [vmem:[#allocation4 + $0xe0] sm:$0xff]
        %v8244 = vld [vmem:[#allocation4 + $0xe8] sm:$0xff]
        %v8245 = vld [vmem:[#allocation4 + $0xf0] sm:$0xff]
        %v8246 = vld [vmem:[#allocation4 + $0xf8] sm:$0xf]
        %v8247 = vld [vmem:[#allocation4 + $0xfc] sm:$0xff]
        %v8248 = vld [vmem:[#allocation4 + $0x104] sm:$0xff]
        %v8249 = vld [vmem:[#allocation4 + $0x10c] sm:$0xff]
        %v8250 = vld [vmem:[#allocation4 + $0x114] sm:$0xff]
        %v8251 = vld [vmem:[#allocation4 + $0x11c] sm:$0xf]
        %v8252 = vld [vmem:[#allocation4 + $0x120] sm:$0xff]
        %v8253 = vld [vmem:[#allocation4 + $0x128] sm:$0xff]
        %v8254 = vld [vmem:[#allocation4 + $0x130] sm:$0xff]
        %v8255 = vld [vmem:[#allocation4 + $0x138] sm:$0xff]
        %v8256 = vld [vmem:[#allocation4 + $0x140] sm:$0xf]
        %v8257 = vld [vmem:[#allocation4 + $0x144] sm:$0xff]
        %v8258 = vld [vmem:[#allocation4 + $0x14c] sm:$0xff]
        %v8259 = vld [vmem:[#allocation4 + $0x154] sm:$0xff]
        %v8260 = vld [vmem:[#allocation4 + $0x15c] sm:$0xff]
        %v8261 = vld [vmem:[#allocation4 + $0x164] sm:$0xf]
        %v8262 = vld [vmem:[#allocation4 + $0x168] sm:$0xff]
        %v8263 = vld [vmem:[#allocation4 + $0x170] sm:$0xff]
        %v8264 = vld [vmem:[#allocation4 + $0x178] sm:$0xff]
        %v8265 = vld [vmem:[#allocation4 + $0x180] sm:$0xff]
        %v8266 = vld [vmem:[#allocation4 + $0x188] sm:$0xf]
        %v8267 = vld [vmem:[#allocation4 + $0x18c] sm:$0xff]
        %v8268 = vld [vmem:[#allocation4 + $0x194] sm:$0xff]
        %v8269 = vld [vmem:[#allocation4 + $0x19c] sm:$0xff]
        %v8270 = vld [vmem:[#allocation4 + $0x1a4] sm:$0xff]
        %v8271 = vld [vmem:[#allocation4 + $0x1ac] sm:$0xf]
        %v8272 = vld [vmem:[#allocation4 + $0x1b0] sm:$0xff]
        %v8273 = vld [vmem:[#allocation4 + $0x1b8] sm:$0xff]
        %v8274 = vld [vmem:[#allocation4 + $0x1c0] sm:$0xff]
        %v8275 = vld [vmem:[#allocation4 + $0x1c8] sm:$0xff]
        %v8276 = vld [vmem:[#allocation4 + $0x1d0] sm:$0xf]
        %v8277 = vld [vmem:[#allocation4 + $0x1d4] sm:$0xff]
        %v8278 = vld [vmem:[#allocation4 + $0x1dc] sm:$0xff]
        %v8279 = vld [vmem:[#allocation4 + $0x1e4] sm:$0xff]
        %v8280 = vld [vmem:[#allocation4 + $0x1ec] sm:$0xff]
        %v8281 = vld [vmem:[#allocation4 + $0x1f4] sm:$0xf]
        %v8282 = vld [vmem:[#allocation4 + $0x1f8] sm:$0xff]
        %v8283 = vld [vmem:[#allocation4 + $0x200] sm:$0xff]
        %v8284 = vld [vmem:[#allocation4 + $0x208] sm:$0xff]
        %v8285 = vld [vmem:[#allocation4 + $0x210] sm:$0xff]
        %v8286 = vld [vmem:[#allocation4 + $0x218] sm:$0xf]
        %v8287 = vld [vmem:[#allocation4 + $0x21c] sm:$0xff]
        %v8288 = vld [vmem:[#allocation4 + $0x224] sm:$0xff]
        %v8289 = vld [vmem:[#allocation4 + $0x22c] sm:$0xff]
        %v8290 = vld [vmem:[#allocation4 + $0x234] sm:$0xff]
        %v8291 = vld [vmem:[#allocation4 + $0x23c] sm:$0xf]
        %v8292 = vld [vmem:[#allocation4 + $0x240] sm:$0xff]
        %v8293 = vld [vmem:[#allocation4 + $0x248] sm:$0xff]
        %v8294 = vld [vmem:[#allocation4 + $0x250] sm:$0xff]
        %v8295 = vld [vmem:[#allocation4 + $0x258] sm:$0xff]
        %v8296 = vld [vmem:[#allocation4 + $0x260] sm:$0xf]
        %v8297 = vld [vmem:[#allocation4 + $0x264] sm:$0xff]
        %v8298 = vld [vmem:[#allocation4 + $0x26c] sm:$0xff]
        %v8299 = vld [vmem:[#allocation4 + $0x274] sm:$0xff]
        %v8300 = vld [vmem:[#allocation4 + $0x27c] sm:$0xff]
        %v8301 = vld [vmem:[#allocation4 + $0x284] sm:$0xf]
        %v8302 = vld [vmem:[#allocation4 + $0x288] sm:$0xff]
        %v8303 = vld [vmem:[#allocation4 + $0x290] sm:$0xff]
        %v8304 = vld [vmem:[#allocation4 + $0x298] sm:$0xff]
        %v8305 = vld [vmem:[#allocation4 + $0x2a0] sm:$0xff]
        %v8306 = vld [vmem:[#allocation4 + $0x2a8] sm:$0xf]
        %v8307 = vld [vmem:[#allocation4 + $0x2ac] sm:$0xff]
        %v8308 = vld [vmem:[#allocation4 + $0x2b4] sm:$0xff]
        %v8309 = vld [vmem:[#allocation4 + $0x2bc] sm:$0xff]
        %v8310 = vld [vmem:[#allocation4 + $0x2c4] sm:$0xff]
        %v8311 = vld [vmem:[#allocation4 + $0x2cc] sm:$0xf]
        %v8312 = vld [vmem:[#allocation4 + $0x2d0] sm:$0xff]
        %v8313 = vld [vmem:[#allocation4 + $0x2d8] sm:$0xff]
        %v8314 = vld [vmem:[#allocation4 + $0x2e0] sm:$0xff]
        %v8315 = vld [vmem:[#allocation4 + $0x2e8] sm:$0xff]
        %v8316 = vld [vmem:[#allocation4 + $0x2f0] sm:$0xf]
        %v8317 = vld [vmem:[#allocation4 + $0x2f4] sm:$0xff]
        %v8318 = vld [vmem:[#allocation4 + $0x2fc] sm:$0xff]
        %v8319 = vld [vmem:[#allocation4 + $0x304] sm:$0xff]
        %v8320 = vld [vmem:[#allocation4 + $0x30c] sm:$0xff]
        %v8321 = vld [vmem:[#allocation4 + $0x314] sm:$0xf]
        %v8322 = vld [vmem:[#allocation4 + $0x318] sm:$0xff]
        %v8323 = vld [vmem:[#allocation4 + $0x320] sm:$0xff]
        %v8324 = vld [vmem:[#allocation4 + $0x328] sm:$0xff]
        %v8325 = vld [vmem:[#allocation4 + $0x330] sm:$0xff]
        %v8326 = vld [vmem:[#allocation4 + $0x338] sm:$0xf]
        %v8327 = vld [vmem:[#allocation4 + $0x33c] sm:$0xff]
        %v8328 = vld [vmem:[#allocation4 + $0x344] sm:$0xff]
        %v8329 = vld [vmem:[#allocation4 + $0x34c] sm:$0xff]
        %v8330 = vld [vmem:[#allocation4 + $0x354] sm:$0xff]
        %v8331 = vld [vmem:[#allocation4 + $0x35c] sm:$0xf]
        %v8332 = vld [vmem:[#allocation4 + $0x360] sm:$0xff]
        %v8333 = vld [vmem:[#allocation4 + $0x368] sm:$0xff]
        %v8334 = vld [vmem:[#allocation4 + $0x370] sm:$0xff]
        %v8335 = vld [vmem:[#allocation4 + $0x378] sm:$0xff]
        %v8336 = vld [vmem:[#allocation4 + $0x380] sm:$0xf]
        %v8337 = vld [vmem:[#allocation4 + $0x384] sm:$0xff]
        %v8338 = vld [vmem:[#allocation4 + $0x38c] sm:$0xff]
        %v8339 = vld [vmem:[#allocation4 + $0x394] sm:$0xff]
        %v8340 = vld [vmem:[#allocation4 + $0x39c] sm:$0xff]
        %v8341 = vld [vmem:[#allocation4 + $0x3a4] sm:$0xf]
        %v8342 = vld [vmem:[#allocation4 + $0x3a8] sm:$0xff]
        %v8343 = vld [vmem:[#allocation4 + $0x3b0] sm:$0xff]
        %v8344 = vld [vmem:[#allocation4 + $0x3b8] sm:$0xff]
        %v8345 = vld [vmem:[#allocation4 + $0x3c0] sm:$0xff]
        %v8346 = vld [vmem:[#allocation4 + $0x3c8] sm:$0xf]
        %v8347 = vld [vmem:[#allocation4 + $0x3cc] sm:$0xff]
        %v8348 = vld [vmem:[#allocation4 + $0x3d4] sm:$0xff]
        %v8349 = vld [vmem:[#allocation4 + $0x3dc] sm:$0xff]
        %v8350 = vld [vmem:[#allocation4 + $0x3e4] sm:$0xff]
        %v8351 = vld [vmem:[#allocation4 + $0x3ec] sm:$0xf]
        %v8352 = vld [vmem:[#allocation4 + $0x3f0] sm:$0xff]
        %v8353 = vld [vmem:[#allocation4 + $0x3f8] sm:$0xff]
        %v8354 = vld [vmem:[#allocation4 + $0x400] sm:$0xff]
        %v8355 = vld [vmem:[#allocation4 + $0x408] sm:$0xff]
        %v8356 = vld [vmem:[#allocation4 + $0x410] sm:$0xf]
        %v8357 = vld [vmem:[#allocation4 + $0x414] sm:$0xff]
        %v8358 = vld [vmem:[#allocation4 + $0x41c] sm:$0xff]
        %v8359 = vld [vmem:[#allocation4 + $0x424] sm:$0xff]
        %v8360 = vld [vmem:[#allocation4 + $0x42c] sm:$0xff]
        %v8361 = vld [vmem:[#allocation4 + $0x434] sm:$0xf]
        %v8362 = vld [vmem:[#allocation4 + $0x438] sm:$0xff]
        %v8363 = vld [vmem:[#allocation4 + $0x440] sm:$0xff]
        %v8364 = vld [vmem:[#allocation4 + $0x448] sm:$0xff]
        %v8365 = vld [vmem:[#allocation4 + $0x450] sm:$0xff]
        %v8366 = vld [vmem:[#allocation4 + $0x458] sm:$0xf]
        %v8367 = vld [vmem:[#allocation4 + $0x45c] sm:$0xff]
        %v8368 = vld [vmem:[#allocation4 + $0x464] sm:$0xff]
        %v8369 = vld [vmem:[#allocation4 + $0x46c] sm:$0xff]
        %v8370 = vld [vmem:[#allocation4 + $0x474] sm:$0xff]
        %v8371 = vld [vmem:[#allocation4 + $0x47c] sm:$0xf]
        %v8372 = vld [vmem:[%s4] sm:$0xf]
        %v8373 = vld [vmem:[%s4 + $0x4] sm:$0xf]
        %v8374 = vld [vmem:[%s4 + $0x8] sm:$0xf]
        %v8375 = vld [vmem:[%s4 + $0xc] sm:$0xf]
        %v8376 = vld [vmem:[%s4 + $0x10] sm:$0xf]
        %v8377 = vld [vmem:[%s4 + $0x14] sm:$0xf]
        %v8378 = vld [vmem:[%s4 + $0x18] sm:$0xf]
        %v8379 = vld [vmem:[%s4 + $0x1c] sm:$0xf]
        %v8380 = vld [vmem:[%s4 + $0x20] sm:$0xf]
        %v8381 = vld [vmem:[%s4 + $0x24] sm:$0xf]
        %v8382 = vld [vmem:[%s4 + $0x28] sm:$0xf]
        %v8383 = vld [vmem:[%s4 + $0x2c] sm:$0xf]
        %v8384 = vld [vmem:[%s4 + $0x30] sm:$0xf]
        %v8385 = vld [vmem:[%s4 + $0x34] sm:$0xf]
        %v8386 = vld [vmem:[%s4 + $0x38] sm:$0xf]
        %v8387 = vld [vmem:[%s4 + $0x3c] sm:$0xf]
        %v8388 = vld [vmem:[%s4 + $0x40] sm:$0xf]
        %v8389 = vld [vmem:[%s4 + $0x44] sm:$0xf]
        %v8390 = vld [vmem:[%s4 + $0x48] sm:$0xf]
        %v8391 = vld [vmem:[%s4 + $0x4c] sm:$0xf]
        %v8392 = vld [vmem:[%s4 + $0x50] sm:$0xf]
        %v8393 = vld [vmem:[%s4 + $0x54] sm:$0xf]
        %v8394 = vld [vmem:[%s4 + $0x58] sm:$0xf]
        %v8395 = vld [vmem:[%s4 + $0x5c] sm:$0xf]
        %v8396 = vld [vmem:[%s4 + $0x60] sm:$0xf]
        %v8397 = vld [vmem:[%s4 + $0x64] sm:$0xf]
        %v8398 = vld [vmem:[%s4 + $0x68] sm:$0xf]
        %v8399 = vld [vmem:[%s4 + $0x6c] sm:$0xf]
        %v8400 = vld [vmem:[%s4 + $0x70] sm:$0xf]
        %v8401 = vld [vmem:[%s4 + $0x74] sm:$0xf]
        %v8402 = vld [vmem:[%s4 + $0x78] sm:$0xf]
        %v8403 = vld [vmem:[%s4 + $0x7c] sm:$0xf]
        %v8404 = vld [vmem:[%s4 + $0x80] sm:$0xf]
        %v8405 = vld [vmem:[%s4 + $0x84] sm:$0xf]
        %v8406 = vld [vmem:[%s4 + $0x88] sm:$0xf]
        %v8407 = vld [vmem:[%s4 + $0x8c] sm:$0xf]
        %v8408 = vld [vmem:[%s4 + $0x90] sm:$0xf]
        %v8409 = vld [vmem:[%s4 + $0x94] sm:$0xf]
        %v8410 = vld [vmem:[%s4 + $0x98] sm:$0xf]
        %v8411 = vld [vmem:[%s4 + $0x9c] sm:$0xf]
        %v8412 = vld [vmem:[%s4 + $0xa0] sm:$0xf]
        %v8413 = vld [vmem:[%s4 + $0xa4] sm:$0xf]
        %v8414 = vld [vmem:[%s4 + $0xa8] sm:$0xf]
        %v8415 = vld [vmem:[%s4 + $0xac] sm:$0xf]
        %v8416 = vld [vmem:[%s4 + $0xb0] sm:$0xf]
        %v8417 = vld [vmem:[%s4 + $0xb4] sm:$0xf]
        %v8418 = vld [vmem:[%s4 + $0xb8] sm:$0xf]
        %v8419 = vld [vmem:[%s4 + $0xbc] sm:$0xf]
        %v8420 = vld [vmem:[%s4 + $0xc0] sm:$0xf]
        %v8421 = vld [vmem:[%s4 + $0xc4] sm:$0xf]
        %v8422 = vld [vmem:[%s4 + $0xc8] sm:$0xf]
        %v8423 = vld [vmem:[%s4 + $0xcc] sm:$0xf]
        %v8424 = vld [vmem:[%s4 + $0xd0] sm:$0xf]
        %v8425 = vld [vmem:[%s4 + $0xd4] sm:$0xf]
        %v8426 = vld [vmem:[%s4 + $0xd8] sm:$0xf]
        %v8427 = vld [vmem:[%s4 + $0xdc] sm:$0xf]
        %v8428 = vld [vmem:[%s4 + $0xe0] sm:$0xf]
        %v8429 = vld [vmem:[%s4 + $0xe4] sm:$0xf]
        %v8430 = vld [vmem:[%s4 + $0xe8] sm:$0xf]
        %v8431 = vld [vmem:[%s4 + $0xec] sm:$0xf]
        %v8432 = vld [vmem:[%s4 + $0xf0] sm:$0xf]
        %v8433 = vld [vmem:[%s4 + $0xf4] sm:$0xf]
        %v8434 = vld [vmem:[%s4 + $0xf8] sm:$0xf]
        %v8435 = vld [vmem:[%s4 + $0xfc] sm:$0xf]
        %v8436 = vld [vmem:[%s4 + $0x100] sm:$0xf]
        %v8437 = vld [vmem:[%s4 + $0x104] sm:$0xf]
        %v8438 = vld [vmem:[%s4 + $0x108] sm:$0xf]
        %v8439 = vld [vmem:[%s4 + $0x10c] sm:$0xf]
        %v8440 = vld [vmem:[%s4 + $0x110] sm:$0xf]
        %v8441 = vld [vmem:[%s4 + $0x114] sm:$0xf]
        %v8442 = vld [vmem:[%s4 + $0x118] sm:$0xf]
        %v8443 = vld [vmem:[%s4 + $0x11c] sm:$0xf]
        %v8444 = vld [vmem:[%s4 + $0x120] sm:$0xf]
        %v8445 = vld [vmem:[%s4 + $0x124] sm:$0xf]
        %v8446 = vld [vmem:[%s4 + $0x128] sm:$0xf]
        %v8447 = vld [vmem:[%s4 + $0x12c] sm:$0xf]
        %v8448 = vld [vmem:[%s4 + $0x130] sm:$0xf]
        %v8449 = vld [vmem:[%s4 + $0x134] sm:$0xf]
        %v8450 = vld [vmem:[%s4 + $0x138] sm:$0xf]
        %v8451 = vld [vmem:[%s4 + $0x13c] sm:$0xf]
        %v8452 = vld [vmem:[%s4 + $0x140] sm:$0xf]
        %v8453 = vld [vmem:[%s4 + $0x144] sm:$0xf]
        %v8454 = vld [vmem:[%s4 + $0x148] sm:$0xf]
        %v8455 = vld [vmem:[%s4 + $0x14c] sm:$0xf]
        %v8456 = vld [vmem:[%s4 + $0x150] sm:$0xf]
        %v8457 = vld [vmem:[%s4 + $0x154] sm:$0xf]
        %v8458 = vld [vmem:[%s4 + $0x158] sm:$0xf]
        %v8459 = vld [vmem:[%s4 + $0x15c] sm:$0xf]
        %v8460 = vld [vmem:[%s4 + $0x160] sm:$0xf]
        %v8461 = vld [vmem:[%s4 + $0x164] sm:$0xf]
        %v8462 = vld [vmem:[%s4 + $0x168] sm:$0xf]
        %v8463 = vld [vmem:[%s4 + $0x16c] sm:$0xf]
        %v8464 = vld [vmem:[%s4 + $0x170] sm:$0xf]
        %v8465 = vld [vmem:[%s4 + $0x174] sm:$0xf]
        %v8466 = vld [vmem:[%s4 + $0x178] sm:$0xf]
        %v8467 = vld [vmem:[%s4 + $0x17c] sm:$0xf]
        %v8468 = vld [vmem:[%s4 + $0x180] sm:$0xf]
        %v8469 = vld [vmem:[%s4 + $0x184] sm:$0xf]
        %v8470 = vld [vmem:[%s4 + $0x188] sm:$0xf]
        %v8471 = vld [vmem:[%s4 + $0x18c] sm:$0xf]
        %v8472 = vld [vmem:[%s4 + $0x190] sm:$0xf]
        %v8473 = vld [vmem:[%s4 + $0x194] sm:$0xf]
        %v8474 = vld [vmem:[%s4 + $0x198] sm:$0xf]
        %v8475 = vld [vmem:[%s4 + $0x19c] sm:$0xf]
        %v8476 = vld [vmem:[%s4 + $0x1a0] sm:$0xf]
        %v8477 = vld [vmem:[%s4 + $0x1a4] sm:$0xf]
        %v8478 = vld [vmem:[%s4 + $0x1a8] sm:$0xf]
        %v8479 = vld [vmem:[%s4 + $0x1ac] sm:$0xf]
        %v8480 = vld [vmem:[%s4 + $0x1b0] sm:$0xf]
        %v8481 = vld [vmem:[%s4 + $0x1b4] sm:$0xf]
        %v8482 = vld [vmem:[%s4 + $0x1b8] sm:$0xf]
        %v8483 = vld [vmem:[%s4 + $0x1bc] sm:$0xf]
        %v8484 = vld [vmem:[%s4 + $0x1c0] sm:$0xf]
        %v8485 = vld [vmem:[%s4 + $0x1c4] sm:$0xf]
        %v8486 = vld [vmem:[%s4 + $0x1c8] sm:$0xf]
        %v8487 = vld [vmem:[%s4 + $0x1cc] sm:$0xf]
        %v8488 = vld [vmem:[%s4 + $0x1d0] sm:$0xf]
        %v8489 = vld [vmem:[%s4 + $0x1d4] sm:$0xf]
        %v8490 = vld [vmem:[%s4 + $0x1d8] sm:$0xf]
        %v8491 = vld [vmem:[%s4 + $0x1dc] sm:$0xf]
        %v8492 = vld [vmem:[%s4 + $0x1e0] sm:$0xf]
        %v8493 = vld [vmem:[%s4 + $0x1e4] sm:$0xf]
        %v8494 = vld [vmem:[%s4 + $0x1e8] sm:$0xf]
        %v8495 = vld [vmem:[%s4 + $0x1ec] sm:$0xf]
        %v8496 = vld [vmem:[%s4 + $0x1f0] sm:$0xf]
        %v8497 = vld [vmem:[%s4 + $0x1f4] sm:$0xf]
        %v8498 = vld [vmem:[%s4 + $0x1f8] sm:$0xf]
        %v8499 = vld [vmem:[%s4 + $0x1fc] sm:$0xf]
        %v8500 = vld [vmem:[%s4 + $0x200] sm:$0xf]
        %v8501 = vld [vmem:[%s4 + $0x204] sm:$0xf]
        %v8502 = vld [vmem:[%s4 + $0x208] sm:$0xf]
        %v8503 = vld [vmem:[%s4 + $0x20c] sm:$0xf]
        %v8504 = vld [vmem:[%s4 + $0x210] sm:$0xf]
        %v8505 = vld [vmem:[%s4 + $0x214] sm:$0xf]
        %v8506 = vld [vmem:[%s4 + $0x218] sm:$0xf]
        %v8507 = vld [vmem:[%s4 + $0x21c] sm:$0xf]
        %v8508 = vld [vmem:[%s4 + $0x220] sm:$0xf]
        %v8509 = vld [vmem:[%s4 + $0x224] sm:$0xf]
        %v8510 = vld [vmem:[%s4 + $0x228] sm:$0xf]
        %v8511 = vld [vmem:[%s4 + $0x22c] sm:$0xf]
        %v8512 = vld [vmem:[%s4 + $0x230] sm:$0xf]
        %v8513 = vld [vmem:[%s4 + $0x234] sm:$0xf]
        %v8514 = vld [vmem:[%s4 + $0x238] sm:$0xf]
        %v8515 = vld [vmem:[%s4 + $0x23c] sm:$0xf]
        %v8676 = vunpack.c.l.b16 %v8212
        %v8677 = vunpack.c.h.b16 %v8212
        %v8678 = vunpack.c.l.b16 %v8213
        %v8679 = vunpack.c.h.b16 %v8213
        %v8680 = vunpack.c.l.b16 %v8214
        %v8681 = vunpack.c.h.b16 %v8214
        %v8682 = vunpack.c.l.b16 %v8215
        %v8683 = vunpack.c.h.b16 %v8215
        %v8684 = vunpack.c.l.b16 %v8216
        %v8685 = vunpack.c.l.b16 %v8217
        %v8686 = vunpack.c.h.b16 %v8217
        %v8687 = vunpack.c.l.b16 %v8218
        %v8688 = vunpack.c.h.b16 %v8218
        %v8689 = vunpack.c.l.b16 %v8219
        %v8690 = vunpack.c.h.b16 %v8219
        %v8691 = vunpack.c.l.b16 %v8220
        %v8692 = vunpack.c.h.b16 %v8220
        %v8693 = vunpack.c.l.b16 %v8221
        %v8694 = vunpack.c.l.b16 %v8222
        %v8695 = vunpack.c.h.b16 %v8222
        %v8696 = vunpack.c.l.b16 %v8223
        %v8697 = vunpack.c.h.b16 %v8223
        %v8698 = vunpack.c.l.b16 %v8224
        %v8699 = vunpack.c.h.b16 %v8224
        %v8700 = vunpack.c.l.b16 %v8225
        %v8701 = vunpack.c.h.b16 %v8225
        %v8702 = vunpack.c.l.b16 %v8226
        %v8703 = vunpack.c.l.b16 %v8227
        %v8704 = vunpack.c.h.b16 %v8227
        %v8705 = vunpack.c.l.b16 %v8228
        %v8706 = vunpack.c.h.b16 %v8228
        %v8707 = vunpack.c.l.b16 %v8229
        %v8708 = vunpack.c.h.b16 %v8229
        %v8709 = vunpack.c.l.b16 %v8230
        %v8710 = vunpack.c.h.b16 %v8230
        %v8711 = vunpack.c.l.b16 %v8231
        %v8712 = vunpack.c.l.b16 %v8232
        %v8713 = vunpack.c.h.b16 %v8232
        %v8714 = vunpack.c.l.b16 %v8233
        %v8715 = vunpack.c.h.b16 %v8233
        %v8716 = vunpack.c.l.b16 %v8234
        %v8717 = vunpack.c.h.b16 %v8234
        %v8718 = vunpack.c.l.b16 %v8235
        %v8719 = vunpack.c.h.b16 %v8235
        %v8720 = vunpack.c.l.b16 %v8236
        %v8721 = vunpack.c.l.b16 %v8237
        %v8722 = vunpack.c.h.b16 %v8237
        %v8723 = vunpack.c.l.b16 %v8238
        %v8724 = vunpack.c.h.b16 %v8238
        %v8725 = vunpack.c.l.b16 %v8239
        %v8726 = vunpack.c.h.b16 %v8239
        %v8727 = vunpack.c.l.b16 %v8240
        %v8728 = vunpack.c.h.b16 %v8240
        %v8729 = vunpack.c.l.b16 %v8241
        %v8730 = vunpack.c.l.b16 %v8242
        %v8731 = vunpack.c.h.b16 %v8242
        %v8732 = vunpack.c.l.b16 %v8243
        %v8733 = vunpack.c.h.b16 %v8243
        %v8734 = vunpack.c.l.b16 %v8244
        %v8735 = vunpack.c.h.b16 %v8244
        %v8736 = vunpack.c.l.b16 %v8245
        %v8737 = vunpack.c.h.b16 %v8245
        %v8738 = vunpack.c.l.b16 %v8246
        %v8739 = vunpack.c.l.b16 %v8247
        %v8740 = vunpack.c.h.b16 %v8247
        %v8741 = vunpack.c.l.b16 %v8248
        %v8742 = vunpack.c.h.b16 %v8248
        %v8743 = vunpack.c.l.b16 %v8249
        %v8744 = vunpack.c.h.b16 %v8249
        %v8745 = vunpack.c.l.b16 %v8250
        %v8746 = vunpack.c.h.b16 %v8250
        %v8747 = vunpack.c.l.b16 %v8251
        %v8748 = vunpack.c.l.b16 %v8252
        %v8749 = vunpack.c.h.b16 %v8252
        %v8750 = vunpack.c.l.b16 %v8253
        %v8751 = vunpack.c.h.b16 %v8253
        %v8752 = vunpack.c.l.b16 %v8254
        %v8753 = vunpack.c.h.b16 %v8254
        %v8754 = vunpack.c.l.b16 %v8255
        %v8755 = vunpack.c.h.b16 %v8255
        %v8756 = vunpack.c.l.b16 %v8256
        %v8757 = vunpack.c.l.b16 %v8257
        %v8758 = vunpack.c.h.b16 %v8257
        %v8759 = vunpack.c.l.b16 %v8258
        %v8760 = vunpack.c.h.b16 %v8258
        %v8761 = vunpack.c.l.b16 %v8259
        %v8762 = vunpack.c.h.b16 %v8259
        %v8763 = vunpack.c.l.b16 %v8260
        %v8764 = vunpack.c.h.b16 %v8260
        %v8765 = vunpack.c.l.b16 %v8261
        %v8766 = vunpack.c.l.b16 %v8262
        %v8767 = vunpack.c.h.b16 %v8262
        %v8768 = vunpack.c.l.b16 %v8263
        %v8769 = vunpack.c.h.b16 %v8263
        %v8770 = vunpack.c.l.b16 %v8264
        %v8771 = vunpack.c.h.b16 %v8264
        %v8772 = vunpack.c.l.b16 %v8265
        %v8773 = vunpack.c.h.b16 %v8265
        %v8774 = vunpack.c.l.b16 %v8266
        %v8775 = vunpack.c.l.b16 %v8267
        %v8776 = vunpack.c.h.b16 %v8267
        %v8777 = vunpack.c.l.b16 %v8268
        %v8778 = vunpack.c.h.b16 %v8268
        %v8779 = vunpack.c.l.b16 %v8269
        %v8780 = vunpack.c.h.b16 %v8269
        %v8781 = vunpack.c.l.b16 %v8270
        %v8782 = vunpack.c.h.b16 %v8270
        %v8783 = vunpack.c.l.b16 %v8271
        %v8784 = vunpack.c.l.b16 %v8272
        %v8785 = vunpack.c.h.b16 %v8272
        %v8786 = vunpack.c.l.b16 %v8273
        %v8787 = vunpack.c.h.b16 %v8273
        %v8788 = vunpack.c.l.b16 %v8274
        %v8789 = vunpack.c.h.b16 %v8274
        %v8790 = vunpack.c.l.b16 %v8275
        %v8791 = vunpack.c.h.b16 %v8275
        %v8792 = vunpack.c.l.b16 %v8276
        %v8793 = vunpack.c.l.b16 %v8277
        %v8794 = vunpack.c.h.b16 %v8277
        %v8795 = vunpack.c.l.b16 %v8278
        %v8796 = vunpack.c.h.b16 %v8278
        %v8797 = vunpack.c.l.b16 %v8279
        %v8798 = vunpack.c.h.b16 %v8279
        %v8799 = vunpack.c.l.b16 %v8280
        %v8800 = vunpack.c.h.b16 %v8280
        %v8801 = vunpack.c.l.b16 %v8281
        %v8802 = vunpack.c.l.b16 %v8282
        %v8803 = vunpack.c.h.b16 %v8282
        %v8804 = vunpack.c.l.b16 %v8283
        %v8805 = vunpack.c.h.b16 %v8283
        %v8806 = vunpack.c.l.b16 %v8284
        %v8807 = vunpack.c.h.b16 %v8284
        %v8808 = vunpack.c.l.b16 %v8285
        %v8809 = vunpack.c.h.b16 %v8285
        %v8810 = vunpack.c.l.b16 %v8286
        %v8811 = vunpack.c.l.b16 %v8287
        %v8812 = vunpack.c.h.b16 %v8287
        %v8813 = vunpack.c.l.b16 %v8288
        %v8814 = vunpack.c.h.b16 %v8288
        %v8815 = vunpack.c.l.b16 %v8289
        %v8816 = vunpack.c.h.b16 %v8289
        %v8817 = vunpack.c.l.b16 %v8290
        %v8818 = vunpack.c.h.b16 %v8290
        %v8819 = vunpack.c.l.b16 %v8291
        %v8820 = vunpack.c.l.b16 %v8292
        %v8821 = vunpack.c.h.b16 %v8292
        %v8822 = vunpack.c.l.b16 %v8293
        %v8823 = vunpack.c.h.b16 %v8293
        %v8824 = vunpack.c.l.b16 %v8294
        %v8825 = vunpack.c.h.b16 %v8294
        %v8826 = vunpack.c.l.b16 %v8295
        %v8827 = vunpack.c.h.b16 %v8295
        %v8828 = vunpack.c.l.b16 %v8296
        %v8829 = vunpack.c.l.b16 %v8297
        %v8830 = vunpack.c.h.b16 %v8297
        %v8831 = vunpack.c.l.b16 %v8298
        %v8832 = vunpack.c.h.b16 %v8298
        %v8833 = vunpack.c.l.b16 %v8299
        %v8834 = vunpack.c.h.b16 %v8299
        %v8835 = vunpack.c.l.b16 %v8300
        %v8836 = vunpack.c.h.b16 %v8300
        %v8837 = vunpack.c.l.b16 %v8301
        %v8838 = vunpack.c.l.b16 %v8302
        %v8839 = vunpack.c.h.b16 %v8302
        %v8840 = vunpack.c.l.b16 %v8303
        %v8841 = vunpack.c.h.b16 %v8303
        %v8842 = vunpack.c.l.b16 %v8304
        %v8843 = vunpack.c.h.b16 %v8304
        %v8844 = vunpack.c.l.b16 %v8305
        %v8845 = vunpack.c.h.b16 %v8305
        %v8846 = vunpack.c.l.b16 %v8306
        %v8847 = vunpack.c.l.b16 %v8307
        %v8848 = vunpack.c.h.b16 %v8307
        %v8849 = vunpack.c.l.b16 %v8308
        %v8850 = vunpack.c.h.b16 %v8308
        %v8851 = vunpack.c.l.b16 %v8309
        %v8852 = vunpack.c.h.b16 %v8309
        %v8853 = vunpack.c.l.b16 %v8310
        %v8854 = vunpack.c.h.b16 %v8310
        %v8855 = vunpack.c.l.b16 %v8311
        %v8856 = vunpack.c.l.b16 %v8312
        %v8857 = vunpack.c.h.b16 %v8312
        %v8858 = vunpack.c.l.b16 %v8313
        %v8859 = vunpack.c.h.b16 %v8313
        %v8860 = vunpack.c.l.b16 %v8314
        %v8861 = vunpack.c.h.b16 %v8314
        %v8862 = vunpack.c.l.b16 %v8315
        %v8863 = vunpack.c.h.b16 %v8315
        %v8864 = vunpack.c.l.b16 %v8316
        %v8865 = vunpack.c.l.b16 %v8317
        %v8866 = vunpack.c.h.b16 %v8317
        %v8867 = vunpack.c.l.b16 %v8318
        %v8868 = vunpack.c.h.b16 %v8318
        %v8869 = vunpack.c.l.b16 %v8319
        %v8870 = vunpack.c.h.b16 %v8319
        %v8871 = vunpack.c.l.b16 %v8320
        %v8872 = vunpack.c.h.b16 %v8320
        %v8873 = vunpack.c.l.b16 %v8321
        %v8874 = vunpack.c.l.b16 %v8322
        %v8875 = vunpack.c.h.b16 %v8322
        %v8876 = vunpack.c.l.b16 %v8323
        %v8877 = vunpack.c.h.b16 %v8323
        %v8878 = vunpack.c.l.b16 %v8324
        %v8879 = vunpack.c.h.b16 %v8324
        %v8880 = vunpack.c.l.b16 %v8325
        %v8881 = vunpack.c.h.b16 %v8325
        %v8882 = vunpack.c.l.b16 %v8326
        %v8883 = vunpack.c.l.b16 %v8327
        %v8884 = vunpack.c.h.b16 %v8327
        %v8885 = vunpack.c.l.b16 %v8328
        %v8886 = vunpack.c.h.b16 %v8328
        %v8887 = vunpack.c.l.b16 %v8329
        %v8888 = vunpack.c.h.b16 %v8329
        %v8889 = vunpack.c.l.b16 %v8330
        %v8890 = vunpack.c.h.b16 %v8330
        %v8891 = vunpack.c.l.b16 %v8331
        %v8892 = vunpack.c.l.b16 %v8332
        %v8893 = vunpack.c.h.b16 %v8332
        %v8894 = vunpack.c.l.b16 %v8333
        %v8895 = vunpack.c.h.b16 %v8333
        %v8896 = vunpack.c.l.b16 %v8334
        %v8897 = vunpack.c.h.b16 %v8334
        %v8898 = vunpack.c.l.b16 %v8335
        %v8899 = vunpack.c.h.b16 %v8335
        %v8900 = vunpack.c.l.b16 %v8336
        %v8901 = vunpack.c.l.b16 %v8337
        %v8902 = vunpack.c.h.b16 %v8337
        %v8903 = vunpack.c.l.b16 %v8338
        %v8904 = vunpack.c.h.b16 %v8338
        %v8905 = vunpack.c.l.b16 %v8339
        %v8906 = vunpack.c.h.b16 %v8339
        %v8907 = vunpack.c.l.b16 %v8340
        %v8908 = vunpack.c.h.b16 %v8340
        %v8909 = vunpack.c.l.b16 %v8341
        %v8910 = vunpack.c.l.b16 %v8342
        %v8911 = vunpack.c.h.b16 %v8342
        %v8912 = vunpack.c.l.b16 %v8343
        %v8913 = vunpack.c.h.b16 %v8343
        %v8914 = vunpack.c.l.b16 %v8344
        %v8915 = vunpack.c.h.b16 %v8344
        %v8916 = vunpack.c.l.b16 %v8345
        %v8917 = vunpack.c.h.b16 %v8345
        %v8918 = vunpack.c.l.b16 %v8346
        %v8919 = vunpack.c.l.b16 %v8347
        %v8920 = vunpack.c.h.b16 %v8347
        %v8921 = vunpack.c.l.b16 %v8348
        %v8922 = vunpack.c.h.b16 %v8348
        %v8923 = vunpack.c.l.b16 %v8349
        %v8924 = vunpack.c.h.b16 %v8349
        %v8925 = vunpack.c.l.b16 %v8350
        %v8926 = vunpack.c.h.b16 %v8350
        %v8927 = vunpack.c.l.b16 %v8351
        %v8928 = vunpack.c.l.b16 %v8352
        %v8929 = vunpack.c.h.b16 %v8352
        %v8930 = vunpack.c.l.b16 %v8353
        %v8931 = vunpack.c.h.b16 %v8353
        %v8932 = vunpack.c.l.b16 %v8354
        %v8933 = vunpack.c.h.b16 %v8354
        %v8934 = vunpack.c.l.b16 %v8355
        %v8935 = vunpack.c.h.b16 %v8355
        %v8936 = vunpack.c.l.b16 %v8356
        %v8937 = vunpack.c.l.b16 %v8357
        %v8938 = vunpack.c.h.b16 %v8357
        %v8939 = vunpack.c.l.b16 %v8358
        %v8940 = vunpack.c.h.b16 %v8358
        %v8941 = vunpack.c.l.b16 %v8359
        %v8942 = vunpack.c.h.b16 %v8359
        %v8943 = vunpack.c.l.b16 %v8360
        %v8944 = vunpack.c.h.b16 %v8360
        %v8945 = vunpack.c.l.b16 %v8361
        %v8946 = vunpack.c.l.b16 %v8362
        %v8947 = vunpack.c.h.b16 %v8362
        %v8948 = vunpack.c.l.b16 %v8363
        %v8949 = vunpack.c.h.b16 %v8363
        %v8950 = vunpack.c.l.b16 %v8364
        %v8951 = vunpack.c.h.b16 %v8364
        %v8952 = vunpack.c.l.b16 %v8365
        %v8953 = vunpack.c.h.b16 %v8365
        %v8954 = vunpack.c.l.b16 %v8366
        %v8955 = vunpack.c.l.b16 %v8367
        %v8956 = vunpack.c.h.b16 %v8367
        %v8957 = vunpack.c.l.b16 %v8368
        %v8958 = vunpack.c.h.b16 %v8368
        %v8959 = vunpack.c.l.b16 %v8369
        %v8960 = vunpack.c.h.b16 %v8369
        %v8961 = vunpack.c.l.b16 %v8370
        %v8962 = vunpack.c.h.b16 %v8370
        %v8963 = vunpack.c.l.b16 %v8371
        %v8964 = vpack.c.b16 %v8685, %v8676
        %v8965 = vpack.c.b16 %v8686, %v8677
        %v8966 = vpack.c.b16 %v8687, %v8678
        %v8967 = vpack.c.b16 %v8688, %v8679
        %v8968 = vpack.c.b16 %v8689, %v8680
        %v8969 = vpack.c.b16 %v8690, %v8681
        %v8970 = vpack.c.b16 %v8691, %v8682
        %v8971 = vpack.c.b16 %v8692, %v8683
        %v8972 = vpack.c.b16 %v8693, %v8684
        %v8973 = vpack.c.b16 %v8703, %v8694
        %v8974 = vpack.c.b16 %v8704, %v8695
        %v8975 = vpack.c.b16 %v8705, %v8696
        %v8976 = vpack.c.b16 %v8706, %v8697
        %v8977 = vpack.c.b16 %v8707, %v8698
        %v8978 = vpack.c.b16 %v8708, %v8699
        %v8979 = vpack.c.b16 %v8709, %v8700
        %v8980 = vpack.c.b16 %v8710, %v8701
        %v8981 = vpack.c.b16 %v8711, %v8702
        %v8982 = vpack.c.b16 %v8721, %v8712
        %v8983 = vpack.c.b16 %v8722, %v8713
        %v8984 = vpack.c.b16 %v8723, %v8714
        %v8985 = vpack.c.b16 %v8724, %v8715
        %v8986 = vpack.c.b16 %v8725, %v8716
        %v8987 = vpack.c.b16 %v8726, %v8717
        %v8988 = vpack.c.b16 %v8727, %v8718
        %v8989 = vpack.c.b16 %v8728, %v8719
        %v8990 = vpack.c.b16 %v8729, %v8720
        %v8991 = vpack.c.b16 %v8739, %v8730
        %v8992 = vpack.c.b16 %v8740, %v8731
        %v8993 = vpack.c.b16 %v8741, %v8732
        %v8994 = vpack.c.b16 %v8742, %v8733
        %v8995 = vpack.c.b16 %v8743, %v8734
        %v8996 = vpack.c.b16 %v8744, %v8735
        %v8997 = vpack.c.b16 %v8745, %v8736
        %v8998 = vpack.c.b16 %v8746, %v8737
        %v8999 = vpack.c.b16 %v8747, %v8738
        %v9000 = vpack.c.b16 %v8757, %v8748
        %v9001 = vpack.c.b16 %v8758, %v8749
        %v9002 = vpack.c.b16 %v8759, %v8750
        %v9003 = vpack.c.b16 %v8760, %v8751
        %v9004 = vpack.c.b16 %v8761, %v8752
        %v9005 = vpack.c.b16 %v8762, %v8753
        %v9006 = vpack.c.b16 %v8763, %v8754
        %v9007 = vpack.c.b16 %v8764, %v8755
        %v9008 = vpack.c.b16 %v8765, %v8756
        %v9009 = vpack.c.b16 %v8775, %v8766
        %v9010 = vpack.c.b16 %v8776, %v8767
        %v9011 = vpack.c.b16 %v8777, %v8768
        %v9012 = vpack.c.b16 %v8778, %v8769
        %v9013 = vpack.c.b16 %v8779, %v8770
        %v9014 = vpack.c.b16 %v8780, %v8771
        %v9015 = vpack.c.b16 %v8781, %v8772
        %v9016 = vpack.c.b16 %v8782, %v8773
        %v9017 = vpack.c.b16 %v8783, %v8774
        %v9018 = vpack.c.b16 %v8793, %v8784
        %v9019 = vpack.c.b16 %v8794, %v8785
        %v9020 = vpack.c.b16 %v8795, %v8786
        %v9021 = vpack.c.b16 %v8796, %v8787
        %v9022 = vpack.c.b16 %v8797, %v8788
        %v9023 = vpack.c.b16 %v8798, %v8789
        %v9024 = vpack.c.b16 %v8799, %v8790
        %v9025 = vpack.c.b16 %v8800, %v8791
        %v9026 = vpack.c.b16 %v8801, %v8792
        %v9027 = vpack.c.b16 %v8811, %v8802
        %v9028 = vpack.c.b16 %v8812, %v8803
        %v9029 = vpack.c.b16 %v8813, %v8804
        %v9030 = vpack.c.b16 %v8814, %v8805
        %v9031 = vpack.c.b16 %v8815, %v8806
        %v9032 = vpack.c.b16 %v8816, %v8807
        %v9033 = vpack.c.b16 %v8817, %v8808
        %v9034 = vpack.c.b16 %v8818, %v8809
        %v9035 = vpack.c.b16 %v8819, %v8810
        %v9036 = vpack.c.b16 %v8829, %v8820
        %v9037 = vpack.c.b16 %v8830, %v8821
        %v9038 = vpack.c.b16 %v8831, %v8822
        %v9039 = vpack.c.b16 %v8832, %v8823
        %v9040 = vpack.c.b16 %v8833, %v8824
        %v9041 = vpack.c.b16 %v8834, %v8825
        %v9042 = vpack.c.b16 %v8835, %v8826
        %v9043 = vpack.c.b16 %v8836, %v8827
        %v9044 = vpack.c.b16 %v8837, %v8828
        %v9045 = vpack.c.b16 %v8847, %v8838
        %v9046 = vpack.c.b16 %v8848, %v8839
        %v9047 = vpack.c.b16 %v8849, %v8840
        %v9048 = vpack.c.b16 %v8850, %v8841
        %v9049 = vpack.c.b16 %v8851, %v8842
        %v9050 = vpack.c.b16 %v8852, %v8843
        %v9051 = vpack.c.b16 %v8853, %v8844
        %v9052 = vpack.c.b16 %v8854, %v8845
        %v9053 = vpack.c.b16 %v8855, %v8846
        %v9054 = vpack.c.b16 %v8865, %v8856
        %v9055 = vpack.c.b16 %v8866, %v8857
        %v9056 = vpack.c.b16 %v8867, %v8858
        %v9057 = vpack.c.b16 %v8868, %v8859
        %v9058 = vpack.c.b16 %v8869, %v8860
        %v9059 = vpack.c.b16 %v8870, %v8861
        %v9060 = vpack.c.b16 %v8871, %v8862
        %v9061 = vpack.c.b16 %v8872, %v8863
        %v9062 = vpack.c.b16 %v8873, %v8864
        %v9063 = vpack.c.b16 %v8883, %v8874
        %v9064 = vpack.c.b16 %v8884, %v8875
        %v9065 = vpack.c.b16 %v8885, %v8876
        %v9066 = vpack.c.b16 %v8886, %v8877
        %v9067 = vpack.c.b16 %v8887, %v8878
        %v9068 = vpack.c.b16 %v8888, %v8879
        %v9069 = vpack.c.b16 %v8889, %v8880
        %v9070 = vpack.c.b16 %v8890, %v8881
        %v9071 = vpack.c.b16 %v8891, %v8882
        %v9072 = vpack.c.b16 %v8901, %v8892
        %v9073 = vpack.c.b16 %v8902, %v8893
        %v9074 = vpack.c.b16 %v8903, %v8894
        %v9075 = vpack.c.b16 %v8904, %v8895
        %v9076 = vpack.c.b16 %v8905, %v8896
        %v9077 = vpack.c.b16 %v8906, %v8897
        %v9078 = vpack.c.b16 %v8907, %v8898
        %v9079 = vpack.c.b16 %v8908, %v8899
        %v9080 = vpack.c.b16 %v8909, %v8900
        %v9081 = vpack.c.b16 %v8919, %v8910
        %v9082 = vpack.c.b16 %v8920, %v8911
        %v9083 = vpack.c.b16 %v8921, %v8912
        %v9084 = vpack.c.b16 %v8922, %v8913
        %v9085 = vpack.c.b16 %v8923, %v8914
        %v9086 = vpack.c.b16 %v8924, %v8915
        %v9087 = vpack.c.b16 %v8925, %v8916
        %v9088 = vpack.c.b16 %v8926, %v8917
        %v9089 = vpack.c.b16 %v8927, %v8918
        %v9090 = vpack.c.b16 %v8937, %v8928
        %v9091 = vpack.c.b16 %v8938, %v8929
        %v9092 = vpack.c.b16 %v8939, %v8930
        %v9093 = vpack.c.b16 %v8940, %v8931
        %v9094 = vpack.c.b16 %v8941, %v8932
        %v9095 = vpack.c.b16 %v8942, %v8933
        %v9096 = vpack.c.b16 %v8943, %v8934
        %v9097 = vpack.c.b16 %v8944, %v8935
        %v9098 = vpack.c.b16 %v8945, %v8936
        %v9099 = vpack.c.b16 %v8955, %v8946
        %v9100 = vpack.c.b16 %v8956, %v8947
        %v9101 = vpack.c.b16 %v8957, %v8948
        %v9102 = vpack.c.b16 %v8958, %v8949
        %v9103 = vpack.c.b16 %v8959, %v8950
        %v9104 = vpack.c.b16 %v8960, %v8951
        %v9105 = vpack.c.b16 %v8961, %v8952
        %v9106 = vpack.c.b16 %v8962, %v8953
        %v9107 = vpack.c.b16 %v8963, %v8954
        %v9396 = vunpack.c.l.b16 %v8372
        %v9397 = vunpack.c.l.b16 %v8373
        %v9398 = vunpack.c.l.b16 %v8374
        %v9399 = vunpack.c.l.b16 %v8375
        %v9400 = vunpack.c.l.b16 %v8376
        %v9401 = vunpack.c.l.b16 %v8377
        %v9402 = vunpack.c.l.b16 %v8378
        %v9403 = vunpack.c.l.b16 %v8379
        %v9404 = vunpack.c.l.b16 %v8380
        %v9405 = vunpack.c.l.b16 %v8381
        %v9406 = vunpack.c.l.b16 %v8382
        %v9407 = vunpack.c.l.b16 %v8383
        %v9408 = vunpack.c.l.b16 %v8384
        %v9409 = vunpack.c.l.b16 %v8385
        %v9410 = vunpack.c.l.b16 %v8386
        %v9411 = vunpack.c.l.b16 %v8387
        %v9412 = vunpack.c.l.b16 %v8388
        %v9413 = vunpack.c.l.b16 %v8389
        %v9414 = vunpack.c.l.b16 %v8390
        %v9415 = vunpack.c.l.b16 %v8391
        %v9416 = vunpack.c.l.b16 %v8392
        %v9417 = vunpack.c.l.b16 %v8393
        %v9418 = vunpack.c.l.b16 %v8394
        %v9419 = vunpack.c.l.b16 %v8395
        %v9420 = vunpack.c.l.b16 %v8396
        %v9421 = vunpack.c.l.b16 %v8397
        %v9422 = vunpack.c.l.b16 %v8398
        %v9423 = vunpack.c.l.b16 %v8399
        %v9424 = vunpack.c.l.b16 %v8400
        %v9425 = vunpack.c.l.b16 %v8401
        %v9426 = vunpack.c.l.b16 %v8402
        %v9427 = vunpack.c.l.b16 %v8403
        %v9428 = vunpack.c.l.b16 %v8404
        %v9429 = vunpack.c.l.b16 %v8405
        %v9430 = vunpack.c.l.b16 %v8406
        %v9431 = vunpack.c.l.b16 %v8407
        %v9432 = vunpack.c.l.b16 %v8408
        %v9433 = vunpack.c.l.b16 %v8409
        %v9434 = vunpack.c.l.b16 %v8410
        %v9435 = vunpack.c.l.b16 %v8411
        %v9436 = vunpack.c.l.b16 %v8412
        %v9437 = vunpack.c.l.b16 %v8413
        %v9438 = vunpack.c.l.b16 %v8414
        %v9439 = vunpack.c.l.b16 %v8415
        %v9440 = vunpack.c.l.b16 %v8416
        %v9441 = vunpack.c.l.b16 %v8417
        %v9442 = vunpack.c.l.b16 %v8418
        %v9443 = vunpack.c.l.b16 %v8419
        %v9444 = vunpack.c.l.b16 %v8420
        %v9445 = vunpack.c.l.b16 %v8421
        %v9446 = vunpack.c.l.b16 %v8422
        %v9447 = vunpack.c.l.b16 %v8423
        %v9448 = vunpack.c.l.b16 %v8424
        %v9449 = vunpack.c.l.b16 %v8425
        %v9450 = vunpack.c.l.b16 %v8426
        %v9451 = vunpack.c.l.b16 %v8427
        %v9452 = vunpack.c.l.b16 %v8428
        %v9453 = vunpack.c.l.b16 %v8429
        %v9454 = vunpack.c.l.b16 %v8430
        %v9455 = vunpack.c.l.b16 %v8431
        %v9456 = vunpack.c.l.b16 %v8432
        %v9457 = vunpack.c.l.b16 %v8433
        %v9458 = vunpack.c.l.b16 %v8434
        %v9459 = vunpack.c.l.b16 %v8435
        %v9460 = vunpack.c.l.b16 %v8436
        %v9461 = vunpack.c.l.b16 %v8437
        %v9462 = vunpack.c.l.b16 %v8438
        %v9463 = vunpack.c.l.b16 %v8439
        %v9464 = vunpack.c.l.b16 %v8440
        %v9465 = vunpack.c.l.b16 %v8441
        %v9466 = vunpack.c.l.b16 %v8442
        %v9467 = vunpack.c.l.b16 %v8443
        %v9468 = vunpack.c.l.b16 %v8444
        %v9469 = vunpack.c.l.b16 %v8445
        %v9470 = vunpack.c.l.b16 %v8446
        %v9471 = vunpack.c.l.b16 %v8447
        %v9472 = vunpack.c.l.b16 %v8448
        %v9473 = vunpack.c.l.b16 %v8449
        %v9474 = vunpack.c.l.b16 %v8450
        %v9475 = vunpack.c.l.b16 %v8451
        %v9476 = vunpack.c.l.b16 %v8452
        %v9477 = vunpack.c.l.b16 %v8453
        %v9478 = vunpack.c.l.b16 %v8454
        %v9479 = vunpack.c.l.b16 %v8455
        %v9480 = vunpack.c.l.b16 %v8456
        %v9481 = vunpack.c.l.b16 %v8457
        %v9482 = vunpack.c.l.b16 %v8458
        %v9483 = vunpack.c.l.b16 %v8459
        %v9484 = vunpack.c.l.b16 %v8460
        %v9485 = vunpack.c.l.b16 %v8461
        %v9486 = vunpack.c.l.b16 %v8462
        %v9487 = vunpack.c.l.b16 %v8463
        %v9488 = vunpack.c.l.b16 %v8464
        %v9489 = vunpack.c.l.b16 %v8465
        %v9490 = vunpack.c.l.b16 %v8466
        %v9491 = vunpack.c.l.b16 %v8467
        %v9492 = vunpack.c.l.b16 %v8468
        %v9493 = vunpack.c.l.b16 %v8469
        %v9494 = vunpack.c.l.b16 %v8470
        %v9495 = vunpack.c.l.b16 %v8471
        %v9496 = vunpack.c.l.b16 %v8472
        %v9497 = vunpack.c.l.b16 %v8473
        %v9498 = vunpack.c.l.b16 %v8474
        %v9499 = vunpack.c.l.b16 %v8475
        %v9500 = vunpack.c.l.b16 %v8476
        %v9501 = vunpack.c.l.b16 %v8477
        %v9502 = vunpack.c.l.b16 %v8478
        %v9503 = vunpack.c.l.b16 %v8479
        %v9504 = vunpack.c.l.b16 %v8480
        %v9505 = vunpack.c.l.b16 %v8481
        %v9506 = vunpack.c.l.b16 %v8482
        %v9507 = vunpack.c.l.b16 %v8483
        %v9508 = vunpack.c.l.b16 %v8484
        %v9509 = vunpack.c.l.b16 %v8485
        %v9510 = vunpack.c.l.b16 %v8486
        %v9511 = vunpack.c.l.b16 %v8487
        %v9512 = vunpack.c.l.b16 %v8488
        %v9513 = vunpack.c.l.b16 %v8489
        %v9514 = vunpack.c.l.b16 %v8490
        %v9515 = vunpack.c.l.b16 %v8491
        %v9516 = vunpack.c.l.b16 %v8492
        %v9517 = vunpack.c.l.b16 %v8493
        %v9518 = vunpack.c.l.b16 %v8494
        %v9519 = vunpack.c.l.b16 %v8495
        %v9520 = vunpack.c.l.b16 %v8496
        %v9521 = vunpack.c.l.b16 %v8497
        %v9522 = vunpack.c.l.b16 %v8498
        %v9523 = vunpack.c.l.b16 %v8499
        %v9524 = vunpack.c.l.b16 %v8500
        %v9525 = vunpack.c.l.b16 %v8501
        %v9526 = vunpack.c.l.b16 %v8502
        %v9527 = vunpack.c.l.b16 %v8503
        %v9528 = vunpack.c.l.b16 %v8504
        %v9529 = vunpack.c.l.b16 %v8505
        %v9530 = vunpack.c.l.b16 %v8506
        %v9531 = vunpack.c.l.b16 %v8507
        %v9532 = vunpack.c.l.b16 %v8508
        %v9533 = vunpack.c.l.b16 %v8509
        %v9534 = vunpack.c.l.b16 %v8510
        %v9535 = vunpack.c.l.b16 %v8511
        %v9536 = vunpack.c.l.b16 %v8512
        %v9537 = vunpack.c.l.b16 %v8513
        %v9538 = vunpack.c.l.b16 %v8514
        %v9539 = vunpack.c.l.b16 %v8515
        %v9540 = vpack.c.b16 %v9397, %v9396
        %v9541 = vpack.c.b16 %v9399, %v9398
        %v9542 = vpack.c.b16 %v9401, %v9400
        %v9543 = vpack.c.b16 %v9403, %v9402
        %v9544 = vpack.c.b16 %v9405, %v9404
        %v9545 = vpack.c.b16 %v9407, %v9406
        %v9546 = vpack.c.b16 %v9409, %v9408
        %v9547 = vpack.c.b16 %v9411, %v9410
        %v9548 = vpack.c.b16 %v9413, %v9412
        %v9549 = vpack.c.b16 %v9415, %v9414
        %v9550 = vpack.c.b16 %v9417, %v9416
        %v9551 = vpack.c.b16 %v9419, %v9418
        %v9552 = vpack.c.b16 %v9421, %v9420
        %v9553 = vpack.c.b16 %v9423, %v9422
        %v9554 = vpack.c.b16 %v9425, %v9424
        %v9555 = vpack.c.b16 %v9427, %v9426
        %v9556 = vpack.c.b16 %v9429, %v9428
        %v9557 = vpack.c.b16 %v9431, %v9430
        %v9558 = vpack.c.b16 %v9433, %v9432
        %v9559 = vpack.c.b16 %v9435, %v9434
        %v9560 = vpack.c.b16 %v9437, %v9436
        %v9561 = vpack.c.b16 %v9439, %v9438
        %v9562 = vpack.c.b16 %v9441, %v9440
        %v9563 = vpack.c.b16 %v9443, %v9442
        %v9564 = vpack.c.b16 %v9445, %v9444
        %v9565 = vpack.c.b16 %v9447, %v9446
        %v9566 = vpack.c.b16 %v9449, %v9448
        %v9567 = vpack.c.b16 %v9451, %v9450
        %v9568 = vpack.c.b16 %v9453, %v9452
        %v9569 = vpack.c.b16 %v9455, %v9454
        %v9570 = vpack.c.b16 %v9457, %v9456
        %v9571 = vpack.c.b16 %v9459, %v9458
        %v9572 = vpack.c.b16 %v9461, %v9460
        %v9573 = vpack.c.b16 %v9463, %v9462
        %v9574 = vpack.c.b16 %v9465, %v9464
        %v9575 = vpack.c.b16 %v9467, %v9466
        %v9576 = vpack.c.b16 %v9469, %v9468
        %v9577 = vpack.c.b16 %v9471, %v9470
        %v9578 = vpack.c.b16 %v9473, %v9472
        %v9579 = vpack.c.b16 %v9475, %v9474
        %v9580 = vpack.c.b16 %v9477, %v9476
        %v9581 = vpack.c.b16 %v9479, %v9478
        %v9582 = vpack.c.b16 %v9481, %v9480
        %v9583 = vpack.c.b16 %v9483, %v9482
        %v9584 = vpack.c.b16 %v9485, %v9484
        %v9585 = vpack.c.b16 %v9487, %v9486
        %v9586 = vpack.c.b16 %v9489, %v9488
        %v9587 = vpack.c.b16 %v9491, %v9490
        %v9588 = vpack.c.b16 %v9493, %v9492
        %v9589 = vpack.c.b16 %v9495, %v9494
        %v9590 = vpack.c.b16 %v9497, %v9496
        %v9591 = vpack.c.b16 %v9499, %v9498
        %v9592 = vpack.c.b16 %v9501, %v9500
        %v9593 = vpack.c.b16 %v9503, %v9502
        %v9594 = vpack.c.b16 %v9505, %v9504
        %v9595 = vpack.c.b16 %v9507, %v9506
        %v9596 = vpack.c.b16 %v9509, %v9508
        %v9597 = vpack.c.b16 %v9511, %v9510
        %v9598 = vpack.c.b16 %v9513, %v9512
        %v9599 = vpack.c.b16 %v9515, %v9514
        %v9600 = vpack.c.b16 %v9517, %v9516
        %v9601 = vpack.c.b16 %v9519, %v9518
        %v9602 = vpack.c.b16 %v9521, %v9520
        %v9603 = vpack.c.b16 %v9523, %v9522
        %v9604 = vpack.c.b16 %v9525, %v9524
        %v9605 = vpack.c.b16 %v9527, %v9526
        %v9606 = vpack.c.b16 %v9529, %v9528
        %v9607 = vpack.c.b16 %v9531, %v9530
        %v9608 = vpack.c.b16 %v9533, %v9532
        %v9609 = vpack.c.b16 %v9535, %v9534
        %v9610 = vpack.c.b16 %v9537, %v9536
        %v9611 = vpack.c.b16 %v9539, %v9538
        %9684 = vmatpush.bf16.msra.mxu0 %v9547
        %9685 = vmatpush.bf16.msra.mxu0 %v9546
        %9686 = vmatpush.bf16.msra.mxu0 %v9545
        %9687 = vmatpush.bf16.msra.mxu0 %v9544
        %9688 = vmatpush.bf16.msra.mxu0 %v9543
        %9689 = vmatpush.bf16.msra.mxu0 %v9542
        %9690 = vmatpush.bf16.msra.mxu0 %v9541
        %9691 = vmatpush.bf16.msra.mxu0 %v9540
        %9692 = vmatmul.bf16.gmra.mxu0 %v8964
        %v9693 = vpop.f32.mrf.mxu0
        %v9694 = vadd.f32 0.0, %v9693
        %v9695 = vpop.f32.mrf.mxu0
        %v9696 = vadd.f32 0.0, %v9695
        %9697 = vmatmul.bf16.gmra.mxu0 %v8973
        %v9698 = vpop.f32.mrf.mxu0
        %v9699 = vadd.f32 0.0, %v9698
        %v9700 = vpop.f32.mrf.mxu0
        %v9701 = vadd.f32 0.0, %v9700
        %9702 = vmatmul.bf16.gmra.mxu0 %v8982
        %v9703 = vpop.f32.mrf.mxu0
        %v9704 = vadd.f32 0.0, %v9703
        %v9705 = vpop.f32.mrf.mxu0
        %v9706 = vadd.f32 0.0, %v9705
        %9707 = vmatmul.bf16.gmra.mxu0 %v8991
        %v9708 = vpop.f32.mrf.mxu0
        %v9709 = vadd.f32 0.0, %v9708
        %v9710 = vpop.f32.mrf.mxu0
        %v9711 = vadd.f32 0.0, %v9710
        %9712 = vmatmul.bf16.gmra.mxu0 %v9000
        %v9713 = vpop.f32.mrf.mxu0
        %v9714 = vadd.f32 0.0, %v9713
        %v9715 = vpop.f32.mrf.mxu0
        %v9716 = vadd.f32 0.0, %v9715
        %9717 = vmatmul.bf16.gmra.mxu0 %v9009
        %v9718 = vpop.f32.mrf.mxu0
        %v9719 = vadd.f32 0.0, %v9718
        %v9720 = vpop.f32.mrf.mxu0
        %v9721 = vadd.f32 0.0, %v9720
        %9722 = vmatmul.bf16.gmra.mxu0 %v9018
        %v9723 = vpop.f32.mrf.mxu0
        %v9724 = vadd.f32 0.0, %v9723
        %v9725 = vpop.f32.mrf.mxu0
        %v9726 = vadd.f32 0.0, %v9725
        %9727 = vmatmul.bf16.gmra.mxu0 %v9027
        %v9728 = vpop.f32.mrf.mxu0
        %v9729 = vadd.f32 0.0, %v9728
        %v9730 = vpop.f32.mrf.mxu0
        %v9731 = vadd.f32 0.0, %v9730
        %9732 = vmatmul.bf16.gmra.mxu0 %v9036
        %v9733 = vpop.f32.mrf.mxu0
        %v9734 = vadd.f32 0.0, %v9733
        %v9735 = vpop.f32.mrf.mxu0
        %v9736 = vadd.f32 0.0, %v9735
        %9737 = vmatmul.bf16.gmra.mxu0 %v9045
        %v9738 = vpop.f32.mrf.mxu0
        %v9739 = vadd.f32 0.0, %v9738
        %v9740 = vpop.f32.mrf.mxu0
        %v9741 = vadd.f32 0.0, %v9740
        %9742 = vmatmul.bf16.gmra.mxu0 %v9054
        %v9743 = vpop.f32.mrf.mxu0
        %v9744 = vadd.f32 0.0, %v9743
        %v9745 = vpop.f32.mrf.mxu0
        %v9746 = vadd.f32 0.0, %v9745
        %9747 = vmatmul.bf16.gmra.mxu0 %v9063
        %v9748 = vpop.f32.mrf.mxu0
        %v9749 = vadd.f32 0.0, %v9748
        %v9750 = vpop.f32.mrf.mxu0
        %v9751 = vadd.f32 0.0, %v9750
        %9752 = vmatmul.bf16.gmra.mxu0 %v9072
        %v9753 = vpop.f32.mrf.mxu0
        %v9754 = vadd.f32 0.0, %v9753
        %v9755 = vpop.f32.mrf.mxu0
        %v9756 = vadd.f32 0.0, %v9755
        %9757 = vmatmul.bf16.gmra.mxu0 %v9081
        %v9758 = vpop.f32.mrf.mxu0
        %v9759 = vadd.f32 0.0, %v9758
        %v9760 = vpop.f32.mrf.mxu0
        %v9761 = vadd.f32 0.0, %v9760
        %9762 = vmatmul.bf16.gmra.mxu0 %v9090
        %v9763 = vpop.f32.mrf.mxu0
        %v9764 = vadd.f32 0.0, %v9763
        %v9765 = vpop.f32.mrf.mxu0
        %v9766 = vadd.f32 0.0, %v9765
        %9767 = vmatmul.bf16.gmra.mxu0 %v9099
        %v9768 = vpop.f32.mrf.mxu0
        %v9769 = vadd.f32 0.0, %v9768
        %v9770 = vpop.f32.mrf.mxu0
        %v9771 = vadd.f32 0.0, %v9770
        %9772 = vdwg.mxu0
        %9773 = vmatpush.bf16.msra.mxu0 %v9555
        %9774 = vmatpush.bf16.msra.mxu0 %v9554
        %9775 = vmatpush.bf16.msra.mxu0 %v9553
        %9776 = vmatpush.bf16.msra.mxu0 %v9552
        %9777 = vmatpush.bf16.msra.mxu0 %v9551
        %9778 = vmatpush.bf16.msra.mxu0 %v9550
        %9779 = vmatpush.bf16.msra.mxu0 %v9549
        %9780 = vmatpush.bf16.msra.mxu0 %v9548
        %9781 = vmatmul.bf16.gmra.mxu0 %v8965
        %v9782 = vpop.f32.mrf.mxu0
        %v9783 = vadd.f32 %v9694, %v9782
        %v9784 = vpop.f32.mrf.mxu0
        %v9785 = vadd.f32 %v9696, %v9784
        %9786 = vmatmul.bf16.gmra.mxu0 %v8974
        %v9787 = vpop.f32.mrf.mxu0
        %v9788 = vadd.f32 %v9699, %v9787
        %v9789 = vpop.f32.mrf.mxu0
        %v9790 = vadd.f32 %v9701, %v9789
        %9791 = vmatmul.bf16.gmra.mxu0 %v8983
        %v9792 = vpop.f32.mrf.mxu0
        %v9793 = vadd.f32 %v9704, %v9792
        %v9794 = vpop.f32.mrf.mxu0
        %v9795 = vadd.f32 %v9706, %v9794
        %9796 = vmatmul.bf16.gmra.mxu0 %v8992
        %v9797 = vpop.f32.mrf.mxu0
        %v9798 = vadd.f32 %v9709, %v9797
        %v9799 = vpop.f32.mrf.mxu0
        %v9800 = vadd.f32 %v9711, %v9799
        %9801 = vmatmul.bf16.gmra.mxu0 %v9001
        %v9802 = vpop.f32.mrf.mxu0
        %v9803 = vadd.f32 %v9714, %v9802
        %v9804 = vpop.f32.mrf.mxu0
        %v9805 = vadd.f32 %v9716, %v9804
        %9806 = vmatmul.bf16.gmra.mxu0 %v9010
        %v9807 = vpop.f32.mrf.mxu0
        %v9808 = vadd.f32 %v9719, %v9807
        %v9809 = vpop.f32.mrf.mxu0
        %v9810 = vadd.f32 %v9721, %v9809
        %9811 = vmatmul.bf16.gmra.mxu0 %v9019
        %v9812 = vpop.f32.mrf.mxu0
        %v9813 = vadd.f32 %v9724, %v9812
        %v9814 = vpop.f32.mrf.mxu0
        %v9815 = vadd.f32 %v9726, %v9814
        %9816 = vmatmul.bf16.gmra.mxu0 %v9028
        %v9817 = vpop.f32.mrf.mxu0
        %v9818 = vadd.f32 %v9729, %v9817
        %v9819 = vpop.f32.mrf.mxu0
        %v9820 = vadd.f32 %v9731, %v9819
        %9821 = vmatmul.bf16.gmra.mxu0 %v9037
        %v9822 = vpop.f32.mrf.mxu0
        %v9823 = vadd.f32 %v9734, %v9822
        %v9824 = vpop.f32.mrf.mxu0
        %v9825 = vadd.f32 %v9736, %v9824
        %9826 = vmatmul.bf16.gmra.mxu0 %v9046
        %v9827 = vpop.f32.mrf.mxu0
        %v9828 = vadd.f32 %v9739, %v9827
        %v9829 = vpop.f32.mrf.mxu0
        %v9830 = vadd.f32 %v9741, %v9829
        %9831 = vmatmul.bf16.gmra.mxu0 %v9055
        %v9832 = vpop.f32.mrf.mxu0
        %v9833 = vadd.f32 %v9744, %v9832
        %v9834 = vpop.f32.mrf.mxu0
        %v9835 = vadd.f32 %v9746, %v9834
        %9836 = vmatmul.bf16.gmra.mxu0 %v9064
        %v9837 = vpop.f32.mrf.mxu0
        %v9838 = vadd.f32 %v9749, %v9837
        %v9839 = vpop.f32.mrf.mxu0
        %v9840 = vadd.f32 %v9751, %v9839
        %9841 = vmatmul.bf16.gmra.mxu0 %v9073
        %v9842 = vpop.f32.mrf.mxu0
        %v9843 = vadd.f32 %v9754, %v9842
        %v9844 = vpop.f32.mrf.mxu0
        %v9845 = vadd.f32 %v9756, %v9844
        %9846 = vmatmul.bf16.gmra.mxu0 %v9082
        %v9847 = vpop.f32.mrf.mxu0
        %v9848 = vadd.f32 %v9759, %v9847
        %v9849 = vpop.f32.mrf.mxu0
        %v9850 = vadd.f32 %v9761, %v9849
        %9851 = vmatmul.bf16.gmra.mxu0 %v9091
        %v9852 = vpop.f32.mrf.mxu0
        %v9853 = vadd.f32 %v9764, %v9852
        %v9854 = vpop.f32.mrf.mxu0
        %v9855 = vadd.f32 %v9766, %v9854
        %9856 = vmatmul.bf16.gmra.mxu0 %v9100
        %v9857 = vpop.f32.mrf.mxu0
        %v9858 = vadd.f32 %v9769, %v9857
        %v9859 = vpop.f32.mrf.mxu0
        %v9860 = vadd.f32 %v9771, %v9859
        %9861 = vdwg.mxu0
        %9862 = vmatpush.bf16.msra.mxu0 %v9563
        %9863 = vmatpush.bf16.msra.mxu0 %v9562
        %9864 = vmatpush.bf16.msra.mxu0 %v9561
        %9865 = vmatpush.bf16.msra.mxu0 %v9560
        %9866 = vmatpush.bf16.msra.mxu0 %v9559
        %9867 = vmatpush.bf16.msra.mxu0 %v9558
        %9868 = vmatpush.bf16.msra.mxu0 %v9557
        %9869 = vmatpush.bf16.msra.mxu0 %v9556
        %9870 = vmatmul.bf16.gmra.mxu0 %v8966
        %v9871 = vpop.f32.mrf.mxu0
        %v9872 = vadd.f32 %v9783, %v9871
        %v9873 = vpop.f32.mrf.mxu0
        %v9874 = vadd.f32 %v9785, %v9873
        %9875 = vmatmul.bf16.gmra.mxu0 %v8975
        %v9876 = vpop.f32.mrf.mxu0
        %v9877 = vadd.f32 %v9788, %v9876
        %v9878 = vpop.f32.mrf.mxu0
        %v9879 = vadd.f32 %v9790, %v9878
        %9880 = vmatmul.bf16.gmra.mxu0 %v8984
        %v9881 = vpop.f32.mrf.mxu0
        %v9882 = vadd.f32 %v9793, %v9881
        %v9883 = vpop.f32.mrf.mxu0
        %v9884 = vadd.f32 %v9795, %v9883
        %9885 = vmatmul.bf16.gmra.mxu0 %v8993
        %v9886 = vpop.f32.mrf.mxu0
        %v9887 = vadd.f32 %v9798, %v9886
        %v9888 = vpop.f32.mrf.mxu0
        %v9889 = vadd.f32 %v9800, %v9888
        %9890 = vmatmul.bf16.gmra.mxu0 %v9002
        %v9891 = vpop.f32.mrf.mxu0
        %v9892 = vadd.f32 %v9803, %v9891
        %v9893 = vpop.f32.mrf.mxu0
        %v9894 = vadd.f32 %v9805, %v9893
        %9895 = vmatmul.bf16.gmra.mxu0 %v9011
        %v9896 = vpop.f32.mrf.mxu0
        %v9897 = vadd.f32 %v9808, %v9896
        %v9898 = vpop.f32.mrf.mxu0
        %v9899 = vadd.f32 %v9810, %v9898
        %9900 = vmatmul.bf16.gmra.mxu0 %v9020
        %v9901 = vpop.f32.mrf.mxu0
        %v9902 = vadd.f32 %v9813, %v9901
        %v9903 = vpop.f32.mrf.mxu0
        %v9904 = vadd.f32 %v9815, %v9903
        %9905 = vmatmul.bf16.gmra.mxu0 %v9029
        %v9906 = vpop.f32.mrf.mxu0
        %v9907 = vadd.f32 %v9818, %v9906
        %v9908 = vpop.f32.mrf.mxu0
        %v9909 = vadd.f32 %v9820, %v9908
        %9910 = vmatmul.bf16.gmra.mxu0 %v9038
        %v9911 = vpop.f32.mrf.mxu0
        %v9912 = vadd.f32 %v9823, %v9911
        %v9913 = vpop.f32.mrf.mxu0
        %v9914 = vadd.f32 %v9825, %v9913
        %9915 = vmatmul.bf16.gmra.mxu0 %v9047
        %v9916 = vpop.f32.mrf.mxu0
        %v9917 = vadd.f32 %v9828, %v9916
        %v9918 = vpop.f32.mrf.mxu0
        %v9919 = vadd.f32 %v9830, %v9918
        %9920 = vmatmul.bf16.gmra.mxu0 %v9056
        %v9921 = vpop.f32.mrf.mxu0
        %v9922 = vadd.f32 %v9833, %v9921
        %v9923 = vpop.f32.mrf.mxu0
        %v9924 = vadd.f32 %v9835, %v9923
        %9925 = vmatmul.bf16.gmra.mxu0 %v9065
        %v9926 = vpop.f32.mrf.mxu0
        %v9927 = vadd.f32 %v9838, %v9926
        %v9928 = vpop.f32.mrf.mxu0
        %v9929 = vadd.f32 %v9840, %v9928
        %9930 = vmatmul.bf16.gmra.mxu0 %v9074
        %v9931 = vpop.f32.mrf.mxu0
        %v9932 = vadd.f32 %v9843, %v9931
        %v9933 = vpop.f32.mrf.mxu0
        %v9934 = vadd.f32 %v9845, %v9933
        %9935 = vmatmul.bf16.gmra.mxu0 %v9083
        %v9936 = vpop.f32.mrf.mxu0
        %v9937 = vadd.f32 %v9848, %v9936
        %v9938 = vpop.f32.mrf.mxu0
        %v9939 = vadd.f32 %v9850, %v9938
        %9940 = vmatmul.bf16.gmra.mxu0 %v9092
        %v9941 = vpop.f32.mrf.mxu0
        %v9942 = vadd.f32 %v9853, %v9941
        %v9943 = vpop.f32.mrf.mxu0
        %v9944 = vadd.f32 %v9855, %v9943
        %9945 = vmatmul.bf16.gmra.mxu0 %v9101
        %v9946 = vpop.f32.mrf.mxu0
        %v9947 = vadd.f32 %v9858, %v9946
        %v9948 = vpop.f32.mrf.mxu0
        %v9949 = vadd.f32 %v9860, %v9948
        %9950 = vdwg.mxu0
        %9951 = vmatpush.bf16.msra.mxu0 %v9571
        %9952 = vmatpush.bf16.msra.mxu0 %v9570
        %9953 = vmatpush.bf16.msra.mxu0 %v9569
        %9954 = vmatpush.bf16.msra.mxu0 %v9568
        %9955 = vmatpush.bf16.msra.mxu0 %v9567
        %9956 = vmatpush.bf16.msra.mxu0 %v9566
        %9957 = vmatpush.bf16.msra.mxu0 %v9565
        %9958 = vmatpush.bf16.msra.mxu0 %v9564
        %9959 = vmatmul.bf16.gmra.mxu0 %v8967
        %v9960 = vpop.f32.mrf.mxu0
        %v9961 = vadd.f32 %v9872, %v9960
        %v9962 = vpop.f32.mrf.mxu0
        %v9963 = vadd.f32 %v9874, %v9962
        %9964 = vmatmul.bf16.gmra.mxu0 %v8976
        %v9965 = vpop.f32.mrf.mxu0
        %v9966 = vadd.f32 %v9877, %v9965
        %v9967 = vpop.f32.mrf.mxu0
        %v9968 = vadd.f32 %v9879, %v9967
        %9969 = vmatmul.bf16.gmra.mxu0 %v8985
        %v9970 = vpop.f32.mrf.mxu0
        %v9971 = vadd.f32 %v9882, %v9970
        %v9972 = vpop.f32.mrf.mxu0
        %v9973 = vadd.f32 %v9884, %v9972
        %9974 = vmatmul.bf16.gmra.mxu0 %v8994
        %v9975 = vpop.f32.mrf.mxu0
        %v9976 = vadd.f32 %v9887, %v9975
        %v9977 = vpop.f32.mrf.mxu0
        %v9978 = vadd.f32 %v9889, %v9977
        %9979 = vmatmul.bf16.gmra.mxu0 %v9003
        %v9980 = vpop.f32.mrf.mxu0
        %v9981 = vadd.f32 %v9892, %v9980
        %v9982 = vpop.f32.mrf.mxu0
        %v9983 = vadd.f32 %v9894, %v9982
        %9984 = vmatmul.bf16.gmra.mxu0 %v9012
        %v9985 = vpop.f32.mrf.mxu0
        %v9986 = vadd.f32 %v9897, %v9985
        %v9987 = vpop.f32.mrf.mxu0
        %v9988 = vadd.f32 %v9899, %v9987
        %9989 = vmatmul.bf16.gmra.mxu0 %v9021
        %v9990 = vpop.f32.mrf.mxu0
        %v9991 = vadd.f32 %v9902, %v9990
        %v9992 = vpop.f32.mrf.mxu0
        %v9993 = vadd.f32 %v9904, %v9992
        %9994 = vmatmul.bf16.gmra.mxu0 %v9030
        %v9995 = vpop.f32.mrf.mxu0
        %v9996 = vadd.f32 %v9907, %v9995
        %v9997 = vpop.f32.mrf.mxu0
        %v9998 = vadd.f32 %v9909, %v9997
        %9999 = vmatmul.bf16.gmra.mxu0 %v9039
        %v10000 = vpop.f32.mrf.mxu0
        %v10001 = vadd.f32 %v9912, %v10000
        %v10002 = vpop.f32.mrf.mxu0
        %v10003 = vadd.f32 %v9914, %v10002
        %10004 = vmatmul.bf16.gmra.mxu0 %v9048
        %v10005 = vpop.f32.mrf.mxu0
        %v10006 = vadd.f32 %v9917, %v10005
        %v10007 = vpop.f32.mrf.mxu0
        %v10008 = vadd.f32 %v9919, %v10007
        %10009 = vmatmul.bf16.gmra.mxu0 %v9057
        %v10010 = vpop.f32.mrf.mxu0
        %v10011 = vadd.f32 %v9922, %v10010
        %v10012 = vpop.f32.mrf.mxu0
        %v10013 = vadd.f32 %v9924, %v10012
        %10014 = vmatmul.bf16.gmra.mxu0 %v9066
        %v10015 = vpop.f32.mrf.mxu0
        %v10016 = vadd.f32 %v9927, %v10015
        %v10017 = vpop.f32.mrf.mxu0
        %v10018 = vadd.f32 %v9929, %v10017
        %10019 = vmatmul.bf16.gmra.mxu0 %v9075
        %v10020 = vpop.f32.mrf.mxu0
        %v10021 = vadd.f32 %v9932, %v10020
        %v10022 = vpop.f32.mrf.mxu0
        %v10023 = vadd.f32 %v9934, %v10022
        %10024 = vmatmul.bf16.gmra.mxu0 %v9084
        %v10025 = vpop.f32.mrf.mxu0
        %v10026 = vadd.f32 %v9937, %v10025
        %v10027 = vpop.f32.mrf.mxu0
        %v10028 = vadd.f32 %v9939, %v10027
        %10029 = vmatmul.bf16.gmra.mxu0 %v9093
        %v10030 = vpop.f32.mrf.mxu0
        %v10031 = vadd.f32 %v9942, %v10030
        %v10032 = vpop.f32.mrf.mxu0
        %v10033 = vadd.f32 %v9944, %v10032
        %10034 = vmatmul.bf16.gmra.mxu0 %v9102
        %v10035 = vpop.f32.mrf.mxu0
        %v10036 = vadd.f32 %v9947, %v10035
        %v10037 = vpop.f32.mrf.mxu0
        %v10038 = vadd.f32 %v9949, %v10037
        %10039 = vdwg.mxu0
        %10040 = vmatpush.bf16.msra.mxu0 %v9579
        %10041 = vmatpush.bf16.msra.mxu0 %v9578
        %10042 = vmatpush.bf16.msra.mxu0 %v9577
        %10043 = vmatpush.bf16.msra.mxu0 %v9576
        %10044 = vmatpush.bf16.msra.mxu0 %v9575
        %10045 = vmatpush.bf16.msra.mxu0 %v9574
        %10046 = vmatpush.bf16.msra.mxu0 %v9573
        %10047 = vmatpush.bf16.msra.mxu0 %v9572
        %10048 = vmatmul.bf16.gmra.mxu0 %v8968
        %v10049 = vpop.f32.mrf.mxu0
        %v10050 = vadd.f32 %v9961, %v10049
        %v10051 = vpop.f32.mrf.mxu0
        %v10052 = vadd.f32 %v9963, %v10051
        %10053 = vmatmul.bf16.gmra.mxu0 %v8977
        %v10054 = vpop.f32.mrf.mxu0
        %v10055 = vadd.f32 %v9966, %v10054
        %v10056 = vpop.f32.mrf.mxu0
        %v10057 = vadd.f32 %v9968, %v10056
        %10058 = vmatmul.bf16.gmra.mxu0 %v8986
        %v10059 = vpop.f32.mrf.mxu0
        %v10060 = vadd.f32 %v9971, %v10059
        %v10061 = vpop.f32.mrf.mxu0
        %v10062 = vadd.f32 %v9973, %v10061
        %10063 = vmatmul.bf16.gmra.mxu0 %v8995
        %v10064 = vpop.f32.mrf.mxu0
        %v10065 = vadd.f32 %v9976, %v10064
        %v10066 = vpop.f32.mrf.mxu0
        %v10067 = vadd.f32 %v9978, %v10066
        %10068 = vmatmul.bf16.gmra.mxu0 %v9004
        %v10069 = vpop.f32.mrf.mxu0
        %v10070 = vadd.f32 %v9981, %v10069
        %v10071 = vpop.f32.mrf.mxu0
        %v10072 = vadd.f32 %v9983, %v10071
        %10073 = vmatmul.bf16.gmra.mxu0 %v9013
        %v10074 = vpop.f32.mrf.mxu0
        %v10075 = vadd.f32 %v9986, %v10074
        %v10076 = vpop.f32.mrf.mxu0
        %v10077 = vadd.f32 %v9988, %v10076
        %10078 = vmatmul.bf16.gmra.mxu0 %v9022
        %v10079 = vpop.f32.mrf.mxu0
        %v10080 = vadd.f32 %v9991, %v10079
        %v10081 = vpop.f32.mrf.mxu0
        %v10082 = vadd.f32 %v9993, %v10081
        %10083 = vmatmul.bf16.gmra.mxu0 %v9031
        %v10084 = vpop.f32.mrf.mxu0
        %v10085 = vadd.f32 %v9996, %v10084
        %v10086 = vpop.f32.mrf.mxu0
        %v10087 = vadd.f32 %v9998, %v10086
        %10088 = vmatmul.bf16.gmra.mxu0 %v9040
        %v10089 = vpop.f32.mrf.mxu0
        %v10090 = vadd.f32 %v10001, %v10089
        %v10091 = vpop.f32.mrf.mxu0
        %v10092 = vadd.f32 %v10003, %v10091
        %10093 = vmatmul.bf16.gmra.mxu0 %v9049
        %v10094 = vpop.f32.mrf.mxu0
        %v10095 = vadd.f32 %v10006, %v10094
        %v10096 = vpop.f32.mrf.mxu0
        %v10097 = vadd.f32 %v10008, %v10096
        %10098 = vmatmul.bf16.gmra.mxu0 %v9058
        %v10099 = vpop.f32.mrf.mxu0
        %v10100 = vadd.f32 %v10011, %v10099
        %v10101 = vpop.f32.mrf.mxu0
        %v10102 = vadd.f32 %v10013, %v10101
        %10103 = vmatmul.bf16.gmra.mxu0 %v9067
        %v10104 = vpop.f32.mrf.mxu0
        %v10105 = vadd.f32 %v10016, %v10104
        %v10106 = vpop.f32.mrf.mxu0
        %v10107 = vadd.f32 %v10018, %v10106
        %10108 = vmatmul.bf16.gmra.mxu0 %v9076
        %v10109 = vpop.f32.mrf.mxu0
        %v10110 = vadd.f32 %v10021, %v10109
        %v10111 = vpop.f32.mrf.mxu0
        %v10112 = vadd.f32 %v10023, %v10111
        %10113 = vmatmul.bf16.gmra.mxu0 %v9085
        %v10114 = vpop.f32.mrf.mxu0
        %v10115 = vadd.f32 %v10026, %v10114
        %v10116 = vpop.f32.mrf.mxu0
        %v10117 = vadd.f32 %v10028, %v10116
        %10118 = vmatmul.bf16.gmra.mxu0 %v9094
        %v10119 = vpop.f32.mrf.mxu0
        %v10120 = vadd.f32 %v10031, %v10119
        %v10121 = vpop.f32.mrf.mxu0
        %v10122 = vadd.f32 %v10033, %v10121
        %10123 = vmatmul.bf16.gmra.mxu0 %v9103
        %v10124 = vpop.f32.mrf.mxu0
        %v10125 = vadd.f32 %v10036, %v10124
        %v10126 = vpop.f32.mrf.mxu0
        %v10127 = vadd.f32 %v10038, %v10126
        %10128 = vdwg.mxu0
        %10129 = vmatpush.bf16.msra.mxu0 %v9587
        %10130 = vmatpush.bf16.msra.mxu0 %v9586
        %10131 = vmatpush.bf16.msra.mxu0 %v9585
        %10132 = vmatpush.bf16.msra.mxu0 %v9584
        %10133 = vmatpush.bf16.msra.mxu0 %v9583
        %10134 = vmatpush.bf16.msra.mxu0 %v9582
        %10135 = vmatpush.bf16.msra.mxu0 %v9581
        %10136 = vmatpush.bf16.msra.mxu0 %v9580
        %10137 = vmatmul.bf16.gmra.mxu0 %v8969
        %v10138 = vpop.f32.mrf.mxu0
        %v10139 = vadd.f32 %v10050, %v10138
        %v10140 = vpop.f32.mrf.mxu0
        %v10141 = vadd.f32 %v10052, %v10140
        %10142 = vmatmul.bf16.gmra.mxu0 %v8978
        %v10143 = vpop.f32.mrf.mxu0
        %v10144 = vadd.f32 %v10055, %v10143
        %v10145 = vpop.f32.mrf.mxu0
        %v10146 = vadd.f32 %v10057, %v10145
        %10147 = vmatmul.bf16.gmra.mxu0 %v8987
        %v10148 = vpop.f32.mrf.mxu0
        %v10149 = vadd.f32 %v10060, %v10148
        %v10150 = vpop.f32.mrf.mxu0
        %v10151 = vadd.f32 %v10062, %v10150
        %10152 = vmatmul.bf16.gmra.mxu0 %v8996
        %v10153 = vpop.f32.mrf.mxu0
        %v10154 = vadd.f32 %v10065, %v10153
        %v10155 = vpop.f32.mrf.mxu0
        %v10156 = vadd.f32 %v10067, %v10155
        %10157 = vmatmul.bf16.gmra.mxu0 %v9005
        %v10158 = vpop.f32.mrf.mxu0
        %v10159 = vadd.f32 %v10070, %v10158
        %v10160 = vpop.f32.mrf.mxu0
        %v10161 = vadd.f32 %v10072, %v10160
        %10162 = vmatmul.bf16.gmra.mxu0 %v9014
        %v10163 = vpop.f32.mrf.mxu0
        %v10164 = vadd.f32 %v10075, %v10163
        %v10165 = vpop.f32.mrf.mxu0
        %v10166 = vadd.f32 %v10077, %v10165
        %10167 = vmatmul.bf16.gmra.mxu0 %v9023
        %v10168 = vpop.f32.mrf.mxu0
        %v10169 = vadd.f32 %v10080, %v10168
        %v10170 = vpop.f32.mrf.mxu0
        %v10171 = vadd.f32 %v10082, %v10170
        %10172 = vmatmul.bf16.gmra.mxu0 %v9032
        %v10173 = vpop.f32.mrf.mxu0
        %v10174 = vadd.f32 %v10085, %v10173
        %v10175 = vpop.f32.mrf.mxu0
        %v10176 = vadd.f32 %v10087, %v10175
        %10177 = vmatmul.bf16.gmra.mxu0 %v9041
        %v10178 = vpop.f32.mrf.mxu0
        %v10179 = vadd.f32 %v10090, %v10178
        %v10180 = vpop.f32.mrf.mxu0
        %v10181 = vadd.f32 %v10092, %v10180
        %10182 = vmatmul.bf16.gmra.mxu0 %v9050
        %v10183 = vpop.f32.mrf.mxu0
        %v10184 = vadd.f32 %v10095, %v10183
        %v10185 = vpop.f32.mrf.mxu0
        %v10186 = vadd.f32 %v10097, %v10185
        %10187 = vmatmul.bf16.gmra.mxu0 %v9059
        %v10188 = vpop.f32.mrf.mxu0
        %v10189 = vadd.f32 %v10100, %v10188
        %v10190 = vpop.f32.mrf.mxu0
        %v10191 = vadd.f32 %v10102, %v10190
        %10192 = vmatmul.bf16.gmra.mxu0 %v9068
        %v10193 = vpop.f32.mrf.mxu0
        %v10194 = vadd.f32 %v10105, %v10193
        %v10195 = vpop.f32.mrf.mxu0
        %v10196 = vadd.f32 %v10107, %v10195
        %10197 = vmatmul.bf16.gmra.mxu0 %v9077
        %v10198 = vpop.f32.mrf.mxu0
        %v10199 = vadd.f32 %v10110, %v10198
        %v10200 = vpop.f32.mrf.mxu0
        %v10201 = vadd.f32 %v10112, %v10200
        %10202 = vmatmul.bf16.gmra.mxu0 %v9086
        %v10203 = vpop.f32.mrf.mxu0
        %v10204 = vadd.f32 %v10115, %v10203
        %v10205 = vpop.f32.mrf.mxu0
        %v10206 = vadd.f32 %v10117, %v10205
        %10207 = vmatmul.bf16.gmra.mxu0 %v9095
        %v10208 = vpop.f32.mrf.mxu0
        %v10209 = vadd.f32 %v10120, %v10208
        %v10210 = vpop.f32.mrf.mxu0
        %v10211 = vadd.f32 %v10122, %v10210
        %10212 = vmatmul.bf16.gmra.mxu0 %v9104
        %v10213 = vpop.f32.mrf.mxu0
        %v10214 = vadd.f32 %v10125, %v10213
        %v10215 = vpop.f32.mrf.mxu0
        %v10216 = vadd.f32 %v10127, %v10215
        %10217 = vdwg.mxu0
        %10218 = vmatpush.bf16.msra.mxu0 %v9595
        %10219 = vmatpush.bf16.msra.mxu0 %v9594
        %10220 = vmatpush.bf16.msra.mxu0 %v9593
        %10221 = vmatpush.bf16.msra.mxu0 %v9592
        %10222 = vmatpush.bf16.msra.mxu0 %v9591
        %10223 = vmatpush.bf16.msra.mxu0 %v9590
        %10224 = vmatpush.bf16.msra.mxu0 %v9589
        %10225 = vmatpush.bf16.msra.mxu0 %v9588
        %10226 = vmatmul.bf16.gmra.mxu0 %v8970
        %v10227 = vpop.f32.mrf.mxu0
        %v10228 = vadd.f32 %v10139, %v10227
        %v10229 = vpop.f32.mrf.mxu0
        %v10230 = vadd.f32 %v10141, %v10229
        %10231 = vmatmul.bf16.gmra.mxu0 %v8979
        %v10232 = vpop.f32.mrf.mxu0
        %v10233 = vadd.f32 %v10144, %v10232
        %v10234 = vpop.f32.mrf.mxu0
        %v10235 = vadd.f32 %v10146, %v10234
        %10236 = vmatmul.bf16.gmra.mxu0 %v8988
        %v10237 = vpop.f32.mrf.mxu0
        %v10238 = vadd.f32 %v10149, %v10237
        %v10239 = vpop.f32.mrf.mxu0
        %v10240 = vadd.f32 %v10151, %v10239
        %10241 = vmatmul.bf16.gmra.mxu0 %v8997
        %v10242 = vpop.f32.mrf.mxu0
        %v10243 = vadd.f32 %v10154, %v10242
        %v10244 = vpop.f32.mrf.mxu0
        %v10245 = vadd.f32 %v10156, %v10244
        %10246 = vmatmul.bf16.gmra.mxu0 %v9006
        %v10247 = vpop.f32.mrf.mxu0
        %v10248 = vadd.f32 %v10159, %v10247
        %v10249 = vpop.f32.mrf.mxu0
        %v10250 = vadd.f32 %v10161, %v10249
        %10251 = vmatmul.bf16.gmra.mxu0 %v9015
        %v10252 = vpop.f32.mrf.mxu0
        %v10253 = vadd.f32 %v10164, %v10252
        %v10254 = vpop.f32.mrf.mxu0
        %v10255 = vadd.f32 %v10166, %v10254
        %10256 = vmatmul.bf16.gmra.mxu0 %v9024
        %v10257 = vpop.f32.mrf.mxu0
        %v10258 = vadd.f32 %v10169, %v10257
        %v10259 = vpop.f32.mrf.mxu0
        %v10260 = vadd.f32 %v10171, %v10259
        %10261 = vmatmul.bf16.gmra.mxu0 %v9033
        %v10262 = vpop.f32.mrf.mxu0
        %v10263 = vadd.f32 %v10174, %v10262
        %v10264 = vpop.f32.mrf.mxu0
        %v10265 = vadd.f32 %v10176, %v10264
        %10266 = vmatmul.bf16.gmra.mxu0 %v9042
        %v10267 = vpop.f32.mrf.mxu0
        %v10268 = vadd.f32 %v10179, %v10267
        %v10269 = vpop.f32.mrf.mxu0
        %v10270 = vadd.f32 %v10181, %v10269
        %10271 = vmatmul.bf16.gmra.mxu0 %v9051
        %v10272 = vpop.f32.mrf.mxu0
        %v10273 = vadd.f32 %v10184, %v10272
        %v10274 = vpop.f32.mrf.mxu0
        %v10275 = vadd.f32 %v10186, %v10274
        %10276 = vmatmul.bf16.gmra.mxu0 %v9060
        %v10277 = vpop.f32.mrf.mxu0
        %v10278 = vadd.f32 %v10189, %v10277
        %v10279 = vpop.f32.mrf.mxu0
        %v10280 = vadd.f32 %v10191, %v10279
        %10281 = vmatmul.bf16.gmra.mxu0 %v9069
        %v10282 = vpop.f32.mrf.mxu0
        %v10283 = vadd.f32 %v10194, %v10282
        %v10284 = vpop.f32.mrf.mxu0
        %v10285 = vadd.f32 %v10196, %v10284
        %10286 = vmatmul.bf16.gmra.mxu0 %v9078
        %v10287 = vpop.f32.mrf.mxu0
        %v10288 = vadd.f32 %v10199, %v10287
        %v10289 = vpop.f32.mrf.mxu0
        %v10290 = vadd.f32 %v10201, %v10289
        %10291 = vmatmul.bf16.gmra.mxu0 %v9087
        %v10292 = vpop.f32.mrf.mxu0
        %v10293 = vadd.f32 %v10204, %v10292
        %v10294 = vpop.f32.mrf.mxu0
        %v10295 = vadd.f32 %v10206, %v10294
        %10296 = vmatmul.bf16.gmra.mxu0 %v9096
        %v10297 = vpop.f32.mrf.mxu0
        %v10298 = vadd.f32 %v10209, %v10297
        %v10299 = vpop.f32.mrf.mxu0
        %v10300 = vadd.f32 %v10211, %v10299
        %10301 = vmatmul.bf16.gmra.mxu0 %v9105
        %v10302 = vpop.f32.mrf.mxu0
        %v10303 = vadd.f32 %v10214, %v10302
        %v10304 = vpop.f32.mrf.mxu0
        %v10305 = vadd.f32 %v10216, %v10304
        %10306 = vdwg.mxu0
        %10307 = vmatpush.bf16.msra.mxu0 %v9603
        %10308 = vmatpush.bf16.msra.mxu0 %v9602
        %10309 = vmatpush.bf16.msra.mxu0 %v9601
        %10310 = vmatpush.bf16.msra.mxu0 %v9600
        %10311 = vmatpush.bf16.msra.mxu0 %v9599
        %10312 = vmatpush.bf16.msra.mxu0 %v9598
        %10313 = vmatpush.bf16.msra.mxu0 %v9597
        %10314 = vmatpush.bf16.msra.mxu0 %v9596
        %10315 = vmatmul.bf16.gmra.mxu0 %v8971
        %v10316 = vpop.f32.mrf.mxu0
        %v10317 = vadd.f32 %v10228, %v10316
        %v10318 = vpop.f32.mrf.mxu0
        %v10319 = vadd.f32 %v10230, %v10318
        %10320 = vmatmul.bf16.gmra.mxu0 %v8980
        %v10321 = vpop.f32.mrf.mxu0
        %v10322 = vadd.f32 %v10233, %v10321
        %v10323 = vpop.f32.mrf.mxu0
        %v10324 = vadd.f32 %v10235, %v10323
        %10325 = vmatmul.bf16.gmra.mxu0 %v8989
        %v10326 = vpop.f32.mrf.mxu0
        %v10327 = vadd.f32 %v10238, %v10326
        %v10328 = vpop.f32.mrf.mxu0
        %v10329 = vadd.f32 %v10240, %v10328
        %10330 = vmatmul.bf16.gmra.mxu0 %v8998
        %v10331 = vpop.f32.mrf.mxu0
        %v10332 = vadd.f32 %v10243, %v10331
        %v10333 = vpop.f32.mrf.mxu0
        %v10334 = vadd.f32 %v10245, %v10333
        %10335 = vmatmul.bf16.gmra.mxu0 %v9007
        %v10336 = vpop.f32.mrf.mxu0
        %v10337 = vadd.f32 %v10248, %v10336
        %v10338 = vpop.f32.mrf.mxu0
        %v10339 = vadd.f32 %v10250, %v10338
        %10340 = vmatmul.bf16.gmra.mxu0 %v9016
        %v10341 = vpop.f32.mrf.mxu0
        %v10342 = vadd.f32 %v10253, %v10341
        %v10343 = vpop.f32.mrf.mxu0
        %v10344 = vadd.f32 %v10255, %v10343
        %10345 = vmatmul.bf16.gmra.mxu0 %v9025
        %v10346 = vpop.f32.mrf.mxu0
        %v10347 = vadd.f32 %v10258, %v10346
        %v10348 = vpop.f32.mrf.mxu0
        %v10349 = vadd.f32 %v10260, %v10348
        %10350 = vmatmul.bf16.gmra.mxu0 %v9034
        %v10351 = vpop.f32.mrf.mxu0
        %v10352 = vadd.f32 %v10263, %v10351
        %v10353 = vpop.f32.mrf.mxu0
        %v10354 = vadd.f32 %v10265, %v10353
        %10355 = vmatmul.bf16.gmra.mxu0 %v9043
        %v10356 = vpop.f32.mrf.mxu0
        %v10357 = vadd.f32 %v10268, %v10356
        %v10358 = vpop.f32.mrf.mxu0
        %v10359 = vadd.f32 %v10270, %v10358
        %10360 = vmatmul.bf16.gmra.mxu0 %v9052
        %v10361 = vpop.f32.mrf.mxu0
        %v10362 = vadd.f32 %v10273, %v10361
        %v10363 = vpop.f32.mrf.mxu0
        %v10364 = vadd.f32 %v10275, %v10363
        %10365 = vmatmul.bf16.gmra.mxu0 %v9061
        %v10366 = vpop.f32.mrf.mxu0
        %v10367 = vadd.f32 %v10278, %v10366
        %v10368 = vpop.f32.mrf.mxu0
        %v10369 = vadd.f32 %v10280, %v10368
        %10370 = vmatmul.bf16.gmra.mxu0 %v9070
        %v10371 = vpop.f32.mrf.mxu0
        %v10372 = vadd.f32 %v10283, %v10371
        %v10373 = vpop.f32.mrf.mxu0
        %v10374 = vadd.f32 %v10285, %v10373
        %10375 = vmatmul.bf16.gmra.mxu0 %v9079
        %v10376 = vpop.f32.mrf.mxu0
        %v10377 = vadd.f32 %v10288, %v10376
        %v10378 = vpop.f32.mrf.mxu0
        %v10379 = vadd.f32 %v10290, %v10378
        %10380 = vmatmul.bf16.gmra.mxu0 %v9088
        %v10381 = vpop.f32.mrf.mxu0
        %v10382 = vadd.f32 %v10293, %v10381
        %v10383 = vpop.f32.mrf.mxu0
        %v10384 = vadd.f32 %v10295, %v10383
        %10385 = vmatmul.bf16.gmra.mxu0 %v9097
        %v10386 = vpop.f32.mrf.mxu0
        %v10387 = vadd.f32 %v10298, %v10386
        %v10388 = vpop.f32.mrf.mxu0
        %v10389 = vadd.f32 %v10300, %v10388
        %10390 = vmatmul.bf16.gmra.mxu0 %v9106
        %v10391 = vpop.f32.mrf.mxu0
        %v10392 = vadd.f32 %v10303, %v10391
        %v10393 = vpop.f32.mrf.mxu0
        %v10394 = vadd.f32 %v10305, %v10393
        %10395 = vdwg.mxu0
        %10396 = vmatpush.bf16.msra.mxu0 %v9611
        %10397 = vmatpush.bf16.msra.mxu0 %v9610
        %10398 = vmatpush.bf16.msra.mxu0 %v9609
        %10399 = vmatpush.bf16.msra.mxu0 %v9608
        %10400 = vmatpush.bf16.msra.mxu0 %v9607
        %10401 = vmatpush.bf16.msra.mxu0 %v9606
        %10402 = vmatpush.bf16.msra.mxu0 %v9605
        %10403 = vmatpush.bf16.msra.mxu0 %v9604
        %10404 = vmatmul.bf16.gmra.mxu0 %v8972
        %v10405 = vpop.f32.mrf.mxu0
        %v10406 = vadd.f32 %v10317, %v10405
        %v10407 = vpop.f32.mrf.mxu0
        %v10408 = vadd.f32 %v10319, %v10407
        %10409 = vmatmul.bf16.gmra.mxu0 %v8981
        %v10410 = vpop.f32.mrf.mxu0
        %v10411 = vadd.f32 %v10322, %v10410
        %v10412 = vpop.f32.mrf.mxu0
        %v10413 = vadd.f32 %v10324, %v10412
        %10414 = vmatmul.bf16.gmra.mxu0 %v8990
        %v10415 = vpop.f32.mrf.mxu0
        %v10416 = vadd.f32 %v10327, %v10415
        %v10417 = vpop.f32.mrf.mxu0
        %v10418 = vadd.f32 %v10329, %v10417
        %10419 = vmatmul.bf16.gmra.mxu0 %v8999
        %v10420 = vpop.f32.mrf.mxu0
        %v10421 = vadd.f32 %v10332, %v10420
        %v10422 = vpop.f32.mrf.mxu0
        %v10423 = vadd.f32 %v10334, %v10422
        %10424 = vmatmul.bf16.gmra.mxu0 %v9008
        %v10425 = vpop.f32.mrf.mxu0
        %v10426 = vadd.f32 %v10337, %v10425
        %v10427 = vpop.f32.mrf.mxu0
        %v10428 = vadd.f32 %v10339, %v10427
        %10429 = vmatmul.bf16.gmra.mxu0 %v9017
        %v10430 = vpop.f32.mrf.mxu0
        %v10431 = vadd.f32 %v10342, %v10430
        %v10432 = vpop.f32.mrf.mxu0
        %v10433 = vadd.f32 %v10344, %v10432
        %10434 = vmatmul.bf16.gmra.mxu0 %v9026
        %v10435 = vpop.f32.mrf.mxu0
        %v10436 = vadd.f32 %v10347, %v10435
        %v10437 = vpop.f32.mrf.mxu0
        %v10438 = vadd.f32 %v10349, %v10437
        %10439 = vmatmul.bf16.gmra.mxu0 %v9035
        %v10440 = vpop.f32.mrf.mxu0
        %v10441 = vadd.f32 %v10352, %v10440
        %v10442 = vpop.f32.mrf.mxu0
        %v10443 = vadd.f32 %v10354, %v10442
        %10444 = vmatmul.bf16.gmra.mxu0 %v9044
        %v10445 = vpop.f32.mrf.mxu0
        %v10446 = vadd.f32 %v10357, %v10445
        %v10447 = vpop.f32.mrf.mxu0
        %v10448 = vadd.f32 %v10359, %v10447
        %10449 = vmatmul.bf16.gmra.mxu0 %v9053
        %v10450 = vpop.f32.mrf.mxu0
        %v10451 = vadd.f32 %v10362, %v10450
        %v10452 = vpop.f32.mrf.mxu0
        %v10453 = vadd.f32 %v10364, %v10452
        %10454 = vmatmul.bf16.gmra.mxu0 %v9062
        %v10455 = vpop.f32.mrf.mxu0
        %v10456 = vadd.f32 %v10367, %v10455
        %v10457 = vpop.f32.mrf.mxu0
        %v10458 = vadd.f32 %v10369, %v10457
        %10459 = vmatmul.bf16.gmra.mxu0 %v9071
        %v10460 = vpop.f32.mrf.mxu0
        %v10461 = vadd.f32 %v10372, %v10460
        %v10462 = vpop.f32.mrf.mxu0
        %v10463 = vadd.f32 %v10374, %v10462
        %10464 = vmatmul.bf16.gmra.mxu0 %v9080
        %v10465 = vpop.f32.mrf.mxu0
        %v10466 = vadd.f32 %v10377, %v10465
        %v10467 = vpop.f32.mrf.mxu0
        %v10468 = vadd.f32 %v10379, %v10467
        %10469 = vmatmul.bf16.gmra.mxu0 %v9089
        %v10470 = vpop.f32.mrf.mxu0
        %v10471 = vadd.f32 %v10382, %v10470
        %v10472 = vpop.f32.mrf.mxu0
        %v10473 = vadd.f32 %v10384, %v10472
        %10474 = vmatmul.bf16.gmra.mxu0 %v9098
        %v10475 = vpop.f32.mrf.mxu0
        %v10476 = vadd.f32 %v10387, %v10475
        %v10477 = vpop.f32.mrf.mxu0
        %v10478 = vadd.f32 %v10389, %v10477
        %10479 = vmatmul.bf16.gmra.mxu0 %v9107
        %v10480 = vpop.f32.mrf.mxu0
        %v10481 = vadd.f32 %v10392, %v10480
        %v10482 = vpop.f32.mrf.mxu0
        %v10483 = vadd.f32 %v10394, %v10482
        %10484 = vdwg.mxu0
        %v10485 = vld [vmem:[%s5] sm:$0x1]
        %v10487 = vperm.slane %v10485, 0
        %v10489 = vmul.f32 %v10406, %v10487
        %v10490 = vmul.f32 %v10408, %v10487
        %v10491 = vmul.f32 %v10411, %v10487
        %v10492 = vmul.f32 %v10413, %v10487
        %v10493 = vmul.f32 %v10416, %v10487
        %v10494 = vmul.f32 %v10418, %v10487
        %v10495 = vmul.f32 %v10421, %v10487
        %v10496 = vmul.f32 %v10423, %v10487
        %v10497 = vmul.f32 %v10426, %v10487
        %v10498 = vmul.f32 %v10428, %v10487
        %v10499 = vmul.f32 %v10431, %v10487
        %v10500 = vmul.f32 %v10433, %v10487
        %v10501 = vmul.f32 %v10436, %v10487
        %v10502 = vmul.f32 %v10438, %v10487
        %v10503 = vmul.f32 %v10441, %v10487
        %v10504 = vmul.f32 %v10443, %v10487
        %v10505 = vmul.f32 %v10446, %v10487
        %v10506 = vmul.f32 %v10448, %v10487
        %v10507 = vmul.f32 %v10451, %v10487
        %v10508 = vmul.f32 %v10453, %v10487
        %v10509 = vmul.f32 %v10456, %v10487
        %v10510 = vmul.f32 %v10458, %v10487
        %v10511 = vmul.f32 %v10461, %v10487
        %v10512 = vmul.f32 %v10463, %v10487
        %v10513 = vmul.f32 %v10466, %v10487
        %v10514 = vmul.f32 %v10468, %v10487
        %v10515 = vmul.f32 %v10471, %v10487
        %v10516 = vmul.f32 %v10473, %v10487
        %v10517 = vmul.f32 %v10476, %v10487
        %v10518 = vmul.f32 %v10478, %v10487
        %v10519 = vmul.f32 %v10481, %v10487
        %v10520 = vmul.f32 %v10483, %v10487
        %v10521 = vld [vmem:[%s6] sm:$0x1]
        %v10523 = vperm.slane %v10521, 0
        %v10525 = vadd.f32 %v10489, %v10523
        %v10526 = vadd.f32 %v10490, %v10523
        %v10527 = vadd.f32 %v10491, %v10523
        %v10528 = vadd.f32 %v10492, %v10523
        %v10529 = vadd.f32 %v10493, %v10523
        %v10530 = vadd.f32 %v10494, %v10523
        %v10531 = vadd.f32 %v10495, %v10523
        %v10532 = vadd.f32 %v10496, %v10523
        %v10533 = vadd.f32 %v10497, %v10523
        %v10534 = vadd.f32 %v10498, %v10523
        %v10535 = vadd.f32 %v10499, %v10523
        %v10536 = vadd.f32 %v10500, %v10523
        %v10537 = vadd.f32 %v10501, %v10523
        %v10538 = vadd.f32 %v10502, %v10523
        %v10539 = vadd.f32 %v10503, %v10523
        %v10540 = vadd.f32 %v10504, %v10523
        %v10541 = vadd.f32 %v10505, %v10523
        %v10542 = vadd.f32 %v10506, %v10523
        %v10543 = vadd.f32 %v10507, %v10523
        %v10544 = vadd.f32 %v10508, %v10523
        %v10545 = vadd.f32 %v10509, %v10523
        %v10546 = vadd.f32 %v10510, %v10523
        %v10547 = vadd.f32 %v10511, %v10523
        %v10548 = vadd.f32 %v10512, %v10523
        %v10549 = vadd.f32 %v10513, %v10523
        %v10550 = vadd.f32 %v10514, %v10523
        %v10551 = vadd.f32 %v10515, %v10523
        %v10552 = vadd.f32 %v10516, %v10523
        %v10553 = vadd.f32 %v10517, %v10523
        %v10554 = vadd.f32 %v10518, %v10523
        %v10555 = vadd.f32 %v10519, %v10523
        %v10556 = vadd.f32 %v10520, %v10523
        %v10557 = vld [vmem:[%s2777] sm:$0xf]
        %v10558 = vld [vmem:[%s2777 + $0x4] sm:$0xf]
        %v10559 = vld [vmem:[%s2777 + $0xc] sm:$0xf]
        %v10560 = vld [vmem:[%s2777 + $0x10] sm:$0xf]
        %v10561 = vld [vmem:[%s2777 + $0x18] sm:$0xf]
        %v10562 = vld [vmem:[%s2777 + $0x1c] sm:$0xf]
        %v10563 = vld [vmem:[%s2777 + $0x24] sm:$0xf]
        %v10564 = vld [vmem:[%s2777 + $0x28] sm:$0xf]
        %v10565 = vld [vmem:[%s2777 + $0x30] sm:$0xf]
        %v10566 = vld [vmem:[%s2777 + $0x34] sm:$0xf]
        %v10567 = vld [vmem:[%s2777 + $0x3c] sm:$0xf]
        %v10568 = vld [vmem:[%s2777 + $0x40] sm:$0xf]
        %v10569 = vld [vmem:[%s2777 + $0x48] sm:$0xf]
        %v10570 = vld [vmem:[%s2777 + $0x4c] sm:$0xf]
        %v10571 = vld [vmem:[%s2777 + $0x54] sm:$0xf]
        %v10572 = vld [vmem:[%s2777 + $0x58] sm:$0xf]
        %v10573 = vld [vmem:[%s2777 + $0x60] sm:$0xf]
        %v10574 = vld [vmem:[%s2777 + $0x64] sm:$0xf]
        %v10575 = vld [vmem:[%s2777 + $0x6c] sm:$0xf]
        %v10576 = vld [vmem:[%s2777 + $0x70] sm:$0xf]
        %v10577 = vld [vmem:[%s2777 + $0x78] sm:$0xf]
        %v10578 = vld [vmem:[%s2777 + $0x7c] sm:$0xf]
        %v10579 = vld [vmem:[%s2777 + $0x84] sm:$0xf]
        %v10580 = vld [vmem:[%s2777 + $0x88] sm:$0xf]
        %v10581 = vld [vmem:[%s2777 + $0x90] sm:$0xf]
        %v10582 = vld [vmem:[%s2777 + $0x94] sm:$0xf]
        %v10583 = vld [vmem:[%s2777 + $0x9c] sm:$0xf]
        %v10584 = vld [vmem:[%s2777 + $0xa0] sm:$0xf]
        %v10585 = vld [vmem:[%s2777 + $0xa8] sm:$0xf]
        %v10586 = vld [vmem:[%s2777 + $0xac] sm:$0xf]
        %v10587 = vld [vmem:[%s2777 + $0xb4] sm:$0xf]
        %v10588 = vld [vmem:[%s2777 + $0xb8] sm:$0xf]
        %v10589 = vld [vmem:[%s7] sm:$0xf]
        %v10590 = vld [vmem:[%s7 + $0x4] sm:$0xf]
        %v10591 = vld [vmem:[%s7 + $0x8] sm:$0xf]
        %v10592 = vld [vmem:[%s7 + $0xc] sm:$0xf]
        %v10593 = vld [vmem:[%s7 + $0x10] sm:$0xf]
        %v10594 = vld [vmem:[%s7 + $0x14] sm:$0xf]
        %v10595 = vld [vmem:[%s7 + $0x18] sm:$0xf]
        %v10596 = vld [vmem:[%s7 + $0x1c] sm:$0xf]
        %v10629 = vunpack.c.l.b16 %v10557
        %v10630 = vunpack.c.l.b16 %v10558
        %v10631 = vunpack.c.l.b16 %v10559
        %v10632 = vunpack.c.l.b16 %v10560
        %v10633 = vunpack.c.l.b16 %v10561
        %v10634 = vunpack.c.l.b16 %v10562
        %v10635 = vunpack.c.l.b16 %v10563
        %v10636 = vunpack.c.l.b16 %v10564
        %v10637 = vunpack.c.l.b16 %v10565
        %v10638 = vunpack.c.l.b16 %v10566
        %v10639 = vunpack.c.l.b16 %v10567
        %v10640 = vunpack.c.l.b16 %v10568
        %v10641 = vunpack.c.l.b16 %v10569
        %v10642 = vunpack.c.l.b16 %v10570
        %v10643 = vunpack.c.l.b16 %v10571
        %v10644 = vunpack.c.l.b16 %v10572
        %v10645 = vunpack.c.l.b16 %v10573
        %v10646 = vunpack.c.l.b16 %v10574
        %v10647 = vunpack.c.l.b16 %v10575
        %v10648 = vunpack.c.l.b16 %v10576
        %v10649 = vunpack.c.l.b16 %v10577
        %v10650 = vunpack.c.l.b16 %v10578
        %v10651 = vunpack.c.l.b16 %v10579
        %v10652 = vunpack.c.l.b16 %v10580
        %v10653 = vunpack.c.l.b16 %v10581
        %v10654 = vunpack.c.l.b16 %v10582
        %v10655 = vunpack.c.l.b16 %v10583
        %v10656 = vunpack.c.l.b16 %v10584
        %v10657 = vunpack.c.l.b16 %v10585
        %v10658 = vunpack.c.l.b16 %v10586
        %v10659 = vunpack.c.l.b16 %v10587
        %v10660 = vunpack.c.l.b16 %v10588
        %v10661 = vpack.c.b16 %v10630, %v10629
        %v10662 = vpack.c.b16 %v10632, %v10631
        %v10663 = vpack.c.b16 %v10634, %v10633
        %v10664 = vpack.c.b16 %v10636, %v10635
        %v10665 = vpack.c.b16 %v10638, %v10637
        %v10666 = vpack.c.b16 %v10640, %v10639
        %v10667 = vpack.c.b16 %v10642, %v10641
        %v10668 = vpack.c.b16 %v10644, %v10643
        %v10669 = vpack.c.b16 %v10646, %v10645
        %v10670 = vpack.c.b16 %v10648, %v10647
        %v10671 = vpack.c.b16 %v10650, %v10649
        %v10672 = vpack.c.b16 %v10652, %v10651
        %v10673 = vpack.c.b16 %v10654, %v10653
        %v10674 = vpack.c.b16 %v10656, %v10655
        %v10675 = vpack.c.b16 %v10658, %v10657
        %v10676 = vpack.c.b16 %v10660, %v10659
        %v10685 = vunpack.c.l.b16 %v10589
        %v10686 = vunpack.c.l.b16 %v10590
        %v10687 = vunpack.c.l.b16 %v10591
        %v10688 = vunpack.c.l.b16 %v10592
        %v10689 = vunpack.c.l.b16 %v10593
        %v10690 = vunpack.c.l.b16 %v10594
        %v10691 = vunpack.c.l.b16 %v10595
        %v10692 = vunpack.c.l.b16 %v10596
        %v10693 = vpack.c.b16 %v10686, %v10685
        %v10694 = vpack.c.b16 %v10688, %v10687
        %v10695 = vpack.c.b16 %v10690, %v10689
        %v10696 = vpack.c.b16 %v10692, %v10691
        %v10702 = vsel %vm1400, %v10661, 0
        %v10705 = vsel %vm1400, %v10662, 0
        %v10708 = vsel %vm1400, %v10663, 0
        %v10711 = vsel %vm1400, %v10664, 0
        %v10714 = vsel %vm1400, %v10665, 0
        %v10717 = vsel %vm1400, %v10666, 0
        %v10720 = vsel %vm1400, %v10667, 0
        %v10723 = vsel %vm1400, %v10668, 0
        %v10726 = vsel %vm1400, %v10669, 0
        %v10729 = vsel %vm1400, %v10670, 0
        %v10732 = vsel %vm1400, %v10671, 0
        %v10735 = vsel %vm1400, %v10672, 0
        %v10738 = vsel %vm1400, %v10673, 0
        %v10741 = vsel %vm1400, %v10674, 0
        %v10744 = vsel %vm1400, %v10675, 0
        %v10747 = vsel %vm1400, %v10676, 0
        %10749 = vmatpush.bf16.msra.mxu0 0
        %10750 = vmatpush.bf16.msra.mxu0 0
        %10751 = vmatpush.bf16.msra.mxu0 0
        %10752 = vmatpush.bf16.msra.mxu0 0
        %10753 = vmatpush.bf16.msra.mxu0 %v10696
        %10754 = vmatpush.bf16.msra.mxu0 %v10695
        %10755 = vmatpush.bf16.msra.mxu0 %v10694
        %10756 = vmatpush.bf16.msra.mxu0 %v10693
        %10757 = vmatmul.bf16.gmra.mxu0 %v10702
        %v10758 = vpop.f32.mrf.mxu0
        %v10759 = vadd.f32 0.0, %v10758
        %v10760 = vpop.f32.mrf.mxu0
        %v10761 = vadd.f32 0.0, %v10760
        %10762 = vmatmul.bf16.gmra.mxu0 %v10705
        %v10763 = vpop.f32.mrf.mxu0
        %v10764 = vadd.f32 0.0, %v10763
        %v10765 = vpop.f32.mrf.mxu0
        %v10766 = vadd.f32 0.0, %v10765
        %10767 = vmatmul.bf16.gmra.mxu0 %v10708
        %v10768 = vpop.f32.mrf.mxu0
        %v10769 = vadd.f32 0.0, %v10768
        %v10770 = vpop.f32.mrf.mxu0
        %v10771 = vadd.f32 0.0, %v10770
        %10772 = vmatmul.bf16.gmra.mxu0 %v10711
        %v10773 = vpop.f32.mrf.mxu0
        %v10774 = vadd.f32 0.0, %v10773
        %v10775 = vpop.f32.mrf.mxu0
        %v10776 = vadd.f32 0.0, %v10775
        %10777 = vmatmul.bf16.gmra.mxu0 %v10714
        %v10778 = vpop.f32.mrf.mxu0
        %v10779 = vadd.f32 0.0, %v10778
        %v10780 = vpop.f32.mrf.mxu0
        %v10781 = vadd.f32 0.0, %v10780
        %10782 = vmatmul.bf16.gmra.mxu0 %v10717
        %v10783 = vpop.f32.mrf.mxu0
        %v10784 = vadd.f32 0.0, %v10783
        %v10785 = vpop.f32.mrf.mxu0
        %v10786 = vadd.f32 0.0, %v10785
        %10787 = vmatmul.bf16.gmra.mxu0 %v10720
        %v10788 = vpop.f32.mrf.mxu0
        %v10789 = vadd.f32 0.0, %v10788
        %v10790 = vpop.f32.mrf.mxu0
        %v10791 = vadd.f32 0.0, %v10790
        %10792 = vmatmul.bf16.gmra.mxu0 %v10723
        %v10793 = vpop.f32.mrf.mxu0
        %v10794 = vadd.f32 0.0, %v10793
        %v10795 = vpop.f32.mrf.mxu0
        %v10796 = vadd.f32 0.0, %v10795
        %10797 = vmatmul.bf16.gmra.mxu0 %v10726
        %v10798 = vpop.f32.mrf.mxu0
        %v10799 = vadd.f32 0.0, %v10798
        %v10800 = vpop.f32.mrf.mxu0
        %v10801 = vadd.f32 0.0, %v10800
        %10802 = vmatmul.bf16.gmra.mxu0 %v10729
        %v10803 = vpop.f32.mrf.mxu0
        %v10804 = vadd.f32 0.0, %v10803
        %v10805 = vpop.f32.mrf.mxu0
        %v10806 = vadd.f32 0.0, %v10805
        %10807 = vmatmul.bf16.gmra.mxu0 %v10732
        %v10808 = vpop.f32.mrf.mxu0
        %v10809 = vadd.f32 0.0, %v10808
        %v10810 = vpop.f32.mrf.mxu0
        %v10811 = vadd.f32 0.0, %v10810
        %10812 = vmatmul.bf16.gmra.mxu0 %v10735
        %v10813 = vpop.f32.mrf.mxu0
        %v10814 = vadd.f32 0.0, %v10813
        %v10815 = vpop.f32.mrf.mxu0
        %v10816 = vadd.f32 0.0, %v10815
        %10817 = vmatmul.bf16.gmra.mxu0 %v10738
        %v10818 = vpop.f32.mrf.mxu0
        %v10819 = vadd.f32 0.0, %v10818
        %v10820 = vpop.f32.mrf.mxu0
        %v10821 = vadd.f32 0.0, %v10820
        %10822 = vmatmul.bf16.gmra.mxu0 %v10741
        %v10823 = vpop.f32.mrf.mxu0
        %v10824 = vadd.f32 0.0, %v10823
        %v10825 = vpop.f32.mrf.mxu0
        %v10826 = vadd.f32 0.0, %v10825
        %10827 = vmatmul.bf16.gmra.mxu0 %v10744
        %v10828 = vpop.f32.mrf.mxu0
        %v10829 = vadd.f32 0.0, %v10828
        %v10830 = vpop.f32.mrf.mxu0
        %v10831 = vadd.f32 0.0, %v10830
        %10832 = vmatmul.bf16.gmra.mxu0 %v10747
        %v10833 = vpop.f32.mrf.mxu0
        %v10834 = vadd.f32 0.0, %v10833
        %v10835 = vpop.f32.mrf.mxu0
        %v10836 = vadd.f32 0.0, %v10835
        %10837 = vdwg.mxu0
        %v10838 = vld [vmem:[%s8] sm:$0x1]
        %v10840 = vperm.slane %v10838, 0
        %v10842 = vmul.f32 %v10759, %v10840
        %v10843 = vmul.f32 %v10761, %v10840
        %v10844 = vmul.f32 %v10764, %v10840
        %v10845 = vmul.f32 %v10766, %v10840
        %v10846 = vmul.f32 %v10769, %v10840
        %v10847 = vmul.f32 %v10771, %v10840
        %v10848 = vmul.f32 %v10774, %v10840
        %v10849 = vmul.f32 %v10776, %v10840
        %v10850 = vmul.f32 %v10779, %v10840
        %v10851 = vmul.f32 %v10781, %v10840
        %v10852 = vmul.f32 %v10784, %v10840
        %v10853 = vmul.f32 %v10786, %v10840
        %v10854 = vmul.f32 %v10789, %v10840
        %v10855 = vmul.f32 %v10791, %v10840
        %v10856 = vmul.f32 %v10794, %v10840
        %v10857 = vmul.f32 %v10796, %v10840
        %v10858 = vmul.f32 %v10799, %v10840
        %v10859 = vmul.f32 %v10801, %v10840
        %v10860 = vmul.f32 %v10804, %v10840
        %v10861 = vmul.f32 %v10806, %v10840
        %v10862 = vmul.f32 %v10809, %v10840
        %v10863 = vmul.f32 %v10811, %v10840
        %v10864 = vmul.f32 %v10814, %v10840
        %v10865 = vmul.f32 %v10816, %v10840
        %v10866 = vmul.f32 %v10819, %v10840
        %v10867 = vmul.f32 %v10821, %v10840
        %v10868 = vmul.f32 %v10824, %v10840
        %v10869 = vmul.f32 %v10826, %v10840
        %v10870 = vmul.f32 %v10829, %v10840
        %v10871 = vmul.f32 %v10831, %v10840
        %v10872 = vmul.f32 %v10834, %v10840
        %v10873 = vmul.f32 %v10836, %v10840
        %v10874 = vld [vmem:[%s9] sm:$0x1]
        %v10876 = vperm.slane %v10874, 0
        %v10878 = vadd.f32 %v10842, %v10876
        %v10879 = vadd.f32 %v10843, %v10876
        %v10880 = vadd.f32 %v10844, %v10876
        %v10881 = vadd.f32 %v10845, %v10876
        %v10882 = vadd.f32 %v10846, %v10876
        %v10883 = vadd.f32 %v10847, %v10876
        %v10884 = vadd.f32 %v10848, %v10876
        %v10885 = vadd.f32 %v10849, %v10876
        %v10886 = vadd.f32 %v10850, %v10876
        %v10887 = vadd.f32 %v10851, %v10876
        %v10888 = vadd.f32 %v10852, %v10876
        %v10889 = vadd.f32 %v10853, %v10876
        %v10890 = vadd.f32 %v10854, %v10876
        %v10891 = vadd.f32 %v10855, %v10876
        %v10892 = vadd.f32 %v10856, %v10876
        %v10893 = vadd.f32 %v10857, %v10876
        %v10894 = vadd.f32 %v10858, %v10876
        %v10895 = vadd.f32 %v10859, %v10876
        %v10896 = vadd.f32 %v10860, %v10876
        %v10897 = vadd.f32 %v10861, %v10876
        %v10898 = vadd.f32 %v10862, %v10876
        %v10899 = vadd.f32 %v10863, %v10876
        %v10900 = vadd.f32 %v10864, %v10876
        %v10901 = vadd.f32 %v10865, %v10876
        %v10902 = vadd.f32 %v10866, %v10876
        %v10903 = vadd.f32 %v10867, %v10876
        %v10904 = vadd.f32 %v10868, %v10876
        %v10905 = vadd.f32 %v10869, %v10876
        %v10906 = vadd.f32 %v10870, %v10876
        %v10907 = vadd.f32 %v10871, %v10876
        %v10908 = vadd.f32 %v10872, %v10876
        %v10909 = vadd.f32 %v10873, %v10876
        %v10910 = vadd.f32 %v10525, %v10878
        %v10911 = vadd.f32 %v10526, %v10879
        %v10912 = vadd.f32 %v10527, %v10880
        %v10913 = vadd.f32 %v10528, %v10881
        %v10914 = vadd.f32 %v10529, %v10882
        %v10915 = vadd.f32 %v10530, %v10883
        %v10916 = vadd.f32 %v10531, %v10884
        %v10917 = vadd.f32 %v10532, %v10885
        %v10918 = vadd.f32 %v10533, %v10886
        %v10919 = vadd.f32 %v10534, %v10887
        %v10920 = vadd.f32 %v10535, %v10888
        %v10921 = vadd.f32 %v10536, %v10889
        %v10922 = vadd.f32 %v10537, %v10890
        %v10923 = vadd.f32 %v10538, %v10891
        %v10924 = vadd.f32 %v10539, %v10892
        %v10925 = vadd.f32 %v10540, %v10893
        %v10926 = vadd.f32 %v10541, %v10894
        %v10927 = vadd.f32 %v10542, %v10895
        %v10928 = vadd.f32 %v10543, %v10896
        %v10929 = vadd.f32 %v10544, %v10897
        %v10930 = vadd.f32 %v10545, %v10898
        %v10931 = vadd.f32 %v10546, %v10899
        %v10932 = vadd.f32 %v10547, %v10900
        %v10933 = vadd.f32 %v10548, %v10901
        %v10934 = vadd.f32 %v10549, %v10902
        %v10935 = vadd.f32 %v10550, %v10903
        %v10936 = vadd.f32 %v10551, %v10904
        %v10937 = vadd.f32 %v10552, %v10905
        %v10938 = vadd.f32 %v10553, %v10906
        %v10939 = vadd.f32 %v10554, %v10907
        %v10940 = vadd.f32 %v10555, %v10908
        %v10941 = vadd.f32 %v10556, %v10909
        %v10942 = vmax.f32 %v10910, 0.0
        %v10943 = vmax.f32 %v10911, 0.0
        %v10944 = vmax.f32 %v10912, 0.0
        %v10945 = vmax.f32 %v10913, 0.0
        %v10946 = vmax.f32 %v10914, 0.0
        %v10947 = vmax.f32 %v10915, 0.0
        %v10948 = vmax.f32 %v10916, 0.0
        %v10949 = vmax.f32 %v10917, 0.0
        %v10950 = vmax.f32 %v10918, 0.0
        %v10951 = vmax.f32 %v10919, 0.0
        %v10952 = vmax.f32 %v10920, 0.0
        %v10953 = vmax.f32 %v10921, 0.0
        %v10954 = vmax.f32 %v10922, 0.0
        %v10955 = vmax.f32 %v10923, 0.0
        %v10956 = vmax.f32 %v10924, 0.0
        %v10957 = vmax.f32 %v10925, 0.0
        %v10958 = vmax.f32 %v10926, 0.0
        %v10959 = vmax.f32 %v10927, 0.0
        %v10960 = vmax.f32 %v10928, 0.0
        %v10961 = vmax.f32 %v10929, 0.0
        %v10962 = vmax.f32 %v10930, 0.0
        %v10963 = vmax.f32 %v10931, 0.0
        %v10964 = vmax.f32 %v10932, 0.0
        %v10965 = vmax.f32 %v10933, 0.0
        %v10966 = vmax.f32 %v10934, 0.0
        %v10967 = vmax.f32 %v10935, 0.0
        %v10968 = vmax.f32 %v10936, 0.0
        %v10969 = vmax.f32 %v10937, 0.0
        %v10970 = vmax.f32 %v10938, 0.0
        %v10971 = vmax.f32 %v10939, 0.0
        %v10972 = vmax.f32 %v10940, 0.0
        %v10973 = vmax.f32 %v10941, 0.0
        %10974 = vst [vmem:[%s1213] sm:$0xff] %v10942
        %10975 = vst [vmem:[%s1213 + $0x8] sm:$0xff] %v10943
        %10976 = vst [vmem:[%s1213 + $0x10] sm:$0xff] %v10944
        %10977 = vst [vmem:[%s1213 + $0x18] sm:$0xff] %v10945
        %10978 = vst [vmem:[%s1213 + $0x20] sm:$0xff] %v10946
        %10979 = vst [vmem:[%s1213 + $0x28] sm:$0xff] %v10947
        %10980 = vst [vmem:[%s1213 + $0x30] sm:$0xff] %v10948
        %10981 = vst [vmem:[%s1213 + $0x38] sm:$0xff] %v10949
        %10982 = vst [vmem:[%s1213 + $0x40] sm:$0xff] %v10950
        %10983 = vst [vmem:[%s1213 + $0x48] sm:$0xff] %v10951
        %10984 = vst [vmem:[%s1213 + $0x50] sm:$0xff] %v10952
        %10985 = vst [vmem:[%s1213 + $0x58] sm:$0xff] %v10953
        %10986 = vst [vmem:[%s1213 + $0x60] sm:$0xff] %v10954
        %10987 = vst [vmem:[%s1213 + $0x68] sm:$0xff] %v10955
        %10988 = vst [vmem:[%s1213 + $0x70] sm:$0xff] %v10956
        %10989 = vst [vmem:[%s1213 + $0x78] sm:$0xff] %v10957
        %10990 = vst [vmem:[%s1213 + $0x80] sm:$0xff] %v10958
        %10991 = vst [vmem:[%s1213 + $0x88] sm:$0xff] %v10959
        %10992 = vst [vmem:[%s1213 + $0x90] sm:$0xff] %v10960
        %10993 = vst [vmem:[%s1213 + $0x98] sm:$0xff] %v10961
        %10994 = vst [vmem:[%s1213 + $0xa0] sm:$0xff] %v10962
        %10995 = vst [vmem:[%s1213 + $0xa8] sm:$0xff] %v10963
        %10996 = vst [vmem:[%s1213 + $0xb0] sm:$0xff] %v10964
        %10997 = vst [vmem:[%s1213 + $0xb8] sm:$0xff] %v10965
        %10998 = vst [vmem:[%s1213 + $0xc0] sm:$0xff] %v10966
        %10999 = vst [vmem:[%s1213 + $0xc8] sm:$0xff] %v10967
        %11000 = vst [vmem:[%s1213 + $0xd0] sm:$0xff] %v10968
        %11001 = vst [vmem:[%s1213 + $0xd8] sm:$0xff] %v10969
        %11002 = vst [vmem:[%s1213 + $0xe0] sm:$0xff] %v10970
        %11003 = vst [vmem:[%s1213 + $0xe8] sm:$0xff] %v10971
        %11004 = vst [vmem:[%s1213 + $0xf0] sm:$0xff] %v10972
        %11005 = vst [vmem:[%s1213 + $0xf8] sm:$0xff] %v10973
        %s11006 = sand.u32 %s247, 1
        %s11007 = scalar_lea.sflag [#allocation7], %s11006
        %s11008 = sand.u32 %s247, 1
        %s11009 = smul.addr %s11008, 256
        %s11010 = scalar_lea.vmem [#allocation6], %s11009
        // Predicated region
        $region102: #{tpu_custom_call.1} parent=96 // pred_check
          %p11011 = pneg %p257
        $region103: #{tpu_custom_call.1} parent=96 // pred_check_branch
          %11013 = sbr.rel (%p11011) target = $region105
        $region104: #{tpu_custom_call.1} parent=96 // pred_region
          %11015 = vsyncadd %s11007, 0
          %s11016 = smul.addr %s24, 32
          %s11017 = smul.addr %s11016, 8
          %s11018 = scalar_lea.hbm %s10, %s11017
          %s11019 = sshll.u32 %s11010, 4
          %s11020 = int_to_ptr.vmem [resolvable:$true] %s11019
          %s11021 = sshll.u32 %s11018, 4
          %s11022 = int_to_ptr.hbm [resolvable:$true] %s11021
          %11027 = dma.vmem_to_hbm [thread:$0]  %s11020, 4096, %s11022, %s11007, 128, 128, 8
        $region105: #{tpu_custom_call.1} parent=96 // pred_fallthru
          _
      $region97: #{tpu_custom_call.1} parent=5 // pred_fallthru
        _
      %p11028 = scmp.le.s32.totalorder 2, %s19
      // Predicated region
      $region106: #{tpu_custom_call.1} parent=5 // pred_check
        %p11029 = pneg %p11028
      $region107: #{tpu_custom_call.1} parent=5 // pred_check_branch
        %11031 = sbr.rel (%p11029) target = $region109
      $region108: #{tpu_custom_call.1} parent=5 // pred_region
        %s11032 = ssub.s32 %s19, 2
        // Predicated region
        $region110: #{tpu_custom_call.1} parent=108 // pred_check
          %p11033 = pneg %p263
        $region111: #{tpu_custom_call.1} parent=108 // pred_check_branch
          %11035 = sbr.rel (%p11033) target = $region113
        $region112: #{tpu_custom_call.1} parent=108 // pred_region
          %s11036 = sand.u32 %s248, 1
          %s11037 = scalar_lea.sflag [#allocation7], %s11036
          %s11038 = sand.u32 %s248, 1
          %s11039 = smul.addr %s11038, 256
          %s11040 = scalar_lea.vmem [#allocation6], %s11039
          %11042 = dma.done %s11037, 4096
        $region113: #{tpu_custom_call.1} parent=108 // pred_fallthru
          _
      $region109: #{tpu_custom_call.1} parent=5 // pred_fallthru
        _
    $region6: #{tpu_custom_call.1} parent=1 // loop_footer
      %s23 = sadd.s32 1, %s19
    $region7: #{tpu_custom_call.1} parent=1 // loop_footer_branch
      %18 = sbr.rel target = $region3
    $region8: #{tpu_custom_call.1} parent=1 // loop_exit
      _
    %11043 = vsyncpa [#allocation7], 1
    %s11044 = scalar_lea.sflag [#allocation7], 1
    %11045 = vsyncpa %s11044, 1

</llo_original>
